<compile_context>
chip_gen: v7x
topology: tpu7x:2x2x1
jax: 0.10.0
libtpu: 0.0.40
codegen_flags: <defaults>
</compile_context>

<pallas_src>
import functools

import jax
import jax.numpy as jnp
from jax.experimental import pallas as pl
from jax.experimental.pallas import tpu as pltpu

H_LSTM = 128  # fixed by the module definition


# ----------------------------------------------------------------------------
# Single fused kernel: 3 LSTM layers + MLP head + exact softmax.
# Gate order inside the kernel is [i, f, o, g] (reordered at param prep).
# ----------------------------------------------------------------------------
def _fused_lstm_kernel(x_ref,
                       wih1_ref, whh1_ref, b1_ref,
                       wih2_ref, whh2_ref, b2_ref,
                       wih3_ref, whh3_ref, b3_ref,
                       hw1_ref, hb1_ref, hw2_ref, hb2_ref,
                       h0_ref, c0_ref,
                       out_ref,
                       gx_sc, ya_sc, yb_sc,
                       *, seq, bpad, hidden):
    S, B, H = seq, bpad, hidden

    def run_layer(x2d, wih_ref, whh_ref, b_ref, h, c, y_out):
        # Hoisted input projection: one (S*B, I) x (I, 4H) bf16 matmul per
        # layer, stored time-major so the recurrence does aligned [t] loads.
        gx = (jnp.dot(x2d.astype(jnp.bfloat16), wih_ref[...],
                      preferred_element_type=jnp.float32)
              + b_ref[...])                                   # (S*B, 4H) f32
        gx_sc[...] = gx.reshape(S, B, 4 * H)

        # Statically unrolled time loop: per-step serial chain is a single
        # (B, H) x (H, 4H) bf16 MXU matmul + fused gate activations.
        for t in range(S):
            g = gx_sc[t] + jnp.dot(h.astype(jnp.bfloat16), whh_ref[...],
                                   preferred_element_type=jnp.float32)
            ifo = jax.nn.sigmoid(g[:, :3 * H])                # i | f | o
            g_g = jnp.tanh(g[:, 3 * H:])
            c = ifo[:, H:2 * H] * c + ifo[:, :H] * g_g
            h = ifo[:, 2 * H:] * jnp.tanh(c)
            y_out[t] = h                                       # (B, H) aligned
        return h, c

    h0 = h0_ref[...]
    c0 = c0_ref[...]

    # Layer 1 consumes x; layers 2/3 seed from the previous layer's FINAL
    # (h, c) — matching `output, _ = backbone2(output1, _)` in PyTorch.
    h1, c1 = run_layer(x_ref[...], wih1_ref, whh1_ref, b1_ref, h0, c0, ya_sc)
    y1 = ya_sc[...].reshape(S * B, H)
    h2, c2 = run_layer(y1, wih2_ref, whh2_ref, b2_ref, h1, c1, yb_sc)
    y2 = yb_sc[...].reshape(S * B, H)
    run_layer(y2, wih3_ref, whh3_ref, b3_ref, h2, c2, ya_sc)
    y3 = ya_sc[...].reshape(S * B, H)

    # Head: Linear -> (Dropout=id) -> ReLU -> Linear -> (Dropout=id) -> ReLU
    #       -> Softmax(dim=-1).  Runs once, off the critical path: keep f32
    #       and use an EXACT softmax so rows sum to 1.
    hdn = jnp.dot(y3, hw1_ref[...],
                  preferred_element_type=jnp.float32) + hb1_ref[...]
    hdn = jnp.maximum(hdn, 0.0)                               # (S*B, 128)
    z = jnp.dot(hdn, hw2_ref[...],
                preferred_element_type=jnp.float32) + hb2_ref[...]
    z = jnp.maximum(z, 0.0)                                   # (S*B, 2)
    m = jnp.max(z, axis=-1, keepdims=True)
    e = jnp.exp(z - m)
    s = jnp.sum(e, axis=-1, keepdims=True)
    out_ref[...] = (e / s).astype(out_ref.dtype)


def lstm_model_forward(x, params, h0, c0):
    """x: (batch, seq, factors) -> output: squeeze of (seq, batch, 2).

    `params` must already be processed by `prepare_params`.
    """
    B, S, F = x.shape
    H = H_LSTM
    Bp = max(8, ((B + 7) // 8) * 8)          # sublane-aligned batch

    # input.permute(1, 0, 2), pad batch to Bp, flatten time*batch for the
    # hoisted input projection.
    xt = jnp.transpose(x, (1, 0, 2))                         # (S, B, F)
    xt = jnp.pad(xt, ((0, 0), (0, Bp - B), (0, 0)))          # (S, Bp, F)
    xt = xt.reshape(S * Bp, F)
    h0p = jnp.pad(h0, ((0, Bp - B), (0, 0)))                 # (Bp, H)
    c0p = jnp.pad(c0, ((0, Bp - B), (0, 0)))

    out2d = pl.pallas_call(
        functools.partial(_fused_lstm_kernel, seq=S, bpad=Bp, hidden=H),
        out_shape=jax.ShapeDtypeStruct((S * Bp, 2), jnp.float32),
        scratch_shapes=[
            pltpu.VMEM((S, Bp, 4 * H), jnp.float32),   # gx (time-major)
            pltpu.VMEM((S, Bp, H), jnp.float32),       # y ping
            pltpu.VMEM((S, Bp, H), jnp.float32),       # y pong
        ],
    )(xt,
      params["wih1"], params["whh1"], params["b1"],
      params["wih2"], params["whh2"], params["b2"],
      params["wih3"], params["whh3"], params["b3"],
      params["hw1"], params["hb1"], params["hw2"], params["hb2"],
      h0p, c0p)

    out = out2d.reshape(S, Bp, 2)[:, :B, :]
    # torch.squeeze semantics (drops any size-1 dims; no-op for B,S > 1).
    return jnp.squeeze(out)


# ----------------------------------------------------------------------------
# Parameters (PyTorch layout) + kernel-side preparation.
# ----------------------------------------------------------------------------
def init_params(key, factors, hidden_size):
    """Deterministic init mimicking PyTorch default uniform(-1/sqrt(H), 1/sqrt(H)).

    Produced in PyTorch gate order [i, f, g, o], (I, 4H)/(H, 4H) layout,
    b = b_ih + b_hh.
    """
    H = H_LSTM
    ks = list(jax.random.split(key, 16))

    def uni(k, shape, bound):
        return jax.random.uniform(k, shape, jnp.float32, -bound, bound)

    kl = 1.0 / jnp.sqrt(H)
    params = {}
    in_sizes = [factors, H, H]
    for layer in range(3):
        i = in_sizes[layer]
        params[f"wih{layer + 1}"] = uni(ks.pop(), (i, 4 * H), kl)
        params[f"whh{layer + 1}"] = uni(ks.pop(), (H, 4 * H), kl)
        b_ih = uni(ks.pop(), (1, 4 * H), kl)
        b_hh = uni(ks.pop(), (1, 4 * H), kl)
        params[f"b{layer + 1}"] = b_ih + b_hh

    d1_in, d1_out = H, hidden_size * 2
    d2_in, d2_out = hidden_size * 2, 2
    k1 = 1.0 / jnp.sqrt(d1_in)
    k2 = 1.0 / jnp.sqrt(d2_in)
    params["hw1"] = uni(ks.pop(), (d1_in, d1_out), k1)
    params["hb1"] = uni(ks.pop(), (1, d1_out), k1)
    params["hw2"] = uni(ks.pop(), (d2_in, d2_out), k2)
    params["hb2"] = uni(ks.pop(), (1, d2_out), k2)
    return params


def _reorder_gates(w, H):
    # PyTorch [i, f, g, o] -> kernel [i, f, o, g] along the last axis.
    return jnp.concatenate(
        [w[..., 0:2 * H], w[..., 3 * H:4 * H], w[..., 2 * H:3 * H]], axis=-1)


def prepare_params(params):
    """Reorder gates, cast LSTM matmul weights to bf16, lane-pad head-1."""
    H = H_LSTM
    p = {}
    for l in (1, 2, 3):
        p[f"wih{l}"] = _reorder_gates(params[f"wih{l}"], H).astype(jnp.bfloat16)
        p[f"whh{l}"] = _reorder_gates(params[f"whh{l}"], H).astype(jnp.bfloat16)
        p[f"b{l}"] = _reorder_gates(params[f"b{l}"], H)        # f32 bias

    d1 = params["hw1"].shape[1]
    d1p = ((d1 + 127) // 128) * 128        # lane-dense intermediate width
    pad = d1p - d1
    # Zero-padded hidden columns are matched by zero rows in hw2 -> exact.
    p["hw1"] = jnp.pad(params["hw1"], ((0, 0), (0, pad)))
    p["hb1"] = jnp.pad(params["hb1"], ((0, 0), (0, pad)))
    p["hw2"] = jnp.pad(params["hw2"], ((0, pad), (0, 0)))
    p["hb2"] = params["hb2"]
    return p


if __name__ == "__main__":
    batch, seq, factors, hidden_size = 2, 8, 8, 32

    key = jax.random.PRNGKey(0)
    k_x, k_h, k_c, k_p = jax.random.split(key, 4)

    x = jax.random.normal(k_x, (batch, seq, factors), jnp.float32)
    # torch.randn(1, B, 128) initial states (deterministic here via PRNGKey)
    h0 = jax.random.normal(k_h, (batch, H_LSTM), jnp.float32)
    c0 = jax.random.normal(k_c, (batch, H_LSTM), jnp.float32)

    params = prepare_params(init_params(k_p, factors, hidden_size))

    out = jax.jit(lstm_model_forward)(x, params, h0, c0)
    jax.block_until_ready(out)

    assert out.shape == (seq, batch, 2), out.shape
    assert bool(jnp.all(jnp.isfinite(out)))
    # softmax rows sum to 1 (exact softmax in-kernel)
    assert bool(jnp.allclose(jnp.sum(out, axis=-1), 1.0, atol=1e-5))
    print("KERNEL_OK")
</pallas_src>

<mosaic_0001>
module attributes {stable_mosaic.version = 11 : i64} {
  func.func @_fused_lstm_kernel(%arg0: memref<64x8xf32, #tpu.memory_space<vmem>>, %arg1: memref<8x512xbf16, #tpu.memory_space<vmem>>, %arg2: memref<128x512xbf16, #tpu.memory_space<vmem>>, %arg3: memref<1x512xf32, #tpu.memory_space<vmem>>, %arg4: memref<128x512xbf16, #tpu.memory_space<vmem>>, %arg5: memref<128x512xbf16, #tpu.memory_space<vmem>>, %arg6: memref<1x512xf32, #tpu.memory_space<vmem>>, %arg7: memref<128x512xbf16, #tpu.memory_space<vmem>>, %arg8: memref<128x512xbf16, #tpu.memory_space<vmem>>, %arg9: memref<1x512xf32, #tpu.memory_space<vmem>>, %arg10: memref<128x128xf32, #tpu.memory_space<vmem>>, %arg11: memref<1x128xf32, #tpu.memory_space<vmem>>, %arg12: memref<128x2xf32, #tpu.memory_space<vmem>>, %arg13: memref<1x2xf32, #tpu.memory_space<vmem>>, %arg14: memref<8x128xf32, #tpu.memory_space<vmem>>, %arg15: memref<8x128xf32, #tpu.memory_space<vmem>>, %arg16: memref<64x2xf32, #tpu.memory_space<vmem>>, %arg17: memref<8x8x512xf32, #tpu.memory_space<vmem>>, %arg18: memref<8x8x128xf32, #tpu.memory_space<vmem>>, %arg19: memref<8x8x128xf32, #tpu.memory_space<vmem>>) attributes {dimension_semantics = [], scalar_prefetch = 0 : i64, scratch_operands = 3 : i64, tpu.core_type = #tpu.core_type<tc>} {
    %c0 = arith.constant 0 : index
    %c0_0 = arith.constant 0 : index
    %0 = vector.load %arg14[%c0, %c0_0] : memref<8x128xf32, #tpu.memory_space<vmem>>, vector<8x128xf32>
    %c0_1 = arith.constant 0 : index
    %c0_2 = arith.constant 0 : index
    %1 = vector.load %arg15[%c0_1, %c0_2] : memref<8x128xf32, #tpu.memory_space<vmem>>, vector<8x128xf32>
    %c0_3 = arith.constant 0 : index
    %c0_4 = arith.constant 0 : index
    %2 = vector.load %arg0[%c0_3, %c0_4] : memref<64x8xf32, #tpu.memory_space<vmem>>, vector<64x8xf32>
    %3 = arith.truncf %2 : vector<64x8xf32> to vector<64x8xbf16>
    %c0_5 = arith.constant 0 : index
    %c0_6 = arith.constant 0 : index
    %4 = vector.load %arg1[%c0_5, %c0_6] : memref<8x512xbf16, #tpu.memory_space<vmem>>, vector<8x512xbf16>
    %cst = arith.constant dense<0.000000e+00> : vector<64x512xf32>
    %5 = tpu.matmul %3, %4, %cst {dimension_numbers = #tpu.dot_dimension_numbers<[1], [0], [0], [1], [0, 0, 1, 1], [], []>} : vector<64x8xbf16>, vector<8x512xbf16>, vector<64x512xf32> -> vector<64x512xf32>
    %c0_7 = arith.constant 0 : index
    %c0_8 = arith.constant 0 : index
    %6 = vector.load %arg3[%c0_7, %c0_8] : memref<1x512xf32, #tpu.memory_space<vmem>>, vector<1x512xf32>
    %7 = vector.broadcast %6 : vector<1x512xf32> to vector<64x512xf32>
    %8 = arith.addf %5, %7 : vector<64x512xf32>
    %9 = vector.shape_cast %8 : vector<64x512xf32> to vector<8x8x512xf32>
    %c0_9 = arith.constant 0 : index
    %c0_10 = arith.constant 0 : index
    %c0_11 = arith.constant 0 : index
    %10 = vector.load %arg17[%c0_9, %c0_10, %c0_11] : memref<8x8x512xf32, #tpu.memory_space<vmem>>, vector<8x8x512xf32>
    tpu.vector_store %arg17[%c0_9, %c0_10, %c0_11], %9 {strides = array<i32>} : memref<8x8x512xf32, #tpu.memory_space<vmem>>, vector<8x8x512xf32>,
    %c0_12 = arith.constant 0 : index
    %c0_13 = arith.constant 0 : index
    %c0_14 = arith.constant 0 : index
    %11 = vector.load %arg17[%c0_12, %c0_13, %c0_14] : memref<8x8x512xf32, #tpu.memory_space<vmem>>, vector<1x8x512xf32>
    %12 = vector.shape_cast %11 : vector<1x8x512xf32> to vector<8x512xf32>
    %13 = arith.truncf %0 : vector<8x128xf32> to vector<8x128xbf16>
    %c0_15 = arith.constant 0 : index
    %c0_16 = arith.constant 0 : index
    %14 = vector.load %arg2[%c0_15, %c0_16] : memref<128x512xbf16, #tpu.memory_space<vmem>>, vector<128x512xbf16>
    %cst_17 = arith.constant dense<0.000000e+00> : vector<8x512xf32>
    %15 = tpu.matmul %13, %14, %cst_17 {dimension_numbers = #tpu.dot_dimension_numbers<[1], [0], [0], [1], [0, 0, 1, 1], [], []>} : vector<8x128xbf16>, vector<128x512xbf16>, vector<8x512xf32> -> vector<8x512xf32>
    %16 = arith.addf %12, %15 : vector<8x512xf32>
    %17 = vector.extract_strided_slice %16 {offsets = [0, 0], sizes = [8, 384], strides = [1, 1]} : vector<8x512xf32> to vector<8x384xf32>
    %18 = arith.negf %17 : vector<8x384xf32>
    %19 = math.exp %18 : vector<8x384xf32>
    %cst_18 = arith.constant 1.000000e+00 : f32
    %20 = vector.broadcast %cst_18 : f32 to vector<8x384xf32>
    %21 = arith.addf %20, %19 : vector<8x384xf32>
    %22 = arith.divf %20, %21 : vector<8x384xf32>
    %23 = vector.extract_strided_slice %16 {offsets = [0, 384], sizes = [8, 128], strides = [1, 1]} : vector<8x512xf32> to vector<8x128xf32>
    %24 = math.tanh %23 : vector<8x128xf32>
    %25 = vector.extract_strided_slice %22 {offsets = [0, 128], sizes = [8, 128], strides = [1, 1]} : vector<8x384xf32> to vector<8x128xf32>
    %26 = arith.mulf %25, %1 : vector<8x128xf32>
    %27 = vector.extract_strided_slice %22 {offsets = [0, 0], sizes = [8, 128], strides = [1, 1]} : vector<8x384xf32> to vector<8x128xf32>
    %28 = arith.mulf %27, %24 : vector<8x128xf32>
    %29 = arith.addf %26, %28 : vector<8x128xf32>
    %30 = vector.extract_strided_slice %22 {offsets = [0, 256], sizes = [8, 128], strides = [1, 1]} : vector<8x384xf32> to vector<8x128xf32>
    %31 = math.tanh %29 : vector<8x128xf32>
    %32 = arith.mulf %30, %31 : vector<8x128xf32>
    %c0_19 = arith.constant 0 : index
    %c0_20 = arith.constant 0 : index
    %c0_21 = arith.constant 0 : index
    %33 = vector.load %arg18[%c0_19, %c0_20, %c0_21] : memref<8x8x128xf32, #tpu.memory_space<vmem>>, vector<1x8x128xf32>
    %34 = vector.shape_cast %33 : vector<1x8x128xf32> to vector<8x128xf32>
    %35 = vector.shape_cast %32 : vector<8x128xf32> to vector<1x8x128xf32>
    tpu.vector_store %arg18[%c0_19, %c0_20, %c0_21], %35 {strides = array<i32>} : memref<8x8x128xf32, #tpu.memory_space<vmem>>, vector<1x8x128xf32>,
    %c1 = arith.constant 1 : index
    %c0_22 = arith.constant 0 : index
    %c0_23 = arith.constant 0 : index
    %36 = vector.load %arg17[%c1, %c0_22, %c0_23] : memref<8x8x512xf32, #tpu.memory_space<vmem>>, vector<1x8x512xf32>
    %37 = vector.shape_cast %36 : vector<1x8x512xf32> to vector<8x512xf32>
    %38 = arith.truncf %32 : vector<8x128xf32> to vector<8x128xbf16>
    %c0_24 = arith.constant 0 : index
    %c0_25 = arith.constant 0 : index
    %39 = vector.load %arg2[%c0_24, %c0_25] : memref<128x512xbf16, #tpu.memory_space<vmem>>, vector<128x512xbf16>
    %cst_26 = arith.constant dense<0.000000e+00> : vector<8x512xf32>
    %40 = tpu.matmul %38, %39, %cst_26 {dimension_numbers = #tpu.dot_dimension_numbers<[1], [0], [0], [1], [0, 0, 1, 1], [], []>} : vector<8x128xbf16>, vector<128x512xbf16>, vector<8x512xf32> -> vector<8x512xf32>
    %41 = arith.addf %37, %40 : vector<8x512xf32>
    %42 = vector.extract_strided_slice %41 {offsets = [0, 0], sizes = [8, 384], strides = [1, 1]} : vector<8x512xf32> to vector<8x384xf32>
    %43 = arith.negf %42 : vector<8x384xf32>
    %44 = math.exp %43 : vector<8x384xf32>
    %cst_27 = arith.constant 1.000000e+00 : f32
    %45 = vector.broadcast %cst_27 : f32 to vector<8x384xf32>
    %46 = arith.addf %45, %44 : vector<8x384xf32>
    %47 = arith.divf %45, %46 : vector<8x384xf32>
    %48 = vector.extract_strided_slice %41 {offsets = [0, 384], sizes = [8, 128], strides = [1, 1]} : vector<8x512xf32> to vector<8x128xf32>
    %49 = math.tanh %48 : vector<8x128xf32>
    %50 = vector.extract_strided_slice %47 {offsets = [0, 128], sizes = [8, 128], strides = [1, 1]} : vector<8x384xf32> to vector<8x128xf32>
    %51 = arith.mulf %50, %29 : vector<8x128xf32>
    %52 = vector.extract_strided_slice %47 {offsets = [0, 0], sizes = [8, 128], strides = [1, 1]} : vector<8x384xf32> to vector<8x128xf32>
    %53 = arith.mulf %52, %49 : vector<8x128xf32>
    %54 = arith.addf %51, %53 : vector<8x128xf32>
    %55 = vector.extract_strided_slice %47 {offsets = [0, 256], sizes = [8, 128], strides = [1, 1]} : vector<8x384xf32> to vector<8x128xf32>
    %56 = math.tanh %54 : vector<8x128xf32>
    %57 = arith.mulf %55, %56 : vector<8x128xf32>
    %c1_28 = arith.constant 1 : index
    %c0_29 = arith.constant 0 : index
    %c0_30 = arith.constant 0 : index
    %58 = vector.load %arg18[%c1_28, %c0_29, %c0_30] : memref<8x8x128xf32, #tpu.memory_space<vmem>>, vector<1x8x128xf32>
    %59 = vector.shape_cast %58 : vector<1x8x128xf32> to vector<8x128xf32>
    %60 = vector.shape_cast %57 : vector<8x128xf32> to vector<1x8x128xf32>
    tpu.vector_store %arg18[%c1_28, %c0_29, %c0_30], %60 {strides = array<i32>} : memref<8x8x128xf32, #tpu.memory_space<vmem>>, vector<1x8x128xf32>,
    %c2 = arith.constant 2 : index
    %c0_31 = arith.constant 0 : index
    %c0_32 = arith.constant 0 : index
    %61 = vector.load %arg17[%c2, %c0_31, %c0_32] : memref<8x8x512xf32, #tpu.memory_space<vmem>>, vector<1x8x512xf32>
    %62 = vector.shape_cast %61 : vector<1x8x512xf32> to vector<8x512xf32>
    %63 = arith.truncf %57 : vector<8x128xf32> to vector<8x128xbf16>
    %c0_33 = arith.constant 0 : index
    %c0_34 = arith.constant 0 : index
    %64 = vector.load %arg2[%c0_33, %c0_34] : memref<128x512xbf16, #tpu.memory_space<vmem>>, vector<128x512xbf16>
    %cst_35 = arith.constant dense<0.000000e+00> : vector<8x512xf32>
    %65 = tpu.matmul %63, %64, %cst_35 {dimension_numbers = #tpu.dot_dimension_numbers<[1], [0], [0], [1], [0, 0, 1, 1], [], []>} : vector<8x128xbf16>, vector<128x512xbf16>, vector<8x512xf32> -> vector<8x512xf32>
    %66 = arith.addf %62, %65 : vector<8x512xf32>
    %67 = vector.extract_strided_slice %66 {offsets = [0, 0], sizes = [8, 384], strides = [1, 1]} : vector<8x512xf32> to vector<8x384xf32>
    %68 = arith.negf %67 : vector<8x384xf32>
    %69 = math.exp %68 : vector<8x384xf32>
    %cst_36 = arith.constant 1.000000e+00 : f32
    %70 = vector.broadcast %cst_36 : f32 to vector<8x384xf32>
    %71 = arith.addf %70, %69 : vector<8x384xf32>
    %72 = arith.divf %70, %71 : vector<8x384xf32>
    %73 = vector.extract_strided_slice %66 {offsets = [0, 384], sizes = [8, 128], strides = [1, 1]} : vector<8x512xf32> to vector<8x128xf32>
    %74 = math.tanh %73 : vector<8x128xf32>
    %75 = vector.extract_strided_slice %72 {offsets = [0, 128], sizes = [8, 128], strides = [1, 1]} : vector<8x384xf32> to vector<8x128xf32>
    %76 = arith.mulf %75, %54 : vector<8x128xf32>
    %77 = vector.extract_strided_slice %72 {offsets = [0, 0], sizes = [8, 128], strides = [1, 1]} : vector<8x384xf32> to vector<8x128xf32>
    %78 = arith.mulf %77, %74 : vector<8x128xf32>
    %79 = arith.addf %76, %78 : vector<8x128xf32>
    %80 = vector.extract_strided_slice %72 {offsets = [0, 256], sizes = [8, 128], strides = [1, 1]} : vector<8x384xf32> to vector<8x128xf32>
    %81 = math.tanh %79 : vector<8x128xf32>
    %82 = arith.mulf %80, %81 : vector<8x128xf32>
    %c2_37 = arith.constant 2 : index
    %c0_38 = arith.constant 0 : index
    %c0_39 = arith.constant 0 : index
    %83 = vector.load %arg18[%c2_37, %c0_38, %c0_39] : memref<8x8x128xf32, #tpu.memory_space<vmem>>, vector<1x8x128xf32>
    %84 = vector.shape_cast %83 : vector<1x8x128xf32> to vector<8x128xf32>
    %85 = vector.shape_cast %82 : vector<8x128xf32> to vector<1x8x128xf32>
    tpu.vector_store %arg18[%c2_37, %c0_38, %c0_39], %85 {strides = array<i32>} : memref<8x8x128xf32, #tpu.memory_space<vmem>>, vector<1x8x128xf32>,
    %c3 = arith.constant 3 : index
    %c0_40 = arith.constant 0 : index
    %c0_41 = arith.constant 0 : index
    %86 = vector.load %arg17[%c3, %c0_40, %c0_41] : memref<8x8x512xf32, #tpu.memory_space<vmem>>, vector<1x8x512xf32>
    %87 = vector.shape_cast %86 : vector<1x8x512xf32> to vector<8x512xf32>
    %88 = arith.truncf %82 : vector<8x128xf32> to vector<8x128xbf16>
    %c0_42 = arith.constant 0 : index
    %c0_43 = arith.constant 0 : index
    %89 = vector.load %arg2[%c0_42, %c0_43] : memref<128x512xbf16, #tpu.memory_space<vmem>>, vector<128x512xbf16>
    %cst_44 = arith.constant dense<0.000000e+00> : vector<8x512xf32>
    %90 = tpu.matmul %88, %89, %cst_44 {dimension_numbers = #tpu.dot_dimension_numbers<[1], [0], [0], [1], [0, 0, 1, 1], [], []>} : vector<8x128xbf16>, vector<128x512xbf16>, vector<8x512xf32> -> vector<8x512xf32>
    %91 = arith.addf %87, %90 : vector<8x512xf32>
    %92 = vector.extract_strided_slice %91 {offsets = [0, 0], sizes = [8, 384], strides = [1, 1]} : vector<8x512xf32> to vector<8x384xf32>
    %93 = arith.negf %92 : vector<8x384xf32>
    %94 = math.exp %93 : vector<8x384xf32>
    %cst_45 = arith.constant 1.000000e+00 : f32
    %95 = vector.broadcast %cst_45 : f32 to vector<8x384xf32>
    %96 = arith.addf %95, %94 : vector<8x384xf32>
    %97 = arith.divf %95, %96 : vector<8x384xf32>
    %98 = vector.extract_strided_slice %91 {offsets = [0, 384], sizes = [8, 128], strides = [1, 1]} : vector<8x512xf32> to vector<8x128xf32>
    %99 = math.tanh %98 : vector<8x128xf32>
    %100 = vector.extract_strided_slice %97 {offsets = [0, 128], sizes = [8, 128], strides = [1, 1]} : vector<8x384xf32> to vector<8x128xf32>
    %101 = arith.mulf %100, %79 : vector<8x128xf32>
    %102 = vector.extract_strided_slice %97 {offsets = [0, 0], sizes = [8, 128], strides = [1, 1]} : vector<8x384xf32> to vector<8x128xf32>
    %103 = arith.mulf %102, %99 : vector<8x128xf32>
    %104 = arith.addf %101, %103 : vector<8x128xf32>
    %105 = vector.extract_strided_slice %97 {offsets = [0, 256], sizes = [8, 128], strides = [1, 1]} : vector<8x384xf32> to vector<8x128xf32>
    %106 = math.tanh %104 : vector<8x128xf32>
    %107 = arith.mulf %105, %106 : vector<8x128xf32>
    %c3_46 = arith.constant 3 : index
    %c0_47 = arith.constant 0 : index
    %c0_48 = arith.constant 0 : index
    %108 = vector.load %arg18[%c3_46, %c0_47, %c0_48] : memref<8x8x128xf32, #tpu.memory_space<vmem>>, vector<1x8x128xf32>
    %109 = vector.shape_cast %108 : vector<1x8x128xf32> to vector<8x128xf32>
    %110 = vector.shape_cast %107 : vector<8x128xf32> to vector<1x8x128xf32>
    tpu.vector_store %arg18[%c3_46, %c0_47, %c0_48], %110 {strides = array<i32>} : memref<8x8x128xf32, #tpu.memory_space<vmem>>, vector<1x8x128xf32>,
    %c4 = arith.constant 4 : index
    %c0_49 = arith.constant 0 : index
    %c0_50 = arith.constant 0 : index
    %111 = vector.load %arg17[%c4, %c0_49, %c0_50] : memref<8x8x512xf32, #tpu.memory_space<vmem>>, vector<1x8x512xf32>
    %112 = vector.shape_cast %111 : vector<1x8x512xf32> to vector<8x512xf32>
    %113 = arith.truncf %107 : vector<8x128xf32> to vector<8x128xbf16>
    %c0_51 = arith.constant 0 : index
    %c0_52 = arith.constant 0 : index
    %114 = vector.load %arg2[%c0_51, %c0_52] : memref<128x512xbf16, #tpu.memory_space<vmem>>, vector<128x512xbf16>
    %cst_53 = arith.constant dense<0.000000e+00> : vector<8x512xf32>
    %115 = tpu.matmul %113, %114, %cst_53 {dimension_numbers = #tpu.dot_dimension_numbers<[1], [0], [0], [1], [0, 0, 1, 1], [], []>} : vector<8x128xbf16>, vector<128x512xbf16>, vector<8x512xf32> -> vector<8x512xf32>
    %116 = arith.addf %112, %115 : vector<8x512xf32>
    %117 = vector.extract_strided_slice %116 {offsets = [0, 0], sizes = [8, 384], strides = [1, 1]} : vector<8x512xf32> to vector<8x384xf32>
    %118 = arith.negf %117 : vector<8x384xf32>
    %119 = math.exp %118 : vector<8x384xf32>
    %cst_54 = arith.constant 1.000000e+00 : f32
    %120 = vector.broadcast %cst_54 : f32 to vector<8x384xf32>
    %121 = arith.addf %120, %119 : vector<8x384xf32>
    %122 = arith.divf %120, %121 : vector<8x384xf32>
    %123 = vector.extract_strided_slice %116 {offsets = [0, 384], sizes = [8, 128], strides = [1, 1]} : vector<8x512xf32> to vector<8x128xf32>
    %124 = math.tanh %123 : vector<8x128xf32>
    %125 = vector.extract_strided_slice %122 {offsets = [0, 128], sizes = [8, 128], strides = [1, 1]} : vector<8x384xf32> to vector<8x128xf32>
    %126 = arith.mulf %125, %104 : vector<8x128xf32>
    %127 = vector.extract_strided_slice %122 {offsets = [0, 0], sizes = [8, 128], strides = [1, 1]} : vector<8x384xf32> to vector<8x128xf32>
    %128 = arith.mulf %127, %124 : vector<8x128xf32>
    %129 = arith.addf %126, %128 : vector<8x128xf32>
    %130 = vector.extract_strided_slice %122 {offsets = [0, 256], sizes = [8, 128], strides = [1, 1]} : vector<8x384xf32> to vector<8x128xf32>
    %131 = math.tanh %129 : vector<8x128xf32>
    %132 = arith.mulf %130, %131 : vector<8x128xf32>
    %c4_55 = arith.constant 4 : index
    %c0_56 = arith.constant 0 : index
    %c0_57 = arith.constant 0 : index
    %133 = vector.load %arg18[%c4_55, %c0_56, %c0_57] : memref<8x8x128xf32, #tpu.memory_space<vmem>>, vector<1x8x128xf32>
    %134 = vector.shape_cast %133 : vector<1x8x128xf32> to vector<8x128xf32>
    %135 = vector.shape_cast %132 : vector<8x128xf32> to vector<1x8x128xf32>
    tpu.vector_store %arg18[%c4_55, %c0_56, %c0_57], %135 {strides = array<i32>} : memref<8x8x128xf32, #tpu.memory_space<vmem>>, vector<1x8x128xf32>,
    %c5 = arith.constant 5 : index
    %c0_58 = arith.constant 0 : index
    %c0_59 = arith.constant 0 : index
    %136 = vector.load %arg17[%c5, %c0_58, %c0_59] : memref<8x8x512xf32, #tpu.memory_space<vmem>>, vector<1x8x512xf32>
    %137 = vector.shape_cast %136 : vector<1x8x512xf32> to vector<8x512xf32>
    %138 = arith.truncf %132 : vector<8x128xf32> to vector<8x128xbf16>
    %c0_60 = arith.constant 0 : index
    %c0_61 = arith.constant 0 : index
    %139 = vector.load %arg2[%c0_60, %c0_61] : memref<128x512xbf16, #tpu.memory_space<vmem>>, vector<128x512xbf16>
    %cst_62 = arith.constant dense<0.000000e+00> : vector<8x512xf32>
    %140 = tpu.matmul %138, %139, %cst_62 {dimension_numbers = #tpu.dot_dimension_numbers<[1], [0], [0], [1], [0, 0, 1, 1], [], []>} : vector<8x128xbf16>, vector<128x512xbf16>, vector<8x512xf32> -> vector<8x512xf32>
    %141 = arith.addf %137, %140 : vector<8x512xf32>
    %142 = vector.extract_strided_slice %141 {offsets = [0, 0], sizes = [8, 384], strides = [1, 1]} : vector<8x512xf32> to vector<8x384xf32>
    %143 = arith.negf %142 : vector<8x384xf32>
    %144 = math.exp %143 : vector<8x384xf32>
    %cst_63 = arith.constant 1.000000e+00 : f32
    %145 = vector.broadcast %cst_63 : f32 to vector<8x384xf32>
    %146 = arith.addf %145, %144 : vector<8x384xf32>
    %147 = arith.divf %145, %146 : vector<8x384xf32>
    %148 = vector.extract_strided_slice %141 {offsets = [0, 384], sizes = [8, 128], strides = [1, 1]} : vector<8x512xf32> to vector<8x128xf32>
    %149 = math.tanh %148 : vector<8x128xf32>
    %150 = vector.extract_strided_slice %147 {offsets = [0, 128], sizes = [8, 128], strides = [1, 1]} : vector<8x384xf32> to vector<8x128xf32>
    %151 = arith.mulf %150, %129 : vector<8x128xf32>
    %152 = vector.extract_strided_slice %147 {offsets = [0, 0], sizes = [8, 128], strides = [1, 1]} : vector<8x384xf32> to vector<8x128xf32>
    %153 = arith.mulf %152, %149 : vector<8x128xf32>
    %154 = arith.addf %151, %153 : vector<8x128xf32>
    %155 = vector.extract_strided_slice %147 {offsets = [0, 256], sizes = [8, 128], strides = [1, 1]} : vector<8x384xf32> to vector<8x128xf32>
    %156 = math.tanh %154 : vector<8x128xf32>
    %157 = arith.mulf %155, %156 : vector<8x128xf32>
    %c5_64 = arith.constant 5 : index
    %c0_65 = arith.constant 0 : index
    %c0_66 = arith.constant 0 : index
    %158 = vector.load %arg18[%c5_64, %c0_65, %c0_66] : memref<8x8x128xf32, #tpu.memory_space<vmem>>, vector<1x8x128xf32>
    %159 = vector.shape_cast %158 : vector<1x8x128xf32> to vector<8x128xf32>
    %160 = vector.shape_cast %157 : vector<8x128xf32> to vector<1x8x128xf32>
    tpu.vector_store %arg18[%c5_64, %c0_65, %c0_66], %160 {strides = array<i32>} : memref<8x8x128xf32, #tpu.memory_space<vmem>>, vector<1x8x128xf32>,
    %c6 = arith.constant 6 : index
    %c0_67 = arith.constant 0 : index
    %c0_68 = arith.constant 0 : index
    %161 = vector.load %arg17[%c6, %c0_67, %c0_68] : memref<8x8x512xf32, #tpu.memory_space<vmem>>, vector<1x8x512xf32>
    %162 = vector.shape_cast %161 : vector<1x8x512xf32> to vector<8x512xf32>
    %163 = arith.truncf %157 : vector<8x128xf32> to vector<8x128xbf16>
    %c0_69 = arith.constant 0 : index
    %c0_70 = arith.constant 0 : index
    %164 = vector.load %arg2[%c0_69, %c0_70] : memref<128x512xbf16, #tpu.memory_space<vmem>>, vector<128x512xbf16>
    %cst_71 = arith.constant dense<0.000000e+00> : vector<8x512xf32>
    %165 = tpu.matmul %163, %164, %cst_71 {dimension_numbers = #tpu.dot_dimension_numbers<[1], [0], [0], [1], [0, 0, 1, 1], [], []>} : vector<8x128xbf16>, vector<128x512xbf16>, vector<8x512xf32> -> vector<8x512xf32>
    %166 = arith.addf %162, %165 : vector<8x512xf32>
    %167 = vector.extract_strided_slice %166 {offsets = [0, 0], sizes = [8, 384], strides = [1, 1]} : vector<8x512xf32> to vector<8x384xf32>
    %168 = arith.negf %167 : vector<8x384xf32>
    %169 = math.exp %168 : vector<8x384xf32>
    %cst_72 = arith.constant 1.000000e+00 : f32
    %170 = vector.broadcast %cst_72 : f32 to vector<8x384xf32>
    %171 = arith.addf %170, %169 : vector<8x384xf32>
    %172 = arith.divf %170, %171 : vector<8x384xf32>
    %173 = vector.extract_strided_slice %166 {offsets = [0, 384], sizes = [8, 128], strides = [1, 1]} : vector<8x512xf32> to vector<8x128xf32>
    %174 = math.tanh %173 : vector<8x128xf32>
    %175 = vector.extract_strided_slice %172 {offsets = [0, 128], sizes = [8, 128], strides = [1, 1]} : vector<8x384xf32> to vector<8x128xf32>
    %176 = arith.mulf %175, %154 : vector<8x128xf32>
    %177 = vector.extract_strided_slice %172 {offsets = [0, 0], sizes = [8, 128], strides = [1, 1]} : vector<8x384xf32> to vector<8x128xf32>
    %178 = arith.mulf %177, %174 : vector<8x128xf32>
    %179 = arith.addf %176, %178 : vector<8x128xf32>
    %180 = vector.extract_strided_slice %172 {offsets = [0, 256], sizes = [8, 128], strides = [1, 1]} : vector<8x384xf32> to vector<8x128xf32>
    %181 = math.tanh %179 : vector<8x128xf32>
    %182 = arith.mulf %180, %181 : vector<8x128xf32>
    %c6_73 = arith.constant 6 : index
    %c0_74 = arith.constant 0 : index
    %c0_75 = arith.constant 0 : index
    %183 = vector.load %arg18[%c6_73, %c0_74, %c0_75] : memref<8x8x128xf32, #tpu.memory_space<vmem>>, vector<1x8x128xf32>
    %184 = vector.shape_cast %183 : vector<1x8x128xf32> to vector<8x128xf32>
    %185 = vector.shape_cast %182 : vector<8x128xf32> to vector<1x8x128xf32>
    tpu.vector_store %arg18[%c6_73, %c0_74, %c0_75], %185 {strides = array<i32>} : memref<8x8x128xf32, #tpu.memory_space<vmem>>, vector<1x8x128xf32>,
    %c7 = arith.constant 7 : index
    %c0_76 = arith.constant 0 : index
    %c0_77 = arith.constant 0 : index
    %186 = vector.load %arg17[%c7, %c0_76, %c0_77] : memref<8x8x512xf32, #tpu.memory_space<vmem>>, vector<1x8x512xf32>
    %187 = vector.shape_cast %186 : vector<1x8x512xf32> to vector<8x512xf32>
    %188 = arith.truncf %182 : vector<8x128xf32> to vector<8x128xbf16>
    %c0_78 = arith.constant 0 : index
    %c0_79 = arith.constant 0 : index
    %189 = vector.load %arg2[%c0_78, %c0_79] : memref<128x512xbf16, #tpu.memory_space<vmem>>, vector<128x512xbf16>
    %cst_80 = arith.constant dense<0.000000e+00> : vector<8x512xf32>
    %190 = tpu.matmul %188, %189, %cst_80 {dimension_numbers = #tpu.dot_dimension_numbers<[1], [0], [0], [1], [0, 0, 1, 1], [], []>} : vector<8x128xbf16>, vector<128x512xbf16>, vector<8x512xf32> -> vector<8x512xf32>
    %191 = arith.addf %187, %190 : vector<8x512xf32>
    %192 = vector.extract_strided_slice %191 {offsets = [0, 0], sizes = [8, 384], strides = [1, 1]} : vector<8x512xf32> to vector<8x384xf32>
    %193 = arith.negf %192 : vector<8x384xf32>
    %194 = math.exp %193 : vector<8x384xf32>
    %cst_81 = arith.constant 1.000000e+00 : f32
    %195 = vector.broadcast %cst_81 : f32 to vector<8x384xf32>
    %196 = arith.addf %195, %194 : vector<8x384xf32>
    %197 = arith.divf %195, %196 : vector<8x384xf32>
    %198 = vector.extract_strided_slice %191 {offsets = [0, 384], sizes = [8, 128], strides = [1, 1]} : vector<8x512xf32> to vector<8x128xf32>
    %199 = math.tanh %198 : vector<8x128xf32>
    %200 = vector.extract_strided_slice %197 {offsets = [0, 128], sizes = [8, 128], strides = [1, 1]} : vector<8x384xf32> to vector<8x128xf32>
    %201 = arith.mulf %200, %179 : vector<8x128xf32>
    %202 = vector.extract_strided_slice %197 {offsets = [0, 0], sizes = [8, 128], strides = [1, 1]} : vector<8x384xf32> to vector<8x128xf32>
    %203 = arith.mulf %202, %199 : vector<8x128xf32>
    %204 = arith.addf %201, %203 : vector<8x128xf32>
    %205 = vector.extract_strided_slice %197 {offsets = [0, 256], sizes = [8, 128], strides = [1, 1]} : vector<8x384xf32> to vector<8x128xf32>
    %206 = math.tanh %204 : vector<8x128xf32>
    %207 = arith.mulf %205, %206 : vector<8x128xf32>
    %c7_82 = arith.constant 7 : index
    %c0_83 = arith.constant 0 : index
    %c0_84 = arith.constant 0 : index
    %208 = vector.load %arg18[%c7_82, %c0_83, %c0_84] : memref<8x8x128xf32, #tpu.memory_space<vmem>>, vector<1x8x128xf32>
    %209 = vector.shape_cast %208 : vector<1x8x128xf32> to vector<8x128xf32>
    %210 = vector.shape_cast %207 : vector<8x128xf32> to vector<1x8x128xf32>
    tpu.vector_store %arg18[%c7_82, %c0_83, %c0_84], %210 {strides = array<i32>} : memref<8x8x128xf32, #tpu.memory_space<vmem>>, vector<1x8x128xf32>,
    %c0_85 = arith.constant 0 : index
    %c0_86 = arith.constant 0 : index
    %c0_87 = arith.constant 0 : index
    %211 = vector.load %arg18[%c0_85, %c0_86, %c0_87] : memref<8x8x128xf32, #tpu.memory_space<vmem>>, vector<8x8x128xf32>
    %212 = vector.shape_cast %211 : vector<8x8x128xf32> to vector<64x128xf32>
    %213 = arith.truncf %212 : vector<64x128xf32> to vector<64x128xbf16>
    %c0_88 = arith.constant 0 : index
    %c0_89 = arith.constant 0 : index
    %214 = vector.load %arg4[%c0_88, %c0_89] : memref<128x512xbf16, #tpu.memory_space<vmem>>, vector<128x512xbf16>
    %cst_90 = arith.constant dense<0.000000e+00> : vector<64x512xf32>
    %215 = tpu.matmul %213, %214, %cst_90 {dimension_numbers = #tpu.dot_dimension_numbers<[1], [0], [0], [1], [0, 0, 1, 1], [], []>} : vector<64x128xbf16>, vector<128x512xbf16>, vector<64x512xf32> -> vector<64x512xf32>
    %c0_91 = arith.constant 0 : index
    %c0_92 = arith.constant 0 : index
    %216 = vector.load %arg6[%c0_91, %c0_92] : memref<1x512xf32, #tpu.memory_space<vmem>>, vector<1x512xf32>
    %217 = vector.broadcast %216 : vector<1x512xf32> to vector<64x512xf32>
    %218 = arith.addf %215, %217 : vector<64x512xf32>
    %219 = vector.shape_cast %218 : vector<64x512xf32> to vector<8x8x512xf32>
    %c0_93 = arith.constant 0 : index
    %c0_94 = arith.constant 0 : index
    %c0_95 = arith.constant 0 : index
    %220 = vector.load %arg17[%c0_93, %c0_94, %c0_95] : memref<8x8x512xf32, #tpu.memory_space<vmem>>, vector<8x8x512xf32>
    tpu.vector_store %arg17[%c0_93, %c0_94, %c0_95], %219 {strides = array<i32>} : memref<8x8x512xf32, #tpu.memory_space<vmem>>, vector<8x8x512xf32>,
    %c0_96 = arith.constant 0 : index
    %c0_97 = arith.constant 0 : index
    %c0_98 = arith.constant 0 : index
    %221 = vector.load %arg17[%c0_96, %c0_97, %c0_98] : memref<8x8x512xf32, #tpu.memory_space<vmem>>, vector<1x8x512xf32>
    %222 = vector.shape_cast %221 : vector<1x8x512xf32> to vector<8x512xf32>
    %223 = arith.truncf %207 : vector<8x128xf32> to vector<8x128xbf16>
    %c0_99 = arith.constant 0 : index
    %c0_100 = arith.constant 0 : index
    %224 = vector.load %arg5[%c0_99, %c0_100] : memref<128x512xbf16, #tpu.memory_space<vmem>>, vector<128x512xbf16>
    %cst_101 = arith.constant dense<0.000000e+00> : vector<8x512xf32>
    %225 = tpu.matmul %223, %224, %cst_101 {dimension_numbers = #tpu.dot_dimension_numbers<[1], [0], [0], [1], [0, 0, 1, 1], [], []>} : vector<8x128xbf16>, vector<128x512xbf16>, vector<8x512xf32> -> vector<8x512xf32>
    %226 = arith.addf %222, %225 : vector<8x512xf32>
    %227 = vector.extract_strided_slice %226 {offsets = [0, 0], sizes = [8, 384], strides = [1, 1]} : vector<8x512xf32> to vector<8x384xf32>
    %228 = arith.negf %227 : vector<8x384xf32>
    %229 = math.exp %228 : vector<8x384xf32>
    %cst_102 = arith.constant 1.000000e+00 : f32
    %230 = vector.broadcast %cst_102 : f32 to vector<8x384xf32>
    %231 = arith.addf %230, %229 : vector<8x384xf32>
    %232 = arith.divf %230, %231 : vector<8x384xf32>
    %233 = vector.extract_strided_slice %226 {offsets = [0, 384], sizes = [8, 128], strides = [1, 1]} : vector<8x512xf32> to vector<8x128xf32>
    %234 = math.tanh %233 : vector<8x128xf32>
    %235 = vector.extract_strided_slice %232 {offsets = [0, 128], sizes = [8, 128], strides = [1, 1]} : vector<8x384xf32> to vector<8x128xf32>
    %236 = arith.mulf %235, %204 : vector<8x128xf32>
    %237 = vector.extract_strided_slice %232 {offsets = [0, 0], sizes = [8, 128], strides = [1, 1]} : vector<8x384xf32> to vector<8x128xf32>
    %238 = arith.mulf %237, %234 : vector<8x128xf32>
    %239 = arith.addf %236, %238 : vector<8x128xf32>
    %240 = vector.extract_strided_slice %232 {offsets = [0, 256], sizes = [8, 128], strides = [1, 1]} : vector<8x384xf32> to vector<8x128xf32>
    %241 = math.tanh %239 : vector<8x128xf32>
    %242 = arith.mulf %240, %241 : vector<8x128xf32>
    %c0_103 = arith.constant 0 : index
    %c0_104 = arith.constant 0 : index
    %c0_105 = arith.constant 0 : index
    %243 = vector.load %arg19[%c0_103, %c0_104, %c0_105] : memref<8x8x128xf32, #tpu.memory_space<vmem>>, vector<1x8x128xf32>
    %244 = vector.shape_cast %243 : vector<1x8x128xf32> to vector<8x128xf32>
    %245 = vector.shape_cast %242 : vector<8x128xf32> to vector<1x8x128xf32>
    tpu.vector_store %arg19[%c0_103, %c0_104, %c0_105], %245 {strides = array<i32>} : memref<8x8x128xf32, #tpu.memory_space<vmem>>, vector<1x8x128xf32>,
    %c1_106 = arith.constant 1 : index
    %c0_107 = arith.constant 0 : index
    %c0_108 = arith.constant 0 : index
    %246 = vector.load %arg17[%c1_106, %c0_107, %c0_108] : memref<8x8x512xf32, #tpu.memory_space<vmem>>, vector<1x8x512xf32>
    %247 = vector.shape_cast %246 : vector<1x8x512xf32> to vector<8x512xf32>
    %248 = arith.truncf %242 : vector<8x128xf32> to vector<8x128xbf16>
    %c0_109 = arith.constant 0 : index
    %c0_110 = arith.constant 0 : index
    %249 = vector.load %arg5[%c0_109, %c0_110] : memref<128x512xbf16, #tpu.memory_space<vmem>>, vector<128x512xbf16>
    %cst_111 = arith.constant dense<0.000000e+00> : vector<8x512xf32>
    %250 = tpu.matmul %248, %249, %cst_111 {dimension_numbers = #tpu.dot_dimension_numbers<[1], [0], [0], [1], [0, 0, 1, 1], [], []>} : vector<8x128xbf16>, vector<128x512xbf16>, vector<8x512xf32> -> vector<8x512xf32>
    %251 = arith.addf %247, %250 : vector<8x512xf32>
    %252 = vector.extract_strided_slice %251 {offsets = [0, 0], sizes = [8, 384], strides = [1, 1]} : vector<8x512xf32> to vector<8x384xf32>
    %253 = arith.negf %252 : vector<8x384xf32>
    %254 = math.exp %253 : vector<8x384xf32>
    %cst_112 = arith.constant 1.000000e+00 : f32
    %255 = vector.broadcast %cst_112 : f32 to vector<8x384xf32>
    %256 = arith.addf %255, %254 : vector<8x384xf32>
    %257 = arith.divf %255, %256 : vector<8x384xf32>
    %258 = vector.extract_strided_slice %251 {offsets = [0, 384], sizes = [8, 128], strides = [1, 1]} : vector<8x512xf32> to vector<8x128xf32>
    %259 = math.tanh %258 : vector<8x128xf32>
    %260 = vector.extract_strided_slice %257 {offsets = [0, 128], sizes = [8, 128], strides = [1, 1]} : vector<8x384xf32> to vector<8x128xf32>
    %261 = arith.mulf %260, %239 : vector<8x128xf32>
    %262 = vector.extract_strided_slice %257 {offsets = [0, 0], sizes = [8, 128], strides = [1, 1]} : vector<8x384xf32> to vector<8x128xf32>
    %263 = arith.mulf %262, %259 : vector<8x128xf32>
    %264 = arith.addf %261, %263 : vector<8x128xf32>
    %265 = vector.extract_strided_slice %257 {offsets = [0, 256], sizes = [8, 128], strides = [1, 1]} : vector<8x384xf32> to vector<8x128xf32>
    %266 = math.tanh %264 : vector<8x128xf32>
    %267 = arith.mulf %265, %266 : vector<8x128xf32>
    %c1_113 = arith.constant 1 : index
    %c0_114 = arith.constant 0 : index
    %c0_115 = arith.constant 0 : index
    %268 = vector.load %arg19[%c1_113, %c0_114, %c0_115] : memref<8x8x128xf32, #tpu.memory_space<vmem>>, vector<1x8x128xf32>
    %269 = vector.shape_cast %268 : vector<1x8x128xf32> to vector<8x128xf32>
    %270 = vector.shape_cast %267 : vector<8x128xf32> to vector<1x8x128xf32>
    tpu.vector_store %arg19[%c1_113, %c0_114, %c0_115], %270 {strides = array<i32>} : memref<8x8x128xf32, #tpu.memory_space<vmem>>, vector<1x8x128xf32>,
    %c2_116 = arith.constant 2 : index
    %c0_117 = arith.constant 0 : index
    %c0_118 = arith.constant 0 : index
    %271 = vector.load %arg17[%c2_116, %c0_117, %c0_118] : memref<8x8x512xf32, #tpu.memory_space<vmem>>, vector<1x8x512xf32>
    %272 = vector.shape_cast %271 : vector<1x8x512xf32> to vector<8x512xf32>
    %273 = arith.truncf %267 : vector<8x128xf32> to vector<8x128xbf16>
    %c0_119 = arith.constant 0 : index
    %c0_120 = arith.constant 0 : index
    %274 = vector.load %arg5[%c0_119, %c0_120] : memref<128x512xbf16, #tpu.memory_space<vmem>>, vector<128x512xbf16>
    %cst_121 = arith.constant dense<0.000000e+00> : vector<8x512xf32>
    %275 = tpu.matmul %273, %274, %cst_121 {dimension_numbers = #tpu.dot_dimension_numbers<[1], [0], [0], [1], [0, 0, 1, 1], [], []>} : vector<8x128xbf16>, vector<128x512xbf16>, vector<8x512xf32> -> vector<8x512xf32>
    %276 = arith.addf %272, %275 : vector<8x512xf32>
    %277 = vector.extract_strided_slice %276 {offsets = [0, 0], sizes = [8, 384], strides = [1, 1]} : vector<8x512xf32> to vector<8x384xf32>
    %278 = arith.negf %277 : vector<8x384xf32>
    %279 = math.exp %278 : vector<8x384xf32>
    %cst_122 = arith.constant 1.000000e+00 : f32
    %280 = vector.broadcast %cst_122 : f32 to vector<8x384xf32>
    %281 = arith.addf %280, %279 : vector<8x384xf32>
    %282 = arith.divf %280, %281 : vector<8x384xf32>
    %283 = vector.extract_strided_slice %276 {offsets = [0, 384], sizes = [8, 128], strides = [1, 1]} : vector<8x512xf32> to vector<8x128xf32>
    %284 = math.tanh %283 : vector<8x128xf32>
    %285 = vector.extract_strided_slice %282 {offsets = [0, 128], sizes = [8, 128], strides = [1, 1]} : vector<8x384xf32> to vector<8x128xf32>
    %286 = arith.mulf %285, %264 : vector<8x128xf32>
    %287 = vector.extract_strided_slice %282 {offsets = [0, 0], sizes = [8, 128], strides = [1, 1]} : vector<8x384xf32> to vector<8x128xf32>
    %288 = arith.mulf %287, %284 : vector<8x128xf32>
    %289 = arith.addf %286, %288 : vector<8x128xf32>
    %290 = vector.extract_strided_slice %282 {offsets = [0, 256], sizes = [8, 128], strides = [1, 1]} : vector<8x384xf32> to vector<8x128xf32>
    %291 = math.tanh %289 : vector<8x128xf32>
    %292 = arith.mulf %290, %291 : vector<8x128xf32>
    %c2_123 = arith.constant 2 : index
    %c0_124 = arith.constant 0 : index
    %c0_125 = arith.constant 0 : index
    %293 = vector.load %arg19[%c2_123, %c0_124, %c0_125] : memref<8x8x128xf32, #tpu.memory_space<vmem>>, vector<1x8x128xf32>
    %294 = vector.shape_cast %293 : vector<1x8x128xf32> to vector<8x128xf32>
    %295 = vector.shape_cast %292 : vector<8x128xf32> to vector<1x8x128xf32>
    tpu.vector_store %arg19[%c2_123, %c0_124, %c0_125], %295 {strides = array<i32>} : memref<8x8x128xf32, #tpu.memory_space<vmem>>, vector<1x8x128xf32>,
    %c3_126 = arith.constant 3 : index
    %c0_127 = arith.constant 0 : index
    %c0_128 = arith.constant 0 : index
    %296 = vector.load %arg17[%c3_126, %c0_127, %c0_128] : memref<8x8x512xf32, #tpu.memory_space<vmem>>, vector<1x8x512xf32>
    %297 = vector.shape_cast %296 : vector<1x8x512xf32> to vector<8x512xf32>
    %298 = arith.truncf %292 : vector<8x128xf32> to vector<8x128xbf16>
    %c0_129 = arith.constant 0 : index
    %c0_130 = arith.constant 0 : index
    %299 = vector.load %arg5[%c0_129, %c0_130] : memref<128x512xbf16, #tpu.memory_space<vmem>>, vector<128x512xbf16>
    %cst_131 = arith.constant dense<0.000000e+00> : vector<8x512xf32>
    %300 = tpu.matmul %298, %299, %cst_131 {dimension_numbers = #tpu.dot_dimension_numbers<[1], [0], [0], [1], [0, 0, 1, 1], [], []>} : vector<8x128xbf16>, vector<128x512xbf16>, vector<8x512xf32> -> vector<8x512xf32>
    %301 = arith.addf %297, %300 : vector<8x512xf32>
    %302 = vector.extract_strided_slice %301 {offsets = [0, 0], sizes = [8, 384], strides = [1, 1]} : vector<8x512xf32> to vector<8x384xf32>
    %303 = arith.negf %302 : vector<8x384xf32>
    %304 = math.exp %303 : vector<8x384xf32>
    %cst_132 = arith.constant 1.000000e+00 : f32
    %305 = vector.broadcast %cst_132 : f32 to vector<8x384xf32>
    %306 = arith.addf %305, %304 : vector<8x384xf32>
    %307 = arith.divf %305, %306 : vector<8x384xf32>
    %308 = vector.extract_strided_slice %301 {offsets = [0, 384], sizes = [8, 128], strides = [1, 1]} : vector<8x512xf32> to vector<8x128xf32>
    %309 = math.tanh %308 : vector<8x128xf32>
    %310 = vector.extract_strided_slice %307 {offsets = [0, 128], sizes = [8, 128], strides = [1, 1]} : vector<8x384xf32> to vector<8x128xf32>
    %311 = arith.mulf %310, %289 : vector<8x128xf32>
    %312 = vector.extract_strided_slice %307 {offsets = [0, 0], sizes = [8, 128], strides = [1, 1]} : vector<8x384xf32> to vector<8x128xf32>
    %313 = arith.mulf %312, %309 : vector<8x128xf32>
    %314 = arith.addf %311, %313 : vector<8x128xf32>
    %315 = vector.extract_strided_slice %307 {offsets = [0, 256], sizes = [8, 128], strides = [1, 1]} : vector<8x384xf32> to vector<8x128xf32>
    %316 = math.tanh %314 : vector<8x128xf32>
    %317 = arith.mulf %315, %316 : vector<8x128xf32>
    %c3_133 = arith.constant 3 : index
    %c0_134 = arith.constant 0 : index
    %c0_135 = arith.constant 0 : index
    %318 = vector.load %arg19[%c3_133, %c0_134, %c0_135] : memref<8x8x128xf32, #tpu.memory_space<vmem>>, vector<1x8x128xf32>
    %319 = vector.shape_cast %318 : vector<1x8x128xf32> to vector<8x128xf32>
    %320 = vector.shape_cast %317 : vector<8x128xf32> to vector<1x8x128xf32>
    tpu.vector_store %arg19[%c3_133, %c0_134, %c0_135], %320 {strides = array<i32>} : memref<8x8x128xf32, #tpu.memory_space<vmem>>, vector<1x8x128xf32>,
    %c4_136 = arith.constant 4 : index
    %c0_137 = arith.constant 0 : index
    %c0_138 = arith.constant 0 : index
    %321 = vector.load %arg17[%c4_136, %c0_137, %c0_138] : memref<8x8x512xf32, #tpu.memory_space<vmem>>, vector<1x8x512xf32>
    %322 = vector.shape_cast %321 : vector<1x8x512xf32> to vector<8x512xf32>
    %323 = arith.truncf %317 : vector<8x128xf32> to vector<8x128xbf16>
    %c0_139 = arith.constant 0 : index
    %c0_140 = arith.constant 0 : index
    %324 = vector.load %arg5[%c0_139, %c0_140] : memref<128x512xbf16, #tpu.memory_space<vmem>>, vector<128x512xbf16>
    %cst_141 = arith.constant dense<0.000000e+00> : vector<8x512xf32>
    %325 = tpu.matmul %323, %324, %cst_141 {dimension_numbers = #tpu.dot_dimension_numbers<[1], [0], [0], [1], [0, 0, 1, 1], [], []>} : vector<8x128xbf16>, vector<128x512xbf16>, vector<8x512xf32> -> vector<8x512xf32>
    %326 = arith.addf %322, %325 : vector<8x512xf32>
    %327 = vector.extract_strided_slice %326 {offsets = [0, 0], sizes = [8, 384], strides = [1, 1]} : vector<8x512xf32> to vector<8x384xf32>
    %328 = arith.negf %327 : vector<8x384xf32>
    %329 = math.exp %328 : vector<8x384xf32>
    %cst_142 = arith.constant 1.000000e+00 : f32
    %330 = vector.broadcast %cst_142 : f32 to vector<8x384xf32>
    %331 = arith.addf %330, %329 : vector<8x384xf32>
    %332 = arith.divf %330, %331 : vector<8x384xf32>
    %333 = vector.extract_strided_slice %326 {offsets = [0, 384], sizes = [8, 128], strides = [1, 1]} : vector<8x512xf32> to vector<8x128xf32>
    %334 = math.tanh %333 : vector<8x128xf32>
    %335 = vector.extract_strided_slice %332 {offsets = [0, 128], sizes = [8, 128], strides = [1, 1]} : vector<8x384xf32> to vector<8x128xf32>
    %336 = arith.mulf %335, %314 : vector<8x128xf32>
    %337 = vector.extract_strided_slice %332 {offsets = [0, 0], sizes = [8, 128], strides = [1, 1]} : vector<8x384xf32> to vector<8x128xf32>
    %338 = arith.mulf %337, %334 : vector<8x128xf32>
    %339 = arith.addf %336, %338 : vector<8x128xf32>
    %340 = vector.extract_strided_slice %332 {offsets = [0, 256], sizes = [8, 128], strides = [1, 1]} : vector<8x384xf32> to vector<8x128xf32>
    %341 = math.tanh %339 : vector<8x128xf32>
    %342 = arith.mulf %340, %341 : vector<8x128xf32>
    %c4_143 = arith.constant 4 : index
    %c0_144 = arith.constant 0 : index
    %c0_145 = arith.constant 0 : index
    %343 = vector.load %arg19[%c4_143, %c0_144, %c0_145] : memref<8x8x128xf32, #tpu.memory_space<vmem>>, vector<1x8x128xf32>
    %344 = vector.shape_cast %343 : vector<1x8x128xf32> to vector<8x128xf32>
    %345 = vector.shape_cast %342 : vector<8x128xf32> to vector<1x8x128xf32>
    tpu.vector_store %arg19[%c4_143, %c0_144, %c0_145], %345 {strides = array<i32>} : memref<8x8x128xf32, #tpu.memory_space<vmem>>, vector<1x8x128xf32>,
    %c5_146 = arith.constant 5 : index
    %c0_147 = arith.constant 0 : index
    %c0_148 = arith.constant 0 : index
    %346 = vector.load %arg17[%c5_146, %c0_147, %c0_148] : memref<8x8x512xf32, #tpu.memory_space<vmem>>, vector<1x8x512xf32>
    %347 = vector.shape_cast %346 : vector<1x8x512xf32> to vector<8x512xf32>
    %348 = arith.truncf %342 : vector<8x128xf32> to vector<8x128xbf16>
    %c0_149 = arith.constant 0 : index
    %c0_150 = arith.constant 0 : index
    %349 = vector.load %arg5[%c0_149, %c0_150] : memref<128x512xbf16, #tpu.memory_space<vmem>>, vector<128x512xbf16>
    %cst_151 = arith.constant dense<0.000000e+00> : vector<8x512xf32>
    %350 = tpu.matmul %348, %349, %cst_151 {dimension_numbers = #tpu.dot_dimension_numbers<[1], [0], [0], [1], [0, 0, 1, 1], [], []>} : vector<8x128xbf16>, vector<128x512xbf16>, vector<8x512xf32> -> vector<8x512xf32>
    %351 = arith.addf %347, %350 : vector<8x512xf32>
    %352 = vector.extract_strided_slice %351 {offsets = [0, 0], sizes = [8, 384], strides = [1, 1]} : vector<8x512xf32> to vector<8x384xf32>
    %353 = arith.negf %352 : vector<8x384xf32>
    %354 = math.exp %353 : vector<8x384xf32>
    %cst_152 = arith.constant 1.000000e+00 : f32
    %355 = vector.broadcast %cst_152 : f32 to vector<8x384xf32>
    %356 = arith.addf %355, %354 : vector<8x384xf32>
    %357 = arith.divf %355, %356 : vector<8x384xf32>
    %358 = vector.extract_strided_slice %351 {offsets = [0, 384], sizes = [8, 128], strides = [1, 1]} : vector<8x512xf32> to vector<8x128xf32>
    %359 = math.tanh %358 : vector<8x128xf32>
    %360 = vector.extract_strided_slice %357 {offsets = [0, 128], sizes = [8, 128], strides = [1, 1]} : vector<8x384xf32> to vector<8x128xf32>
    %361 = arith.mulf %360, %339 : vector<8x128xf32>
    %362 = vector.extract_strided_slice %357 {offsets = [0, 0], sizes = [8, 128], strides = [1, 1]} : vector<8x384xf32> to vector<8x128xf32>
    %363 = arith.mulf %362, %359 : vector<8x128xf32>
    %364 = arith.addf %361, %363 : vector<8x128xf32>
    %365 = vector.extract_strided_slice %357 {offsets = [0, 256], sizes = [8, 128], strides = [1, 1]} : vector<8x384xf32> to vector<8x128xf32>
    %366 = math.tanh %364 : vector<8x128xf32>
    %367 = arith.mulf %365, %366 : vector<8x128xf32>
    %c5_153 = arith.constant 5 : index
    %c0_154 = arith.constant 0 : index
    %c0_155 = arith.constant 0 : index
    %368 = vector.load %arg19[%c5_153, %c0_154, %c0_155] : memref<8x8x128xf32, #tpu.memory_space<vmem>>, vector<1x8x128xf32>
    %369 = vector.shape_cast %368 : vector<1x8x128xf32> to vector<8x128xf32>
    %370 = vector.shape_cast %367 : vector<8x128xf32> to vector<1x8x128xf32>
    tpu.vector_store %arg19[%c5_153, %c0_154, %c0_155], %370 {strides = array<i32>} : memref<8x8x128xf32, #tpu.memory_space<vmem>>, vector<1x8x128xf32>,
    %c6_156 = arith.constant 6 : index
    %c0_157 = arith.constant 0 : index
    %c0_158 = arith.constant 0 : index
    %371 = vector.load %arg17[%c6_156, %c0_157, %c0_158] : memref<8x8x512xf32, #tpu.memory_space<vmem>>, vector<1x8x512xf32>
    %372 = vector.shape_cast %371 : vector<1x8x512xf32> to vector<8x512xf32>
    %373 = arith.truncf %367 : vector<8x128xf32> to vector<8x128xbf16>
    %c0_159 = arith.constant 0 : index
    %c0_160 = arith.constant 0 : index
    %374 = vector.load %arg5[%c0_159, %c0_160] : memref<128x512xbf16, #tpu.memory_space<vmem>>, vector<128x512xbf16>
    %cst_161 = arith.constant dense<0.000000e+00> : vector<8x512xf32>
    %375 = tpu.matmul %373, %374, %cst_161 {dimension_numbers = #tpu.dot_dimension_numbers<[1], [0], [0], [1], [0, 0, 1, 1], [], []>} : vector<8x128xbf16>, vector<128x512xbf16>, vector<8x512xf32> -> vector<8x512xf32>
    %376 = arith.addf %372, %375 : vector<8x512xf32>
    %377 = vector.extract_strided_slice %376 {offsets = [0, 0], sizes = [8, 384], strides = [1, 1]} : vector<8x512xf32> to vector<8x384xf32>
    %378 = arith.negf %377 : vector<8x384xf32>
    %379 = math.exp %378 : vector<8x384xf32>
    %cst_162 = arith.constant 1.000000e+00 : f32
    %380 = vector.broadcast %cst_162 : f32 to vector<8x384xf32>
    %381 = arith.addf %380, %379 : vector<8x384xf32>
    %382 = arith.divf %380, %381 : vector<8x384xf32>
    %383 = vector.extract_strided_slice %376 {offsets = [0, 384], sizes = [8, 128], strides = [1, 1]} : vector<8x512xf32> to vector<8x128xf32>
    %384 = math.tanh %383 : vector<8x128xf32>
    %385 = vector.extract_strided_slice %382 {offsets = [0, 128], sizes = [8, 128], strides = [1, 1]} : vector<8x384xf32> to vector<8x128xf32>
    %386 = arith.mulf %385, %364 : vector<8x128xf32>
    %387 = vector.extract_strided_slice %382 {offsets = [0, 0], sizes = [8, 128], strides = [1, 1]} : vector<8x384xf32> to vector<8x128xf32>
    %388 = arith.mulf %387, %384 : vector<8x128xf32>
    %389 = arith.addf %386, %388 : vector<8x128xf32>
    %390 = vector.extract_strided_slice %382 {offsets = [0, 256], sizes = [8, 128], strides = [1, 1]} : vector<8x384xf32> to vector<8x128xf32>
    %391 = math.tanh %389 : vector<8x128xf32>
    %392 = arith.mulf %390, %391 : vector<8x128xf32>
    %c6_163 = arith.constant 6 : index
    %c0_164 = arith.constant 0 : index
    %c0_165 = arith.constant 0 : index
    %393 = vector.load %arg19[%c6_163, %c0_164, %c0_165] : memref<8x8x128xf32, #tpu.memory_space<vmem>>, vector<1x8x128xf32>
    %394 = vector.shape_cast %393 : vector<1x8x128xf32> to vector<8x128xf32>
    %395 = vector.shape_cast %392 : vector<8x128xf32> to vector<1x8x128xf32>
    tpu.vector_store %arg19[%c6_163, %c0_164, %c0_165], %395 {strides = array<i32>} : memref<8x8x128xf32, #tpu.memory_space<vmem>>, vector<1x8x128xf32>,
    %c7_166 = arith.constant 7 : index
    %c0_167 = arith.constant 0 : index
    %c0_168 = arith.constant 0 : index
    %396 = vector.load %arg17[%c7_166, %c0_167, %c0_168] : memref<8x8x512xf32, #tpu.memory_space<vmem>>, vector<1x8x512xf32>
    %397 = vector.shape_cast %396 : vector<1x8x512xf32> to vector<8x512xf32>
    %398 = arith.truncf %392 : vector<8x128xf32> to vector<8x128xbf16>
    %c0_169 = arith.constant 0 : index
    %c0_170 = arith.constant 0 : index
    %399 = vector.load %arg5[%c0_169, %c0_170] : memref<128x512xbf16, #tpu.memory_space<vmem>>, vector<128x512xbf16>
    %cst_171 = arith.constant dense<0.000000e+00> : vector<8x512xf32>
    %400 = tpu.matmul %398, %399, %cst_171 {dimension_numbers = #tpu.dot_dimension_numbers<[1], [0], [0], [1], [0, 0, 1, 1], [], []>} : vector<8x128xbf16>, vector<128x512xbf16>, vector<8x512xf32> -> vector<8x512xf32>
    %401 = arith.addf %397, %400 : vector<8x512xf32>
    %402 = vector.extract_strided_slice %401 {offsets = [0, 0], sizes = [8, 384], strides = [1, 1]} : vector<8x512xf32> to vector<8x384xf32>
    %403 = arith.negf %402 : vector<8x384xf32>
    %404 = math.exp %403 : vector<8x384xf32>
    %cst_172 = arith.constant 1.000000e+00 : f32
    %405 = vector.broadcast %cst_172 : f32 to vector<8x384xf32>
    %406 = arith.addf %405, %404 : vector<8x384xf32>
    %407 = arith.divf %405, %406 : vector<8x384xf32>
    %408 = vector.extract_strided_slice %401 {offsets = [0, 384], sizes = [8, 128], strides = [1, 1]} : vector<8x512xf32> to vector<8x128xf32>
    %409 = math.tanh %408 : vector<8x128xf32>
    %410 = vector.extract_strided_slice %407 {offsets = [0, 128], sizes = [8, 128], strides = [1, 1]} : vector<8x384xf32> to vector<8x128xf32>
    %411 = arith.mulf %410, %389 : vector<8x128xf32>
    %412 = vector.extract_strided_slice %407 {offsets = [0, 0], sizes = [8, 128], strides = [1, 1]} : vector<8x384xf32> to vector<8x128xf32>
    %413 = arith.mulf %412, %409 : vector<8x128xf32>
    %414 = arith.addf %411, %413 : vector<8x128xf32>
    %415 = vector.extract_strided_slice %407 {offsets = [0, 256], sizes = [8, 128], strides = [1, 1]} : vector<8x384xf32> to vector<8x128xf32>
    %416 = math.tanh %414 : vector<8x128xf32>
    %417 = arith.mulf %415, %416 : vector<8x128xf32>
    %c7_173 = arith.constant 7 : index
    %c0_174 = arith.constant 0 : index
    %c0_175 = arith.constant 0 : index
    %418 = vector.load %arg19[%c7_173, %c0_174, %c0_175] : memref<8x8x128xf32, #tpu.memory_space<vmem>>, vector<1x8x128xf32>
    %419 = vector.shape_cast %418 : vector<1x8x128xf32> to vector<8x128xf32>
    %420 = vector.shape_cast %417 : vector<8x128xf32> to vector<1x8x128xf32>
    tpu.vector_store %arg19[%c7_173, %c0_174, %c0_175], %420 {strides = array<i32>} : memref<8x8x128xf32, #tpu.memory_space<vmem>>, vector<1x8x128xf32>,
    %c0_176 = arith.constant 0 : index
    %c0_177 = arith.constant 0 : index
    %c0_178 = arith.constant 0 : index
    %421 = vector.load %arg19[%c0_176, %c0_177, %c0_178] : memref<8x8x128xf32, #tpu.memory_space<vmem>>, vector<8x8x128xf32>
    %422 = vector.shape_cast %421 : vector<8x8x128xf32> to vector<64x128xf32>
    %423 = arith.truncf %422 : vector<64x128xf32> to vector<64x128xbf16>
    %c0_179 = arith.constant 0 : index
    %c0_180 = arith.constant 0 : index
    %424 = vector.load %arg7[%c0_179, %c0_180] : memref<128x512xbf16, #tpu.memory_space<vmem>>, vector<128x512xbf16>
    %cst_181 = arith.constant dense<0.000000e+00> : vector<64x512xf32>
    %425 = tpu.matmul %423, %424, %cst_181 {dimension_numbers = #tpu.dot_dimension_numbers<[1], [0], [0], [1], [0, 0, 1, 1], [], []>} : vector<64x128xbf16>, vector<128x512xbf16>, vector<64x512xf32> -> vector<64x512xf32>
    %c0_182 = arith.constant 0 : index
    %c0_183 = arith.constant 0 : index
    %426 = vector.load %arg9[%c0_182, %c0_183] : memref<1x512xf32, #tpu.memory_space<vmem>>, vector<1x512xf32>
    %427 = vector.broadcast %426 : vector<1x512xf32> to vector<64x512xf32>
    %428 = arith.addf %425, %427 : vector<64x512xf32>
    %429 = vector.shape_cast %428 : vector<64x512xf32> to vector<8x8x512xf32>
    %c0_184 = arith.constant 0 : index
    %c0_185 = arith.constant 0 : index
    %c0_186 = arith.constant 0 : index
    %430 = vector.load %arg17[%c0_184, %c0_185, %c0_186] : memref<8x8x512xf32, #tpu.memory_space<vmem>>, vector<8x8x512xf32>
    tpu.vector_store %arg17[%c0_184, %c0_185, %c0_186], %429 {strides = array<i32>} : memref<8x8x512xf32, #tpu.memory_space<vmem>>, vector<8x8x512xf32>,
    %c0_187 = arith.constant 0 : index
    %c0_188 = arith.constant 0 : index
    %c0_189 = arith.constant 0 : index
    %431 = vector.load %arg17[%c0_187, %c0_188, %c0_189] : memref<8x8x512xf32, #tpu.memory_space<vmem>>, vector<1x8x512xf32>
    %432 = vector.shape_cast %431 : vector<1x8x512xf32> to vector<8x512xf32>
    %433 = arith.truncf %417 : vector<8x128xf32> to vector<8x128xbf16>
    %c0_190 = arith.constant 0 : index
    %c0_191 = arith.constant 0 : index
    %434 = vector.load %arg8[%c0_190, %c0_191] : memref<128x512xbf16, #tpu.memory_space<vmem>>, vector<128x512xbf16>
    %cst_192 = arith.constant dense<0.000000e+00> : vector<8x512xf32>
    %435 = tpu.matmul %433, %434, %cst_192 {dimension_numbers = #tpu.dot_dimension_numbers<[1], [0], [0], [1], [0, 0, 1, 1], [], []>} : vector<8x128xbf16>, vector<128x512xbf16>, vector<8x512xf32> -> vector<8x512xf32>
    %436 = arith.addf %432, %435 : vector<8x512xf32>
    %437 = vector.extract_strided_slice %436 {offsets = [0, 0], sizes = [8, 384], strides = [1, 1]} : vector<8x512xf32> to vector<8x384xf32>
    %438 = arith.negf %437 : vector<8x384xf32>
    %439 = math.exp %438 : vector<8x384xf32>
    %cst_193 = arith.constant 1.000000e+00 : f32
    %440 = vector.broadcast %cst_193 : f32 to vector<8x384xf32>
    %441 = arith.addf %440, %439 : vector<8x384xf32>
    %442 = arith.divf %440, %441 : vector<8x384xf32>
    %443 = vector.extract_strided_slice %436 {offsets = [0, 384], sizes = [8, 128], strides = [1, 1]} : vector<8x512xf32> to vector<8x128xf32>
    %444 = math.tanh %443 : vector<8x128xf32>
    %445 = vector.extract_strided_slice %442 {offsets = [0, 128], sizes = [8, 128], strides = [1, 1]} : vector<8x384xf32> to vector<8x128xf32>
    %446 = arith.mulf %445, %414 : vector<8x128xf32>
    %447 = vector.extract_strided_slice %442 {offsets = [0, 0], sizes = [8, 128], strides = [1, 1]} : vector<8x384xf32> to vector<8x128xf32>
    %448 = arith.mulf %447, %444 : vector<8x128xf32>
    %449 = arith.addf %446, %448 : vector<8x128xf32>
    %450 = vector.extract_strided_slice %442 {offsets = [0, 256], sizes = [8, 128], strides = [1, 1]} : vector<8x384xf32> to vector<8x128xf32>
    %451 = math.tanh %449 : vector<8x128xf32>
    %452 = arith.mulf %450, %451 : vector<8x128xf32>
    %c0_194 = arith.constant 0 : index
    %c0_195 = arith.constant 0 : index
    %c0_196 = arith.constant 0 : index
    %453 = vector.load %arg18[%c0_194, %c0_195, %c0_196] : memref<8x8x128xf32, #tpu.memory_space<vmem>>, vector<1x8x128xf32>
    %454 = vector.shape_cast %453 : vector<1x8x128xf32> to vector<8x128xf32>
    %455 = vector.shape_cast %452 : vector<8x128xf32> to vector<1x8x128xf32>
    tpu.vector_store %arg18[%c0_194, %c0_195, %c0_196], %455 {strides = array<i32>} : memref<8x8x128xf32, #tpu.memory_space<vmem>>, vector<1x8x128xf32>,
    %c1_197 = arith.constant 1 : index
    %c0_198 = arith.constant 0 : index
    %c0_199 = arith.constant 0 : index
    %456 = vector.load %arg17[%c1_197, %c0_198, %c0_199] : memref<8x8x512xf32, #tpu.memory_space<vmem>>, vector<1x8x512xf32>
    %457 = vector.shape_cast %456 : vector<1x8x512xf32> to vector<8x512xf32>
    %458 = arith.truncf %452 : vector<8x128xf32> to vector<8x128xbf16>
    %c0_200 = arith.constant 0 : index
    %c0_201 = arith.constant 0 : index
    %459 = vector.load %arg8[%c0_200, %c0_201] : memref<128x512xbf16, #tpu.memory_space<vmem>>, vector<128x512xbf16>
    %cst_202 = arith.constant dense<0.000000e+00> : vector<8x512xf32>
    %460 = tpu.matmul %458, %459, %cst_202 {dimension_numbers = #tpu.dot_dimension_numbers<[1], [0], [0], [1], [0, 0, 1, 1], [], []>} : vector<8x128xbf16>, vector<128x512xbf16>, vector<8x512xf32> -> vector<8x512xf32>
    %461 = arith.addf %457, %460 : vector<8x512xf32>
    %462 = vector.extract_strided_slice %461 {offsets = [0, 0], sizes = [8, 384], strides = [1, 1]} : vector<8x512xf32> to vector<8x384xf32>
    %463 = arith.negf %462 : vector<8x384xf32>
    %464 = math.exp %463 : vector<8x384xf32>
    %cst_203 = arith.constant 1.000000e+00 : f32
    %465 = vector.broadcast %cst_203 : f32 to vector<8x384xf32>
    %466 = arith.addf %465, %464 : vector<8x384xf32>
    %467 = arith.divf %465, %466 : vector<8x384xf32>
    %468 = vector.extract_strided_slice %461 {offsets = [0, 384], sizes = [8, 128], strides = [1, 1]} : vector<8x512xf32> to vector<8x128xf32>
    %469 = math.tanh %468 : vector<8x128xf32>
    %470 = vector.extract_strided_slice %467 {offsets = [0, 128], sizes = [8, 128], strides = [1, 1]} : vector<8x384xf32> to vector<8x128xf32>
    %471 = arith.mulf %470, %449 : vector<8x128xf32>
    %472 = vector.extract_strided_slice %467 {offsets = [0, 0], sizes = [8, 128], strides = [1, 1]} : vector<8x384xf32> to vector<8x128xf32>
    %473 = arith.mulf %472, %469 : vector<8x128xf32>
    %474 = arith.addf %471, %473 : vector<8x128xf32>
    %475 = vector.extract_strided_slice %467 {offsets = [0, 256], sizes = [8, 128], strides = [1, 1]} : vector<8x384xf32> to vector<8x128xf32>
    %476 = math.tanh %474 : vector<8x128xf32>
    %477 = arith.mulf %475, %476 : vector<8x128xf32>
    %c1_204 = arith.constant 1 : index
    %c0_205 = arith.constant 0 : index
    %c0_206 = arith.constant 0 : index
    %478 = vector.load %arg18[%c1_204, %c0_205, %c0_206] : memref<8x8x128xf32, #tpu.memory_space<vmem>>, vector<1x8x128xf32>
    %479 = vector.shape_cast %478 : vector<1x8x128xf32> to vector<8x128xf32>
    %480 = vector.shape_cast %477 : vector<8x128xf32> to vector<1x8x128xf32>
    tpu.vector_store %arg18[%c1_204, %c0_205, %c0_206], %480 {strides = array<i32>} : memref<8x8x128xf32, #tpu.memory_space<vmem>>, vector<1x8x128xf32>,
    %c2_207 = arith.constant 2 : index
    %c0_208 = arith.constant 0 : index
    %c0_209 = arith.constant 0 : index
    %481 = vector.load %arg17[%c2_207, %c0_208, %c0_209] : memref<8x8x512xf32, #tpu.memory_space<vmem>>, vector<1x8x512xf32>
    %482 = vector.shape_cast %481 : vector<1x8x512xf32> to vector<8x512xf32>
    %483 = arith.truncf %477 : vector<8x128xf32> to vector<8x128xbf16>
    %c0_210 = arith.constant 0 : index
    %c0_211 = arith.constant 0 : index
    %484 = vector.load %arg8[%c0_210, %c0_211] : memref<128x512xbf16, #tpu.memory_space<vmem>>, vector<128x512xbf16>
    %cst_212 = arith.constant dense<0.000000e+00> : vector<8x512xf32>
    %485 = tpu.matmul %483, %484, %cst_212 {dimension_numbers = #tpu.dot_dimension_numbers<[1], [0], [0], [1], [0, 0, 1, 1], [], []>} : vector<8x128xbf16>, vector<128x512xbf16>, vector<8x512xf32> -> vector<8x512xf32>
    %486 = arith.addf %482, %485 : vector<8x512xf32>
    %487 = vector.extract_strided_slice %486 {offsets = [0, 0], sizes = [8, 384], strides = [1, 1]} : vector<8x512xf32> to vector<8x384xf32>
    %488 = arith.negf %487 : vector<8x384xf32>
    %489 = math.exp %488 : vector<8x384xf32>
    %cst_213 = arith.constant 1.000000e+00 : f32
    %490 = vector.broadcast %cst_213 : f32 to vector<8x384xf32>
    %491 = arith.addf %490, %489 : vector<8x384xf32>
    %492 = arith.divf %490, %491 : vector<8x384xf32>
    %493 = vector.extract_strided_slice %486 {offsets = [0, 384], sizes = [8, 128], strides = [1, 1]} : vector<8x512xf32> to vector<8x128xf32>
    %494 = math.tanh %493 : vector<8x128xf32>
    %495 = vector.extract_strided_slice %492 {offsets = [0, 128], sizes = [8, 128], strides = [1, 1]} : vector<8x384xf32> to vector<8x128xf32>
    %496 = arith.mulf %495, %474 : vector<8x128xf32>
    %497 = vector.extract_strided_slice %492 {offsets = [0, 0], sizes = [8, 128], strides = [1, 1]} : vector<8x384xf32> to vector<8x128xf32>
    %498 = arith.mulf %497, %494 : vector<8x128xf32>
    %499 = arith.addf %496, %498 : vector<8x128xf32>
    %500 = vector.extract_strided_slice %492 {offsets = [0, 256], sizes = [8, 128], strides = [1, 1]} : vector<8x384xf32> to vector<8x128xf32>
    %501 = math.tanh %499 : vector<8x128xf32>
    %502 = arith.mulf %500, %501 : vector<8x128xf32>
    %c2_214 = arith.constant 2 : index
    %c0_215 = arith.constant 0 : index
    %c0_216 = arith.constant 0 : index
    %503 = vector.load %arg18[%c2_214, %c0_215, %c0_216] : memref<8x8x128xf32, #tpu.memory_space<vmem>>, vector<1x8x128xf32>
    %504 = vector.shape_cast %503 : vector<1x8x128xf32> to vector<8x128xf32>
    %505 = vector.shape_cast %502 : vector<8x128xf32> to vector<1x8x128xf32>
    tpu.vector_store %arg18[%c2_214, %c0_215, %c0_216], %505 {strides = array<i32>} : memref<8x8x128xf32, #tpu.memory_space<vmem>>, vector<1x8x128xf32>,
    %c3_217 = arith.constant 3 : index
    %c0_218 = arith.constant 0 : index
    %c0_219 = arith.constant 0 : index
    %506 = vector.load %arg17[%c3_217, %c0_218, %c0_219] : memref<8x8x512xf32, #tpu.memory_space<vmem>>, vector<1x8x512xf32>
    %507 = vector.shape_cast %506 : vector<1x8x512xf32> to vector<8x512xf32>
    %508 = arith.truncf %502 : vector<8x128xf32> to vector<8x128xbf16>
    %c0_220 = arith.constant 0 : index
    %c0_221 = arith.constant 0 : index
    %509 = vector.load %arg8[%c0_220, %c0_221] : memref<128x512xbf16, #tpu.memory_space<vmem>>, vector<128x512xbf16>
    %cst_222 = arith.constant dense<0.000000e+00> : vector<8x512xf32>
    %510 = tpu.matmul %508, %509, %cst_222 {dimension_numbers = #tpu.dot_dimension_numbers<[1], [0], [0], [1], [0, 0, 1, 1], [], []>} : vector<8x128xbf16>, vector<128x512xbf16>, vector<8x512xf32> -> vector<8x512xf32>
    %511 = arith.addf %507, %510 : vector<8x512xf32>
    %512 = vector.extract_strided_slice %511 {offsets = [0, 0], sizes = [8, 384], strides = [1, 1]} : vector<8x512xf32> to vector<8x384xf32>
    %513 = arith.negf %512 : vector<8x384xf32>
    %514 = math.exp %513 : vector<8x384xf32>
    %cst_223 = arith.constant 1.000000e+00 : f32
    %515 = vector.broadcast %cst_223 : f32 to vector<8x384xf32>
    %516 = arith.addf %515, %514 : vector<8x384xf32>
    %517 = arith.divf %515, %516 : vector<8x384xf32>
    %518 = vector.extract_strided_slice %511 {offsets = [0, 384], sizes = [8, 128], strides = [1, 1]} : vector<8x512xf32> to vector<8x128xf32>
    %519 = math.tanh %518 : vector<8x128xf32>
    %520 = vector.extract_strided_slice %517 {offsets = [0, 128], sizes = [8, 128], strides = [1, 1]} : vector<8x384xf32> to vector<8x128xf32>
    %521 = arith.mulf %520, %499 : vector<8x128xf32>
    %522 = vector.extract_strided_slice %517 {offsets = [0, 0], sizes = [8, 128], strides = [1, 1]} : vector<8x384xf32> to vector<8x128xf32>
    %523 = arith.mulf %522, %519 : vector<8x128xf32>
    %524 = arith.addf %521, %523 : vector<8x128xf32>
    %525 = vector.extract_strided_slice %517 {offsets = [0, 256], sizes = [8, 128], strides = [1, 1]} : vector<8x384xf32> to vector<8x128xf32>
    %526 = math.tanh %524 : vector<8x128xf32>
    %527 = arith.mulf %525, %526 : vector<8x128xf32>
    %c3_224 = arith.constant 3 : index
    %c0_225 = arith.constant 0 : index
    %c0_226 = arith.constant 0 : index
    %528 = vector.load %arg18[%c3_224, %c0_225, %c0_226] : memref<8x8x128xf32, #tpu.memory_space<vmem>>, vector<1x8x128xf32>
    %529 = vector.shape_cast %528 : vector<1x8x128xf32> to vector<8x128xf32>
    %530 = vector.shape_cast %527 : vector<8x128xf32> to vector<1x8x128xf32>
    tpu.vector_store %arg18[%c3_224, %c0_225, %c0_226], %530 {strides = array<i32>} : memref<8x8x128xf32, #tpu.memory_space<vmem>>, vector<1x8x128xf32>,
    %c4_227 = arith.constant 4 : index
    %c0_228 = arith.constant 0 : index
    %c0_229 = arith.constant 0 : index
    %531 = vector.load %arg17[%c4_227, %c0_228, %c0_229] : memref<8x8x512xf32, #tpu.memory_space<vmem>>, vector<1x8x512xf32>
    %532 = vector.shape_cast %531 : vector<1x8x512xf32> to vector<8x512xf32>
    %533 = arith.truncf %527 : vector<8x128xf32> to vector<8x128xbf16>
    %c0_230 = arith.constant 0 : index
    %c0_231 = arith.constant 0 : index
    %534 = vector.load %arg8[%c0_230, %c0_231] : memref<128x512xbf16, #tpu.memory_space<vmem>>, vector<128x512xbf16>
    %cst_232 = arith.constant dense<0.000000e+00> : vector<8x512xf32>
    %535 = tpu.matmul %533, %534, %cst_232 {dimension_numbers = #tpu.dot_dimension_numbers<[1], [0], [0], [1], [0, 0, 1, 1], [], []>} : vector<8x128xbf16>, vector<128x512xbf16>, vector<8x512xf32> -> vector<8x512xf32>
    %536 = arith.addf %532, %535 : vector<8x512xf32>
    %537 = vector.extract_strided_slice %536 {offsets = [0, 0], sizes = [8, 384], strides = [1, 1]} : vector<8x512xf32> to vector<8x384xf32>
    %538 = arith.negf %537 : vector<8x384xf32>
    %539 = math.exp %538 : vector<8x384xf32>
    %cst_233 = arith.constant 1.000000e+00 : f32
    %540 = vector.broadcast %cst_233 : f32 to vector<8x384xf32>
    %541 = arith.addf %540, %539 : vector<8x384xf32>
    %542 = arith.divf %540, %541 : vector<8x384xf32>
    %543 = vector.extract_strided_slice %536 {offsets = [0, 384], sizes = [8, 128], strides = [1, 1]} : vector<8x512xf32> to vector<8x128xf32>
    %544 = math.tanh %543 : vector<8x128xf32>
    %545 = vector.extract_strided_slice %542 {offsets = [0, 128], sizes = [8, 128], strides = [1, 1]} : vector<8x384xf32> to vector<8x128xf32>
    %546 = arith.mulf %545, %524 : vector<8x128xf32>
    %547 = vector.extract_strided_slice %542 {offsets = [0, 0], sizes = [8, 128], strides = [1, 1]} : vector<8x384xf32> to vector<8x128xf32>
    %548 = arith.mulf %547, %544 : vector<8x128xf32>
    %549 = arith.addf %546, %548 : vector<8x128xf32>
    %550 = vector.extract_strided_slice %542 {offsets = [0, 256], sizes = [8, 128], strides = [1, 1]} : vector<8x384xf32> to vector<8x128xf32>
    %551 = math.tanh %549 : vector<8x128xf32>
    %552 = arith.mulf %550, %551 : vector<8x128xf32>
    %c4_234 = arith.constant 4 : index
    %c0_235 = arith.constant 0 : index
    %c0_236 = arith.constant 0 : index
    %553 = vector.load %arg18[%c4_234, %c0_235, %c0_236] : memref<8x8x128xf32, #tpu.memory_space<vmem>>, vector<1x8x128xf32>
    %554 = vector.shape_cast %553 : vector<1x8x128xf32> to vector<8x128xf32>
    %555 = vector.shape_cast %552 : vector<8x128xf32> to vector<1x8x128xf32>
    tpu.vector_store %arg18[%c4_234, %c0_235, %c0_236], %555 {strides = array<i32>} : memref<8x8x128xf32, #tpu.memory_space<vmem>>, vector<1x8x128xf32>,
    %c5_237 = arith.constant 5 : index
    %c0_238 = arith.constant 0 : index
    %c0_239 = arith.constant 0 : index
    %556 = vector.load %arg17[%c5_237, %c0_238, %c0_239] : memref<8x8x512xf32, #tpu.memory_space<vmem>>, vector<1x8x512xf32>
    %557 = vector.shape_cast %556 : vector<1x8x512xf32> to vector<8x512xf32>
    %558 = arith.truncf %552 : vector<8x128xf32> to vector<8x128xbf16>
    %c0_240 = arith.constant 0 : index
    %c0_241 = arith.constant 0 : index
    %559 = vector.load %arg8[%c0_240, %c0_241] : memref<128x512xbf16, #tpu.memory_space<vmem>>, vector<128x512xbf16>
    %cst_242 = arith.constant dense<0.000000e+00> : vector<8x512xf32>
    %560 = tpu.matmul %558, %559, %cst_242 {dimension_numbers = #tpu.dot_dimension_numbers<[1], [0], [0], [1], [0, 0, 1, 1], [], []>} : vector<8x128xbf16>, vector<128x512xbf16>, vector<8x512xf32> -> vector<8x512xf32>
    %561 = arith.addf %557, %560 : vector<8x512xf32>
    %562 = vector.extract_strided_slice %561 {offsets = [0, 0], sizes = [8, 384], strides = [1, 1]} : vector<8x512xf32> to vector<8x384xf32>
    %563 = arith.negf %562 : vector<8x384xf32>
    %564 = math.exp %563 : vector<8x384xf32>
    %cst_243 = arith.constant 1.000000e+00 : f32
    %565 = vector.broadcast %cst_243 : f32 to vector<8x384xf32>
    %566 = arith.addf %565, %564 : vector<8x384xf32>
    %567 = arith.divf %565, %566 : vector<8x384xf32>
    %568 = vector.extract_strided_slice %561 {offsets = [0, 384], sizes = [8, 128], strides = [1, 1]} : vector<8x512xf32> to vector<8x128xf32>
    %569 = math.tanh %568 : vector<8x128xf32>
    %570 = vector.extract_strided_slice %567 {offsets = [0, 128], sizes = [8, 128], strides = [1, 1]} : vector<8x384xf32> to vector<8x128xf32>
    %571 = arith.mulf %570, %549 : vector<8x128xf32>
    %572 = vector.extract_strided_slice %567 {offsets = [0, 0], sizes = [8, 128], strides = [1, 1]} : vector<8x384xf32> to vector<8x128xf32>
    %573 = arith.mulf %572, %569 : vector<8x128xf32>
    %574 = arith.addf %571, %573 : vector<8x128xf32>
    %575 = vector.extract_strided_slice %567 {offsets = [0, 256], sizes = [8, 128], strides = [1, 1]} : vector<8x384xf32> to vector<8x128xf32>
    %576 = math.tanh %574 : vector<8x128xf32>
    %577 = arith.mulf %575, %576 : vector<8x128xf32>
    %c5_244 = arith.constant 5 : index
    %c0_245 = arith.constant 0 : index
    %c0_246 = arith.constant 0 : index
    %578 = vector.load %arg18[%c5_244, %c0_245, %c0_246] : memref<8x8x128xf32, #tpu.memory_space<vmem>>, vector<1x8x128xf32>
    %579 = vector.shape_cast %578 : vector<1x8x128xf32> to vector<8x128xf32>
    %580 = vector.shape_cast %577 : vector<8x128xf32> to vector<1x8x128xf32>
    tpu.vector_store %arg18[%c5_244, %c0_245, %c0_246], %580 {strides = array<i32>} : memref<8x8x128xf32, #tpu.memory_space<vmem>>, vector<1x8x128xf32>,
    %c6_247 = arith.constant 6 : index
    %c0_248 = arith.constant 0 : index
    %c0_249 = arith.constant 0 : index
    %581 = vector.load %arg17[%c6_247, %c0_248, %c0_249] : memref<8x8x512xf32, #tpu.memory_space<vmem>>, vector<1x8x512xf32>
    %582 = vector.shape_cast %581 : vector<1x8x512xf32> to vector<8x512xf32>
    %583 = arith.truncf %577 : vector<8x128xf32> to vector<8x128xbf16>
    %c0_250 = arith.constant 0 : index
    %c0_251 = arith.constant 0 : index
    %584 = vector.load %arg8[%c0_250, %c0_251] : memref<128x512xbf16, #tpu.memory_space<vmem>>, vector<128x512xbf16>
    %cst_252 = arith.constant dense<0.000000e+00> : vector<8x512xf32>
    %585 = tpu.matmul %583, %584, %cst_252 {dimension_numbers = #tpu.dot_dimension_numbers<[1], [0], [0], [1], [0, 0, 1, 1], [], []>} : vector<8x128xbf16>, vector<128x512xbf16>, vector<8x512xf32> -> vector<8x512xf32>
    %586 = arith.addf %582, %585 : vector<8x512xf32>
    %587 = vector.extract_strided_slice %586 {offsets = [0, 0], sizes = [8, 384], strides = [1, 1]} : vector<8x512xf32> to vector<8x384xf32>
    %588 = arith.negf %587 : vector<8x384xf32>
    %589 = math.exp %588 : vector<8x384xf32>
    %cst_253 = arith.constant 1.000000e+00 : f32
    %590 = vector.broadcast %cst_253 : f32 to vector<8x384xf32>
    %591 = arith.addf %590, %589 : vector<8x384xf32>
    %592 = arith.divf %590, %591 : vector<8x384xf32>
    %593 = vector.extract_strided_slice %586 {offsets = [0, 384], sizes = [8, 128], strides = [1, 1]} : vector<8x512xf32> to vector<8x128xf32>
    %594 = math.tanh %593 : vector<8x128xf32>
    %595 = vector.extract_strided_slice %592 {offsets = [0, 128], sizes = [8, 128], strides = [1, 1]} : vector<8x384xf32> to vector<8x128xf32>
    %596 = arith.mulf %595, %574 : vector<8x128xf32>
    %597 = vector.extract_strided_slice %592 {offsets = [0, 0], sizes = [8, 128], strides = [1, 1]} : vector<8x384xf32> to vector<8x128xf32>
    %598 = arith.mulf %597, %594 : vector<8x128xf32>
    %599 = arith.addf %596, %598 : vector<8x128xf32>
    %600 = vector.extract_strided_slice %592 {offsets = [0, 256], sizes = [8, 128], strides = [1, 1]} : vector<8x384xf32> to vector<8x128xf32>
    %601 = math.tanh %599 : vector<8x128xf32>
    %602 = arith.mulf %600, %601 : vector<8x128xf32>
    %c6_254 = arith.constant 6 : index
    %c0_255 = arith.constant 0 : index
    %c0_256 = arith.constant 0 : index
    %603 = vector.load %arg18[%c6_254, %c0_255, %c0_256] : memref<8x8x128xf32, #tpu.memory_space<vmem>>, vector<1x8x128xf32>
    %604 = vector.shape_cast %603 : vector<1x8x128xf32> to vector<8x128xf32>
    %605 = vector.shape_cast %602 : vector<8x128xf32> to vector<1x8x128xf32>
    tpu.vector_store %arg18[%c6_254, %c0_255, %c0_256], %605 {strides = array<i32>} : memref<8x8x128xf32, #tpu.memory_space<vmem>>, vector<1x8x128xf32>,
    %c7_257 = arith.constant 7 : index
    %c0_258 = arith.constant 0 : index
    %c0_259 = arith.constant 0 : index
    %606 = vector.load %arg17[%c7_257, %c0_258, %c0_259] : memref<8x8x512xf32, #tpu.memory_space<vmem>>, vector<1x8x512xf32>
    %607 = vector.shape_cast %606 : vector<1x8x512xf32> to vector<8x512xf32>
    %608 = arith.truncf %602 : vector<8x128xf32> to vector<8x128xbf16>
    %c0_260 = arith.constant 0 : index
    %c0_261 = arith.constant 0 : index
    %609 = vector.load %arg8[%c0_260, %c0_261] : memref<128x512xbf16, #tpu.memory_space<vmem>>, vector<128x512xbf16>
    %cst_262 = arith.constant dense<0.000000e+00> : vector<8x512xf32>
    %610 = tpu.matmul %608, %609, %cst_262 {dimension_numbers = #tpu.dot_dimension_numbers<[1], [0], [0], [1], [0, 0, 1, 1], [], []>} : vector<8x128xbf16>, vector<128x512xbf16>, vector<8x512xf32> -> vector<8x512xf32>
    %611 = arith.addf %607, %610 : vector<8x512xf32>
    %612 = vector.extract_strided_slice %611 {offsets = [0, 0], sizes = [8, 384], strides = [1, 1]} : vector<8x512xf32> to vector<8x384xf32>
    %613 = arith.negf %612 : vector<8x384xf32>
    %614 = math.exp %613 : vector<8x384xf32>
    %cst_263 = arith.constant 1.000000e+00 : f32
    %615 = vector.broadcast %cst_263 : f32 to vector<8x384xf32>
    %616 = arith.addf %615, %614 : vector<8x384xf32>
    %617 = arith.divf %615, %616 : vector<8x384xf32>
    %618 = vector.extract_strided_slice %611 {offsets = [0, 384], sizes = [8, 128], strides = [1, 1]} : vector<8x512xf32> to vector<8x128xf32>
    %619 = math.tanh %618 : vector<8x128xf32>
    %620 = vector.extract_strided_slice %617 {offsets = [0, 128], sizes = [8, 128], strides = [1, 1]} : vector<8x384xf32> to vector<8x128xf32>
    %621 = arith.mulf %620, %599 : vector<8x128xf32>
    %622 = vector.extract_strided_slice %617 {offsets = [0, 0], sizes = [8, 128], strides = [1, 1]} : vector<8x384xf32> to vector<8x128xf32>
    %623 = arith.mulf %622, %619 : vector<8x128xf32>
    %624 = arith.addf %621, %623 : vector<8x128xf32>
    %625 = vector.extract_strided_slice %617 {offsets = [0, 256], sizes = [8, 128], strides = [1, 1]} : vector<8x384xf32> to vector<8x128xf32>
    %626 = math.tanh %624 : vector<8x128xf32>
    %627 = arith.mulf %625, %626 : vector<8x128xf32>
    %c7_264 = arith.constant 7 : index
    %c0_265 = arith.constant 0 : index
    %c0_266 = arith.constant 0 : index
    %628 = vector.load %arg18[%c7_264, %c0_265, %c0_266] : memref<8x8x128xf32, #tpu.memory_space<vmem>>, vector<1x8x128xf32>
    %629 = vector.shape_cast %628 : vector<1x8x128xf32> to vector<8x128xf32>
    %630 = vector.shape_cast %627 : vector<8x128xf32> to vector<1x8x128xf32>
    tpu.vector_store %arg18[%c7_264, %c0_265, %c0_266], %630 {strides = array<i32>} : memref<8x8x128xf32, #tpu.memory_space<vmem>>, vector<1x8x128xf32>,
    %c0_267 = arith.constant 0 : index
    %c0_268 = arith.constant 0 : index
    %c0_269 = arith.constant 0 : index
    %631 = vector.load %arg18[%c0_267, %c0_268, %c0_269] : memref<8x8x128xf32, #tpu.memory_space<vmem>>, vector<8x8x128xf32>
    %632 = vector.shape_cast %631 : vector<8x8x128xf32> to vector<64x128xf32>
    %c0_270 = arith.constant 0 : index
    %c0_271 = arith.constant 0 : index
    %633 = vector.load %arg10[%c0_270, %c0_271] : memref<128x128xf32, #tpu.memory_space<vmem>>, vector<128x128xf32>
    %cst_272 = arith.constant dense<0.000000e+00> : vector<64x128xf32>
    %634 = tpu.matmul %632, %633, %cst_272 {dimension_numbers = #tpu.dot_dimension_numbers<[1], [0], [0], [1], [0, 0, 1, 1], [], []>} : vector<64x128xf32>, vector<128x128xf32>, vector<64x128xf32> -> vector<64x128xf32>
    %c0_273 = arith.constant 0 : index
    %c0_274 = arith.constant 0 : index
    %635 = vector.load %arg11[%c0_273, %c0_274] : memref<1x128xf32, #tpu.memory_space<vmem>>, vector<1x128xf32>
    %636 = vector.broadcast %635 : vector<1x128xf32> to vector<64x128xf32>
    %637 = arith.addf %634, %636 : vector<64x128xf32>
    %cst_275 = arith.constant 0.000000e+00 : f32
    %638 = vector.broadcast %cst_275 : f32 to vector<64x128xf32>
    %639 = arith.maximumf %637, %638 : vector<64x128xf32>
    %c0_276 = arith.constant 0 : index
    %c0_277 = arith.constant 0 : index
    %640 = vector.load %arg12[%c0_276, %c0_277] : memref<128x2xf32, #tpu.memory_space<vmem>>, vector<128x2xf32>
    %cst_278 = arith.constant dense<0.000000e+00> : vector<64x2xf32>
    %641 = tpu.matmul %639, %640, %cst_278 {dimension_numbers = #tpu.dot_dimension_numbers<[1], [0], [0], [1], [0, 0, 1, 1], [], []>} : vector<64x128xf32>, vector<128x2xf32>, vector<64x2xf32> -> vector<64x2xf32>
    %c0_279 = arith.constant 0 : index
    %c0_280 = arith.constant 0 : index
    %642 = vector.load %arg13[%c0_279, %c0_280] : memref<1x2xf32, #tpu.memory_space<vmem>>, vector<1x2xf32>
    %643 = vector.broadcast %642 : vector<1x2xf32> to vector<64x2xf32>
    %644 = arith.addf %641, %643 : vector<64x2xf32>
    %cst_281 = arith.constant 0.000000e+00 : f32
    %645 = vector.broadcast %cst_281 : f32 to vector<64x2xf32>
    %646 = arith.maximumf %644, %645 : vector<64x2xf32>
    %cst_282 = arith.constant dense<0xFF800000> : vector<64xf32>
    %647 = vector.multi_reduction <maximumf>, %646, %cst_282 [1] : vector<64x2xf32> to vector<64xf32>
    %648 = vector.shape_cast %647 : vector<64xf32> to vector<64x1xf32>
    %649 = vector.broadcast %648 : vector<64x1xf32> to vector<64x2xf32>
    %650 = arith.subf %646, %649 : vector<64x2xf32>
    %651 = math.exp %650 : vector<64x2xf32>
    %cst_283 = arith.constant dense<0.000000e+00> : vector<64xf32>
    %652 = vector.multi_reduction <add>, %651, %cst_283 [1] : vector<64x2xf32> to vector<64xf32>
    %653 = vector.shape_cast %652 : vector<64xf32> to vector<64x1xf32>
    %654 = vector.broadcast %653 : vector<64x1xf32> to vector<64x2xf32>
    %655 = arith.divf %651, %654 : vector<64x2xf32>
    %c0_284 = arith.constant 0 : index
    %c0_285 = arith.constant 0 : index
    %656 = vector.load %arg16[%c0_284, %c0_285] : memref<64x2xf32, #tpu.memory_space<vmem>>, vector<64x2xf32>
    tpu.vector_store %arg16[%c0_284, %c0_285], %655 {strides = array<i32>} : memref<64x2xf32, #tpu.memory_space<vmem>>, vector<64x2xf32>,
    return
  }
}

</mosaic_0001>

<llo_original>
// kernel: lstm_model_forward.1
$region0: #{lstm_model_forward.1}
  #allocation0 [shape = 'u32[]', space=smem, size = 0x4, offset = 0x4, fixed_abs, tag = 'smem constant byte address 0x4 - core index']
  #allocation1 [shape = 'u32[144,128]{1,0:T(1,128)}', space=vmem, size = 0x12000, scoped, tag = 'internal scratch']
  #allocation2 [shape = 'f32[8,8,512]{2,1,0:T(8,128)}', space=vmem, size = 0x20000, scoped, tag = 'scratch operand']
  #allocation3 [shape = 'f32[8,8,128]{2,1,0:T(8,128)}', space=vmem, size = 0x8000, scoped, tag = 'scratch operand']
  #allocation4 [shape = 'f32[8,8,128]{2,1,0:T(8,128)}', space=vmem, size = 0x8000, scoped, tag = 'scratch operand']
  %s0 = inlined_call_operand.vmem [shape: f32[64,8], index: 0, kind: input, shape index: {}]
  %s1 = inlined_call_operand.vmem [shape: bf16[8,512], index: 1, kind: input, shape index: {}]
  %s2 = inlined_call_operand.vmem [shape: bf16[128,512], index: 2, kind: input, shape index: {}]
  %s3 = inlined_call_operand.vmem [shape: f32[1,512], index: 3, kind: input, shape index: {}]
  %s4 = inlined_call_operand.hbm [shape: bf16[128,512], index: 4, kind: input, shape index: {}]
  %s5 = inlined_call_operand.hbm [shape: bf16[128,512], index: 5, kind: input, shape index: {}]
  %s6 = inlined_call_operand.vmem [shape: f32[1,512], index: 6, kind: input, shape index: {}]
  %s7 = inlined_call_operand.hbm [shape: bf16[128,512], index: 7, kind: input, shape index: {}]
  %s8 = inlined_call_operand.hbm [shape: bf16[128,512], index: 8, kind: input, shape index: {}]
  %s9 = inlined_call_operand.vmem [shape: f32[1,512], index: 9, kind: input, shape index: {}]
  %s10 = inlined_call_operand.hbm [shape: f32[128,128], index: 10, kind: input, shape index: {}]
  %s11 = inlined_call_operand.vmem [shape: f32[1,128], index: 11, kind: input, shape index: {}]
  %s12 = inlined_call_operand.vmem [shape: f32[128,2], index: 12, kind: input, shape index: {}]
  %s13 = inlined_call_operand.vmem [shape: f32[1,2], index: 13, kind: input, shape index: {}]
  %s14 = inlined_call_operand.vmem [shape: f32[8,128], index: 14, kind: input, shape index: {}]
  %s15 = inlined_call_operand.vmem [shape: f32[8,128], index: 15, kind: input, shape index: {}]
  %s16 = inlined_call_operand.vmem [shape: f32[64,2], index: 16, kind: output, shape index: {}]
  %s17 = sld [smem:[#allocation0]]
  $region94: #{lstm_model_forward.1} parent=0
    _
  %s19 = ssub.s32 1, %s17
  %s20 = scalar_select 0, %s19, %s17
  $region1: #{lstm_model_forward.1} parent=0
    #allocation5 [shape = 'u8[131072]{0}', space=vmem, size = 0x20000, scoped, tag = 'input window, operand 4, single buffered']
    #allocation6 [shape = 's32[1]{0}', space=sflag, size = 0x4, scoped, tag = 'scoped memory for lstm_model_forward.1']
    #allocation7 [shape = 'u8[131072]{0}', space=vmem, size = 0x20000, scoped, tag = 'input window, operand 5, single buffered']
    #allocation8 [shape = 's32[1]{0}', space=sflag, size = 0x4, scoped, tag = 'scoped memory for lstm_model_forward.1']
    #allocation9 [shape = 'u8[131072]{0}', space=vmem, size = 0x20000, scoped, tag = 'input window, operand 7, single buffered']
    #allocation10 [shape = 'u8[131072]{0}', space=vmem, size = 0x20000, scoped, tag = 'input window, operand 8, single buffered']
    #allocation11 [shape = 's32[1]{0}', space=sflag, size = 0x4, scoped, tag = 'scoped memory for lstm_model_forward.1']
    #allocation12 [shape = 'u8[65536]{0}', space=vmem, size = 0x10000, scoped, tag = 'input window, operand 10, single buffered']
    %21 = vsyncpa [#allocation6], 0
    %22 = vsyncpa [#allocation8], 0
    %23 = vsyncpa [#allocation11], 0
    // Predicated region
    $region2: #{lstm_model_forward.1} parent=1 // pred_check
      _
    $region3: #{lstm_model_forward.1} parent=1 // pred_check_branch
      %25 = sbr.rel (0) target = $region5
    $region4: #{lstm_model_forward.1} parent=1 // pred_region
      _
    $region5: #{lstm_model_forward.1} parent=1 // pred_fallthru
      _
    // Predicated region
    $region6: #{lstm_model_forward.1} parent=1 // pred_check
      _
    $region7: #{lstm_model_forward.1} parent=1 // pred_check_branch
      %27 = sbr.rel (0) target = $region9
    $region8: #{lstm_model_forward.1} parent=1 // pred_region
      _
    $region9: #{lstm_model_forward.1} parent=1 // pred_fallthru
      _
    // Predicated region
    $region10: #{lstm_model_forward.1} parent=1 // pred_check
      _
    $region11: #{lstm_model_forward.1} parent=1 // pred_check_branch
      %29 = sbr.rel (0) target = $region13
    $region12: #{lstm_model_forward.1} parent=1 // pred_region
      _
    $region13: #{lstm_model_forward.1} parent=1 // pred_fallthru
      _
    // Predicated region
    $region14: #{lstm_model_forward.1} parent=1 // pred_check
      _
    $region15: #{lstm_model_forward.1} parent=1 // pred_check_branch
      %31 = sbr.rel (0) target = $region17
    $region16: #{lstm_model_forward.1} parent=1 // pred_region
      _
    $region17: #{lstm_model_forward.1} parent=1 // pred_fallthru
      _
    // Predicated region
    $region18: #{lstm_model_forward.1} parent=1 // pred_check
      _
    $region19: #{lstm_model_forward.1} parent=1 // pred_check_branch
      %33 = sbr.rel (0) target = $region21
    $region20: #{lstm_model_forward.1} parent=1 // pred_region
      %s35 = ssub.s32 4096, 4096
      %36 = vsyncadd [#allocation6], %s35
      %s37 = sshll.u32 [#allocation5], 4
      %s38 = int_to_ptr.vmem [resolvable:$true] %s37
      %43 = dma.hbm_to_vmem [thread:$0]  %s4, 4096, %s38, [#allocation6], 256, 256, 16
    $region21: #{lstm_model_forward.1} parent=1 // pred_fallthru
      _
    // Predicated region
    $region22: #{lstm_model_forward.1} parent=1 // pred_check
      _
    $region23: #{lstm_model_forward.1} parent=1 // pred_check_branch
      %45 = sbr.rel (0) target = $region25
    $region24: #{lstm_model_forward.1} parent=1 // pred_region
      %s47 = ssub.s32 4096, 4096
      %48 = vsyncadd [#allocation8], %s47
      %s49 = sshll.u32 [#allocation7], 4
      %s50 = int_to_ptr.vmem [resolvable:$true] %s49
      %55 = dma.hbm_to_vmem [thread:$0]  %s5, 4096, %s50, [#allocation8], 256, 256, 16
    $region25: #{lstm_model_forward.1} parent=1 // pred_fallthru
      _
    // Predicated region
    $region26: #{lstm_model_forward.1} parent=1 // pred_check
      _
    $region27: #{lstm_model_forward.1} parent=1 // pred_check_branch
      %57 = sbr.rel (0) target = $region29
    $region28: #{lstm_model_forward.1} parent=1 // pred_region
      _
    $region29: #{lstm_model_forward.1} parent=1 // pred_fallthru
      _
    // Predicated region
    $region30: #{lstm_model_forward.1} parent=1 // pred_check
      _
    $region31: #{lstm_model_forward.1} parent=1 // pred_check_branch
      %59 = sbr.rel (0) target = $region33
    $region32: #{lstm_model_forward.1} parent=1 // pred_region
      %s61 = ssub.s32 4096, 4096
      %62 = vsyncadd [#allocation8], %s61
      %s63 = sshll.u32 [#allocation9], 4
      %s64 = int_to_ptr.vmem [resolvable:$true] %s63
      %69 = dma.hbm_to_vmem [thread:$0]  %s7, 4096, %s64, [#allocation8], 256, 256, 16
    $region33: #{lstm_model_forward.1} parent=1 // pred_fallthru
      _
    // Predicated region
    $region34: #{lstm_model_forward.1} parent=1 // pred_check
      _
    $region35: #{lstm_model_forward.1} parent=1 // pred_check_branch
      %71 = sbr.rel (0) target = $region37
    $region36: #{lstm_model_forward.1} parent=1 // pred_region
      %s73 = ssub.s32 4096, 4096
      %74 = vsyncadd [#allocation11], %s73
      %s75 = sshll.u32 [#allocation10], 4
      %s76 = int_to_ptr.vmem [resolvable:$true] %s75
      %81 = dma.hbm_to_vmem [thread:$0]  %s8, 4096, %s76, [#allocation11], 256, 256, 16
    $region37: #{lstm_model_forward.1} parent=1 // pred_fallthru
      _
    // Predicated region
    $region38: #{lstm_model_forward.1} parent=1 // pred_check
      _
    $region39: #{lstm_model_forward.1} parent=1 // pred_check_branch
      %83 = sbr.rel (0) target = $region41
    $region40: #{lstm_model_forward.1} parent=1 // pred_region
      _
    $region41: #{lstm_model_forward.1} parent=1 // pred_fallthru
      _
    // Predicated region
    $region42: #{lstm_model_forward.1} parent=1 // pred_check
      _
    $region43: #{lstm_model_forward.1} parent=1 // pred_check_branch
      %85 = sbr.rel (0) target = $region45
    $region44: #{lstm_model_forward.1} parent=1 // pred_region
      %s87 = ssub.s32 2048, 2048
      %88 = vsyncadd [#allocation11], %s87
      %s89 = sshll.u32 [#allocation12], 4
      %s90 = int_to_ptr.vmem [resolvable:$true] %s89
      %95 = dma.hbm_to_vmem [thread:$0]  %s10, 2048, %s90, [#allocation11], 128, 128, 8
    $region45: #{lstm_model_forward.1} parent=1 // pred_fallthru
      _
    // Predicated region
    $region46: #{lstm_model_forward.1} parent=1 // pred_check
      _
    $region47: #{lstm_model_forward.1} parent=1 // pred_check_branch
      %97 = sbr.rel (0) target = $region49
    $region48: #{lstm_model_forward.1} parent=1 // pred_region
      _
    $region49: #{lstm_model_forward.1} parent=1 // pred_fallthru
      _
    // Predicated region
    $region50: #{lstm_model_forward.1} parent=1 // pred_check
      _
    $region51: #{lstm_model_forward.1} parent=1 // pred_check_branch
      %99 = sbr.rel (0) target = $region53
    $region52: #{lstm_model_forward.1} parent=1 // pred_region
      _
    $region53: #{lstm_model_forward.1} parent=1 // pred_fallthru
      _
    // Predicated region
    $region54: #{lstm_model_forward.1} parent=1 // pred_check
      _
    $region55: #{lstm_model_forward.1} parent=1 // pred_check_branch
      %101 = sbr.rel (0) target = $region57
    $region56: #{lstm_model_forward.1} parent=1 // pred_region
      _
    $region57: #{lstm_model_forward.1} parent=1 // pred_fallthru
      _
    // Predicated region
    $region58: #{lstm_model_forward.1} parent=1 // pred_check
      _
    $region59: #{lstm_model_forward.1} parent=1 // pred_check_branch
      %103 = sbr.rel (0) target = $region61
    $region60: #{lstm_model_forward.1} parent=1 // pred_region
      _
    $region61: #{lstm_model_forward.1} parent=1 // pred_fallthru
      _
    // Predicated region
    $region62: #{lstm_model_forward.1} parent=1 // pred_check
      _
    $region63: #{lstm_model_forward.1} parent=1 // pred_check_branch
      %105 = sbr.rel (0) target = $region65
    $region64: #{lstm_model_forward.1} parent=1 // pred_region
      _
    $region65: #{lstm_model_forward.1} parent=1 // pred_fallthru
      _
    // Predicated region
    $region66: #{lstm_model_forward.1} parent=1 // pred_check
      _
    $region67: #{lstm_model_forward.1} parent=1 // pred_check_branch
      %107 = sbr.rel (0) target = $region69
    $region68: #{lstm_model_forward.1} parent=1 // pred_region
      %108 = dma.done [#allocation6], 4096
    $region69: #{lstm_model_forward.1} parent=1 // pred_fallthru
      _
    // Predicated region
    $region70: #{lstm_model_forward.1} parent=1 // pred_check
      _
    $region71: #{lstm_model_forward.1} parent=1 // pred_check_branch
      %110 = sbr.rel (0) target = $region73
    $region72: #{lstm_model_forward.1} parent=1 // pred_region
      %111 = dma.done [#allocation8], 4096
    $region73: #{lstm_model_forward.1} parent=1 // pred_fallthru
      _
    // Predicated region
    $region74: #{lstm_model_forward.1} parent=1 // pred_check
      _
    $region75: #{lstm_model_forward.1} parent=1 // pred_check_branch
      %113 = sbr.rel (0) target = $region77
    $region76: #{lstm_model_forward.1} parent=1 // pred_region
      %114 = dma.done [#allocation8], 4096
    $region77: #{lstm_model_forward.1} parent=1 // pred_fallthru
      _
    // Predicated region
    $region78: #{lstm_model_forward.1} parent=1 // pred_check
      _
    $region79: #{lstm_model_forward.1} parent=1 // pred_check_branch
      %116 = sbr.rel (0) target = $region81
    $region80: #{lstm_model_forward.1} parent=1 // pred_region
      %117 = dma.done [#allocation11], 4096
    $region81: #{lstm_model_forward.1} parent=1 // pred_fallthru
      _
    // Predicated region
    $region82: #{lstm_model_forward.1} parent=1 // pred_check
      _
    $region83: #{lstm_model_forward.1} parent=1 // pred_check_branch
      %119 = sbr.rel (0) target = $region85
    $region84: #{lstm_model_forward.1} parent=1 // pred_region
      %120 = dma.done [#allocation11], 2048
    $region85: #{lstm_model_forward.1} parent=1 // pred_fallthru
      _
    %v122 = vld [vmem:[%s14] sm:$0xff]
    %v123 = vld [vmem:[%s15] sm:$0xff]
    %v124 = vld [vmem:[%s0] sm:$0xff]
    %v125 = vld [vmem:[%s0 + $0x8] sm:$0xff]
    %v126 = vld [vmem:[%s0 + $0x10] sm:$0xff]
    %v127 = vld [vmem:[%s0 + $0x18] sm:$0xff]
    %v128 = vld [vmem:[%s0 + $0x20] sm:$0xff]
    %v129 = vld [vmem:[%s0 + $0x28] sm:$0xff]
    %v130 = vld [vmem:[%s0 + $0x30] sm:$0xff]
    %v131 = vld [vmem:[%s0 + $0x38] sm:$0xff]
    %v132 = vpack.c.bf16 %v125, %v124
    %v133 = vpack.c.bf16 %v127, %v126
    %v134 = vpack.c.bf16 %v129, %v128
    %v135 = vpack.c.bf16 %v131, %v130
    %v136 = vld [vmem:[%s1] sm:$0xff]
    %v137 = vld [vmem:[%s1 + $0x8] sm:$0xff]
    %v138 = vld [vmem:[%s3] sm:$0xf]
    %v140 = vlaneseq
    %v141 = vshrl.u32 %v140, 7
    %v142 = vsub.s32 0, %v141
    %v143 = vrot.slane %v138, %v142
    %v144 = vlaneseq
    %v145 = vshrl.u32 %v144, 7
    %v146 = vsub.s32 1, %v145
    %v147 = vrot.slane %v138, %v146
    %v148 = vlaneseq
    %v149 = vshrl.u32 %v148, 7
    %v150 = vsub.s32 2, %v149
    %v151 = vrot.slane %v138, %v150
    %v152 = vlaneseq
    %v153 = vshrl.u32 %v152, 7
    %v154 = vsub.s32 3, %v153
    %v155 = vrot.slane %v138, %v154
    %v162 = vunpack.c.l.b16 %v136
    %v163 = vunpack.c.h.b16 %v136
    %v164 = vunpack.c.l.b16 %v137
    %v165 = vunpack.c.h.b16 %v137
    %v166 = vpack.c.b16 %v162, %v162
    %v167 = vpack.c.b16 %v163, %v163
    %v168 = vpack.c.b16 %v164, %v164
    %v169 = vpack.c.b16 %v165, %v165
    %vm170 = vcmask 64512
    %v172 = vsel %vm170, %v132, 0
    %v175 = vsel %vm170, %v133, 0
    %v178 = vsel %vm170, %v134, 0
    %v181 = vsel %vm170, %v135, 0
    %vm183 = vcmask 1043456
    %v185 = vsel %vm183, %v166, 0
    %v188 = vsel %vm183, %v167, 0
    %v191 = vsel %vm183, %v168, 0
    %v194 = vsel %vm183, %v169, 0
    %196 = vmatprep.subr.bf16.mxu0 %v188
    %197 = vmatpush1.bf16.msra.mxu0 %v185
    %198 = vmatprep.subr.bf16.mxu0 0
    %199 = vmatpush1.bf16.msra.mxu0 0
    %200 = vmatprep.subr.bf16.mxu0 0
    %201 = vmatpush1.bf16.msra.mxu0 0
    %202 = vmatprep.subr.bf16.mxu0 0
    %203 = vmatpush1.bf16.msra.mxu0 0
    %204 = vmatprep.subr.bf16.mxu0 0
    %205 = vmatpush1.bf16.msra.mxu0 0
    %206 = vmatprep.subr.bf16.mxu0 0
    %207 = vmatpush1.bf16.msra.mxu0 0
    %208 = vmatprep.subr.bf16.mxu0 0
    %209 = vmatpush1.bf16.msra.mxu0 0
    %210 = vmatprep.subr.bf16.mxu0 0
    %211 = vmatpush1.bf16.msra.mxu0 0
    %212 = vmatprep.subr.bf16.mxu0 0
    %213 = vmatpush1.bf16.msra.mxu0 0
    %214 = vmatprep.subr.bf16.mxu0 0
    %215 = vmatpush1.bf16.msra.mxu0 0
    %216 = vmatprep.subr.bf16.mxu0 0
    %217 = vmatpush1.bf16.msra.mxu0 0
    %218 = vmatprep.subr.bf16.mxu0 0
    %219 = vmatpush1.bf16.msra.mxu0 0
    %220 = vmatprep.subr.bf16.mxu0 0
    %221 = vmatpush1.bf16.msra.mxu0 0
    %222 = vmatprep.subr.bf16.mxu0 0
    %223 = vmatpush1.bf16.msra.mxu0 0
    %224 = vmatprep.subr.bf16.mxu0 0
    %225 = vmatpush1.bf16.msra.mxu0 0
    %226 = vmatprep.subr.bf16.mxu0 0
    %227 = vmatpush1.bf16.msra.mxu0 0
    %228 = vmatprep.mubr.bf16.mxu0 0
    %229 = vmatmul.mubr.bf16.gmra.mrb[0].mxu0 %v172
    %v230 = vpop.f32.mrb[0].mxu0
    %v231 = vadd.f32 %v143, %v230
    %v232 = vpop.f32.mrb[0].mxu0
    %v233 = vadd.f32 %v147, %v232
    %v234 = vpop.f32.mrb[0].mxu0
    %v235 = vadd.f32 %v143, %v234
    %v236 = vpop.f32.mrb[0].mxu0
    %v237 = vadd.f32 %v147, %v236
    %238 = vmatprep.mubr.bf16.mxu0 0
    %239 = vmatmul.mubr.bf16.gmra.mrb[0].mxu0 %v175
    %v240 = vpop.f32.mrb[0].mxu0
    %v241 = vadd.f32 %v143, %v240
    %v242 = vpop.f32.mrb[0].mxu0
    %v243 = vadd.f32 %v147, %v242
    %v244 = vpop.f32.mrb[0].mxu0
    %v245 = vadd.f32 %v143, %v244
    %v246 = vpop.f32.mrb[0].mxu0
    %v247 = vadd.f32 %v147, %v246
    %248 = vmatprep.mubr.bf16.mxu0 0
    %249 = vmatmul.mubr.bf16.gmra.mrb[0].mxu0 %v178
    %v250 = vpop.f32.mrb[0].mxu0
    %v251 = vadd.f32 %v143, %v250
    %v252 = vpop.f32.mrb[0].mxu0
    %v253 = vadd.f32 %v147, %v252
    %v254 = vpop.f32.mrb[0].mxu0
    %v255 = vadd.f32 %v143, %v254
    %v256 = vpop.f32.mrb[0].mxu0
    %v257 = vadd.f32 %v147, %v256
    %258 = vmatprep.mubr.bf16.mxu0 0
    %259 = vmatmul.mubr.bf16.gmra.mrb[0].mxu0 %v181
    %v260 = vpop.f32.mrb[0].mxu0
    %v261 = vadd.f32 %v143, %v260
    %v262 = vpop.f32.mrb[0].mxu0
    %v263 = vadd.f32 %v147, %v262
    %v264 = vpop.f32.mrb[0].mxu0
    %v265 = vadd.f32 %v143, %v264
    %v266 = vpop.f32.mrb[0].mxu0
    %v267 = vadd.f32 %v147, %v266
    %268 = vdwg.mxu0
    %269 = vmatprep.subr.bf16.mxu0 %v194
    %270 = vmatpush1.bf16.msra.mxu0 %v191
    %271 = vmatprep.subr.bf16.mxu0 0
    %272 = vmatpush1.bf16.msra.mxu0 0
    %273 = vmatprep.subr.bf16.mxu0 0
    %274 = vmatpush1.bf16.msra.mxu0 0
    %275 = vmatprep.subr.bf16.mxu0 0
    %276 = vmatpush1.bf16.msra.mxu0 0
    %277 = vmatprep.subr.bf16.mxu0 0
    %278 = vmatpush1.bf16.msra.mxu0 0
    %279 = vmatprep.subr.bf16.mxu0 0
    %280 = vmatpush1.bf16.msra.mxu0 0
    %281 = vmatprep.subr.bf16.mxu0 0
    %282 = vmatpush1.bf16.msra.mxu0 0
    %283 = vmatprep.subr.bf16.mxu0 0
    %284 = vmatpush1.bf16.msra.mxu0 0
    %285 = vmatprep.subr.bf16.mxu0 0
    %286 = vmatpush1.bf16.msra.mxu0 0
    %287 = vmatprep.subr.bf16.mxu0 0
    %288 = vmatpush1.bf16.msra.mxu0 0
    %289 = vmatprep.subr.bf16.mxu0 0
    %290 = vmatpush1.bf16.msra.mxu0 0
    %291 = vmatprep.subr.bf16.mxu0 0
    %292 = vmatpush1.bf16.msra.mxu0 0
    %293 = vmatprep.subr.bf16.mxu0 0
    %294 = vmatpush1.bf16.msra.mxu0 0
    %295 = vmatprep.subr.bf16.mxu0 0
    %296 = vmatpush1.bf16.msra.mxu0 0
    %297 = vmatprep.subr.bf16.mxu0 0
    %298 = vmatpush1.bf16.msra.mxu0 0
    %299 = vmatprep.subr.bf16.mxu0 0
    %300 = vmatpush1.bf16.msra.mxu0 0
    %301 = vmatprep.mubr.bf16.mxu0 0
    %302 = vmatmul.mubr.bf16.gmra.mrb[0].mxu0 %v172
    %v303 = vpop.f32.mrb[0].mxu0
    %v304 = vadd.f32 %v151, %v303
    %v305 = vpop.f32.mrb[0].mxu0
    %v306 = vadd.f32 %v155, %v305
    %v307 = vpop.f32.mrb[0].mxu0
    %v308 = vadd.f32 %v151, %v307
    %v309 = vpop.f32.mrb[0].mxu0
    %v310 = vadd.f32 %v155, %v309
    %311 = vmatprep.mubr.bf16.mxu0 0
    %312 = vmatmul.mubr.bf16.gmra.mrb[0].mxu0 %v175
    %v313 = vpop.f32.mrb[0].mxu0
    %v314 = vadd.f32 %v151, %v313
    %v315 = vpop.f32.mrb[0].mxu0
    %v316 = vadd.f32 %v155, %v315
    %v317 = vpop.f32.mrb[0].mxu0
    %v318 = vadd.f32 %v151, %v317
    %v319 = vpop.f32.mrb[0].mxu0
    %v320 = vadd.f32 %v155, %v319
    %321 = vmatprep.mubr.bf16.mxu0 0
    %322 = vmatmul.mubr.bf16.gmra.mrb[0].mxu0 %v178
    %v323 = vpop.f32.mrb[0].mxu0
    %v324 = vadd.f32 %v151, %v323
    %v325 = vpop.f32.mrb[0].mxu0
    %v326 = vadd.f32 %v155, %v325
    %v327 = vpop.f32.mrb[0].mxu0
    %v328 = vadd.f32 %v151, %v327
    %v329 = vpop.f32.mrb[0].mxu0
    %v330 = vadd.f32 %v155, %v329
    %331 = vmatprep.mubr.bf16.mxu0 0
    %332 = vmatmul.mubr.bf16.gmra.mrb[0].mxu0 %v181
    %v333 = vpop.f32.mrb[0].mxu0
    %v334 = vadd.f32 %v151, %v333
    %v335 = vpop.f32.mrb[0].mxu0
    %v336 = vadd.f32 %v155, %v335
    %v337 = vpop.f32.mrb[0].mxu0
    %v338 = vadd.f32 %v151, %v337
    %v339 = vpop.f32.mrb[0].mxu0
    %v340 = vadd.f32 %v155, %v339
    %341 = vdwg.mxu0
    %342 = vst [vmem:[#allocation2] sm:$0xff] %v231
    %343 = vst [vmem:[#allocation2 + $0x8] sm:$0xff] %v233
    %344 = vst [vmem:[#allocation2 + $0x10] sm:$0xff] %v304
    %345 = vst [vmem:[#allocation2 + $0x18] sm:$0xff] %v306
    %346 = vst [vmem:[#allocation2 + $0x20] sm:$0xff] %v235
    %347 = vst [vmem:[#allocation2 + $0x28] sm:$0xff] %v237
    %348 = vst [vmem:[#allocation2 + $0x30] sm:$0xff] %v308
    %349 = vst [vmem:[#allocation2 + $0x38] sm:$0xff] %v310
    %350 = vst [vmem:[#allocation2 + $0x40] sm:$0xff] %v241
    %351 = vst [vmem:[#allocation2 + $0x48] sm:$0xff] %v243
    %352 = vst [vmem:[#allocation2 + $0x50] sm:$0xff] %v314
    %353 = vst [vmem:[#allocation2 + $0x58] sm:$0xff] %v316
    %354 = vst [vmem:[#allocation2 + $0x60] sm:$0xff] %v245
    %355 = vst [vmem:[#allocation2 + $0x68] sm:$0xff] %v247
    %356 = vst [vmem:[#allocation2 + $0x70] sm:$0xff] %v318
    %357 = vst [vmem:[#allocation2 + $0x78] sm:$0xff] %v320
    %358 = vst [vmem:[#allocation2 + $0x80] sm:$0xff] %v251
    %359 = vst [vmem:[#allocation2 + $0x88] sm:$0xff] %v253
    %360 = vst [vmem:[#allocation2 + $0x90] sm:$0xff] %v324
    %361 = vst [vmem:[#allocation2 + $0x98] sm:$0xff] %v326
    %362 = vst [vmem:[#allocation2 + $0xa0] sm:$0xff] %v255
    %363 = vst [vmem:[#allocation2 + $0xa8] sm:$0xff] %v257
    %364 = vst [vmem:[#allocation2 + $0xb0] sm:$0xff] %v328
    %365 = vst [vmem:[#allocation2 + $0xb8] sm:$0xff] %v330
    %366 = vst [vmem:[#allocation2 + $0xc0] sm:$0xff] %v261
    %367 = vst [vmem:[#allocation2 + $0xc8] sm:$0xff] %v263
    %368 = vst [vmem:[#allocation2 + $0xd0] sm:$0xff] %v334
    %369 = vst [vmem:[#allocation2 + $0xd8] sm:$0xff] %v336
    %370 = vst [vmem:[#allocation2 + $0xe0] sm:$0xff] %v265
    %371 = vst [vmem:[#allocation2 + $0xe8] sm:$0xff] %v267
    %372 = vst [vmem:[#allocation2 + $0xf0] sm:$0xff] %v338
    %373 = vst [vmem:[#allocation2 + $0xf8] sm:$0xff] %v340
    %v374 = vld [vmem:[#allocation2] sm:$0xff]
    %v375 = vld [vmem:[#allocation2 + $0x8] sm:$0xff]
    %v376 = vld [vmem:[#allocation2 + $0x10] sm:$0xff]
    %v377 = vld [vmem:[#allocation2 + $0x18] sm:$0xff]
    %v378 = vpack.c.bf16 %v122, %v122
    %v379 = vld [vmem:[%s2] sm:$0xff]
    %v380 = vld [vmem:[%s2 + $0x8] sm:$0xff]
    %v381 = vld [vmem:[%s2 + $0x10] sm:$0xff]
    %v382 = vld [vmem:[%s2 + $0x18] sm:$0xff]
    %v383 = vld [vmem:[%s2 + $0x20] sm:$0xff]
    %v384 = vld [vmem:[%s2 + $0x28] sm:$0xff]
    %v385 = vld [vmem:[%s2 + $0x30] sm:$0xff]
    %v386 = vld [vmem:[%s2 + $0x38] sm:$0xff]
    %v387 = vld [vmem:[%s2 + $0x40] sm:$0xff]
    %v388 = vld [vmem:[%s2 + $0x48] sm:$0xff]
    %v389 = vld [vmem:[%s2 + $0x50] sm:$0xff]
    %v390 = vld [vmem:[%s2 + $0x58] sm:$0xff]
    %v391 = vld [vmem:[%s2 + $0x60] sm:$0xff]
    %v392 = vld [vmem:[%s2 + $0x68] sm:$0xff]
    %v393 = vld [vmem:[%s2 + $0x70] sm:$0xff]
    %v394 = vld [vmem:[%s2 + $0x78] sm:$0xff]
    %v395 = vld [vmem:[%s2 + $0x80] sm:$0xff]
    %v396 = vld [vmem:[%s2 + $0x88] sm:$0xff]
    %v397 = vld [vmem:[%s2 + $0x90] sm:$0xff]
    %v398 = vld [vmem:[%s2 + $0x98] sm:$0xff]
    %v399 = vld [vmem:[%s2 + $0xa0] sm:$0xff]
    %v400 = vld [vmem:[%s2 + $0xa8] sm:$0xff]
    %v401 = vld [vmem:[%s2 + $0xb0] sm:$0xff]
    %v402 = vld [vmem:[%s2 + $0xb8] sm:$0xff]
    %v403 = vld [vmem:[%s2 + $0xc0] sm:$0xff]
    %v404 = vld [vmem:[%s2 + $0xc8] sm:$0xff]
    %v405 = vld [vmem:[%s2 + $0xd0] sm:$0xff]
    %v406 = vld [vmem:[%s2 + $0xd8] sm:$0xff]
    %v407 = vld [vmem:[%s2 + $0xe0] sm:$0xff]
    %v408 = vld [vmem:[%s2 + $0xe8] sm:$0xff]
    %v409 = vld [vmem:[%s2 + $0xf0] sm:$0xff]
    %v410 = vld [vmem:[%s2 + $0xf8] sm:$0xff]
    %v443 = vunpack.c.l.b16 %v379
    %v444 = vunpack.c.h.b16 %v379
    %v445 = vunpack.c.l.b16 %v380
    %v446 = vunpack.c.h.b16 %v380
    %v447 = vunpack.c.l.b16 %v381
    %v448 = vunpack.c.h.b16 %v381
    %v449 = vunpack.c.l.b16 %v382
    %v450 = vunpack.c.h.b16 %v382
    %v451 = vunpack.c.l.b16 %v383
    %v452 = vunpack.c.h.b16 %v383
    %v453 = vunpack.c.l.b16 %v384
    %v454 = vunpack.c.h.b16 %v384
    %v455 = vunpack.c.l.b16 %v385
    %v456 = vunpack.c.h.b16 %v385
    %v457 = vunpack.c.l.b16 %v386
    %v458 = vunpack.c.h.b16 %v386
    %v459 = vunpack.c.l.b16 %v387
    %v460 = vunpack.c.h.b16 %v387
    %v461 = vunpack.c.l.b16 %v388
    %v462 = vunpack.c.h.b16 %v388
    %v463 = vunpack.c.l.b16 %v389
    %v464 = vunpack.c.h.b16 %v389
    %v465 = vunpack.c.l.b16 %v390
    %v466 = vunpack.c.h.b16 %v390
    %v467 = vunpack.c.l.b16 %v391
    %v468 = vunpack.c.h.b16 %v391
    %v469 = vunpack.c.l.b16 %v392
    %v470 = vunpack.c.h.b16 %v392
    %v471 = vunpack.c.l.b16 %v393
    %v472 = vunpack.c.h.b16 %v393
    %v473 = vunpack.c.l.b16 %v394
    %v474 = vunpack.c.h.b16 %v394
    %v475 = vunpack.c.l.b16 %v395
    %v476 = vunpack.c.h.b16 %v395
    %v477 = vunpack.c.l.b16 %v396
    %v478 = vunpack.c.h.b16 %v396
    %v479 = vunpack.c.l.b16 %v397
    %v480 = vunpack.c.h.b16 %v397
    %v481 = vunpack.c.l.b16 %v398
    %v482 = vunpack.c.h.b16 %v398
    %v483 = vunpack.c.l.b16 %v399
    %v484 = vunpack.c.h.b16 %v399
    %v485 = vunpack.c.l.b16 %v400
    %v486 = vunpack.c.h.b16 %v400
    %v487 = vunpack.c.l.b16 %v401
    %v488 = vunpack.c.h.b16 %v401
    %v489 = vunpack.c.l.b16 %v402
    %v490 = vunpack.c.h.b16 %v402
    %v491 = vunpack.c.l.b16 %v403
    %v492 = vunpack.c.h.b16 %v403
    %v493 = vunpack.c.l.b16 %v404
    %v494 = vunpack.c.h.b16 %v404
    %v495 = vunpack.c.l.b16 %v405
    %v496 = vunpack.c.h.b16 %v405
    %v497 = vunpack.c.l.b16 %v406
    %v498 = vunpack.c.h.b16 %v406
    %v499 = vunpack.c.l.b16 %v407
    %v500 = vunpack.c.h.b16 %v407
    %v501 = vunpack.c.l.b16 %v408
    %v502 = vunpack.c.h.b16 %v408
    %v503 = vunpack.c.l.b16 %v409
    %v504 = vunpack.c.h.b16 %v409
    %v505 = vunpack.c.l.b16 %v410
    %v506 = vunpack.c.h.b16 %v410
    %v507 = vpack.c.b16 %v447, %v443
    %v508 = vpack.c.b16 %v448, %v444
    %v509 = vpack.c.b16 %v449, %v445
    %v510 = vpack.c.b16 %v450, %v446
    %v511 = vpack.c.b16 %v455, %v451
    %v512 = vpack.c.b16 %v456, %v452
    %v513 = vpack.c.b16 %v457, %v453
    %v514 = vpack.c.b16 %v458, %v454
    %v515 = vpack.c.b16 %v463, %v459
    %v516 = vpack.c.b16 %v464, %v460
    %v517 = vpack.c.b16 %v465, %v461
    %v518 = vpack.c.b16 %v466, %v462
    %v519 = vpack.c.b16 %v471, %v467
    %v520 = vpack.c.b16 %v472, %v468
    %v521 = vpack.c.b16 %v473, %v469
    %v522 = vpack.c.b16 %v474, %v470
    %v523 = vpack.c.b16 %v479, %v475
    %v524 = vpack.c.b16 %v480, %v476
    %v525 = vpack.c.b16 %v481, %v477
    %v526 = vpack.c.b16 %v482, %v478
    %v527 = vpack.c.b16 %v487, %v483
    %v528 = vpack.c.b16 %v488, %v484
    %v529 = vpack.c.b16 %v489, %v485
    %v530 = vpack.c.b16 %v490, %v486
    %v531 = vpack.c.b16 %v495, %v491
    %v532 = vpack.c.b16 %v496, %v492
    %v533 = vpack.c.b16 %v497, %v493
    %v534 = vpack.c.b16 %v498, %v494
    %v535 = vpack.c.b16 %v503, %v499
    %v536 = vpack.c.b16 %v504, %v500
    %v537 = vpack.c.b16 %v505, %v501
    %v538 = vpack.c.b16 %v506, %v502
    %571 = vmatprep.subr.bf16.mxu0 %v508
    %572 = vmatpush1.bf16.msra.mxu0 %v507
    %573 = vmatprep.subr.bf16.mxu0 %v512
    %574 = vmatpush1.bf16.msra.mxu0 %v511
    %575 = vmatprep.subr.bf16.mxu0 %v516
    %576 = vmatpush1.bf16.msra.mxu0 %v515
    %577 = vmatprep.subr.bf16.mxu0 %v520
    %578 = vmatpush1.bf16.msra.mxu0 %v519
    %579 = vmatprep.subr.bf16.mxu0 %v524
    %580 = vmatpush1.bf16.msra.mxu0 %v523
    %581 = vmatprep.subr.bf16.mxu0 %v528
    %582 = vmatpush1.bf16.msra.mxu0 %v527
    %583 = vmatprep.subr.bf16.mxu0 %v532
    %584 = vmatpush1.bf16.msra.mxu0 %v531
    %585 = vmatprep.subr.bf16.mxu0 %v536
    %586 = vmatpush1.bf16.msra.mxu0 %v535
    %587 = vmatprep.subr.bf16.mxu0 0
    %588 = vmatpush1.bf16.msra.mxu0 0
    %589 = vmatprep.subr.bf16.mxu0 0
    %590 = vmatpush1.bf16.msra.mxu0 0
    %591 = vmatprep.subr.bf16.mxu0 0
    %592 = vmatpush1.bf16.msra.mxu0 0
    %593 = vmatprep.subr.bf16.mxu0 0
    %594 = vmatpush1.bf16.msra.mxu0 0
    %595 = vmatprep.subr.bf16.mxu0 0
    %596 = vmatpush1.bf16.msra.mxu0 0
    %597 = vmatprep.subr.bf16.mxu0 0
    %598 = vmatpush1.bf16.msra.mxu0 0
    %599 = vmatprep.subr.bf16.mxu0 0
    %600 = vmatpush1.bf16.msra.mxu0 0
    %601 = vmatprep.subr.bf16.mxu0 0
    %602 = vmatpush1.bf16.msra.mxu0 0
    %603 = vmatprep.mubr.bf16.mxu0 0
    %604 = vmatmul.mubr.bf16.gmra.mrb[0].mxu0 %v378
    %v605 = vpop.f32.mrb[0].mxu0
    %v606 = vadd.f32 0.0, %v605
    %v607 = vpop.f32.mrb[0].mxu0
    %v608 = vadd.f32 0.0, %v607
    %v609 = vpop.f32.mrb[0].mxu0
    %v610 = vpop.f32.mrb[0].mxu0
    %611 = vdwg.mxu0
    %612 = vmatprep.subr.bf16.mxu0 %v510
    %613 = vmatpush1.bf16.msra.mxu0 %v509
    %614 = vmatprep.subr.bf16.mxu0 %v514
    %615 = vmatpush1.bf16.msra.mxu0 %v513
    %616 = vmatprep.subr.bf16.mxu0 %v518
    %617 = vmatpush1.bf16.msra.mxu0 %v517
    %618 = vmatprep.subr.bf16.mxu0 %v522
    %619 = vmatpush1.bf16.msra.mxu0 %v521
    %620 = vmatprep.subr.bf16.mxu0 %v526
    %621 = vmatpush1.bf16.msra.mxu0 %v525
    %622 = vmatprep.subr.bf16.mxu0 %v530
    %623 = vmatpush1.bf16.msra.mxu0 %v529
    %624 = vmatprep.subr.bf16.mxu0 %v534
    %625 = vmatpush1.bf16.msra.mxu0 %v533
    %626 = vmatprep.subr.bf16.mxu0 %v538
    %627 = vmatpush1.bf16.msra.mxu0 %v537
    %628 = vmatprep.subr.bf16.mxu0 0
    %629 = vmatpush1.bf16.msra.mxu0 0
    %630 = vmatprep.subr.bf16.mxu0 0
    %631 = vmatpush1.bf16.msra.mxu0 0
    %632 = vmatprep.subr.bf16.mxu0 0
    %633 = vmatpush1.bf16.msra.mxu0 0
    %634 = vmatprep.subr.bf16.mxu0 0
    %635 = vmatpush1.bf16.msra.mxu0 0
    %636 = vmatprep.subr.bf16.mxu0 0
    %637 = vmatpush1.bf16.msra.mxu0 0
    %638 = vmatprep.subr.bf16.mxu0 0
    %639 = vmatpush1.bf16.msra.mxu0 0
    %640 = vmatprep.subr.bf16.mxu0 0
    %641 = vmatpush1.bf16.msra.mxu0 0
    %642 = vmatprep.subr.bf16.mxu0 0
    %643 = vmatpush1.bf16.msra.mxu0 0
    %644 = vmatprep.mubr.bf16.mxu0 0
    %645 = vmatmul.mubr.bf16.gmra.mrb[0].mxu0 %v378
    %v646 = vpop.f32.mrb[0].mxu0
    %v647 = vadd.f32 0.0, %v646
    %v648 = vpop.f32.mrb[0].mxu0
    %v649 = vadd.f32 0.0, %v648
    %v650 = vpop.f32.mrb[0].mxu0
    %v651 = vpop.f32.mrb[0].mxu0
    %652 = vdwg.mxu0
    %v653 = vadd.f32 %v374, %v606
    %v654 = vadd.f32 %v375, %v608
    %v655 = vadd.f32 %v376, %v647
    %v656 = vadd.f32 %v377, %v649
    %v657 = vxor.u32 %v653, 2147483648
    %v658 = vxor.u32 %v654, 2147483648
    %v659 = vxor.u32 %v655, 2147483648
    %v660 = vmul.f32 %v657, 1.442695
    %v661 = vpow.pop %v660
    %v662 = vmul.f32 %v658, 1.442695
    %v663 = vpow.pop %v662
    %v664 = vmul.f32 %v659, 1.442695
    %v665 = vpow.pop %v664
    %v666 = vadd.f32 %v661, 1.0
    %v667 = vadd.f32 %v663, 1.0
    %v668 = vadd.f32 %v665, 1.0
    %v669 = vrcp.pop %v666
    %v670 = vmul.f32 1.0, %v669
    %v671 = vrcp.pop %v667
    %v672 = vmul.f32 1.0, %v671
    %v673 = vrcp.pop %v668
    %v674 = vmul.f32 1.0, %v673
    %v675 = vtanh.pop %v656
    %v676 = vmul.f32 %v672, %v123
    %v677 = vmul.f32 %v670, %v675
    %v678 = vadd.f32 %v676, %v677
    %v679 = vtanh.pop %v678
    %v680 = vmul.f32 %v674, %v679
    %681 = vst [vmem:[#allocation3] sm:$0xff] %v680
    %s682 = scalar_lea.vmem [#allocation2], 32
    %v683 = vld [vmem:[%s682] sm:$0xff]
    %v684 = vld [vmem:[%s682 + $0x8] sm:$0xff]
    %v685 = vld [vmem:[%s682 + $0x10] sm:$0xff]
    %v686 = vld [vmem:[%s682 + $0x18] sm:$0xff]
    %v687 = vpack.c.bf16 %v680, %v680
    %v688 = vld [vmem:[%s2] sm:$0xff]
    %v689 = vld [vmem:[%s2 + $0x8] sm:$0xff]
    %v690 = vld [vmem:[%s2 + $0x10] sm:$0xff]
    %v691 = vld [vmem:[%s2 + $0x18] sm:$0xff]
    %v692 = vld [vmem:[%s2 + $0x20] sm:$0xff]
    %v693 = vld [vmem:[%s2 + $0x28] sm:$0xff]
    %v694 = vld [vmem:[%s2 + $0x30] sm:$0xff]
    %v695 = vld [vmem:[%s2 + $0x38] sm:$0xff]
    %v696 = vld [vmem:[%s2 + $0x40] sm:$0xff]
    %v697 = vld [vmem:[%s2 + $0x48] sm:$0xff]
    %v698 = vld [vmem:[%s2 + $0x50] sm:$0xff]
    %v699 = vld [vmem:[%s2 + $0x58] sm:$0xff]
    %v700 = vld [vmem:[%s2 + $0x60] sm:$0xff]
    %v701 = vld [vmem:[%s2 + $0x68] sm:$0xff]
    %v702 = vld [vmem:[%s2 + $0x70] sm:$0xff]
    %v703 = vld [vmem:[%s2 + $0x78] sm:$0xff]
    %v704 = vld [vmem:[%s2 + $0x80] sm:$0xff]
    %v705 = vld [vmem:[%s2 + $0x88] sm:$0xff]
    %v706 = vld [vmem:[%s2 + $0x90] sm:$0xff]
    %v707 = vld [vmem:[%s2 + $0x98] sm:$0xff]
    %v708 = vld [vmem:[%s2 + $0xa0] sm:$0xff]
    %v709 = vld [vmem:[%s2 + $0xa8] sm:$0xff]
    %v710 = vld [vmem:[%s2 + $0xb0] sm:$0xff]
    %v711 = vld [vmem:[%s2 + $0xb8] sm:$0xff]
    %v712 = vld [vmem:[%s2 + $0xc0] sm:$0xff]
    %v713 = vld [vmem:[%s2 + $0xc8] sm:$0xff]
    %v714 = vld [vmem:[%s2 + $0xd0] sm:$0xff]
    %v715 = vld [vmem:[%s2 + $0xd8] sm:$0xff]
    %v716 = vld [vmem:[%s2 + $0xe0] sm:$0xff]
    %v717 = vld [vmem:[%s2 + $0xe8] sm:$0xff]
    %v718 = vld [vmem:[%s2 + $0xf0] sm:$0xff]
    %v719 = vld [vmem:[%s2 + $0xf8] sm:$0xff]
    %v752 = vunpack.c.l.b16 %v688
    %v753 = vunpack.c.h.b16 %v688
    %v754 = vunpack.c.l.b16 %v689
    %v755 = vunpack.c.h.b16 %v689
    %v756 = vunpack.c.l.b16 %v690
    %v757 = vunpack.c.h.b16 %v690
    %v758 = vunpack.c.l.b16 %v691
    %v759 = vunpack.c.h.b16 %v691
    %v760 = vunpack.c.l.b16 %v692
    %v761 = vunpack.c.h.b16 %v692
    %v762 = vunpack.c.l.b16 %v693
    %v763 = vunpack.c.h.b16 %v693
    %v764 = vunpack.c.l.b16 %v694
    %v765 = vunpack.c.h.b16 %v694
    %v766 = vunpack.c.l.b16 %v695
    %v767 = vunpack.c.h.b16 %v695
    %v768 = vunpack.c.l.b16 %v696
    %v769 = vunpack.c.h.b16 %v696
    %v770 = vunpack.c.l.b16 %v697
    %v771 = vunpack.c.h.b16 %v697
    %v772 = vunpack.c.l.b16 %v698
    %v773 = vunpack.c.h.b16 %v698
    %v774 = vunpack.c.l.b16 %v699
    %v775 = vunpack.c.h.b16 %v699
    %v776 = vunpack.c.l.b16 %v700
    %v777 = vunpack.c.h.b16 %v700
    %v778 = vunpack.c.l.b16 %v701
    %v779 = vunpack.c.h.b16 %v701
    %v780 = vunpack.c.l.b16 %v702
    %v781 = vunpack.c.h.b16 %v702
    %v782 = vunpack.c.l.b16 %v703
    %v783 = vunpack.c.h.b16 %v703
    %v784 = vunpack.c.l.b16 %v704
    %v785 = vunpack.c.h.b16 %v704
    %v786 = vunpack.c.l.b16 %v705
    %v787 = vunpack.c.h.b16 %v705
    %v788 = vunpack.c.l.b16 %v706
    %v789 = vunpack.c.h.b16 %v706
    %v790 = vunpack.c.l.b16 %v707
    %v791 = vunpack.c.h.b16 %v707
    %v792 = vunpack.c.l.b16 %v708
    %v793 = vunpack.c.h.b16 %v708
    %v794 = vunpack.c.l.b16 %v709
    %v795 = vunpack.c.h.b16 %v709
    %v796 = vunpack.c.l.b16 %v710
    %v797 = vunpack.c.h.b16 %v710
    %v798 = vunpack.c.l.b16 %v711
    %v799 = vunpack.c.h.b16 %v711
    %v800 = vunpack.c.l.b16 %v712
    %v801 = vunpack.c.h.b16 %v712
    %v802 = vunpack.c.l.b16 %v713
    %v803 = vunpack.c.h.b16 %v713
    %v804 = vunpack.c.l.b16 %v714
    %v805 = vunpack.c.h.b16 %v714
    %v806 = vunpack.c.l.b16 %v715
    %v807 = vunpack.c.h.b16 %v715
    %v808 = vunpack.c.l.b16 %v716
    %v809 = vunpack.c.h.b16 %v716
    %v810 = vunpack.c.l.b16 %v717
    %v811 = vunpack.c.h.b16 %v717
    %v812 = vunpack.c.l.b16 %v718
    %v813 = vunpack.c.h.b16 %v718
    %v814 = vunpack.c.l.b16 %v719
    %v815 = vunpack.c.h.b16 %v719
    %v816 = vpack.c.b16 %v756, %v752
    %v817 = vpack.c.b16 %v757, %v753
    %v818 = vpack.c.b16 %v758, %v754
    %v819 = vpack.c.b16 %v759, %v755
    %v820 = vpack.c.b16 %v764, %v760
    %v821 = vpack.c.b16 %v765, %v761
    %v822 = vpack.c.b16 %v766, %v762
    %v823 = vpack.c.b16 %v767, %v763
    %v824 = vpack.c.b16 %v772, %v768
    %v825 = vpack.c.b16 %v773, %v769
    %v826 = vpack.c.b16 %v774, %v770
    %v827 = vpack.c.b16 %v775, %v771
    %v828 = vpack.c.b16 %v780, %v776
    %v829 = vpack.c.b16 %v781, %v777
    %v830 = vpack.c.b16 %v782, %v778
    %v831 = vpack.c.b16 %v783, %v779
    %v832 = vpack.c.b16 %v788, %v784
    %v833 = vpack.c.b16 %v789, %v785
    %v834 = vpack.c.b16 %v790, %v786
    %v835 = vpack.c.b16 %v791, %v787
    %v836 = vpack.c.b16 %v796, %v792
    %v837 = vpack.c.b16 %v797, %v793
    %v838 = vpack.c.b16 %v798, %v794
    %v839 = vpack.c.b16 %v799, %v795
    %v840 = vpack.c.b16 %v804, %v800
    %v841 = vpack.c.b16 %v805, %v801
    %v842 = vpack.c.b16 %v806, %v802
    %v843 = vpack.c.b16 %v807, %v803
    %v844 = vpack.c.b16 %v812, %v808
    %v845 = vpack.c.b16 %v813, %v809
    %v846 = vpack.c.b16 %v814, %v810
    %v847 = vpack.c.b16 %v815, %v811
    %880 = vmatprep.subr.bf16.mxu0 %v817
    %881 = vmatpush1.bf16.msra.mxu0 %v816
    %882 = vmatprep.subr.bf16.mxu0 %v821
    %883 = vmatpush1.bf16.msra.mxu0 %v820
    %884 = vmatprep.subr.bf16.mxu0 %v825
    %885 = vmatpush1.bf16.msra.mxu0 %v824
    %886 = vmatprep.subr.bf16.mxu0 %v829
    %887 = vmatpush1.bf16.msra.mxu0 %v828
    %888 = vmatprep.subr.bf16.mxu0 %v833
    %889 = vmatpush1.bf16.msra.mxu0 %v832
    %890 = vmatprep.subr.bf16.mxu0 %v837
    %891 = vmatpush1.bf16.msra.mxu0 %v836
    %892 = vmatprep.subr.bf16.mxu0 %v841
    %893 = vmatpush1.bf16.msra.mxu0 %v840
    %894 = vmatprep.subr.bf16.mxu0 %v845
    %895 = vmatpush1.bf16.msra.mxu0 %v844
    %896 = vmatprep.subr.bf16.mxu0 0
    %897 = vmatpush1.bf16.msra.mxu0 0
    %898 = vmatprep.subr.bf16.mxu0 0
    %899 = vmatpush1.bf16.msra.mxu0 0
    %900 = vmatprep.subr.bf16.mxu0 0
    %901 = vmatpush1.bf16.msra.mxu0 0
    %902 = vmatprep.subr.bf16.mxu0 0
    %903 = vmatpush1.bf16.msra.mxu0 0
    %904 = vmatprep.subr.bf16.mxu0 0
    %905 = vmatpush1.bf16.msra.mxu0 0
    %906 = vmatprep.subr.bf16.mxu0 0
    %907 = vmatpush1.bf16.msra.mxu0 0
    %908 = vmatprep.subr.bf16.mxu0 0
    %909 = vmatpush1.bf16.msra.mxu0 0
    %910 = vmatprep.subr.bf16.mxu0 0
    %911 = vmatpush1.bf16.msra.mxu0 0
    %912 = vmatprep.mubr.bf16.mxu0 0
    %913 = vmatmul.mubr.bf16.gmra.mrb[0].mxu0 %v687
    %v914 = vpop.f32.mrb[0].mxu0
    %v915 = vadd.f32 0.0, %v914
    %v916 = vpop.f32.mrb[0].mxu0
    %v917 = vadd.f32 0.0, %v916
    %v918 = vpop.f32.mrb[0].mxu0
    %v919 = vpop.f32.mrb[0].mxu0
    %920 = vdwg.mxu0
    %921 = vmatprep.subr.bf16.mxu0 %v819
    %922 = vmatpush1.bf16.msra.mxu0 %v818
    %923 = vmatprep.subr.bf16.mxu0 %v823
    %924 = vmatpush1.bf16.msra.mxu0 %v822
    %925 = vmatprep.subr.bf16.mxu0 %v827
    %926 = vmatpush1.bf16.msra.mxu0 %v826
    %927 = vmatprep.subr.bf16.mxu0 %v831
    %928 = vmatpush1.bf16.msra.mxu0 %v830
    %929 = vmatprep.subr.bf16.mxu0 %v835
    %930 = vmatpush1.bf16.msra.mxu0 %v834
    %931 = vmatprep.subr.bf16.mxu0 %v839
    %932 = vmatpush1.bf16.msra.mxu0 %v838
    %933 = vmatprep.subr.bf16.mxu0 %v843
    %934 = vmatpush1.bf16.msra.mxu0 %v842
    %935 = vmatprep.subr.bf16.mxu0 %v847
    %936 = vmatpush1.bf16.msra.mxu0 %v846
    %937 = vmatprep.subr.bf16.mxu0 0
    %938 = vmatpush1.bf16.msra.mxu0 0
    %939 = vmatprep.subr.bf16.mxu0 0
    %940 = vmatpush1.bf16.msra.mxu0 0
    %941 = vmatprep.subr.bf16.mxu0 0
    %942 = vmatpush1.bf16.msra.mxu0 0
    %943 = vmatprep.subr.bf16.mxu0 0
    %944 = vmatpush1.bf16.msra.mxu0 0
    %945 = vmatprep.subr.bf16.mxu0 0
    %946 = vmatpush1.bf16.msra.mxu0 0
    %947 = vmatprep.subr.bf16.mxu0 0
    %948 = vmatpush1.bf16.msra.mxu0 0
    %949 = vmatprep.subr.bf16.mxu0 0
    %950 = vmatpush1.bf16.msra.mxu0 0
    %951 = vmatprep.subr.bf16.mxu0 0
    %952 = vmatpush1.bf16.msra.mxu0 0
    %953 = vmatprep.mubr.bf16.mxu0 0
    %954 = vmatmul.mubr.bf16.gmra.mrb[0].mxu0 %v687
    %v955 = vpop.f32.mrb[0].mxu0
    %v956 = vadd.f32 0.0, %v955
    %v957 = vpop.f32.mrb[0].mxu0
    %v958 = vadd.f32 0.0, %v957
    %v959 = vpop.f32.mrb[0].mxu0
    %v960 = vpop.f32.mrb[0].mxu0
    %961 = vdwg.mxu0
    %v962 = vadd.f32 %v683, %v915
    %v963 = vadd.f32 %v684, %v917
    %v964 = vadd.f32 %v685, %v956
    %v965 = vadd.f32 %v686, %v958
    %v966 = vxor.u32 %v962, 2147483648
    %v967 = vxor.u32 %v963, 2147483648
    %v968 = vxor.u32 %v964, 2147483648
    %v969 = vmul.f32 %v966, 1.442695
    %v970 = vpow.pop %v969
    %v971 = vmul.f32 %v967, 1.442695
    %v972 = vpow.pop %v971
    %v973 = vmul.f32 %v968, 1.442695
    %v974 = vpow.pop %v973
    %v975 = vadd.f32 %v970, 1.0
    %v976 = vadd.f32 %v972, 1.0
    %v977 = vadd.f32 %v974, 1.0
    %v978 = vrcp.pop %v975
    %v979 = vmul.f32 1.0, %v978
    %v980 = vrcp.pop %v976
    %v981 = vmul.f32 1.0, %v980
    %v982 = vrcp.pop %v977
    %v983 = vmul.f32 1.0, %v982
    %v984 = vtanh.pop %v965
    %v985 = vmul.f32 %v981, %v678
    %v986 = vmul.f32 %v979, %v984
    %v987 = vadd.f32 %v985, %v986
    %v988 = vtanh.pop %v987
    %v989 = vmul.f32 %v983, %v988
    %s990 = scalar_lea.vmem [#allocation3], 8
    %991 = vst [vmem:[%s990] sm:$0xff] %v989
    %s992 = scalar_lea.vmem [#allocation2], 64
    %v993 = vld [vmem:[%s992] sm:$0xff]
    %v994 = vld [vmem:[%s992 + $0x8] sm:$0xff]
    %v995 = vld [vmem:[%s992 + $0x10] sm:$0xff]
    %v996 = vld [vmem:[%s992 + $0x18] sm:$0xff]
    %v997 = vpack.c.bf16 %v989, %v989
    %v998 = vld [vmem:[%s2] sm:$0xff]
    %v999 = vld [vmem:[%s2 + $0x8] sm:$0xff]
    %v1000 = vld [vmem:[%s2 + $0x10] sm:$0xff]
    %v1001 = vld [vmem:[%s2 + $0x18] sm:$0xff]
    %v1002 = vld [vmem:[%s2 + $0x20] sm:$0xff]
    %v1003 = vld [vmem:[%s2 + $0x28] sm:$0xff]
    %v1004 = vld [vmem:[%s2 + $0x30] sm:$0xff]
    %v1005 = vld [vmem:[%s2 + $0x38] sm:$0xff]
    %v1006 = vld [vmem:[%s2 + $0x40] sm:$0xff]
    %v1007 = vld [vmem:[%s2 + $0x48] sm:$0xff]
    %v1008 = vld [vmem:[%s2 + $0x50] sm:$0xff]
    %v1009 = vld [vmem:[%s2 + $0x58] sm:$0xff]
    %v1010 = vld [vmem:[%s2 + $0x60] sm:$0xff]
    %v1011 = vld [vmem:[%s2 + $0x68] sm:$0xff]
    %v1012 = vld [vmem:[%s2 + $0x70] sm:$0xff]
    %v1013 = vld [vmem:[%s2 + $0x78] sm:$0xff]
    %v1014 = vld [vmem:[%s2 + $0x80] sm:$0xff]
    %v1015 = vld [vmem:[%s2 + $0x88] sm:$0xff]
    %v1016 = vld [vmem:[%s2 + $0x90] sm:$0xff]
    %v1017 = vld [vmem:[%s2 + $0x98] sm:$0xff]
    %v1018 = vld [vmem:[%s2 + $0xa0] sm:$0xff]
    %v1019 = vld [vmem:[%s2 + $0xa8] sm:$0xff]
    %v1020 = vld [vmem:[%s2 + $0xb0] sm:$0xff]
    %v1021 = vld [vmem:[%s2 + $0xb8] sm:$0xff]
    %v1022 = vld [vmem:[%s2 + $0xc0] sm:$0xff]
    %v1023 = vld [vmem:[%s2 + $0xc8] sm:$0xff]
    %v1024 = vld [vmem:[%s2 + $0xd0] sm:$0xff]
    %v1025 = vld [vmem:[%s2 + $0xd8] sm:$0xff]
    %v1026 = vld [vmem:[%s2 + $0xe0] sm:$0xff]
    %v1027 = vld [vmem:[%s2 + $0xe8] sm:$0xff]
    %v1028 = vld [vmem:[%s2 + $0xf0] sm:$0xff]
    %v1029 = vld [vmem:[%s2 + $0xf8] sm:$0xff]
    %v1062 = vunpack.c.l.b16 %v998
    %v1063 = vunpack.c.h.b16 %v998
    %v1064 = vunpack.c.l.b16 %v999
    %v1065 = vunpack.c.h.b16 %v999
    %v1066 = vunpack.c.l.b16 %v1000
    %v1067 = vunpack.c.h.b16 %v1000
    %v1068 = vunpack.c.l.b16 %v1001
    %v1069 = vunpack.c.h.b16 %v1001
    %v1070 = vunpack.c.l.b16 %v1002
    %v1071 = vunpack.c.h.b16 %v1002
    %v1072 = vunpack.c.l.b16 %v1003
    %v1073 = vunpack.c.h.b16 %v1003
    %v1074 = vunpack.c.l.b16 %v1004
    %v1075 = vunpack.c.h.b16 %v1004
    %v1076 = vunpack.c.l.b16 %v1005
    %v1077 = vunpack.c.h.b16 %v1005
    %v1078 = vunpack.c.l.b16 %v1006
    %v1079 = vunpack.c.h.b16 %v1006
    %v1080 = vunpack.c.l.b16 %v1007
    %v1081 = vunpack.c.h.b16 %v1007
    %v1082 = vunpack.c.l.b16 %v1008
    %v1083 = vunpack.c.h.b16 %v1008
    %v1084 = vunpack.c.l.b16 %v1009
    %v1085 = vunpack.c.h.b16 %v1009
    %v1086 = vunpack.c.l.b16 %v1010
    %v1087 = vunpack.c.h.b16 %v1010
    %v1088 = vunpack.c.l.b16 %v1011
    %v1089 = vunpack.c.h.b16 %v1011
    %v1090 = vunpack.c.l.b16 %v1012
    %v1091 = vunpack.c.h.b16 %v1012
    %v1092 = vunpack.c.l.b16 %v1013
    %v1093 = vunpack.c.h.b16 %v1013
    %v1094 = vunpack.c.l.b16 %v1014
    %v1095 = vunpack.c.h.b16 %v1014
    %v1096 = vunpack.c.l.b16 %v1015
    %v1097 = vunpack.c.h.b16 %v1015
    %v1098 = vunpack.c.l.b16 %v1016
    %v1099 = vunpack.c.h.b16 %v1016
    %v1100 = vunpack.c.l.b16 %v1017
    %v1101 = vunpack.c.h.b16 %v1017
    %v1102 = vunpack.c.l.b16 %v1018
    %v1103 = vunpack.c.h.b16 %v1018
    %v1104 = vunpack.c.l.b16 %v1019
    %v1105 = vunpack.c.h.b16 %v1019
    %v1106 = vunpack.c.l.b16 %v1020
    %v1107 = vunpack.c.h.b16 %v1020
    %v1108 = vunpack.c.l.b16 %v1021
    %v1109 = vunpack.c.h.b16 %v1021
    %v1110 = vunpack.c.l.b16 %v1022
    %v1111 = vunpack.c.h.b16 %v1022
    %v1112 = vunpack.c.l.b16 %v1023
    %v1113 = vunpack.c.h.b16 %v1023
    %v1114 = vunpack.c.l.b16 %v1024
    %v1115 = vunpack.c.h.b16 %v1024
    %v1116 = vunpack.c.l.b16 %v1025
    %v1117 = vunpack.c.h.b16 %v1025
    %v1118 = vunpack.c.l.b16 %v1026
    %v1119 = vunpack.c.h.b16 %v1026
    %v1120 = vunpack.c.l.b16 %v1027
    %v1121 = vunpack.c.h.b16 %v1027
    %v1122 = vunpack.c.l.b16 %v1028
    %v1123 = vunpack.c.h.b16 %v1028
    %v1124 = vunpack.c.l.b16 %v1029
    %v1125 = vunpack.c.h.b16 %v1029
    %v1126 = vpack.c.b16 %v1066, %v1062
    %v1127 = vpack.c.b16 %v1067, %v1063
    %v1128 = vpack.c.b16 %v1068, %v1064
    %v1129 = vpack.c.b16 %v1069, %v1065
    %v1130 = vpack.c.b16 %v1074, %v1070
    %v1131 = vpack.c.b16 %v1075, %v1071
    %v1132 = vpack.c.b16 %v1076, %v1072
    %v1133 = vpack.c.b16 %v1077, %v1073
    %v1134 = vpack.c.b16 %v1082, %v1078
    %v1135 = vpack.c.b16 %v1083, %v1079
    %v1136 = vpack.c.b16 %v1084, %v1080
    %v1137 = vpack.c.b16 %v1085, %v1081
    %v1138 = vpack.c.b16 %v1090, %v1086
    %v1139 = vpack.c.b16 %v1091, %v1087
    %v1140 = vpack.c.b16 %v1092, %v1088
    %v1141 = vpack.c.b16 %v1093, %v1089
    %v1142 = vpack.c.b16 %v1098, %v1094
    %v1143 = vpack.c.b16 %v1099, %v1095
    %v1144 = vpack.c.b16 %v1100, %v1096
    %v1145 = vpack.c.b16 %v1101, %v1097
    %v1146 = vpack.c.b16 %v1106, %v1102
    %v1147 = vpack.c.b16 %v1107, %v1103
    %v1148 = vpack.c.b16 %v1108, %v1104
    %v1149 = vpack.c.b16 %v1109, %v1105
    %v1150 = vpack.c.b16 %v1114, %v1110
    %v1151 = vpack.c.b16 %v1115, %v1111
    %v1152 = vpack.c.b16 %v1116, %v1112
    %v1153 = vpack.c.b16 %v1117, %v1113
    %v1154 = vpack.c.b16 %v1122, %v1118
    %v1155 = vpack.c.b16 %v1123, %v1119
    %v1156 = vpack.c.b16 %v1124, %v1120
    %v1157 = vpack.c.b16 %v1125, %v1121
    %1190 = vmatprep.subr.bf16.mxu0 %v1127
    %1191 = vmatpush1.bf16.msra.mxu0 %v1126
    %1192 = vmatprep.subr.bf16.mxu0 %v1131
    %1193 = vmatpush1.bf16.msra.mxu0 %v1130
    %1194 = vmatprep.subr.bf16.mxu0 %v1135
    %1195 = vmatpush1.bf16.msra.mxu0 %v1134
    %1196 = vmatprep.subr.bf16.mxu0 %v1139
    %1197 = vmatpush1.bf16.msra.mxu0 %v1138
    %1198 = vmatprep.subr.bf16.mxu0 %v1143
    %1199 = vmatpush1.bf16.msra.mxu0 %v1142
    %1200 = vmatprep.subr.bf16.mxu0 %v1147
    %1201 = vmatpush1.bf16.msra.mxu0 %v1146
    %1202 = vmatprep.subr.bf16.mxu0 %v1151
    %1203 = vmatpush1.bf16.msra.mxu0 %v1150
    %1204 = vmatprep.subr.bf16.mxu0 %v1155
    %1205 = vmatpush1.bf16.msra.mxu0 %v1154
    %1206 = vmatprep.subr.bf16.mxu0 0
    %1207 = vmatpush1.bf16.msra.mxu0 0
    %1208 = vmatprep.subr.bf16.mxu0 0
    %1209 = vmatpush1.bf16.msra.mxu0 0
    %1210 = vmatprep.subr.bf16.mxu0 0
    %1211 = vmatpush1.bf16.msra.mxu0 0
    %1212 = vmatprep.subr.bf16.mxu0 0
    %1213 = vmatpush1.bf16.msra.mxu0 0
    %1214 = vmatprep.subr.bf16.mxu0 0
    %1215 = vmatpush1.bf16.msra.mxu0 0
    %1216 = vmatprep.subr.bf16.mxu0 0
    %1217 = vmatpush1.bf16.msra.mxu0 0
    %1218 = vmatprep.subr.bf16.mxu0 0
    %1219 = vmatpush1.bf16.msra.mxu0 0
    %1220 = vmatprep.subr.bf16.mxu0 0
    %1221 = vmatpush1.bf16.msra.mxu0 0
    %1222 = vmatprep.mubr.bf16.mxu0 0
    %1223 = vmatmul.mubr.bf16.gmra.mrb[0].mxu0 %v997
    %v1224 = vpop.f32.mrb[0].mxu0
    %v1225 = vadd.f32 0.0, %v1224
    %v1226 = vpop.f32.mrb[0].mxu0
    %v1227 = vadd.f32 0.0, %v1226
    %v1228 = vpop.f32.mrb[0].mxu0
    %v1229 = vpop.f32.mrb[0].mxu0
    %1230 = vdwg.mxu0
    %1231 = vmatprep.subr.bf16.mxu0 %v1129
    %1232 = vmatpush1.bf16.msra.mxu0 %v1128
    %1233 = vmatprep.subr.bf16.mxu0 %v1133
    %1234 = vmatpush1.bf16.msra.mxu0 %v1132
    %1235 = vmatprep.subr.bf16.mxu0 %v1137
    %1236 = vmatpush1.bf16.msra.mxu0 %v1136
    %1237 = vmatprep.subr.bf16.mxu0 %v1141
    %1238 = vmatpush1.bf16.msra.mxu0 %v1140
    %1239 = vmatprep.subr.bf16.mxu0 %v1145
    %1240 = vmatpush1.bf16.msra.mxu0 %v1144
    %1241 = vmatprep.subr.bf16.mxu0 %v1149
    %1242 = vmatpush1.bf16.msra.mxu0 %v1148
    %1243 = vmatprep.subr.bf16.mxu0 %v1153
    %1244 = vmatpush1.bf16.msra.mxu0 %v1152
    %1245 = vmatprep.subr.bf16.mxu0 %v1157
    %1246 = vmatpush1.bf16.msra.mxu0 %v1156
    %1247 = vmatprep.subr.bf16.mxu0 0
    %1248 = vmatpush1.bf16.msra.mxu0 0
    %1249 = vmatprep.subr.bf16.mxu0 0
    %1250 = vmatpush1.bf16.msra.mxu0 0
    %1251 = vmatprep.subr.bf16.mxu0 0
    %1252 = vmatpush1.bf16.msra.mxu0 0
    %1253 = vmatprep.subr.bf16.mxu0 0
    %1254 = vmatpush1.bf16.msra.mxu0 0
    %1255 = vmatprep.subr.bf16.mxu0 0
    %1256 = vmatpush1.bf16.msra.mxu0 0
    %1257 = vmatprep.subr.bf16.mxu0 0
    %1258 = vmatpush1.bf16.msra.mxu0 0
    %1259 = vmatprep.subr.bf16.mxu0 0
    %1260 = vmatpush1.bf16.msra.mxu0 0
    %1261 = vmatprep.subr.bf16.mxu0 0
    %1262 = vmatpush1.bf16.msra.mxu0 0
    %1263 = vmatprep.mubr.bf16.mxu0 0
    %1264 = vmatmul.mubr.bf16.gmra.mrb[0].mxu0 %v997
    %v1265 = vpop.f32.mrb[0].mxu0
    %v1266 = vadd.f32 0.0, %v1265
    %v1267 = vpop.f32.mrb[0].mxu0
    %v1268 = vadd.f32 0.0, %v1267
    %v1269 = vpop.f32.mrb[0].mxu0
    %v1270 = vpop.f32.mrb[0].mxu0
    %1271 = vdwg.mxu0
    %v1272 = vadd.f32 %v993, %v1225
    %v1273 = vadd.f32 %v994, %v1227
    %v1274 = vadd.f32 %v995, %v1266
    %v1275 = vadd.f32 %v996, %v1268
    %v1276 = vxor.u32 %v1272, 2147483648
    %v1277 = vxor.u32 %v1273, 2147483648
    %v1278 = vxor.u32 %v1274, 2147483648
    %v1279 = vmul.f32 %v1276, 1.442695
    %v1280 = vpow.pop %v1279
    %v1281 = vmul.f32 %v1277, 1.442695
    %v1282 = vpow.pop %v1281
    %v1283 = vmul.f32 %v1278, 1.442695
    %v1284 = vpow.pop %v1283
    %v1285 = vadd.f32 %v1280, 1.0
    %v1286 = vadd.f32 %v1282, 1.0
    %v1287 = vadd.f32 %v1284, 1.0
    %v1288 = vrcp.pop %v1285
    %v1289 = vmul.f32 1.0, %v1288
    %v1290 = vrcp.pop %v1286
    %v1291 = vmul.f32 1.0, %v1290
    %v1292 = vrcp.pop %v1287
    %v1293 = vmul.f32 1.0, %v1292
    %v1294 = vtanh.pop %v1275
    %v1295 = vmul.f32 %v1291, %v987
    %v1296 = vmul.f32 %v1289, %v1294
    %v1297 = vadd.f32 %v1295, %v1296
    %v1298 = vtanh.pop %v1297
    %v1299 = vmul.f32 %v1293, %v1298
    %s1300 = scalar_lea.vmem [#allocation3], 16
    %1301 = vst [vmem:[%s1300] sm:$0xff] %v1299
    %s1302 = scalar_lea.vmem [#allocation2], 96
    %v1303 = vld [vmem:[%s1302] sm:$0xff]
    %v1304 = vld [vmem:[%s1302 + $0x8] sm:$0xff]
    %v1305 = vld [vmem:[%s1302 + $0x10] sm:$0xff]
    %v1306 = vld [vmem:[%s1302 + $0x18] sm:$0xff]
    %v1307 = vpack.c.bf16 %v1299, %v1299
    %v1308 = vld [vmem:[%s2] sm:$0xff]
    %v1309 = vld [vmem:[%s2 + $0x8] sm:$0xff]
    %v1310 = vld [vmem:[%s2 + $0x10] sm:$0xff]
    %v1311 = vld [vmem:[%s2 + $0x18] sm:$0xff]
    %v1312 = vld [vmem:[%s2 + $0x20] sm:$0xff]
    %v1313 = vld [vmem:[%s2 + $0x28] sm:$0xff]
    %v1314 = vld [vmem:[%s2 + $0x30] sm:$0xff]
    %v1315 = vld [vmem:[%s2 + $0x38] sm:$0xff]
    %v1316 = vld [vmem:[%s2 + $0x40] sm:$0xff]
    %v1317 = vld [vmem:[%s2 + $0x48] sm:$0xff]
    %v1318 = vld [vmem:[%s2 + $0x50] sm:$0xff]
    %v1319 = vld [vmem:[%s2 + $0x58] sm:$0xff]
    %v1320 = vld [vmem:[%s2 + $0x60] sm:$0xff]
    %v1321 = vld [vmem:[%s2 + $0x68] sm:$0xff]
    %v1322 = vld [vmem:[%s2 + $0x70] sm:$0xff]
    %v1323 = vld [vmem:[%s2 + $0x78] sm:$0xff]
    %v1324 = vld [vmem:[%s2 + $0x80] sm:$0xff]
    %v1325 = vld [vmem:[%s2 + $0x88] sm:$0xff]
    %v1326 = vld [vmem:[%s2 + $0x90] sm:$0xff]
    %v1327 = vld [vmem:[%s2 + $0x98] sm:$0xff]
    %v1328 = vld [vmem:[%s2 + $0xa0] sm:$0xff]
    %v1329 = vld [vmem:[%s2 + $0xa8] sm:$0xff]
    %v1330 = vld [vmem:[%s2 + $0xb0] sm:$0xff]
    %v1331 = vld [vmem:[%s2 + $0xb8] sm:$0xff]
    %v1332 = vld [vmem:[%s2 + $0xc0] sm:$0xff]
    %v1333 = vld [vmem:[%s2 + $0xc8] sm:$0xff]
    %v1334 = vld [vmem:[%s2 + $0xd0] sm:$0xff]
    %v1335 = vld [vmem:[%s2 + $0xd8] sm:$0xff]
    %v1336 = vld [vmem:[%s2 + $0xe0] sm:$0xff]
    %v1337 = vld [vmem:[%s2 + $0xe8] sm:$0xff]
    %v1338 = vld [vmem:[%s2 + $0xf0] sm:$0xff]
    %v1339 = vld [vmem:[%s2 + $0xf8] sm:$0xff]
    %v1372 = vunpack.c.l.b16 %v1308
    %v1373 = vunpack.c.h.b16 %v1308
    %v1374 = vunpack.c.l.b16 %v1309
    %v1375 = vunpack.c.h.b16 %v1309
    %v1376 = vunpack.c.l.b16 %v1310
    %v1377 = vunpack.c.h.b16 %v1310
    %v1378 = vunpack.c.l.b16 %v1311
    %v1379 = vunpack.c.h.b16 %v1311
    %v1380 = vunpack.c.l.b16 %v1312
    %v1381 = vunpack.c.h.b16 %v1312
    %v1382 = vunpack.c.l.b16 %v1313
    %v1383 = vunpack.c.h.b16 %v1313
    %v1384 = vunpack.c.l.b16 %v1314
    %v1385 = vunpack.c.h.b16 %v1314
    %v1386 = vunpack.c.l.b16 %v1315
    %v1387 = vunpack.c.h.b16 %v1315
    %v1388 = vunpack.c.l.b16 %v1316
    %v1389 = vunpack.c.h.b16 %v1316
    %v1390 = vunpack.c.l.b16 %v1317
    %v1391 = vunpack.c.h.b16 %v1317
    %v1392 = vunpack.c.l.b16 %v1318
    %v1393 = vunpack.c.h.b16 %v1318
    %v1394 = vunpack.c.l.b16 %v1319
    %v1395 = vunpack.c.h.b16 %v1319
    %v1396 = vunpack.c.l.b16 %v1320
    %v1397 = vunpack.c.h.b16 %v1320
    %v1398 = vunpack.c.l.b16 %v1321
    %v1399 = vunpack.c.h.b16 %v1321
    %v1400 = vunpack.c.l.b16 %v1322
    %v1401 = vunpack.c.h.b16 %v1322
    %v1402 = vunpack.c.l.b16 %v1323
    %v1403 = vunpack.c.h.b16 %v1323
    %v1404 = vunpack.c.l.b16 %v1324
    %v1405 = vunpack.c.h.b16 %v1324
    %v1406 = vunpack.c.l.b16 %v1325
    %v1407 = vunpack.c.h.b16 %v1325
    %v1408 = vunpack.c.l.b16 %v1326
    %v1409 = vunpack.c.h.b16 %v1326
    %v1410 = vunpack.c.l.b16 %v1327
    %v1411 = vunpack.c.h.b16 %v1327
    %v1412 = vunpack.c.l.b16 %v1328
    %v1413 = vunpack.c.h.b16 %v1328
    %v1414 = vunpack.c.l.b16 %v1329
    %v1415 = vunpack.c.h.b16 %v1329
    %v1416 = vunpack.c.l.b16 %v1330
    %v1417 = vunpack.c.h.b16 %v1330
    %v1418 = vunpack.c.l.b16 %v1331
    %v1419 = vunpack.c.h.b16 %v1331
    %v1420 = vunpack.c.l.b16 %v1332
    %v1421 = vunpack.c.h.b16 %v1332
    %v1422 = vunpack.c.l.b16 %v1333
    %v1423 = vunpack.c.h.b16 %v1333
    %v1424 = vunpack.c.l.b16 %v1334
    %v1425 = vunpack.c.h.b16 %v1334
    %v1426 = vunpack.c.l.b16 %v1335
    %v1427 = vunpack.c.h.b16 %v1335
    %v1428 = vunpack.c.l.b16 %v1336
    %v1429 = vunpack.c.h.b16 %v1336
    %v1430 = vunpack.c.l.b16 %v1337
    %v1431 = vunpack.c.h.b16 %v1337
    %v1432 = vunpack.c.l.b16 %v1338
    %v1433 = vunpack.c.h.b16 %v1338
    %v1434 = vunpack.c.l.b16 %v1339
    %v1435 = vunpack.c.h.b16 %v1339
    %v1436 = vpack.c.b16 %v1376, %v1372
    %v1437 = vpack.c.b16 %v1377, %v1373
    %v1438 = vpack.c.b16 %v1378, %v1374
    %v1439 = vpack.c.b16 %v1379, %v1375
    %v1440 = vpack.c.b16 %v1384, %v1380
    %v1441 = vpack.c.b16 %v1385, %v1381
    %v1442 = vpack.c.b16 %v1386, %v1382
    %v1443 = vpack.c.b16 %v1387, %v1383
    %v1444 = vpack.c.b16 %v1392, %v1388
    %v1445 = vpack.c.b16 %v1393, %v1389
    %v1446 = vpack.c.b16 %v1394, %v1390
    %v1447 = vpack.c.b16 %v1395, %v1391
    %v1448 = vpack.c.b16 %v1400, %v1396
    %v1449 = vpack.c.b16 %v1401, %v1397
    %v1450 = vpack.c.b16 %v1402, %v1398
    %v1451 = vpack.c.b16 %v1403, %v1399
    %v1452 = vpack.c.b16 %v1408, %v1404
    %v1453 = vpack.c.b16 %v1409, %v1405
    %v1454 = vpack.c.b16 %v1410, %v1406
    %v1455 = vpack.c.b16 %v1411, %v1407
    %v1456 = vpack.c.b16 %v1416, %v1412
    %v1457 = vpack.c.b16 %v1417, %v1413
    %v1458 = vpack.c.b16 %v1418, %v1414
    %v1459 = vpack.c.b16 %v1419, %v1415
    %v1460 = vpack.c.b16 %v1424, %v1420
    %v1461 = vpack.c.b16 %v1425, %v1421
    %v1462 = vpack.c.b16 %v1426, %v1422
    %v1463 = vpack.c.b16 %v1427, %v1423
    %v1464 = vpack.c.b16 %v1432, %v1428
    %v1465 = vpack.c.b16 %v1433, %v1429
    %v1466 = vpack.c.b16 %v1434, %v1430
    %v1467 = vpack.c.b16 %v1435, %v1431
    %1500 = vmatprep.subr.bf16.mxu0 %v1437
    %1501 = vmatpush1.bf16.msra.mxu0 %v1436
    %1502 = vmatprep.subr.bf16.mxu0 %v1441
    %1503 = vmatpush1.bf16.msra.mxu0 %v1440
    %1504 = vmatprep.subr.bf16.mxu0 %v1445
    %1505 = vmatpush1.bf16.msra.mxu0 %v1444
    %1506 = vmatprep.subr.bf16.mxu0 %v1449
    %1507 = vmatpush1.bf16.msra.mxu0 %v1448
    %1508 = vmatprep.subr.bf16.mxu0 %v1453
    %1509 = vmatpush1.bf16.msra.mxu0 %v1452
    %1510 = vmatprep.subr.bf16.mxu0 %v1457
    %1511 = vmatpush1.bf16.msra.mxu0 %v1456
    %1512 = vmatprep.subr.bf16.mxu0 %v1461
    %1513 = vmatpush1.bf16.msra.mxu0 %v1460
    %1514 = vmatprep.subr.bf16.mxu0 %v1465
    %1515 = vmatpush1.bf16.msra.mxu0 %v1464
    %1516 = vmatprep.subr.bf16.mxu0 0
    %1517 = vmatpush1.bf16.msra.mxu0 0
    %1518 = vmatprep.subr.bf16.mxu0 0
    %1519 = vmatpush1.bf16.msra.mxu0 0
    %1520 = vmatprep.subr.bf16.mxu0 0
    %1521 = vmatpush1.bf16.msra.mxu0 0
    %1522 = vmatprep.subr.bf16.mxu0 0
    %1523 = vmatpush1.bf16.msra.mxu0 0
    %1524 = vmatprep.subr.bf16.mxu0 0
    %1525 = vmatpush1.bf16.msra.mxu0 0
    %1526 = vmatprep.subr.bf16.mxu0 0
    %1527 = vmatpush1.bf16.msra.mxu0 0
    %1528 = vmatprep.subr.bf16.mxu0 0
    %1529 = vmatpush1.bf16.msra.mxu0 0
    %1530 = vmatprep.subr.bf16.mxu0 0
    %1531 = vmatpush1.bf16.msra.mxu0 0
    %1532 = vmatprep.mubr.bf16.mxu0 0
    %1533 = vmatmul.mubr.bf16.gmra.mrb[0].mxu0 %v1307
    %v1534 = vpop.f32.mrb[0].mxu0
    %v1535 = vadd.f32 0.0, %v1534
    %v1536 = vpop.f32.mrb[0].mxu0
    %v1537 = vadd.f32 0.0, %v1536
    %v1538 = vpop.f32.mrb[0].mxu0
    %v1539 = vpop.f32.mrb[0].mxu0
    %1540 = vdwg.mxu0
    %1541 = vmatprep.subr.bf16.mxu0 %v1439
    %1542 = vmatpush1.bf16.msra.mxu0 %v1438
    %1543 = vmatprep.subr.bf16.mxu0 %v1443
    %1544 = vmatpush1.bf16.msra.mxu0 %v1442
    %1545 = vmatprep.subr.bf16.mxu0 %v1447
    %1546 = vmatpush1.bf16.msra.mxu0 %v1446
    %1547 = vmatprep.subr.bf16.mxu0 %v1451
    %1548 = vmatpush1.bf16.msra.mxu0 %v1450
    %1549 = vmatprep.subr.bf16.mxu0 %v1455
    %1550 = vmatpush1.bf16.msra.mxu0 %v1454
    %1551 = vmatprep.subr.bf16.mxu0 %v1459
    %1552 = vmatpush1.bf16.msra.mxu0 %v1458
    %1553 = vmatprep.subr.bf16.mxu0 %v1463
    %1554 = vmatpush1.bf16.msra.mxu0 %v1462
    %1555 = vmatprep.subr.bf16.mxu0 %v1467
    %1556 = vmatpush1.bf16.msra.mxu0 %v1466
    %1557 = vmatprep.subr.bf16.mxu0 0
    %1558 = vmatpush1.bf16.msra.mxu0 0
    %1559 = vmatprep.subr.bf16.mxu0 0
    %1560 = vmatpush1.bf16.msra.mxu0 0
    %1561 = vmatprep.subr.bf16.mxu0 0
    %1562 = vmatpush1.bf16.msra.mxu0 0
    %1563 = vmatprep.subr.bf16.mxu0 0
    %1564 = vmatpush1.bf16.msra.mxu0 0
    %1565 = vmatprep.subr.bf16.mxu0 0
    %1566 = vmatpush1.bf16.msra.mxu0 0
    %1567 = vmatprep.subr.bf16.mxu0 0
    %1568 = vmatpush1.bf16.msra.mxu0 0
    %1569 = vmatprep.subr.bf16.mxu0 0
    %1570 = vmatpush1.bf16.msra.mxu0 0
    %1571 = vmatprep.subr.bf16.mxu0 0
    %1572 = vmatpush1.bf16.msra.mxu0 0
    %1573 = vmatprep.mubr.bf16.mxu0 0
    %1574 = vmatmul.mubr.bf16.gmra.mrb[0].mxu0 %v1307
    %v1575 = vpop.f32.mrb[0].mxu0
    %v1576 = vadd.f32 0.0, %v1575
    %v1577 = vpop.f32.mrb[0].mxu0
    %v1578 = vadd.f32 0.0, %v1577
    %v1579 = vpop.f32.mrb[0].mxu0
    %v1580 = vpop.f32.mrb[0].mxu0
    %1581 = vdwg.mxu0
    %v1582 = vadd.f32 %v1303, %v1535
    %v1583 = vadd.f32 %v1304, %v1537
    %v1584 = vadd.f32 %v1305, %v1576
    %v1585 = vadd.f32 %v1306, %v1578
    %v1586 = vxor.u32 %v1582, 2147483648
    %v1587 = vxor.u32 %v1583, 2147483648
    %v1588 = vxor.u32 %v1584, 2147483648
    %v1589 = vmul.f32 %v1586, 1.442695
    %v1590 = vpow.pop %v1589
    %v1591 = vmul.f32 %v1587, 1.442695
    %v1592 = vpow.pop %v1591
    %v1593 = vmul.f32 %v1588, 1.442695
    %v1594 = vpow.pop %v1593
    %v1595 = vadd.f32 %v1590, 1.0
    %v1596 = vadd.f32 %v1592, 1.0
    %v1597 = vadd.f32 %v1594, 1.0
    %v1598 = vrcp.pop %v1595
    %v1599 = vmul.f32 1.0, %v1598
    %v1600 = vrcp.pop %v1596
    %v1601 = vmul.f32 1.0, %v1600
    %v1602 = vrcp.pop %v1597
    %v1603 = vmul.f32 1.0, %v1602
    %v1604 = vtanh.pop %v1585
    %v1605 = vmul.f32 %v1601, %v1297
    %v1606 = vmul.f32 %v1599, %v1604
    %v1607 = vadd.f32 %v1605, %v1606
    %v1608 = vtanh.pop %v1607
    %v1609 = vmul.f32 %v1603, %v1608
    %s1610 = scalar_lea.vmem [#allocation3], 24
    %1611 = vst [vmem:[%s1610] sm:$0xff] %v1609
    %s1612 = scalar_lea.vmem [#allocation2], 128
    %v1613 = vld [vmem:[%s1612] sm:$0xff]
    %v1614 = vld [vmem:[%s1612 + $0x8] sm:$0xff]
    %v1615 = vld [vmem:[%s1612 + $0x10] sm:$0xff]
    %v1616 = vld [vmem:[%s1612 + $0x18] sm:$0xff]
    %v1617 = vpack.c.bf16 %v1609, %v1609
    %v1618 = vld [vmem:[%s2] sm:$0xff]
    %v1619 = vld [vmem:[%s2 + $0x8] sm:$0xff]
    %v1620 = vld [vmem:[%s2 + $0x10] sm:$0xff]
    %v1621 = vld [vmem:[%s2 + $0x18] sm:$0xff]
    %v1622 = vld [vmem:[%s2 + $0x20] sm:$0xff]
    %v1623 = vld [vmem:[%s2 + $0x28] sm:$0xff]
    %v1624 = vld [vmem:[%s2 + $0x30] sm:$0xff]
    %v1625 = vld [vmem:[%s2 + $0x38] sm:$0xff]
    %v1626 = vld [vmem:[%s2 + $0x40] sm:$0xff]
    %v1627 = vld [vmem:[%s2 + $0x48] sm:$0xff]
    %v1628 = vld [vmem:[%s2 + $0x50] sm:$0xff]
    %v1629 = vld [vmem:[%s2 + $0x58] sm:$0xff]
    %v1630 = vld [vmem:[%s2 + $0x60] sm:$0xff]
    %v1631 = vld [vmem:[%s2 + $0x68] sm:$0xff]
    %v1632 = vld [vmem:[%s2 + $0x70] sm:$0xff]
    %v1633 = vld [vmem:[%s2 + $0x78] sm:$0xff]
    %v1634 = vld [vmem:[%s2 + $0x80] sm:$0xff]
    %v1635 = vld [vmem:[%s2 + $0x88] sm:$0xff]
    %v1636 = vld [vmem:[%s2 + $0x90] sm:$0xff]
    %v1637 = vld [vmem:[%s2 + $0x98] sm:$0xff]
    %v1638 = vld [vmem:[%s2 + $0xa0] sm:$0xff]
    %v1639 = vld [vmem:[%s2 + $0xa8] sm:$0xff]
    %v1640 = vld [vmem:[%s2 + $0xb0] sm:$0xff]
    %v1641 = vld [vmem:[%s2 + $0xb8] sm:$0xff]
    %v1642 = vld [vmem:[%s2 + $0xc0] sm:$0xff]
    %v1643 = vld [vmem:[%s2 + $0xc8] sm:$0xff]
    %v1644 = vld [vmem:[%s2 + $0xd0] sm:$0xff]
    %v1645 = vld [vmem:[%s2 + $0xd8] sm:$0xff]
    %v1646 = vld [vmem:[%s2 + $0xe0] sm:$0xff]
    %v1647 = vld [vmem:[%s2 + $0xe8] sm:$0xff]
    %v1648 = vld [vmem:[%s2 + $0xf0] sm:$0xff]
    %v1649 = vld [vmem:[%s2 + $0xf8] sm:$0xff]
    %v1682 = vunpack.c.l.b16 %v1618
    %v1683 = vunpack.c.h.b16 %v1618
    %v1684 = vunpack.c.l.b16 %v1619
    %v1685 = vunpack.c.h.b16 %v1619
    %v1686 = vunpack.c.l.b16 %v1620
    %v1687 = vunpack.c.h.b16 %v1620
    %v1688 = vunpack.c.l.b16 %v1621
    %v1689 = vunpack.c.h.b16 %v1621
    %v1690 = vunpack.c.l.b16 %v1622
    %v1691 = vunpack.c.h.b16 %v1622
    %v1692 = vunpack.c.l.b16 %v1623
    %v1693 = vunpack.c.h.b16 %v1623
    %v1694 = vunpack.c.l.b16 %v1624
    %v1695 = vunpack.c.h.b16 %v1624
    %v1696 = vunpack.c.l.b16 %v1625
    %v1697 = vunpack.c.h.b16 %v1625
    %v1698 = vunpack.c.l.b16 %v1626
    %v1699 = vunpack.c.h.b16 %v1626
    %v1700 = vunpack.c.l.b16 %v1627
    %v1701 = vunpack.c.h.b16 %v1627
    %v1702 = vunpack.c.l.b16 %v1628
    %v1703 = vunpack.c.h.b16 %v1628
    %v1704 = vunpack.c.l.b16 %v1629
    %v1705 = vunpack.c.h.b16 %v1629
    %v1706 = vunpack.c.l.b16 %v1630
    %v1707 = vunpack.c.h.b16 %v1630
    %v1708 = vunpack.c.l.b16 %v1631
    %v1709 = vunpack.c.h.b16 %v1631
    %v1710 = vunpack.c.l.b16 %v1632
    %v1711 = vunpack.c.h.b16 %v1632
    %v1712 = vunpack.c.l.b16 %v1633
    %v1713 = vunpack.c.h.b16 %v1633
    %v1714 = vunpack.c.l.b16 %v1634
    %v1715 = vunpack.c.h.b16 %v1634
    %v1716 = vunpack.c.l.b16 %v1635
    %v1717 = vunpack.c.h.b16 %v1635
    %v1718 = vunpack.c.l.b16 %v1636
    %v1719 = vunpack.c.h.b16 %v1636
    %v1720 = vunpack.c.l.b16 %v1637
    %v1721 = vunpack.c.h.b16 %v1637
    %v1722 = vunpack.c.l.b16 %v1638
    %v1723 = vunpack.c.h.b16 %v1638
    %v1724 = vunpack.c.l.b16 %v1639
    %v1725 = vunpack.c.h.b16 %v1639
    %v1726 = vunpack.c.l.b16 %v1640
    %v1727 = vunpack.c.h.b16 %v1640
    %v1728 = vunpack.c.l.b16 %v1641
    %v1729 = vunpack.c.h.b16 %v1641
    %v1730 = vunpack.c.l.b16 %v1642
    %v1731 = vunpack.c.h.b16 %v1642
    %v1732 = vunpack.c.l.b16 %v1643
    %v1733 = vunpack.c.h.b16 %v1643
    %v1734 = vunpack.c.l.b16 %v1644
    %v1735 = vunpack.c.h.b16 %v1644
    %v1736 = vunpack.c.l.b16 %v1645
    %v1737 = vunpack.c.h.b16 %v1645
    %v1738 = vunpack.c.l.b16 %v1646
    %v1739 = vunpack.c.h.b16 %v1646
    %v1740 = vunpack.c.l.b16 %v1647
    %v1741 = vunpack.c.h.b16 %v1647
    %v1742 = vunpack.c.l.b16 %v1648
    %v1743 = vunpack.c.h.b16 %v1648
    %v1744 = vunpack.c.l.b16 %v1649
    %v1745 = vunpack.c.h.b16 %v1649
    %v1746 = vpack.c.b16 %v1686, %v1682
    %v1747 = vpack.c.b16 %v1687, %v1683
    %v1748 = vpack.c.b16 %v1688, %v1684
    %v1749 = vpack.c.b16 %v1689, %v1685
    %v1750 = vpack.c.b16 %v1694, %v1690
    %v1751 = vpack.c.b16 %v1695, %v1691
    %v1752 = vpack.c.b16 %v1696, %v1692
    %v1753 = vpack.c.b16 %v1697, %v1693
    %v1754 = vpack.c.b16 %v1702, %v1698
    %v1755 = vpack.c.b16 %v1703, %v1699
    %v1756 = vpack.c.b16 %v1704, %v1700
    %v1757 = vpack.c.b16 %v1705, %v1701
    %v1758 = vpack.c.b16 %v1710, %v1706
    %v1759 = vpack.c.b16 %v1711, %v1707
    %v1760 = vpack.c.b16 %v1712, %v1708
    %v1761 = vpack.c.b16 %v1713, %v1709
    %v1762 = vpack.c.b16 %v1718, %v1714
    %v1763 = vpack.c.b16 %v1719, %v1715
    %v1764 = vpack.c.b16 %v1720, %v1716
    %v1765 = vpack.c.b16 %v1721, %v1717
    %v1766 = vpack.c.b16 %v1726, %v1722
    %v1767 = vpack.c.b16 %v1727, %v1723
    %v1768 = vpack.c.b16 %v1728, %v1724
    %v1769 = vpack.c.b16 %v1729, %v1725
    %v1770 = vpack.c.b16 %v1734, %v1730
    %v1771 = vpack.c.b16 %v1735, %v1731
    %v1772 = vpack.c.b16 %v1736, %v1732
    %v1773 = vpack.c.b16 %v1737, %v1733
    %v1774 = vpack.c.b16 %v1742, %v1738
    %v1775 = vpack.c.b16 %v1743, %v1739
    %v1776 = vpack.c.b16 %v1744, %v1740
    %v1777 = vpack.c.b16 %v1745, %v1741
    %1810 = vmatprep.subr.bf16.mxu0 %v1747
    %1811 = vmatpush1.bf16.msra.mxu0 %v1746
    %1812 = vmatprep.subr.bf16.mxu0 %v1751
    %1813 = vmatpush1.bf16.msra.mxu0 %v1750
    %1814 = vmatprep.subr.bf16.mxu0 %v1755
    %1815 = vmatpush1.bf16.msra.mxu0 %v1754
    %1816 = vmatprep.subr.bf16.mxu0 %v1759
    %1817 = vmatpush1.bf16.msra.mxu0 %v1758
    %1818 = vmatprep.subr.bf16.mxu0 %v1763
    %1819 = vmatpush1.bf16.msra.mxu0 %v1762
    %1820 = vmatprep.subr.bf16.mxu0 %v1767
    %1821 = vmatpush1.bf16.msra.mxu0 %v1766
    %1822 = vmatprep.subr.bf16.mxu0 %v1771
    %1823 = vmatpush1.bf16.msra.mxu0 %v1770
    %1824 = vmatprep.subr.bf16.mxu0 %v1775
    %1825 = vmatpush1.bf16.msra.mxu0 %v1774
    %1826 = vmatprep.subr.bf16.mxu0 0
    %1827 = vmatpush1.bf16.msra.mxu0 0
    %1828 = vmatprep.subr.bf16.mxu0 0
    %1829 = vmatpush1.bf16.msra.mxu0 0
    %1830 = vmatprep.subr.bf16.mxu0 0
    %1831 = vmatpush1.bf16.msra.mxu0 0
    %1832 = vmatprep.subr.bf16.mxu0 0
    %1833 = vmatpush1.bf16.msra.mxu0 0
    %1834 = vmatprep.subr.bf16.mxu0 0
    %1835 = vmatpush1.bf16.msra.mxu0 0
    %1836 = vmatprep.subr.bf16.mxu0 0
    %1837 = vmatpush1.bf16.msra.mxu0 0
    %1838 = vmatprep.subr.bf16.mxu0 0
    %1839 = vmatpush1.bf16.msra.mxu0 0
    %1840 = vmatprep.subr.bf16.mxu0 0
    %1841 = vmatpush1.bf16.msra.mxu0 0
    %1842 = vmatprep.mubr.bf16.mxu0 0
    %1843 = vmatmul.mubr.bf16.gmra.mrb[0].mxu0 %v1617
    %v1844 = vpop.f32.mrb[0].mxu0
    %v1845 = vadd.f32 0.0, %v1844
    %v1846 = vpop.f32.mrb[0].mxu0
    %v1847 = vadd.f32 0.0, %v1846
    %v1848 = vpop.f32.mrb[0].mxu0
    %v1849 = vpop.f32.mrb[0].mxu0
    %1850 = vdwg.mxu0
    %1851 = vmatprep.subr.bf16.mxu0 %v1749
    %1852 = vmatpush1.bf16.msra.mxu0 %v1748
    %1853 = vmatprep.subr.bf16.mxu0 %v1753
    %1854 = vmatpush1.bf16.msra.mxu0 %v1752
    %1855 = vmatprep.subr.bf16.mxu0 %v1757
    %1856 = vmatpush1.bf16.msra.mxu0 %v1756
    %1857 = vmatprep.subr.bf16.mxu0 %v1761
    %1858 = vmatpush1.bf16.msra.mxu0 %v1760
    %1859 = vmatprep.subr.bf16.mxu0 %v1765
    %1860 = vmatpush1.bf16.msra.mxu0 %v1764
    %1861 = vmatprep.subr.bf16.mxu0 %v1769
    %1862 = vmatpush1.bf16.msra.mxu0 %v1768
    %1863 = vmatprep.subr.bf16.mxu0 %v1773
    %1864 = vmatpush1.bf16.msra.mxu0 %v1772
    %1865 = vmatprep.subr.bf16.mxu0 %v1777
    %1866 = vmatpush1.bf16.msra.mxu0 %v1776
    %1867 = vmatprep.subr.bf16.mxu0 0
    %1868 = vmatpush1.bf16.msra.mxu0 0
    %1869 = vmatprep.subr.bf16.mxu0 0
    %1870 = vmatpush1.bf16.msra.mxu0 0
    %1871 = vmatprep.subr.bf16.mxu0 0
    %1872 = vmatpush1.bf16.msra.mxu0 0
    %1873 = vmatprep.subr.bf16.mxu0 0
    %1874 = vmatpush1.bf16.msra.mxu0 0
    %1875 = vmatprep.subr.bf16.mxu0 0
    %1876 = vmatpush1.bf16.msra.mxu0 0
    %1877 = vmatprep.subr.bf16.mxu0 0
    %1878 = vmatpush1.bf16.msra.mxu0 0
    %1879 = vmatprep.subr.bf16.mxu0 0
    %1880 = vmatpush1.bf16.msra.mxu0 0
    %1881 = vmatprep.subr.bf16.mxu0 0
    %1882 = vmatpush1.bf16.msra.mxu0 0
    %1883 = vmatprep.mubr.bf16.mxu0 0
    %1884 = vmatmul.mubr.bf16.gmra.mrb[0].mxu0 %v1617
    %v1885 = vpop.f32.mrb[0].mxu0
    %v1886 = vadd.f32 0.0, %v1885
    %v1887 = vpop.f32.mrb[0].mxu0
    %v1888 = vadd.f32 0.0, %v1887
    %v1889 = vpop.f32.mrb[0].mxu0
    %v1890 = vpop.f32.mrb[0].mxu0
    %1891 = vdwg.mxu0
    %v1892 = vadd.f32 %v1613, %v1845
    %v1893 = vadd.f32 %v1614, %v1847
    %v1894 = vadd.f32 %v1615, %v1886
    %v1895 = vadd.f32 %v1616, %v1888
    %v1896 = vxor.u32 %v1892, 2147483648
    %v1897 = vxor.u32 %v1893, 2147483648
    %v1898 = vxor.u32 %v1894, 2147483648
    %v1899 = vmul.f32 %v1896, 1.442695
    %v1900 = vpow.pop %v1899
    %v1901 = vmul.f32 %v1897, 1.442695
    %v1902 = vpow.pop %v1901
    %v1903 = vmul.f32 %v1898, 1.442695
    %v1904 = vpow.pop %v1903
    %v1905 = vadd.f32 %v1900, 1.0
    %v1906 = vadd.f32 %v1902, 1.0
    %v1907 = vadd.f32 %v1904, 1.0
    %v1908 = vrcp.pop %v1905
    %v1909 = vmul.f32 1.0, %v1908
    %v1910 = vrcp.pop %v1906
    %v1911 = vmul.f32 1.0, %v1910
    %v1912 = vrcp.pop %v1907
    %v1913 = vmul.f32 1.0, %v1912
    %v1914 = vtanh.pop %v1895
    %v1915 = vmul.f32 %v1911, %v1607
    %v1916 = vmul.f32 %v1909, %v1914
    %v1917 = vadd.f32 %v1915, %v1916
    %v1918 = vtanh.pop %v1917
    %v1919 = vmul.f32 %v1913, %v1918
    %s1920 = scalar_lea.vmem [#allocation3], 32
    %1921 = vst [vmem:[%s1920] sm:$0xff] %v1919
    %s1922 = scalar_lea.vmem [#allocation2], 160
    %v1923 = vld [vmem:[%s1922] sm:$0xff]
    %v1924 = vld [vmem:[%s1922 + $0x8] sm:$0xff]
    %v1925 = vld [vmem:[%s1922 + $0x10] sm:$0xff]
    %v1926 = vld [vmem:[%s1922 + $0x18] sm:$0xff]
    %v1927 = vpack.c.bf16 %v1919, %v1919
    %v1928 = vld [vmem:[%s2] sm:$0xff]
    %v1929 = vld [vmem:[%s2 + $0x8] sm:$0xff]
    %v1930 = vld [vmem:[%s2 + $0x10] sm:$0xff]
    %v1931 = vld [vmem:[%s2 + $0x18] sm:$0xff]
    %v1932 = vld [vmem:[%s2 + $0x20] sm:$0xff]
    %v1933 = vld [vmem:[%s2 + $0x28] sm:$0xff]
    %v1934 = vld [vmem:[%s2 + $0x30] sm:$0xff]
    %v1935 = vld [vmem:[%s2 + $0x38] sm:$0xff]
    %v1936 = vld [vmem:[%s2 + $0x40] sm:$0xff]
    %v1937 = vld [vmem:[%s2 + $0x48] sm:$0xff]
    %v1938 = vld [vmem:[%s2 + $0x50] sm:$0xff]
    %v1939 = vld [vmem:[%s2 + $0x58] sm:$0xff]
    %v1940 = vld [vmem:[%s2 + $0x60] sm:$0xff]
    %v1941 = vld [vmem:[%s2 + $0x68] sm:$0xff]
    %v1942 = vld [vmem:[%s2 + $0x70] sm:$0xff]
    %v1943 = vld [vmem:[%s2 + $0x78] sm:$0xff]
    %v1944 = vld [vmem:[%s2 + $0x80] sm:$0xff]
    %v1945 = vld [vmem:[%s2 + $0x88] sm:$0xff]
    %v1946 = vld [vmem:[%s2 + $0x90] sm:$0xff]
    %v1947 = vld [vmem:[%s2 + $0x98] sm:$0xff]
    %v1948 = vld [vmem:[%s2 + $0xa0] sm:$0xff]
    %v1949 = vld [vmem:[%s2 + $0xa8] sm:$0xff]
    %v1950 = vld [vmem:[%s2 + $0xb0] sm:$0xff]
    %v1951 = vld [vmem:[%s2 + $0xb8] sm:$0xff]
    %v1952 = vld [vmem:[%s2 + $0xc0] sm:$0xff]
    %v1953 = vld [vmem:[%s2 + $0xc8] sm:$0xff]
    %v1954 = vld [vmem:[%s2 + $0xd0] sm:$0xff]
    %v1955 = vld [vmem:[%s2 + $0xd8] sm:$0xff]
    %v1956 = vld [vmem:[%s2 + $0xe0] sm:$0xff]
    %v1957 = vld [vmem:[%s2 + $0xe8] sm:$0xff]
    %v1958 = vld [vmem:[%s2 + $0xf0] sm:$0xff]
    %v1959 = vld [vmem:[%s2 + $0xf8] sm:$0xff]
    %v1992 = vunpack.c.l.b16 %v1928
    %v1993 = vunpack.c.h.b16 %v1928
    %v1994 = vunpack.c.l.b16 %v1929
    %v1995 = vunpack.c.h.b16 %v1929
    %v1996 = vunpack.c.l.b16 %v1930
    %v1997 = vunpack.c.h.b16 %v1930
    %v1998 = vunpack.c.l.b16 %v1931
    %v1999 = vunpack.c.h.b16 %v1931
    %v2000 = vunpack.c.l.b16 %v1932
    %v2001 = vunpack.c.h.b16 %v1932
    %v2002 = vunpack.c.l.b16 %v1933
    %v2003 = vunpack.c.h.b16 %v1933
    %v2004 = vunpack.c.l.b16 %v1934
    %v2005 = vunpack.c.h.b16 %v1934
    %v2006 = vunpack.c.l.b16 %v1935
    %v2007 = vunpack.c.h.b16 %v1935
    %v2008 = vunpack.c.l.b16 %v1936
    %v2009 = vunpack.c.h.b16 %v1936
    %v2010 = vunpack.c.l.b16 %v1937
    %v2011 = vunpack.c.h.b16 %v1937
    %v2012 = vunpack.c.l.b16 %v1938
    %v2013 = vunpack.c.h.b16 %v1938
    %v2014 = vunpack.c.l.b16 %v1939
    %v2015 = vunpack.c.h.b16 %v1939
    %v2016 = vunpack.c.l.b16 %v1940
    %v2017 = vunpack.c.h.b16 %v1940
    %v2018 = vunpack.c.l.b16 %v1941
    %v2019 = vunpack.c.h.b16 %v1941
    %v2020 = vunpack.c.l.b16 %v1942
    %v2021 = vunpack.c.h.b16 %v1942
    %v2022 = vunpack.c.l.b16 %v1943
    %v2023 = vunpack.c.h.b16 %v1943
    %v2024 = vunpack.c.l.b16 %v1944
    %v2025 = vunpack.c.h.b16 %v1944
    %v2026 = vunpack.c.l.b16 %v1945
    %v2027 = vunpack.c.h.b16 %v1945
    %v2028 = vunpack.c.l.b16 %v1946
    %v2029 = vunpack.c.h.b16 %v1946
    %v2030 = vunpack.c.l.b16 %v1947
    %v2031 = vunpack.c.h.b16 %v1947
    %v2032 = vunpack.c.l.b16 %v1948
    %v2033 = vunpack.c.h.b16 %v1948
    %v2034 = vunpack.c.l.b16 %v1949
    %v2035 = vunpack.c.h.b16 %v1949
    %v2036 = vunpack.c.l.b16 %v1950
    %v2037 = vunpack.c.h.b16 %v1950
    %v2038 = vunpack.c.l.b16 %v1951
    %v2039 = vunpack.c.h.b16 %v1951
    %v2040 = vunpack.c.l.b16 %v1952
    %v2041 = vunpack.c.h.b16 %v1952
    %v2042 = vunpack.c.l.b16 %v1953
    %v2043 = vunpack.c.h.b16 %v1953
    %v2044 = vunpack.c.l.b16 %v1954
    %v2045 = vunpack.c.h.b16 %v1954
    %v2046 = vunpack.c.l.b16 %v1955
    %v2047 = vunpack.c.h.b16 %v1955
    %v2048 = vunpack.c.l.b16 %v1956
    %v2049 = vunpack.c.h.b16 %v1956
    %v2050 = vunpack.c.l.b16 %v1957
    %v2051 = vunpack.c.h.b16 %v1957
    %v2052 = vunpack.c.l.b16 %v1958
    %v2053 = vunpack.c.h.b16 %v1958
    %v2054 = vunpack.c.l.b16 %v1959
    %v2055 = vunpack.c.h.b16 %v1959
    %v2056 = vpack.c.b16 %v1996, %v1992
    %v2057 = vpack.c.b16 %v1997, %v1993
    %v2058 = vpack.c.b16 %v1998, %v1994
    %v2059 = vpack.c.b16 %v1999, %v1995
    %v2060 = vpack.c.b16 %v2004, %v2000
    %v2061 = vpack.c.b16 %v2005, %v2001
    %v2062 = vpack.c.b16 %v2006, %v2002
    %v2063 = vpack.c.b16 %v2007, %v2003
    %v2064 = vpack.c.b16 %v2012, %v2008
    %v2065 = vpack.c.b16 %v2013, %v2009
    %v2066 = vpack.c.b16 %v2014, %v2010
    %v2067 = vpack.c.b16 %v2015, %v2011
    %v2068 = vpack.c.b16 %v2020, %v2016
    %v2069 = vpack.c.b16 %v2021, %v2017
    %v2070 = vpack.c.b16 %v2022, %v2018
    %v2071 = vpack.c.b16 %v2023, %v2019
    %v2072 = vpack.c.b16 %v2028, %v2024
    %v2073 = vpack.c.b16 %v2029, %v2025
    %v2074 = vpack.c.b16 %v2030, %v2026
    %v2075 = vpack.c.b16 %v2031, %v2027
    %v2076 = vpack.c.b16 %v2036, %v2032
    %v2077 = vpack.c.b16 %v2037, %v2033
    %v2078 = vpack.c.b16 %v2038, %v2034
    %v2079 = vpack.c.b16 %v2039, %v2035
    %v2080 = vpack.c.b16 %v2044, %v2040
    %v2081 = vpack.c.b16 %v2045, %v2041
    %v2082 = vpack.c.b16 %v2046, %v2042
    %v2083 = vpack.c.b16 %v2047, %v2043
    %v2084 = vpack.c.b16 %v2052, %v2048
    %v2085 = vpack.c.b16 %v2053, %v2049
    %v2086 = vpack.c.b16 %v2054, %v2050
    %v2087 = vpack.c.b16 %v2055, %v2051
    %2120 = vmatprep.subr.bf16.mxu0 %v2057
    %2121 = vmatpush1.bf16.msra.mxu0 %v2056
    %2122 = vmatprep.subr.bf16.mxu0 %v2061
    %2123 = vmatpush1.bf16.msra.mxu0 %v2060
    %2124 = vmatprep.subr.bf16.mxu0 %v2065
    %2125 = vmatpush1.bf16.msra.mxu0 %v2064
    %2126 = vmatprep.subr.bf16.mxu0 %v2069
    %2127 = vmatpush1.bf16.msra.mxu0 %v2068
    %2128 = vmatprep.subr.bf16.mxu0 %v2073
    %2129 = vmatpush1.bf16.msra.mxu0 %v2072
    %2130 = vmatprep.subr.bf16.mxu0 %v2077
    %2131 = vmatpush1.bf16.msra.mxu0 %v2076
    %2132 = vmatprep.subr.bf16.mxu0 %v2081
    %2133 = vmatpush1.bf16.msra.mxu0 %v2080
    %2134 = vmatprep.subr.bf16.mxu0 %v2085
    %2135 = vmatpush1.bf16.msra.mxu0 %v2084
    %2136 = vmatprep.subr.bf16.mxu0 0
    %2137 = vmatpush1.bf16.msra.mxu0 0
    %2138 = vmatprep.subr.bf16.mxu0 0
    %2139 = vmatpush1.bf16.msra.mxu0 0
    %2140 = vmatprep.subr.bf16.mxu0 0
    %2141 = vmatpush1.bf16.msra.mxu0 0
    %2142 = vmatprep.subr.bf16.mxu0 0
    %2143 = vmatpush1.bf16.msra.mxu0 0
    %2144 = vmatprep.subr.bf16.mxu0 0
    %2145 = vmatpush1.bf16.msra.mxu0 0
    %2146 = vmatprep.subr.bf16.mxu0 0
    %2147 = vmatpush1.bf16.msra.mxu0 0
    %2148 = vmatprep.subr.bf16.mxu0 0
    %2149 = vmatpush1.bf16.msra.mxu0 0
    %2150 = vmatprep.subr.bf16.mxu0 0
    %2151 = vmatpush1.bf16.msra.mxu0 0
    %2152 = vmatprep.mubr.bf16.mxu0 0
    %2153 = vmatmul.mubr.bf16.gmra.mrb[0].mxu0 %v1927
    %v2154 = vpop.f32.mrb[0].mxu0
    %v2155 = vadd.f32 0.0, %v2154
    %v2156 = vpop.f32.mrb[0].mxu0
    %v2157 = vadd.f32 0.0, %v2156
    %v2158 = vpop.f32.mrb[0].mxu0
    %v2159 = vpop.f32.mrb[0].mxu0
    %2160 = vdwg.mxu0
    %2161 = vmatprep.subr.bf16.mxu0 %v2059
    %2162 = vmatpush1.bf16.msra.mxu0 %v2058
    %2163 = vmatprep.subr.bf16.mxu0 %v2063
    %2164 = vmatpush1.bf16.msra.mxu0 %v2062
    %2165 = vmatprep.subr.bf16.mxu0 %v2067
    %2166 = vmatpush1.bf16.msra.mxu0 %v2066
    %2167 = vmatprep.subr.bf16.mxu0 %v2071
    %2168 = vmatpush1.bf16.msra.mxu0 %v2070
    %2169 = vmatprep.subr.bf16.mxu0 %v2075
    %2170 = vmatpush1.bf16.msra.mxu0 %v2074
    %2171 = vmatprep.subr.bf16.mxu0 %v2079
    %2172 = vmatpush1.bf16.msra.mxu0 %v2078
    %2173 = vmatprep.subr.bf16.mxu0 %v2083
    %2174 = vmatpush1.bf16.msra.mxu0 %v2082
    %2175 = vmatprep.subr.bf16.mxu0 %v2087
    %2176 = vmatpush1.bf16.msra.mxu0 %v2086
    %2177 = vmatprep.subr.bf16.mxu0 0
    %2178 = vmatpush1.bf16.msra.mxu0 0
    %2179 = vmatprep.subr.bf16.mxu0 0
    %2180 = vmatpush1.bf16.msra.mxu0 0
    %2181 = vmatprep.subr.bf16.mxu0 0
    %2182 = vmatpush1.bf16.msra.mxu0 0
    %2183 = vmatprep.subr.bf16.mxu0 0
    %2184 = vmatpush1.bf16.msra.mxu0 0
    %2185 = vmatprep.subr.bf16.mxu0 0
    %2186 = vmatpush1.bf16.msra.mxu0 0
    %2187 = vmatprep.subr.bf16.mxu0 0
    %2188 = vmatpush1.bf16.msra.mxu0 0
    %2189 = vmatprep.subr.bf16.mxu0 0
    %2190 = vmatpush1.bf16.msra.mxu0 0
    %2191 = vmatprep.subr.bf16.mxu0 0
    %2192 = vmatpush1.bf16.msra.mxu0 0
    %2193 = vmatprep.mubr.bf16.mxu0 0
    %2194 = vmatmul.mubr.bf16.gmra.mrb[0].mxu0 %v1927
    %v2195 = vpop.f32.mrb[0].mxu0
    %v2196 = vadd.f32 0.0, %v2195
    %v2197 = vpop.f32.mrb[0].mxu0
    %v2198 = vadd.f32 0.0, %v2197
    %v2199 = vpop.f32.mrb[0].mxu0
    %v2200 = vpop.f32.mrb[0].mxu0
    %2201 = vdwg.mxu0
    %v2202 = vadd.f32 %v1923, %v2155
    %v2203 = vadd.f32 %v1924, %v2157
    %v2204 = vadd.f32 %v1925, %v2196
    %v2205 = vadd.f32 %v1926, %v2198
    %v2206 = vxor.u32 %v2202, 2147483648
    %v2207 = vxor.u32 %v2203, 2147483648
    %v2208 = vxor.u32 %v2204, 2147483648
    %v2209 = vmul.f32 %v2206, 1.442695
    %v2210 = vpow.pop %v2209
    %v2211 = vmul.f32 %v2207, 1.442695
    %v2212 = vpow.pop %v2211
    %v2213 = vmul.f32 %v2208, 1.442695
    %v2214 = vpow.pop %v2213
    %v2215 = vadd.f32 %v2210, 1.0
    %v2216 = vadd.f32 %v2212, 1.0
    %v2217 = vadd.f32 %v2214, 1.0
    %v2218 = vrcp.pop %v2215
    %v2219 = vmul.f32 1.0, %v2218
    %v2220 = vrcp.pop %v2216
    %v2221 = vmul.f32 1.0, %v2220
    %v2222 = vrcp.pop %v2217
    %v2223 = vmul.f32 1.0, %v2222
    %v2224 = vtanh.pop %v2205
    %v2225 = vmul.f32 %v2221, %v1917
    %v2226 = vmul.f32 %v2219, %v2224
    %v2227 = vadd.f32 %v2225, %v2226
    %v2228 = vtanh.pop %v2227
    %v2229 = vmul.f32 %v2223, %v2228
    %s2230 = scalar_lea.vmem [#allocation3], 40
    %2231 = vst [vmem:[%s2230] sm:$0xff] %v2229
    %s2232 = scalar_lea.vmem [#allocation2], 192
    %v2233 = vld [vmem:[%s2232] sm:$0xff]
    %v2234 = vld [vmem:[%s2232 + $0x8] sm:$0xff]
    %v2235 = vld [vmem:[%s2232 + $0x10] sm:$0xff]
    %v2236 = vld [vmem:[%s2232 + $0x18] sm:$0xff]
    %v2237 = vpack.c.bf16 %v2229, %v2229
    %v2238 = vld [vmem:[%s2] sm:$0xff]
    %v2239 = vld [vmem:[%s2 + $0x8] sm:$0xff]
    %v2240 = vld [vmem:[%s2 + $0x10] sm:$0xff]
    %v2241 = vld [vmem:[%s2 + $0x18] sm:$0xff]
    %v2242 = vld [vmem:[%s2 + $0x20] sm:$0xff]
    %v2243 = vld [vmem:[%s2 + $0x28] sm:$0xff]
    %v2244 = vld [vmem:[%s2 + $0x30] sm:$0xff]
    %v2245 = vld [vmem:[%s2 + $0x38] sm:$0xff]
    %v2246 = vld [vmem:[%s2 + $0x40] sm:$0xff]
    %v2247 = vld [vmem:[%s2 + $0x48] sm:$0xff]
    %v2248 = vld [vmem:[%s2 + $0x50] sm:$0xff]
    %v2249 = vld [vmem:[%s2 + $0x58] sm:$0xff]
    %v2250 = vld [vmem:[%s2 + $0x60] sm:$0xff]
    %v2251 = vld [vmem:[%s2 + $0x68] sm:$0xff]
    %v2252 = vld [vmem:[%s2 + $0x70] sm:$0xff]
    %v2253 = vld [vmem:[%s2 + $0x78] sm:$0xff]
    %v2254 = vld [vmem:[%s2 + $0x80] sm:$0xff]
    %v2255 = vld [vmem:[%s2 + $0x88] sm:$0xff]
    %v2256 = vld [vmem:[%s2 + $0x90] sm:$0xff]
    %v2257 = vld [vmem:[%s2 + $0x98] sm:$0xff]
    %v2258 = vld [vmem:[%s2 + $0xa0] sm:$0xff]
    %v2259 = vld [vmem:[%s2 + $0xa8] sm:$0xff]
    %v2260 = vld [vmem:[%s2 + $0xb0] sm:$0xff]
    %v2261 = vld [vmem:[%s2 + $0xb8] sm:$0xff]
    %v2262 = vld [vmem:[%s2 + $0xc0] sm:$0xff]
    %v2263 = vld [vmem:[%s2 + $0xc8] sm:$0xff]
    %v2264 = vld [vmem:[%s2 + $0xd0] sm:$0xff]
    %v2265 = vld [vmem:[%s2 + $0xd8] sm:$0xff]
    %v2266 = vld [vmem:[%s2 + $0xe0] sm:$0xff]
    %v2267 = vld [vmem:[%s2 + $0xe8] sm:$0xff]
    %v2268 = vld [vmem:[%s2 + $0xf0] sm:$0xff]
    %v2269 = vld [vmem:[%s2 + $0xf8] sm:$0xff]
    %v2302 = vunpack.c.l.b16 %v2238
    %v2303 = vunpack.c.h.b16 %v2238
    %v2304 = vunpack.c.l.b16 %v2239
    %v2305 = vunpack.c.h.b16 %v2239
    %v2306 = vunpack.c.l.b16 %v2240
    %v2307 = vunpack.c.h.b16 %v2240
    %v2308 = vunpack.c.l.b16 %v2241
    %v2309 = vunpack.c.h.b16 %v2241
    %v2310 = vunpack.c.l.b16 %v2242
    %v2311 = vunpack.c.h.b16 %v2242
    %v2312 = vunpack.c.l.b16 %v2243
    %v2313 = vunpack.c.h.b16 %v2243
    %v2314 = vunpack.c.l.b16 %v2244
    %v2315 = vunpack.c.h.b16 %v2244
    %v2316 = vunpack.c.l.b16 %v2245
    %v2317 = vunpack.c.h.b16 %v2245
    %v2318 = vunpack.c.l.b16 %v2246
    %v2319 = vunpack.c.h.b16 %v2246
    %v2320 = vunpack.c.l.b16 %v2247
    %v2321 = vunpack.c.h.b16 %v2247
    %v2322 = vunpack.c.l.b16 %v2248
    %v2323 = vunpack.c.h.b16 %v2248
    %v2324 = vunpack.c.l.b16 %v2249
    %v2325 = vunpack.c.h.b16 %v2249
    %v2326 = vunpack.c.l.b16 %v2250
    %v2327 = vunpack.c.h.b16 %v2250
    %v2328 = vunpack.c.l.b16 %v2251
    %v2329 = vunpack.c.h.b16 %v2251
    %v2330 = vunpack.c.l.b16 %v2252
    %v2331 = vunpack.c.h.b16 %v2252
    %v2332 = vunpack.c.l.b16 %v2253
    %v2333 = vunpack.c.h.b16 %v2253
    %v2334 = vunpack.c.l.b16 %v2254
    %v2335 = vunpack.c.h.b16 %v2254
    %v2336 = vunpack.c.l.b16 %v2255
    %v2337 = vunpack.c.h.b16 %v2255
    %v2338 = vunpack.c.l.b16 %v2256
    %v2339 = vunpack.c.h.b16 %v2256
    %v2340 = vunpack.c.l.b16 %v2257
    %v2341 = vunpack.c.h.b16 %v2257
    %v2342 = vunpack.c.l.b16 %v2258
    %v2343 = vunpack.c.h.b16 %v2258
    %v2344 = vunpack.c.l.b16 %v2259
    %v2345 = vunpack.c.h.b16 %v2259
    %v2346 = vunpack.c.l.b16 %v2260
    %v2347 = vunpack.c.h.b16 %v2260
    %v2348 = vunpack.c.l.b16 %v2261
    %v2349 = vunpack.c.h.b16 %v2261
    %v2350 = vunpack.c.l.b16 %v2262
    %v2351 = vunpack.c.h.b16 %v2262
    %v2352 = vunpack.c.l.b16 %v2263
    %v2353 = vunpack.c.h.b16 %v2263
    %v2354 = vunpack.c.l.b16 %v2264
    %v2355 = vunpack.c.h.b16 %v2264
    %v2356 = vunpack.c.l.b16 %v2265
    %v2357 = vunpack.c.h.b16 %v2265
    %v2358 = vunpack.c.l.b16 %v2266
    %v2359 = vunpack.c.h.b16 %v2266
    %v2360 = vunpack.c.l.b16 %v2267
    %v2361 = vunpack.c.h.b16 %v2267
    %v2362 = vunpack.c.l.b16 %v2268
    %v2363 = vunpack.c.h.b16 %v2268
    %v2364 = vunpack.c.l.b16 %v2269
    %v2365 = vunpack.c.h.b16 %v2269
    %v2366 = vpack.c.b16 %v2306, %v2302
    %v2367 = vpack.c.b16 %v2307, %v2303
    %v2368 = vpack.c.b16 %v2308, %v2304
    %v2369 = vpack.c.b16 %v2309, %v2305
    %v2370 = vpack.c.b16 %v2314, %v2310
    %v2371 = vpack.c.b16 %v2315, %v2311
    %v2372 = vpack.c.b16 %v2316, %v2312
    %v2373 = vpack.c.b16 %v2317, %v2313
    %v2374 = vpack.c.b16 %v2322, %v2318
    %v2375 = vpack.c.b16 %v2323, %v2319
    %v2376 = vpack.c.b16 %v2324, %v2320
    %v2377 = vpack.c.b16 %v2325, %v2321
    %v2378 = vpack.c.b16 %v2330, %v2326
    %v2379 = vpack.c.b16 %v2331, %v2327
    %v2380 = vpack.c.b16 %v2332, %v2328
    %v2381 = vpack.c.b16 %v2333, %v2329
    %v2382 = vpack.c.b16 %v2338, %v2334
    %v2383 = vpack.c.b16 %v2339, %v2335
    %v2384 = vpack.c.b16 %v2340, %v2336
    %v2385 = vpack.c.b16 %v2341, %v2337
    %v2386 = vpack.c.b16 %v2346, %v2342
    %v2387 = vpack.c.b16 %v2347, %v2343
    %v2388 = vpack.c.b16 %v2348, %v2344
    %v2389 = vpack.c.b16 %v2349, %v2345
    %v2390 = vpack.c.b16 %v2354, %v2350
    %v2391 = vpack.c.b16 %v2355, %v2351
    %v2392 = vpack.c.b16 %v2356, %v2352
    %v2393 = vpack.c.b16 %v2357, %v2353
    %v2394 = vpack.c.b16 %v2362, %v2358
    %v2395 = vpack.c.b16 %v2363, %v2359
    %v2396 = vpack.c.b16 %v2364, %v2360
    %v2397 = vpack.c.b16 %v2365, %v2361
    %2430 = vmatprep.subr.bf16.mxu0 %v2367
    %2431 = vmatpush1.bf16.msra.mxu0 %v2366
    %2432 = vmatprep.subr.bf16.mxu0 %v2371
    %2433 = vmatpush1.bf16.msra.mxu0 %v2370
    %2434 = vmatprep.subr.bf16.mxu0 %v2375
    %2435 = vmatpush1.bf16.msra.mxu0 %v2374
    %2436 = vmatprep.subr.bf16.mxu0 %v2379
    %2437 = vmatpush1.bf16.msra.mxu0 %v2378
    %2438 = vmatprep.subr.bf16.mxu0 %v2383
    %2439 = vmatpush1.bf16.msra.mxu0 %v2382
    %2440 = vmatprep.subr.bf16.mxu0 %v2387
    %2441 = vmatpush1.bf16.msra.mxu0 %v2386
    %2442 = vmatprep.subr.bf16.mxu0 %v2391
    %2443 = vmatpush1.bf16.msra.mxu0 %v2390
    %2444 = vmatprep.subr.bf16.mxu0 %v2395
    %2445 = vmatpush1.bf16.msra.mxu0 %v2394
    %2446 = vmatprep.subr.bf16.mxu0 0
    %2447 = vmatpush1.bf16.msra.mxu0 0
    %2448 = vmatprep.subr.bf16.mxu0 0
    %2449 = vmatpush1.bf16.msra.mxu0 0
    %2450 = vmatprep.subr.bf16.mxu0 0
    %2451 = vmatpush1.bf16.msra.mxu0 0
    %2452 = vmatprep.subr.bf16.mxu0 0
    %2453 = vmatpush1.bf16.msra.mxu0 0
    %2454 = vmatprep.subr.bf16.mxu0 0
    %2455 = vmatpush1.bf16.msra.mxu0 0
    %2456 = vmatprep.subr.bf16.mxu0 0
    %2457 = vmatpush1.bf16.msra.mxu0 0
    %2458 = vmatprep.subr.bf16.mxu0 0
    %2459 = vmatpush1.bf16.msra.mxu0 0
    %2460 = vmatprep.subr.bf16.mxu0 0
    %2461 = vmatpush1.bf16.msra.mxu0 0
    %2462 = vmatprep.mubr.bf16.mxu0 0
    %2463 = vmatmul.mubr.bf16.gmra.mrb[0].mxu0 %v2237
    %v2464 = vpop.f32.mrb[0].mxu0
    %v2465 = vadd.f32 0.0, %v2464
    %v2466 = vpop.f32.mrb[0].mxu0
    %v2467 = vadd.f32 0.0, %v2466
    %v2468 = vpop.f32.mrb[0].mxu0
    %v2469 = vpop.f32.mrb[0].mxu0
    %2470 = vdwg.mxu0
    %2471 = vmatprep.subr.bf16.mxu0 %v2369
    %2472 = vmatpush1.bf16.msra.mxu0 %v2368
    %2473 = vmatprep.subr.bf16.mxu0 %v2373
    %2474 = vmatpush1.bf16.msra.mxu0 %v2372
    %2475 = vmatprep.subr.bf16.mxu0 %v2377
    %2476 = vmatpush1.bf16.msra.mxu0 %v2376
    %2477 = vmatprep.subr.bf16.mxu0 %v2381
    %2478 = vmatpush1.bf16.msra.mxu0 %v2380
    %2479 = vmatprep.subr.bf16.mxu0 %v2385
    %2480 = vmatpush1.bf16.msra.mxu0 %v2384
    %2481 = vmatprep.subr.bf16.mxu0 %v2389
    %2482 = vmatpush1.bf16.msra.mxu0 %v2388
    %2483 = vmatprep.subr.bf16.mxu0 %v2393
    %2484 = vmatpush1.bf16.msra.mxu0 %v2392
    %2485 = vmatprep.subr.bf16.mxu0 %v2397
    %2486 = vmatpush1.bf16.msra.mxu0 %v2396
    %2487 = vmatprep.subr.bf16.mxu0 0
    %2488 = vmatpush1.bf16.msra.mxu0 0
    %2489 = vmatprep.subr.bf16.mxu0 0
    %2490 = vmatpush1.bf16.msra.mxu0 0
    %2491 = vmatprep.subr.bf16.mxu0 0
    %2492 = vmatpush1.bf16.msra.mxu0 0
    %2493 = vmatprep.subr.bf16.mxu0 0
    %2494 = vmatpush1.bf16.msra.mxu0 0
    %2495 = vmatprep.subr.bf16.mxu0 0
    %2496 = vmatpush1.bf16.msra.mxu0 0
    %2497 = vmatprep.subr.bf16.mxu0 0
    %2498 = vmatpush1.bf16.msra.mxu0 0
    %2499 = vmatprep.subr.bf16.mxu0 0
    %2500 = vmatpush1.bf16.msra.mxu0 0
    %2501 = vmatprep.subr.bf16.mxu0 0
    %2502 = vmatpush1.bf16.msra.mxu0 0
    %2503 = vmatprep.mubr.bf16.mxu0 0
    %2504 = vmatmul.mubr.bf16.gmra.mrb[0].mxu0 %v2237
    %v2505 = vpop.f32.mrb[0].mxu0
    %v2506 = vadd.f32 0.0, %v2505
    %v2507 = vpop.f32.mrb[0].mxu0
    %v2508 = vadd.f32 0.0, %v2507
    %v2509 = vpop.f32.mrb[0].mxu0
    %v2510 = vpop.f32.mrb[0].mxu0
    %2511 = vdwg.mxu0
    %v2512 = vadd.f32 %v2233, %v2465
    %v2513 = vadd.f32 %v2234, %v2467
    %v2514 = vadd.f32 %v2235, %v2506
    %v2515 = vadd.f32 %v2236, %v2508
    %v2516 = vxor.u32 %v2512, 2147483648
    %v2517 = vxor.u32 %v2513, 2147483648
    %v2518 = vxor.u32 %v2514, 2147483648
    %v2519 = vmul.f32 %v2516, 1.442695
    %v2520 = vpow.pop %v2519
    %v2521 = vmul.f32 %v2517, 1.442695
    %v2522 = vpow.pop %v2521
    %v2523 = vmul.f32 %v2518, 1.442695
    %v2524 = vpow.pop %v2523
    %v2525 = vadd.f32 %v2520, 1.0
    %v2526 = vadd.f32 %v2522, 1.0
    %v2527 = vadd.f32 %v2524, 1.0
    %v2528 = vrcp.pop %v2525
    %v2529 = vmul.f32 1.0, %v2528
    %v2530 = vrcp.pop %v2526
    %v2531 = vmul.f32 1.0, %v2530
    %v2532 = vrcp.pop %v2527
    %v2533 = vmul.f32 1.0, %v2532
    %v2534 = vtanh.pop %v2515
    %v2535 = vmul.f32 %v2531, %v2227
    %v2536 = vmul.f32 %v2529, %v2534
    %v2537 = vadd.f32 %v2535, %v2536
    %v2538 = vtanh.pop %v2537
    %v2539 = vmul.f32 %v2533, %v2538
    %s2540 = scalar_lea.vmem [#allocation3], 48
    %2541 = vst [vmem:[%s2540] sm:$0xff] %v2539
    %s2542 = scalar_lea.vmem [#allocation2], 224
    %v2543 = vld [vmem:[%s2542] sm:$0xff]
    %v2544 = vld [vmem:[%s2542 + $0x8] sm:$0xff]
    %v2545 = vld [vmem:[%s2542 + $0x10] sm:$0xff]
    %v2546 = vld [vmem:[%s2542 + $0x18] sm:$0xff]
    %v2547 = vpack.c.bf16 %v2539, %v2539
    %v2548 = vld [vmem:[%s2] sm:$0xff]
    %v2549 = vld [vmem:[%s2 + $0x8] sm:$0xff]
    %v2550 = vld [vmem:[%s2 + $0x10] sm:$0xff]
    %v2551 = vld [vmem:[%s2 + $0x18] sm:$0xff]
    %v2552 = vld [vmem:[%s2 + $0x20] sm:$0xff]
    %v2553 = vld [vmem:[%s2 + $0x28] sm:$0xff]
    %v2554 = vld [vmem:[%s2 + $0x30] sm:$0xff]
    %v2555 = vld [vmem:[%s2 + $0x38] sm:$0xff]
    %v2556 = vld [vmem:[%s2 + $0x40] sm:$0xff]
    %v2557 = vld [vmem:[%s2 + $0x48] sm:$0xff]
    %v2558 = vld [vmem:[%s2 + $0x50] sm:$0xff]
    %v2559 = vld [vmem:[%s2 + $0x58] sm:$0xff]
    %v2560 = vld [vmem:[%s2 + $0x60] sm:$0xff]
    %v2561 = vld [vmem:[%s2 + $0x68] sm:$0xff]
    %v2562 = vld [vmem:[%s2 + $0x70] sm:$0xff]
    %v2563 = vld [vmem:[%s2 + $0x78] sm:$0xff]
    %v2564 = vld [vmem:[%s2 + $0x80] sm:$0xff]
    %v2565 = vld [vmem:[%s2 + $0x88] sm:$0xff]
    %v2566 = vld [vmem:[%s2 + $0x90] sm:$0xff]
    %v2567 = vld [vmem:[%s2 + $0x98] sm:$0xff]
    %v2568 = vld [vmem:[%s2 + $0xa0] sm:$0xff]
    %v2569 = vld [vmem:[%s2 + $0xa8] sm:$0xff]
    %v2570 = vld [vmem:[%s2 + $0xb0] sm:$0xff]
    %v2571 = vld [vmem:[%s2 + $0xb8] sm:$0xff]
    %v2572 = vld [vmem:[%s2 + $0xc0] sm:$0xff]
    %v2573 = vld [vmem:[%s2 + $0xc8] sm:$0xff]
    %v2574 = vld [vmem:[%s2 + $0xd0] sm:$0xff]
    %v2575 = vld [vmem:[%s2 + $0xd8] sm:$0xff]
    %v2576 = vld [vmem:[%s2 + $0xe0] sm:$0xff]
    %v2577 = vld [vmem:[%s2 + $0xe8] sm:$0xff]
    %v2578 = vld [vmem:[%s2 + $0xf0] sm:$0xff]
    %v2579 = vld [vmem:[%s2 + $0xf8] sm:$0xff]
    %v2612 = vunpack.c.l.b16 %v2548
    %v2613 = vunpack.c.h.b16 %v2548
    %v2614 = vunpack.c.l.b16 %v2549
    %v2615 = vunpack.c.h.b16 %v2549
    %v2616 = vunpack.c.l.b16 %v2550
    %v2617 = vunpack.c.h.b16 %v2550
    %v2618 = vunpack.c.l.b16 %v2551
    %v2619 = vunpack.c.h.b16 %v2551
    %v2620 = vunpack.c.l.b16 %v2552
    %v2621 = vunpack.c.h.b16 %v2552
    %v2622 = vunpack.c.l.b16 %v2553
    %v2623 = vunpack.c.h.b16 %v2553
    %v2624 = vunpack.c.l.b16 %v2554
    %v2625 = vunpack.c.h.b16 %v2554
    %v2626 = vunpack.c.l.b16 %v2555
    %v2627 = vunpack.c.h.b16 %v2555
    %v2628 = vunpack.c.l.b16 %v2556
    %v2629 = vunpack.c.h.b16 %v2556
    %v2630 = vunpack.c.l.b16 %v2557
    %v2631 = vunpack.c.h.b16 %v2557
    %v2632 = vunpack.c.l.b16 %v2558
    %v2633 = vunpack.c.h.b16 %v2558
    %v2634 = vunpack.c.l.b16 %v2559
    %v2635 = vunpack.c.h.b16 %v2559
    %v2636 = vunpack.c.l.b16 %v2560
    %v2637 = vunpack.c.h.b16 %v2560
    %v2638 = vunpack.c.l.b16 %v2561
    %v2639 = vunpack.c.h.b16 %v2561
    %v2640 = vunpack.c.l.b16 %v2562
    %v2641 = vunpack.c.h.b16 %v2562
    %v2642 = vunpack.c.l.b16 %v2563
    %v2643 = vunpack.c.h.b16 %v2563
    %v2644 = vunpack.c.l.b16 %v2564
    %v2645 = vunpack.c.h.b16 %v2564
    %v2646 = vunpack.c.l.b16 %v2565
    %v2647 = vunpack.c.h.b16 %v2565
    %v2648 = vunpack.c.l.b16 %v2566
    %v2649 = vunpack.c.h.b16 %v2566
    %v2650 = vunpack.c.l.b16 %v2567
    %v2651 = vunpack.c.h.b16 %v2567
    %v2652 = vunpack.c.l.b16 %v2568
    %v2653 = vunpack.c.h.b16 %v2568
    %v2654 = vunpack.c.l.b16 %v2569
    %v2655 = vunpack.c.h.b16 %v2569
    %v2656 = vunpack.c.l.b16 %v2570
    %v2657 = vunpack.c.h.b16 %v2570
    %v2658 = vunpack.c.l.b16 %v2571
    %v2659 = vunpack.c.h.b16 %v2571
    %v2660 = vunpack.c.l.b16 %v2572
    %v2661 = vunpack.c.h.b16 %v2572
    %v2662 = vunpack.c.l.b16 %v2573
    %v2663 = vunpack.c.h.b16 %v2573
    %v2664 = vunpack.c.l.b16 %v2574
    %v2665 = vunpack.c.h.b16 %v2574
    %v2666 = vunpack.c.l.b16 %v2575
    %v2667 = vunpack.c.h.b16 %v2575
    %v2668 = vunpack.c.l.b16 %v2576
    %v2669 = vunpack.c.h.b16 %v2576
    %v2670 = vunpack.c.l.b16 %v2577
    %v2671 = vunpack.c.h.b16 %v2577
    %v2672 = vunpack.c.l.b16 %v2578
    %v2673 = vunpack.c.h.b16 %v2578
    %v2674 = vunpack.c.l.b16 %v2579
    %v2675 = vunpack.c.h.b16 %v2579
    %v2676 = vpack.c.b16 %v2616, %v2612
    %v2677 = vpack.c.b16 %v2617, %v2613
    %v2678 = vpack.c.b16 %v2618, %v2614
    %v2679 = vpack.c.b16 %v2619, %v2615
    %v2680 = vpack.c.b16 %v2624, %v2620
    %v2681 = vpack.c.b16 %v2625, %v2621
    %v2682 = vpack.c.b16 %v2626, %v2622
    %v2683 = vpack.c.b16 %v2627, %v2623
    %v2684 = vpack.c.b16 %v2632, %v2628
    %v2685 = vpack.c.b16 %v2633, %v2629
    %v2686 = vpack.c.b16 %v2634, %v2630
    %v2687 = vpack.c.b16 %v2635, %v2631
    %v2688 = vpack.c.b16 %v2640, %v2636
    %v2689 = vpack.c.b16 %v2641, %v2637
    %v2690 = vpack.c.b16 %v2642, %v2638
    %v2691 = vpack.c.b16 %v2643, %v2639
    %v2692 = vpack.c.b16 %v2648, %v2644
    %v2693 = vpack.c.b16 %v2649, %v2645
    %v2694 = vpack.c.b16 %v2650, %v2646
    %v2695 = vpack.c.b16 %v2651, %v2647
    %v2696 = vpack.c.b16 %v2656, %v2652
    %v2697 = vpack.c.b16 %v2657, %v2653
    %v2698 = vpack.c.b16 %v2658, %v2654
    %v2699 = vpack.c.b16 %v2659, %v2655
    %v2700 = vpack.c.b16 %v2664, %v2660
    %v2701 = vpack.c.b16 %v2665, %v2661
    %v2702 = vpack.c.b16 %v2666, %v2662
    %v2703 = vpack.c.b16 %v2667, %v2663
    %v2704 = vpack.c.b16 %v2672, %v2668
    %v2705 = vpack.c.b16 %v2673, %v2669
    %v2706 = vpack.c.b16 %v2674, %v2670
    %v2707 = vpack.c.b16 %v2675, %v2671
    %2740 = vmatprep.subr.bf16.mxu0 %v2677
    %2741 = vmatpush1.bf16.msra.mxu0 %v2676
    %2742 = vmatprep.subr.bf16.mxu0 %v2681
    %2743 = vmatpush1.bf16.msra.mxu0 %v2680
    %2744 = vmatprep.subr.bf16.mxu0 %v2685
    %2745 = vmatpush1.bf16.msra.mxu0 %v2684
    %2746 = vmatprep.subr.bf16.mxu0 %v2689
    %2747 = vmatpush1.bf16.msra.mxu0 %v2688
    %2748 = vmatprep.subr.bf16.mxu0 %v2693
    %2749 = vmatpush1.bf16.msra.mxu0 %v2692
    %2750 = vmatprep.subr.bf16.mxu0 %v2697
    %2751 = vmatpush1.bf16.msra.mxu0 %v2696
    %2752 = vmatprep.subr.bf16.mxu0 %v2701
    %2753 = vmatpush1.bf16.msra.mxu0 %v2700
    %2754 = vmatprep.subr.bf16.mxu0 %v2705
    %2755 = vmatpush1.bf16.msra.mxu0 %v2704
    %2756 = vmatprep.subr.bf16.mxu0 0
    %2757 = vmatpush1.bf16.msra.mxu0 0
    %2758 = vmatprep.subr.bf16.mxu0 0
    %2759 = vmatpush1.bf16.msra.mxu0 0
    %2760 = vmatprep.subr.bf16.mxu0 0
    %2761 = vmatpush1.bf16.msra.mxu0 0
    %2762 = vmatprep.subr.bf16.mxu0 0
    %2763 = vmatpush1.bf16.msra.mxu0 0
    %2764 = vmatprep.subr.bf16.mxu0 0
    %2765 = vmatpush1.bf16.msra.mxu0 0
    %2766 = vmatprep.subr.bf16.mxu0 0
    %2767 = vmatpush1.bf16.msra.mxu0 0
    %2768 = vmatprep.subr.bf16.mxu0 0
    %2769 = vmatpush1.bf16.msra.mxu0 0
    %2770 = vmatprep.subr.bf16.mxu0 0
    %2771 = vmatpush1.bf16.msra.mxu0 0
    %2772 = vmatprep.mubr.bf16.mxu0 0
    %2773 = vmatmul.mubr.bf16.gmra.mrb[0].mxu0 %v2547
    %v2774 = vpop.f32.mrb[0].mxu0
    %v2775 = vadd.f32 0.0, %v2774
    %v2776 = vpop.f32.mrb[0].mxu0
    %v2777 = vadd.f32 0.0, %v2776
    %v2778 = vpop.f32.mrb[0].mxu0
    %v2779 = vpop.f32.mrb[0].mxu0
    %2780 = vdwg.mxu0
    %2781 = vmatprep.subr.bf16.mxu0 %v2679
    %2782 = vmatpush1.bf16.msra.mxu0 %v2678
    %2783 = vmatprep.subr.bf16.mxu0 %v2683
    %2784 = vmatpush1.bf16.msra.mxu0 %v2682
    %2785 = vmatprep.subr.bf16.mxu0 %v2687
    %2786 = vmatpush1.bf16.msra.mxu0 %v2686
    %2787 = vmatprep.subr.bf16.mxu0 %v2691
    %2788 = vmatpush1.bf16.msra.mxu0 %v2690
    %2789 = vmatprep.subr.bf16.mxu0 %v2695
    %2790 = vmatpush1.bf16.msra.mxu0 %v2694
    %2791 = vmatprep.subr.bf16.mxu0 %v2699
    %2792 = vmatpush1.bf16.msra.mxu0 %v2698
    %2793 = vmatprep.subr.bf16.mxu0 %v2703
    %2794 = vmatpush1.bf16.msra.mxu0 %v2702
    %2795 = vmatprep.subr.bf16.mxu0 %v2707
    %2796 = vmatpush1.bf16.msra.mxu0 %v2706
    %2797 = vmatprep.subr.bf16.mxu0 0
    %2798 = vmatpush1.bf16.msra.mxu0 0
    %2799 = vmatprep.subr.bf16.mxu0 0
    %2800 = vmatpush1.bf16.msra.mxu0 0
    %2801 = vmatprep.subr.bf16.mxu0 0
    %2802 = vmatpush1.bf16.msra.mxu0 0
    %2803 = vmatprep.subr.bf16.mxu0 0
    %2804 = vmatpush1.bf16.msra.mxu0 0
    %2805 = vmatprep.subr.bf16.mxu0 0
    %2806 = vmatpush1.bf16.msra.mxu0 0
    %2807 = vmatprep.subr.bf16.mxu0 0
    %2808 = vmatpush1.bf16.msra.mxu0 0
    %2809 = vmatprep.subr.bf16.mxu0 0
    %2810 = vmatpush1.bf16.msra.mxu0 0
    %2811 = vmatprep.subr.bf16.mxu0 0
    %2812 = vmatpush1.bf16.msra.mxu0 0
    %2813 = vmatprep.mubr.bf16.mxu0 0
    %2814 = vmatmul.mubr.bf16.gmra.mrb[0].mxu0 %v2547
    %v2815 = vpop.f32.mrb[0].mxu0
    %v2816 = vadd.f32 0.0, %v2815
    %v2817 = vpop.f32.mrb[0].mxu0
    %v2818 = vadd.f32 0.0, %v2817
    %v2819 = vpop.f32.mrb[0].mxu0
    %v2820 = vpop.f32.mrb[0].mxu0
    %2821 = vdwg.mxu0
    %v2822 = vadd.f32 %v2543, %v2775
    %v2823 = vadd.f32 %v2544, %v2777
    %v2824 = vadd.f32 %v2545, %v2816
    %v2825 = vadd.f32 %v2546, %v2818
    %v2826 = vxor.u32 %v2822, 2147483648
    %v2827 = vxor.u32 %v2823, 2147483648
    %v2828 = vxor.u32 %v2824, 2147483648
    %v2829 = vmul.f32 %v2826, 1.442695
    %v2830 = vpow.pop %v2829
    %v2831 = vmul.f32 %v2827, 1.442695
    %v2832 = vpow.pop %v2831
    %v2833 = vmul.f32 %v2828, 1.442695
    %v2834 = vpow.pop %v2833
    %v2835 = vadd.f32 %v2830, 1.0
    %v2836 = vadd.f32 %v2832, 1.0
    %v2837 = vadd.f32 %v2834, 1.0
    %v2838 = vrcp.pop %v2835
    %v2839 = vmul.f32 1.0, %v2838
    %v2840 = vrcp.pop %v2836
    %v2841 = vmul.f32 1.0, %v2840
    %v2842 = vrcp.pop %v2837
    %v2843 = vmul.f32 1.0, %v2842
    %v2844 = vtanh.pop %v2825
    %v2845 = vmul.f32 %v2841, %v2537
    %v2846 = vmul.f32 %v2839, %v2844
    %v2847 = vadd.f32 %v2845, %v2846
    %v2848 = vtanh.pop %v2847
    %v2849 = vmul.f32 %v2843, %v2848
    %s2850 = scalar_lea.vmem [#allocation3], 56
    %2851 = vst [vmem:[%s2850] sm:$0xff] %v2849
    %v2852 = vld [vmem:[#allocation3] sm:$0xff]
    %v2853 = vld [vmem:[#allocation3 + $0x8] sm:$0xff]
    %v2854 = vld [vmem:[#allocation3 + $0x10] sm:$0xff]
    %v2855 = vld [vmem:[#allocation3 + $0x18] sm:$0xff]
    %v2856 = vld [vmem:[#allocation3 + $0x20] sm:$0xff]
    %v2857 = vld [vmem:[#allocation3 + $0x28] sm:$0xff]
    %v2858 = vld [vmem:[#allocation3 + $0x30] sm:$0xff]
    %v2859 = vld [vmem:[#allocation3 + $0x38] sm:$0xff]
    %v2860 = vpack.c.bf16 %v2853, %v2852
    %v2861 = vpack.c.bf16 %v2855, %v2854
    %v2862 = vpack.c.bf16 %v2857, %v2856
    %v2863 = vpack.c.bf16 %v2859, %v2858
    %v2864 = vld [vmem:[#allocation5] sm:$0xff]
    %v2865 = vld [vmem:[#allocation5 + $0x8] sm:$0xff]
    %v2866 = vld [vmem:[#allocation5 + $0x10] sm:$0xff]
    %v2867 = vld [vmem:[#allocation5 + $0x18] sm:$0xff]
    %v2868 = vld [vmem:[#allocation5 + $0x20] sm:$0xff]
    %v2869 = vld [vmem:[#allocation5 + $0x28] sm:$0xff]
    %v2870 = vld [vmem:[#allocation5 + $0x30] sm:$0xff]
    %v2871 = vld [vmem:[#allocation5 + $0x38] sm:$0xff]
    %v2872 = vld [vmem:[#allocation5 + $0x40] sm:$0xff]
    %v2873 = vld [vmem:[#allocation5 + $0x48] sm:$0xff]
    %v2874 = vld [vmem:[#allocation5 + $0x50] sm:$0xff]
    %v2875 = vld [vmem:[#allocation5 + $0x58] sm:$0xff]
    %v2876 = vld [vmem:[#allocation5 + $0x60] sm:$0xff]
    %v2877 = vld [vmem:[#allocation5 + $0x68] sm:$0xff]
    %v2878 = vld [vmem:[#allocation5 + $0x70] sm:$0xff]
    %v2879 = vld [vmem:[#allocation5 + $0x78] sm:$0xff]
    %v2880 = vld [vmem:[#allocation5 + $0x80] sm:$0xff]
    %v2881 = vld [vmem:[#allocation5 + $0x88] sm:$0xff]
    %v2882 = vld [vmem:[#allocation5 + $0x90] sm:$0xff]
    %v2883 = vld [vmem:[#allocation5 + $0x98] sm:$0xff]
    %v2884 = vld [vmem:[#allocation5 + $0xa0] sm:$0xff]
    %v2885 = vld [vmem:[#allocation5 + $0xa8] sm:$0xff]
    %v2886 = vld [vmem:[#allocation5 + $0xb0] sm:$0xff]
    %v2887 = vld [vmem:[#allocation5 + $0xb8] sm:$0xff]
    %v2888 = vld [vmem:[#allocation5 + $0xc0] sm:$0xff]
    %v2889 = vld [vmem:[#allocation5 + $0xc8] sm:$0xff]
    %v2890 = vld [vmem:[#allocation5 + $0xd0] sm:$0xff]
    %v2891 = vld [vmem:[#allocation5 + $0xd8] sm:$0xff]
    %v2892 = vld [vmem:[#allocation5 + $0xe0] sm:$0xff]
    %v2893 = vld [vmem:[#allocation5 + $0xe8] sm:$0xff]
    %v2894 = vld [vmem:[#allocation5 + $0xf0] sm:$0xff]
    %v2895 = vld [vmem:[#allocation5 + $0xf8] sm:$0xff]
    %v2896 = vld [vmem:[%s6] sm:$0xf]
    %v2898 = vlaneseq
    %v2899 = vshrl.u32 %v2898, 7
    %v2900 = vsub.s32 0, %v2899
    %v2901 = vrot.slane %v2896, %v2900
    %v2902 = vlaneseq
    %v2903 = vshrl.u32 %v2902, 7
    %v2904 = vsub.s32 1, %v2903
    %v2905 = vrot.slane %v2896, %v2904
    %v2906 = vlaneseq
    %v2907 = vshrl.u32 %v2906, 7
    %v2908 = vsub.s32 2, %v2907
    %v2909 = vrot.slane %v2896, %v2908
    %v2910 = vlaneseq
    %v2911 = vshrl.u32 %v2910, 7
    %v2912 = vsub.s32 3, %v2911
    %v2913 = vrot.slane %v2896, %v2912
    %v2950 = vunpack.c.l.b16 %v2864
    %v2951 = vunpack.c.h.b16 %v2864
    %v2952 = vunpack.c.l.b16 %v2865
    %v2953 = vunpack.c.h.b16 %v2865
    %v2954 = vunpack.c.l.b16 %v2866
    %v2955 = vunpack.c.h.b16 %v2866
    %v2956 = vunpack.c.l.b16 %v2867
    %v2957 = vunpack.c.h.b16 %v2867
    %v2958 = vunpack.c.l.b16 %v2868
    %v2959 = vunpack.c.h.b16 %v2868
    %v2960 = vunpack.c.l.b16 %v2869
    %v2961 = vunpack.c.h.b16 %v2869
    %v2962 = vunpack.c.l.b16 %v2870
    %v2963 = vunpack.c.h.b16 %v2870
    %v2964 = vunpack.c.l.b16 %v2871
    %v2965 = vunpack.c.h.b16 %v2871
    %v2966 = vunpack.c.l.b16 %v2872
    %v2967 = vunpack.c.h.b16 %v2872
    %v2968 = vunpack.c.l.b16 %v2873
    %v2969 = vunpack.c.h.b16 %v2873
    %v2970 = vunpack.c.l.b16 %v2874
    %v2971 = vunpack.c.h.b16 %v2874
    %v2972 = vunpack.c.l.b16 %v2875
    %v2973 = vunpack.c.h.b16 %v2875
    %v2974 = vunpack.c.l.b16 %v2876
    %v2975 = vunpack.c.h.b16 %v2876
    %v2976 = vunpack.c.l.b16 %v2877
    %v2977 = vunpack.c.h.b16 %v2877
    %v2978 = vunpack.c.l.b16 %v2878
    %v2979 = vunpack.c.h.b16 %v2878
    %v2980 = vunpack.c.l.b16 %v2879
    %v2981 = vunpack.c.h.b16 %v2879
    %v2982 = vunpack.c.l.b16 %v2880
    %v2983 = vunpack.c.h.b16 %v2880
    %v2984 = vunpack.c.l.b16 %v2881
    %v2985 = vunpack.c.h.b16 %v2881
    %v2986 = vunpack.c.l.b16 %v2882
    %v2987 = vunpack.c.h.b16 %v2882
    %v2988 = vunpack.c.l.b16 %v2883
    %v2989 = vunpack.c.h.b16 %v2883
    %v2990 = vunpack.c.l.b16 %v2884
    %v2991 = vunpack.c.h.b16 %v2884
    %v2992 = vunpack.c.l.b16 %v2885
    %v2993 = vunpack.c.h.b16 %v2885
    %v2994 = vunpack.c.l.b16 %v2886
    %v2995 = vunpack.c.h.b16 %v2886
    %v2996 = vunpack.c.l.b16 %v2887
    %v2997 = vunpack.c.h.b16 %v2887
    %v2998 = vunpack.c.l.b16 %v2888
    %v2999 = vunpack.c.h.b16 %v2888
    %v3000 = vunpack.c.l.b16 %v2889
    %v3001 = vunpack.c.h.b16 %v2889
    %v3002 = vunpack.c.l.b16 %v2890
    %v3003 = vunpack.c.h.b16 %v2890
    %v3004 = vunpack.c.l.b16 %v2891
    %v3005 = vunpack.c.h.b16 %v2891
    %v3006 = vunpack.c.l.b16 %v2892
    %v3007 = vunpack.c.h.b16 %v2892
    %v3008 = vunpack.c.l.b16 %v2893
    %v3009 = vunpack.c.h.b16 %v2893
    %v3010 = vunpack.c.l.b16 %v2894
    %v3011 = vunpack.c.h.b16 %v2894
    %v3012 = vunpack.c.l.b16 %v2895
    %v3013 = vunpack.c.h.b16 %v2895
    %v3014 = vpack.c.b16 %v2954, %v2950
    %v3015 = vpack.c.b16 %v2955, %v2951
    %v3016 = vpack.c.b16 %v2956, %v2952
    %v3017 = vpack.c.b16 %v2957, %v2953
    %v3018 = vpack.c.b16 %v2962, %v2958
    %v3019 = vpack.c.b16 %v2963, %v2959
    %v3020 = vpack.c.b16 %v2964, %v2960
    %v3021 = vpack.c.b16 %v2965, %v2961
    %v3022 = vpack.c.b16 %v2970, %v2966
    %v3023 = vpack.c.b16 %v2971, %v2967
    %v3024 = vpack.c.b16 %v2972, %v2968
    %v3025 = vpack.c.b16 %v2973, %v2969
    %v3026 = vpack.c.b16 %v2978, %v2974
    %v3027 = vpack.c.b16 %v2979, %v2975
    %v3028 = vpack.c.b16 %v2980, %v2976
    %v3029 = vpack.c.b16 %v2981, %v2977
    %v3030 = vpack.c.b16 %v2986, %v2982
    %v3031 = vpack.c.b16 %v2987, %v2983
    %v3032 = vpack.c.b16 %v2988, %v2984
    %v3033 = vpack.c.b16 %v2989, %v2985
    %v3034 = vpack.c.b16 %v2994, %v2990
    %v3035 = vpack.c.b16 %v2995, %v2991
    %v3036 = vpack.c.b16 %v2996, %v2992
    %v3037 = vpack.c.b16 %v2997, %v2993
    %v3038 = vpack.c.b16 %v3002, %v2998
    %v3039 = vpack.c.b16 %v3003, %v2999
    %v3040 = vpack.c.b16 %v3004, %v3000
    %v3041 = vpack.c.b16 %v3005, %v3001
    %v3042 = vpack.c.b16 %v3010, %v3006
    %v3043 = vpack.c.b16 %v3011, %v3007
    %v3044 = vpack.c.b16 %v3012, %v3008
    %v3045 = vpack.c.b16 %v3013, %v3009
    %3078 = vmatprep.subr.bf16.mxu0 %v3015
    %3079 = vmatpush1.bf16.msra.mxu0 %v3014
    %3080 = vmatprep.subr.bf16.mxu0 %v3019
    %3081 = vmatpush1.bf16.msra.mxu0 %v3018
    %3082 = vmatprep.subr.bf16.mxu0 %v3023
    %3083 = vmatpush1.bf16.msra.mxu0 %v3022
    %3084 = vmatprep.subr.bf16.mxu0 %v3027
    %3085 = vmatpush1.bf16.msra.mxu0 %v3026
    %3086 = vmatprep.subr.bf16.mxu0 %v3031
    %3087 = vmatpush1.bf16.msra.mxu0 %v3030
    %3088 = vmatprep.subr.bf16.mxu0 %v3035
    %3089 = vmatpush1.bf16.msra.mxu0 %v3034
    %3090 = vmatprep.subr.bf16.mxu0 %v3039
    %3091 = vmatpush1.bf16.msra.mxu0 %v3038
    %3092 = vmatprep.subr.bf16.mxu0 %v3043
    %3093 = vmatpush1.bf16.msra.mxu0 %v3042
    %3094 = vmatprep.subr.bf16.mxu0 0
    %3095 = vmatpush1.bf16.msra.mxu0 0
    %3096 = vmatprep.subr.bf16.mxu0 0
    %3097 = vmatpush1.bf16.msra.mxu0 0
    %3098 = vmatprep.subr.bf16.mxu0 0
    %3099 = vmatpush1.bf16.msra.mxu0 0
    %3100 = vmatprep.subr.bf16.mxu0 0
    %3101 = vmatpush1.bf16.msra.mxu0 0
    %3102 = vmatprep.subr.bf16.mxu0 0
    %3103 = vmatpush1.bf16.msra.mxu0 0
    %3104 = vmatprep.subr.bf16.mxu0 0
    %3105 = vmatpush1.bf16.msra.mxu0 0
    %3106 = vmatprep.subr.bf16.mxu0 0
    %3107 = vmatpush1.bf16.msra.mxu0 0
    %3108 = vmatprep.subr.bf16.mxu0 0
    %3109 = vmatpush1.bf16.msra.mxu0 0
    %3110 = vmatprep.mubr.bf16.mxu0 0
    %3111 = vmatmul.mubr.bf16.gmra.mrb[0].mxu0 %v2860
    %v3112 = vpop.f32.mrb[0].mxu0
    %v3113 = vadd.f32 %v2901, %v3112
    %v3114 = vpop.f32.mrb[0].mxu0
    %v3115 = vadd.f32 %v2905, %v3114
    %v3116 = vpop.f32.mrb[0].mxu0
    %v3117 = vadd.f32 %v2901, %v3116
    %v3118 = vpop.f32.mrb[0].mxu0
    %v3119 = vadd.f32 %v2905, %v3118
    %3120 = vmatprep.mubr.bf16.mxu0 0
    %3121 = vmatmul.mubr.bf16.gmra.mrb[0].mxu0 %v2861
    %v3122 = vpop.f32.mrb[0].mxu0
    %v3123 = vadd.f32 %v2901, %v3122
    %v3124 = vpop.f32.mrb[0].mxu0
    %v3125 = vadd.f32 %v2905, %v3124
    %v3126 = vpop.f32.mrb[0].mxu0
    %v3127 = vadd.f32 %v2901, %v3126
    %v3128 = vpop.f32.mrb[0].mxu0
    %v3129 = vadd.f32 %v2905, %v3128
    %3130 = vmatprep.mubr.bf16.mxu0 0
    %3131 = vmatmul.mubr.bf16.gmra.mrb[0].mxu0 %v2862
    %v3132 = vpop.f32.mrb[0].mxu0
    %v3133 = vadd.f32 %v2901, %v3132
    %v3134 = vpop.f32.mrb[0].mxu0
    %v3135 = vadd.f32 %v2905, %v3134
    %v3136 = vpop.f32.mrb[0].mxu0
    %v3137 = vadd.f32 %v2901, %v3136
    %v3138 = vpop.f32.mrb[0].mxu0
    %v3139 = vadd.f32 %v2905, %v3138
    %3140 = vmatprep.mubr.bf16.mxu0 0
    %3141 = vmatmul.mubr.bf16.gmra.mrb[0].mxu0 %v2863
    %v3142 = vpop.f32.mrb[0].mxu0
    %v3143 = vadd.f32 %v2901, %v3142
    %v3144 = vpop.f32.mrb[0].mxu0
    %v3145 = vadd.f32 %v2905, %v3144
    %v3146 = vpop.f32.mrb[0].mxu0
    %v3147 = vadd.f32 %v2901, %v3146
    %v3148 = vpop.f32.mrb[0].mxu0
    %v3149 = vadd.f32 %v2905, %v3148
    %3150 = vdwg.mxu0
    %3151 = vmatprep.subr.bf16.mxu0 %v3017
    %3152 = vmatpush1.bf16.msra.mxu0 %v3016
    %3153 = vmatprep.subr.bf16.mxu0 %v3021
    %3154 = vmatpush1.bf16.msra.mxu0 %v3020
    %3155 = vmatprep.subr.bf16.mxu0 %v3025
    %3156 = vmatpush1.bf16.msra.mxu0 %v3024
    %3157 = vmatprep.subr.bf16.mxu0 %v3029
    %3158 = vmatpush1.bf16.msra.mxu0 %v3028
    %3159 = vmatprep.subr.bf16.mxu0 %v3033
    %3160 = vmatpush1.bf16.msra.mxu0 %v3032
    %3161 = vmatprep.subr.bf16.mxu0 %v3037
    %3162 = vmatpush1.bf16.msra.mxu0 %v3036
    %3163 = vmatprep.subr.bf16.mxu0 %v3041
    %3164 = vmatpush1.bf16.msra.mxu0 %v3040
    %3165 = vmatprep.subr.bf16.mxu0 %v3045
    %3166 = vmatpush1.bf16.msra.mxu0 %v3044
    %3167 = vmatprep.subr.bf16.mxu0 0
    %3168 = vmatpush1.bf16.msra.mxu0 0
    %3169 = vmatprep.subr.bf16.mxu0 0
    %3170 = vmatpush1.bf16.msra.mxu0 0
    %3171 = vmatprep.subr.bf16.mxu0 0
    %3172 = vmatpush1.bf16.msra.mxu0 0
    %3173 = vmatprep.subr.bf16.mxu0 0
    %3174 = vmatpush1.bf16.msra.mxu0 0
    %3175 = vmatprep.subr.bf16.mxu0 0
    %3176 = vmatpush1.bf16.msra.mxu0 0
    %3177 = vmatprep.subr.bf16.mxu0 0
    %3178 = vmatpush1.bf16.msra.mxu0 0
    %3179 = vmatprep.subr.bf16.mxu0 0
    %3180 = vmatpush1.bf16.msra.mxu0 0
    %3181 = vmatprep.subr.bf16.mxu0 0
    %3182 = vmatpush1.bf16.msra.mxu0 0
    %3183 = vmatprep.mubr.bf16.mxu0 0
    %3184 = vmatmul.mubr.bf16.gmra.mrb[0].mxu0 %v2860
    %v3185 = vpop.f32.mrb[0].mxu0
    %v3186 = vadd.f32 %v2909, %v3185
    %v3187 = vpop.f32.mrb[0].mxu0
    %v3188 = vadd.f32 %v2913, %v3187
    %v3189 = vpop.f32.mrb[0].mxu0
    %v3190 = vadd.f32 %v2909, %v3189
    %v3191 = vpop.f32.mrb[0].mxu0
    %v3192 = vadd.f32 %v2913, %v3191
    %3193 = vmatprep.mubr.bf16.mxu0 0
    %3194 = vmatmul.mubr.bf16.gmra.mrb[0].mxu0 %v2861
    %v3195 = vpop.f32.mrb[0].mxu0
    %v3196 = vadd.f32 %v2909, %v3195
    %v3197 = vpop.f32.mrb[0].mxu0
    %v3198 = vadd.f32 %v2913, %v3197
    %v3199 = vpop.f32.mrb[0].mxu0
    %v3200 = vadd.f32 %v2909, %v3199
    %v3201 = vpop.f32.mrb[0].mxu0
    %v3202 = vadd.f32 %v2913, %v3201
    %3203 = vmatprep.mubr.bf16.mxu0 0
    %3204 = vmatmul.mubr.bf16.gmra.mrb[0].mxu0 %v2862
    %v3205 = vpop.f32.mrb[0].mxu0
    %v3206 = vadd.f32 %v2909, %v3205
    %v3207 = vpop.f32.mrb[0].mxu0
    %v3208 = vadd.f32 %v2913, %v3207
    %v3209 = vpop.f32.mrb[0].mxu0
    %v3210 = vadd.f32 %v2909, %v3209
    %v3211 = vpop.f32.mrb[0].mxu0
    %v3212 = vadd.f32 %v2913, %v3211
    %3213 = vmatprep.mubr.bf16.mxu0 0
    %3214 = vmatmul.mubr.bf16.gmra.mrb[0].mxu0 %v2863
    %v3215 = vpop.f32.mrb[0].mxu0
    %v3216 = vadd.f32 %v2909, %v3215
    %v3217 = vpop.f32.mrb[0].mxu0
    %v3218 = vadd.f32 %v2913, %v3217
    %v3219 = vpop.f32.mrb[0].mxu0
    %v3220 = vadd.f32 %v2909, %v3219
    %v3221 = vpop.f32.mrb[0].mxu0
    %v3222 = vadd.f32 %v2913, %v3221
    %3223 = vdwg.mxu0
    %3224 = vst [vmem:[#allocation2] sm:$0xff] %v3113
    %3225 = vst [vmem:[#allocation2 + $0x8] sm:$0xff] %v3115
    %3226 = vst [vmem:[#allocation2 + $0x10] sm:$0xff] %v3186
    %3227 = vst [vmem:[#allocation2 + $0x18] sm:$0xff] %v3188
    %3228 = vst [vmem:[#allocation2 + $0x20] sm:$0xff] %v3117
    %3229 = vst [vmem:[#allocation2 + $0x28] sm:$0xff] %v3119
    %3230 = vst [vmem:[#allocation2 + $0x30] sm:$0xff] %v3190
    %3231 = vst [vmem:[#allocation2 + $0x38] sm:$0xff] %v3192
    %3232 = vst [vmem:[#allocation2 + $0x40] sm:$0xff] %v3123
    %3233 = vst [vmem:[#allocation2 + $0x48] sm:$0xff] %v3125
    %3234 = vst [vmem:[#allocation2 + $0x50] sm:$0xff] %v3196
    %3235 = vst [vmem:[#allocation2 + $0x58] sm:$0xff] %v3198
    %3236 = vst [vmem:[#allocation2 + $0x60] sm:$0xff] %v3127
    %3237 = vst [vmem:[#allocation2 + $0x68] sm:$0xff] %v3129
    %3238 = vst [vmem:[#allocation2 + $0x70] sm:$0xff] %v3200
    %3239 = vst [vmem:[#allocation2 + $0x78] sm:$0xff] %v3202
    %3240 = vst [vmem:[#allocation2 + $0x80] sm:$0xff] %v3133
    %3241 = vst [vmem:[#allocation2 + $0x88] sm:$0xff] %v3135
    %3242 = vst [vmem:[#allocation2 + $0x90] sm:$0xff] %v3206
    %3243 = vst [vmem:[#allocation2 + $0x98] sm:$0xff] %v3208
    %3244 = vst [vmem:[#allocation2 + $0xa0] sm:$0xff] %v3137
    %3245 = vst [vmem:[#allocation2 + $0xa8] sm:$0xff] %v3139
    %3246 = vst [vmem:[#allocation2 + $0xb0] sm:$0xff] %v3210
    %3247 = vst [vmem:[#allocation2 + $0xb8] sm:$0xff] %v3212
    %3248 = vst [vmem:[#allocation2 + $0xc0] sm:$0xff] %v3143
    %3249 = vst [vmem:[#allocation2 + $0xc8] sm:$0xff] %v3145
    %3250 = vst [vmem:[#allocation2 + $0xd0] sm:$0xff] %v3216
    %3251 = vst [vmem:[#allocation2 + $0xd8] sm:$0xff] %v3218
    %3252 = vst [vmem:[#allocation2 + $0xe0] sm:$0xff] %v3147
    %3253 = vst [vmem:[#allocation2 + $0xe8] sm:$0xff] %v3149
    %3254 = vst [vmem:[#allocation2 + $0xf0] sm:$0xff] %v3220
    %3255 = vst [vmem:[#allocation2 + $0xf8] sm:$0xff] %v3222
    %v3256 = vld [vmem:[#allocation2] sm:$0xff]
    %v3257 = vld [vmem:[#allocation2 + $0x8] sm:$0xff]
    %v3258 = vld [vmem:[#allocation2 + $0x10] sm:$0xff]
    %v3259 = vld [vmem:[#allocation2 + $0x18] sm:$0xff]
    %v3260 = vpack.c.bf16 %v2849, %v2849
    %v3261 = vld [vmem:[#allocation7] sm:$0xff]
    %v3262 = vld [vmem:[#allocation7 + $0x8] sm:$0xff]
    %v3263 = vld [vmem:[#allocation7 + $0x10] sm:$0xff]
    %v3264 = vld [vmem:[#allocation7 + $0x18] sm:$0xff]
    %v3265 = vld [vmem:[#allocation7 + $0x20] sm:$0xff]
    %v3266 = vld [vmem:[#allocation7 + $0x28] sm:$0xff]
    %v3267 = vld [vmem:[#allocation7 + $0x30] sm:$0xff]
    %v3268 = vld [vmem:[#allocation7 + $0x38] sm:$0xff]
    %v3269 = vld [vmem:[#allocation7 + $0x40] sm:$0xff]
    %v3270 = vld [vmem:[#allocation7 + $0x48] sm:$0xff]
    %v3271 = vld [vmem:[#allocation7 + $0x50] sm:$0xff]
    %v3272 = vld [vmem:[#allocation7 + $0x58] sm:$0xff]
    %v3273 = vld [vmem:[#allocation7 + $0x60] sm:$0xff]
    %v3274 = vld [vmem:[#allocation7 + $0x68] sm:$0xff]
    %v3275 = vld [vmem:[#allocation7 + $0x70] sm:$0xff]
    %v3276 = vld [vmem:[#allocation7 + $0x78] sm:$0xff]
    %v3277 = vld [vmem:[#allocation7 + $0x80] sm:$0xff]
    %v3278 = vld [vmem:[#allocation7 + $0x88] sm:$0xff]
    %v3279 = vld [vmem:[#allocation7 + $0x90] sm:$0xff]
    %v3280 = vld [vmem:[#allocation7 + $0x98] sm:$0xff]
    %v3281 = vld [vmem:[#allocation7 + $0xa0] sm:$0xff]
    %v3282 = vld [vmem:[#allocation7 + $0xa8] sm:$0xff]
    %v3283 = vld [vmem:[#allocation7 + $0xb0] sm:$0xff]
    %v3284 = vld [vmem:[#allocation7 + $0xb8] sm:$0xff]
    %v3285 = vld [vmem:[#allocation7 + $0xc0] sm:$0xff]
    %v3286 = vld [vmem:[#allocation7 + $0xc8] sm:$0xff]
    %v3287 = vld [vmem:[#allocation7 + $0xd0] sm:$0xff]
    %v3288 = vld [vmem:[#allocation7 + $0xd8] sm:$0xff]
    %v3289 = vld [vmem:[#allocation7 + $0xe0] sm:$0xff]
    %v3290 = vld [vmem:[#allocation7 + $0xe8] sm:$0xff]
    %v3291 = vld [vmem:[#allocation7 + $0xf0] sm:$0xff]
    %v3292 = vld [vmem:[#allocation7 + $0xf8] sm:$0xff]
    %v3325 = vunpack.c.l.b16 %v3261
    %v3326 = vunpack.c.h.b16 %v3261
    %v3327 = vunpack.c.l.b16 %v3262
    %v3328 = vunpack.c.h.b16 %v3262
    %v3329 = vunpack.c.l.b16 %v3263
    %v3330 = vunpack.c.h.b16 %v3263
    %v3331 = vunpack.c.l.b16 %v3264
    %v3332 = vunpack.c.h.b16 %v3264
    %v3333 = vunpack.c.l.b16 %v3265
    %v3334 = vunpack.c.h.b16 %v3265
    %v3335 = vunpack.c.l.b16 %v3266
    %v3336 = vunpack.c.h.b16 %v3266
    %v3337 = vunpack.c.l.b16 %v3267
    %v3338 = vunpack.c.h.b16 %v3267
    %v3339 = vunpack.c.l.b16 %v3268
    %v3340 = vunpack.c.h.b16 %v3268
    %v3341 = vunpack.c.l.b16 %v3269
    %v3342 = vunpack.c.h.b16 %v3269
    %v3343 = vunpack.c.l.b16 %v3270
    %v3344 = vunpack.c.h.b16 %v3270
    %v3345 = vunpack.c.l.b16 %v3271
    %v3346 = vunpack.c.h.b16 %v3271
    %v3347 = vunpack.c.l.b16 %v3272
    %v3348 = vunpack.c.h.b16 %v3272
    %v3349 = vunpack.c.l.b16 %v3273
    %v3350 = vunpack.c.h.b16 %v3273
    %v3351 = vunpack.c.l.b16 %v3274
    %v3352 = vunpack.c.h.b16 %v3274
    %v3353 = vunpack.c.l.b16 %v3275
    %v3354 = vunpack.c.h.b16 %v3275
    %v3355 = vunpack.c.l.b16 %v3276
    %v3356 = vunpack.c.h.b16 %v3276
    %v3357 = vunpack.c.l.b16 %v3277
    %v3358 = vunpack.c.h.b16 %v3277
    %v3359 = vunpack.c.l.b16 %v3278
    %v3360 = vunpack.c.h.b16 %v3278
    %v3361 = vunpack.c.l.b16 %v3279
    %v3362 = vunpack.c.h.b16 %v3279
    %v3363 = vunpack.c.l.b16 %v3280
    %v3364 = vunpack.c.h.b16 %v3280
    %v3365 = vunpack.c.l.b16 %v3281
    %v3366 = vunpack.c.h.b16 %v3281
    %v3367 = vunpack.c.l.b16 %v3282
    %v3368 = vunpack.c.h.b16 %v3282
    %v3369 = vunpack.c.l.b16 %v3283
    %v3370 = vunpack.c.h.b16 %v3283
    %v3371 = vunpack.c.l.b16 %v3284
    %v3372 = vunpack.c.h.b16 %v3284
    %v3373 = vunpack.c.l.b16 %v3285
    %v3374 = vunpack.c.h.b16 %v3285
    %v3375 = vunpack.c.l.b16 %v3286
    %v3376 = vunpack.c.h.b16 %v3286
    %v3377 = vunpack.c.l.b16 %v3287
    %v3378 = vunpack.c.h.b16 %v3287
    %v3379 = vunpack.c.l.b16 %v3288
    %v3380 = vunpack.c.h.b16 %v3288
    %v3381 = vunpack.c.l.b16 %v3289
    %v3382 = vunpack.c.h.b16 %v3289
    %v3383 = vunpack.c.l.b16 %v3290
    %v3384 = vunpack.c.h.b16 %v3290
    %v3385 = vunpack.c.l.b16 %v3291
    %v3386 = vunpack.c.h.b16 %v3291
    %v3387 = vunpack.c.l.b16 %v3292
    %v3388 = vunpack.c.h.b16 %v3292
    %v3389 = vpack.c.b16 %v3329, %v3325
    %v3390 = vpack.c.b16 %v3330, %v3326
    %v3391 = vpack.c.b16 %v3331, %v3327
    %v3392 = vpack.c.b16 %v3332, %v3328
    %v3393 = vpack.c.b16 %v3337, %v3333
    %v3394 = vpack.c.b16 %v3338, %v3334
    %v3395 = vpack.c.b16 %v3339, %v3335
    %v3396 = vpack.c.b16 %v3340, %v3336
    %v3397 = vpack.c.b16 %v3345, %v3341
    %v3398 = vpack.c.b16 %v3346, %v3342
    %v3399 = vpack.c.b16 %v3347, %v3343
    %v3400 = vpack.c.b16 %v3348, %v3344
    %v3401 = vpack.c.b16 %v3353, %v3349
    %v3402 = vpack.c.b16 %v3354, %v3350
    %v3403 = vpack.c.b16 %v3355, %v3351
    %v3404 = vpack.c.b16 %v3356, %v3352
    %v3405 = vpack.c.b16 %v3361, %v3357
    %v3406 = vpack.c.b16 %v3362, %v3358
    %v3407 = vpack.c.b16 %v3363, %v3359
    %v3408 = vpack.c.b16 %v3364, %v3360
    %v3409 = vpack.c.b16 %v3369, %v3365
    %v3410 = vpack.c.b16 %v3370, %v3366
    %v3411 = vpack.c.b16 %v3371, %v3367
    %v3412 = vpack.c.b16 %v3372, %v3368
    %v3413 = vpack.c.b16 %v3377, %v3373
    %v3414 = vpack.c.b16 %v3378, %v3374
    %v3415 = vpack.c.b16 %v3379, %v3375
    %v3416 = vpack.c.b16 %v3380, %v3376
    %v3417 = vpack.c.b16 %v3385, %v3381
    %v3418 = vpack.c.b16 %v3386, %v3382
    %v3419 = vpack.c.b16 %v3387, %v3383
    %v3420 = vpack.c.b16 %v3388, %v3384
    %3453 = vmatprep.subr.bf16.mxu0 %v3390
    %3454 = vmatpush1.bf16.msra.mxu0 %v3389
    %3455 = vmatprep.subr.bf16.mxu0 %v3394
    %3456 = vmatpush1.bf16.msra.mxu0 %v3393
    %3457 = vmatprep.subr.bf16.mxu0 %v3398
    %3458 = vmatpush1.bf16.msra.mxu0 %v3397
    %3459 = vmatprep.subr.bf16.mxu0 %v3402
    %3460 = vmatpush1.bf16.msra.mxu0 %v3401
    %3461 = vmatprep.subr.bf16.mxu0 %v3406
    %3462 = vmatpush1.bf16.msra.mxu0 %v3405
    %3463 = vmatprep.subr.bf16.mxu0 %v3410
    %3464 = vmatpush1.bf16.msra.mxu0 %v3409
    %3465 = vmatprep.subr.bf16.mxu0 %v3414
    %3466 = vmatpush1.bf16.msra.mxu0 %v3413
    %3467 = vmatprep.subr.bf16.mxu0 %v3418
    %3468 = vmatpush1.bf16.msra.mxu0 %v3417
    %3469 = vmatprep.subr.bf16.mxu0 0
    %3470 = vmatpush1.bf16.msra.mxu0 0
    %3471 = vmatprep.subr.bf16.mxu0 0
    %3472 = vmatpush1.bf16.msra.mxu0 0
    %3473 = vmatprep.subr.bf16.mxu0 0
    %3474 = vmatpush1.bf16.msra.mxu0 0
    %3475 = vmatprep.subr.bf16.mxu0 0
    %3476 = vmatpush1.bf16.msra.mxu0 0
    %3477 = vmatprep.subr.bf16.mxu0 0
    %3478 = vmatpush1.bf16.msra.mxu0 0
    %3479 = vmatprep.subr.bf16.mxu0 0
    %3480 = vmatpush1.bf16.msra.mxu0 0
    %3481 = vmatprep.subr.bf16.mxu0 0
    %3482 = vmatpush1.bf16.msra.mxu0 0
    %3483 = vmatprep.subr.bf16.mxu0 0
    %3484 = vmatpush1.bf16.msra.mxu0 0
    %3485 = vmatprep.mubr.bf16.mxu0 0
    %3486 = vmatmul.mubr.bf16.gmra.mrb[0].mxu0 %v3260
    %v3487 = vpop.f32.mrb[0].mxu0
    %v3488 = vadd.f32 0.0, %v3487
    %v3489 = vpop.f32.mrb[0].mxu0
    %v3490 = vadd.f32 0.0, %v3489
    %v3491 = vpop.f32.mrb[0].mxu0
    %v3492 = vpop.f32.mrb[0].mxu0
    %3493 = vdwg.mxu0
    %3494 = vmatprep.subr.bf16.mxu0 %v3392
    %3495 = vmatpush1.bf16.msra.mxu0 %v3391
    %3496 = vmatprep.subr.bf16.mxu0 %v3396
    %3497 = vmatpush1.bf16.msra.mxu0 %v3395
    %3498 = vmatprep.subr.bf16.mxu0 %v3400
    %3499 = vmatpush1.bf16.msra.mxu0 %v3399
    %3500 = vmatprep.subr.bf16.mxu0 %v3404
    %3501 = vmatpush1.bf16.msra.mxu0 %v3403
    %3502 = vmatprep.subr.bf16.mxu0 %v3408
    %3503 = vmatpush1.bf16.msra.mxu0 %v3407
    %3504 = vmatprep.subr.bf16.mxu0 %v3412
    %3505 = vmatpush1.bf16.msra.mxu0 %v3411
    %3506 = vmatprep.subr.bf16.mxu0 %v3416
    %3507 = vmatpush1.bf16.msra.mxu0 %v3415
    %3508 = vmatprep.subr.bf16.mxu0 %v3420
    %3509 = vmatpush1.bf16.msra.mxu0 %v3419
    %3510 = vmatprep.subr.bf16.mxu0 0
    %3511 = vmatpush1.bf16.msra.mxu0 0
    %3512 = vmatprep.subr.bf16.mxu0 0
    %3513 = vmatpush1.bf16.msra.mxu0 0
    %3514 = vmatprep.subr.bf16.mxu0 0
    %3515 = vmatpush1.bf16.msra.mxu0 0
    %3516 = vmatprep.subr.bf16.mxu0 0
    %3517 = vmatpush1.bf16.msra.mxu0 0
    %3518 = vmatprep.subr.bf16.mxu0 0
    %3519 = vmatpush1.bf16.msra.mxu0 0
    %3520 = vmatprep.subr.bf16.mxu0 0
    %3521 = vmatpush1.bf16.msra.mxu0 0
    %3522 = vmatprep.subr.bf16.mxu0 0
    %3523 = vmatpush1.bf16.msra.mxu0 0
    %3524 = vmatprep.subr.bf16.mxu0 0
    %3525 = vmatpush1.bf16.msra.mxu0 0
    %3526 = vmatprep.mubr.bf16.mxu0 0
    %3527 = vmatmul.mubr.bf16.gmra.mrb[0].mxu0 %v3260
    %v3528 = vpop.f32.mrb[0].mxu0
    %v3529 = vadd.f32 0.0, %v3528
    %v3530 = vpop.f32.mrb[0].mxu0
    %v3531 = vadd.f32 0.0, %v3530
    %v3532 = vpop.f32.mrb[0].mxu0
    %v3533 = vpop.f32.mrb[0].mxu0
    %3534 = vdwg.mxu0
    %v3535 = vadd.f32 %v3256, %v3488
    %v3536 = vadd.f32 %v3257, %v3490
    %v3537 = vadd.f32 %v3258, %v3529
    %v3538 = vadd.f32 %v3259, %v3531
    %v3539 = vxor.u32 %v3535, 2147483648
    %v3540 = vxor.u32 %v3536, 2147483648
    %v3541 = vxor.u32 %v3537, 2147483648
    %v3542 = vmul.f32 %v3539, 1.442695
    %v3543 = vpow.pop %v3542
    %v3544 = vmul.f32 %v3540, 1.442695
    %v3545 = vpow.pop %v3544
    %v3546 = vmul.f32 %v3541, 1.442695
    %v3547 = vpow.pop %v3546
    %v3548 = vadd.f32 %v3543, 1.0
    %v3549 = vadd.f32 %v3545, 1.0
    %v3550 = vadd.f32 %v3547, 1.0
    %v3551 = vrcp.pop %v3548
    %v3552 = vmul.f32 1.0, %v3551
    %v3553 = vrcp.pop %v3549
    %v3554 = vmul.f32 1.0, %v3553
    %v3555 = vrcp.pop %v3550
    %v3556 = vmul.f32 1.0, %v3555
    %v3557 = vtanh.pop %v3538
    %v3558 = vmul.f32 %v3554, %v2847
    %v3559 = vmul.f32 %v3552, %v3557
    %v3560 = vadd.f32 %v3558, %v3559
    %v3561 = vtanh.pop %v3560
    %v3562 = vmul.f32 %v3556, %v3561
    %3563 = vst [vmem:[#allocation4] sm:$0xff] %v3562
    %v3564 = vld [vmem:[%s682] sm:$0xff]
    %v3565 = vld [vmem:[%s682 + $0x8] sm:$0xff]
    %v3566 = vld [vmem:[%s682 + $0x10] sm:$0xff]
    %v3567 = vld [vmem:[%s682 + $0x18] sm:$0xff]
    %v3568 = vpack.c.bf16 %v3562, %v3562
    %v3569 = vld [vmem:[#allocation7] sm:$0xff]
    %v3570 = vld [vmem:[#allocation7 + $0x8] sm:$0xff]
    %v3571 = vld [vmem:[#allocation7 + $0x10] sm:$0xff]
    %v3572 = vld [vmem:[#allocation7 + $0x18] sm:$0xff]
    %v3573 = vld [vmem:[#allocation7 + $0x20] sm:$0xff]
    %v3574 = vld [vmem:[#allocation7 + $0x28] sm:$0xff]
    %v3575 = vld [vmem:[#allocation7 + $0x30] sm:$0xff]
    %v3576 = vld [vmem:[#allocation7 + $0x38] sm:$0xff]
    %v3577 = vld [vmem:[#allocation7 + $0x40] sm:$0xff]
    %v3578 = vld [vmem:[#allocation7 + $0x48] sm:$0xff]
    %v3579 = vld [vmem:[#allocation7 + $0x50] sm:$0xff]
    %v3580 = vld [vmem:[#allocation7 + $0x58] sm:$0xff]
    %v3581 = vld [vmem:[#allocation7 + $0x60] sm:$0xff]
    %v3582 = vld [vmem:[#allocation7 + $0x68] sm:$0xff]
    %v3583 = vld [vmem:[#allocation7 + $0x70] sm:$0xff]
    %v3584 = vld [vmem:[#allocation7 + $0x78] sm:$0xff]
    %v3585 = vld [vmem:[#allocation7 + $0x80] sm:$0xff]
    %v3586 = vld [vmem:[#allocation7 + $0x88] sm:$0xff]
    %v3587 = vld [vmem:[#allocation7 + $0x90] sm:$0xff]
    %v3588 = vld [vmem:[#allocation7 + $0x98] sm:$0xff]
    %v3589 = vld [vmem:[#allocation7 + $0xa0] sm:$0xff]
    %v3590 = vld [vmem:[#allocation7 + $0xa8] sm:$0xff]
    %v3591 = vld [vmem:[#allocation7 + $0xb0] sm:$0xff]
    %v3592 = vld [vmem:[#allocation7 + $0xb8] sm:$0xff]
    %v3593 = vld [vmem:[#allocation7 + $0xc0] sm:$0xff]
    %v3594 = vld [vmem:[#allocation7 + $0xc8] sm:$0xff]
    %v3595 = vld [vmem:[#allocation7 + $0xd0] sm:$0xff]
    %v3596 = vld [vmem:[#allocation7 + $0xd8] sm:$0xff]
    %v3597 = vld [vmem:[#allocation7 + $0xe0] sm:$0xff]
    %v3598 = vld [vmem:[#allocation7 + $0xe8] sm:$0xff]
    %v3599 = vld [vmem:[#allocation7 + $0xf0] sm:$0xff]
    %v3600 = vld [vmem:[#allocation7 + $0xf8] sm:$0xff]
    %v3633 = vunpack.c.l.b16 %v3569
    %v3634 = vunpack.c.h.b16 %v3569
    %v3635 = vunpack.c.l.b16 %v3570
    %v3636 = vunpack.c.h.b16 %v3570
    %v3637 = vunpack.c.l.b16 %v3571
    %v3638 = vunpack.c.h.b16 %v3571
    %v3639 = vunpack.c.l.b16 %v3572
    %v3640 = vunpack.c.h.b16 %v3572
    %v3641 = vunpack.c.l.b16 %v3573
    %v3642 = vunpack.c.h.b16 %v3573
    %v3643 = vunpack.c.l.b16 %v3574
    %v3644 = vunpack.c.h.b16 %v3574
    %v3645 = vunpack.c.l.b16 %v3575
    %v3646 = vunpack.c.h.b16 %v3575
    %v3647 = vunpack.c.l.b16 %v3576
    %v3648 = vunpack.c.h.b16 %v3576
    %v3649 = vunpack.c.l.b16 %v3577
    %v3650 = vunpack.c.h.b16 %v3577
    %v3651 = vunpack.c.l.b16 %v3578
    %v3652 = vunpack.c.h.b16 %v3578
    %v3653 = vunpack.c.l.b16 %v3579
    %v3654 = vunpack.c.h.b16 %v3579
    %v3655 = vunpack.c.l.b16 %v3580
    %v3656 = vunpack.c.h.b16 %v3580
    %v3657 = vunpack.c.l.b16 %v3581
    %v3658 = vunpack.c.h.b16 %v3581
    %v3659 = vunpack.c.l.b16 %v3582
    %v3660 = vunpack.c.h.b16 %v3582
    %v3661 = vunpack.c.l.b16 %v3583
    %v3662 = vunpack.c.h.b16 %v3583
    %v3663 = vunpack.c.l.b16 %v3584
    %v3664 = vunpack.c.h.b16 %v3584
    %v3665 = vunpack.c.l.b16 %v3585
    %v3666 = vunpack.c.h.b16 %v3585
    %v3667 = vunpack.c.l.b16 %v3586
    %v3668 = vunpack.c.h.b16 %v3586
    %v3669 = vunpack.c.l.b16 %v3587
    %v3670 = vunpack.c.h.b16 %v3587
    %v3671 = vunpack.c.l.b16 %v3588
    %v3672 = vunpack.c.h.b16 %v3588
    %v3673 = vunpack.c.l.b16 %v3589
    %v3674 = vunpack.c.h.b16 %v3589
    %v3675 = vunpack.c.l.b16 %v3590
    %v3676 = vunpack.c.h.b16 %v3590
    %v3677 = vunpack.c.l.b16 %v3591
    %v3678 = vunpack.c.h.b16 %v3591
    %v3679 = vunpack.c.l.b16 %v3592
    %v3680 = vunpack.c.h.b16 %v3592
    %v3681 = vunpack.c.l.b16 %v3593
    %v3682 = vunpack.c.h.b16 %v3593
    %v3683 = vunpack.c.l.b16 %v3594
    %v3684 = vunpack.c.h.b16 %v3594
    %v3685 = vunpack.c.l.b16 %v3595
    %v3686 = vunpack.c.h.b16 %v3595
    %v3687 = vunpack.c.l.b16 %v3596
    %v3688 = vunpack.c.h.b16 %v3596
    %v3689 = vunpack.c.l.b16 %v3597
    %v3690 = vunpack.c.h.b16 %v3597
    %v3691 = vunpack.c.l.b16 %v3598
    %v3692 = vunpack.c.h.b16 %v3598
    %v3693 = vunpack.c.l.b16 %v3599
    %v3694 = vunpack.c.h.b16 %v3599
    %v3695 = vunpack.c.l.b16 %v3600
    %v3696 = vunpack.c.h.b16 %v3600
    %v3697 = vpack.c.b16 %v3637, %v3633
    %v3698 = vpack.c.b16 %v3638, %v3634
    %v3699 = vpack.c.b16 %v3639, %v3635
    %v3700 = vpack.c.b16 %v3640, %v3636
    %v3701 = vpack.c.b16 %v3645, %v3641
    %v3702 = vpack.c.b16 %v3646, %v3642
    %v3703 = vpack.c.b16 %v3647, %v3643
    %v3704 = vpack.c.b16 %v3648, %v3644
    %v3705 = vpack.c.b16 %v3653, %v3649
    %v3706 = vpack.c.b16 %v3654, %v3650
    %v3707 = vpack.c.b16 %v3655, %v3651
    %v3708 = vpack.c.b16 %v3656, %v3652
    %v3709 = vpack.c.b16 %v3661, %v3657
    %v3710 = vpack.c.b16 %v3662, %v3658
    %v3711 = vpack.c.b16 %v3663, %v3659
    %v3712 = vpack.c.b16 %v3664, %v3660
    %v3713 = vpack.c.b16 %v3669, %v3665
    %v3714 = vpack.c.b16 %v3670, %v3666
    %v3715 = vpack.c.b16 %v3671, %v3667
    %v3716 = vpack.c.b16 %v3672, %v3668
    %v3717 = vpack.c.b16 %v3677, %v3673
    %v3718 = vpack.c.b16 %v3678, %v3674
    %v3719 = vpack.c.b16 %v3679, %v3675
    %v3720 = vpack.c.b16 %v3680, %v3676
    %v3721 = vpack.c.b16 %v3685, %v3681
    %v3722 = vpack.c.b16 %v3686, %v3682
    %v3723 = vpack.c.b16 %v3687, %v3683
    %v3724 = vpack.c.b16 %v3688, %v3684
    %v3725 = vpack.c.b16 %v3693, %v3689
    %v3726 = vpack.c.b16 %v3694, %v3690
    %v3727 = vpack.c.b16 %v3695, %v3691
    %v3728 = vpack.c.b16 %v3696, %v3692
    %3761 = vmatprep.subr.bf16.mxu0 %v3698
    %3762 = vmatpush1.bf16.msra.mxu0 %v3697
    %3763 = vmatprep.subr.bf16.mxu0 %v3702
    %3764 = vmatpush1.bf16.msra.mxu0 %v3701
    %3765 = vmatprep.subr.bf16.mxu0 %v3706
    %3766 = vmatpush1.bf16.msra.mxu0 %v3705
    %3767 = vmatprep.subr.bf16.mxu0 %v3710
    %3768 = vmatpush1.bf16.msra.mxu0 %v3709
    %3769 = vmatprep.subr.bf16.mxu0 %v3714
    %3770 = vmatpush1.bf16.msra.mxu0 %v3713
    %3771 = vmatprep.subr.bf16.mxu0 %v3718
    %3772 = vmatpush1.bf16.msra.mxu0 %v3717
    %3773 = vmatprep.subr.bf16.mxu0 %v3722
    %3774 = vmatpush1.bf16.msra.mxu0 %v3721
    %3775 = vmatprep.subr.bf16.mxu0 %v3726
    %3776 = vmatpush1.bf16.msra.mxu0 %v3725
    %3777 = vmatprep.subr.bf16.mxu0 0
    %3778 = vmatpush1.bf16.msra.mxu0 0
    %3779 = vmatprep.subr.bf16.mxu0 0
    %3780 = vmatpush1.bf16.msra.mxu0 0
    %3781 = vmatprep.subr.bf16.mxu0 0
    %3782 = vmatpush1.bf16.msra.mxu0 0
    %3783 = vmatprep.subr.bf16.mxu0 0
    %3784 = vmatpush1.bf16.msra.mxu0 0
    %3785 = vmatprep.subr.bf16.mxu0 0
    %3786 = vmatpush1.bf16.msra.mxu0 0
    %3787 = vmatprep.subr.bf16.mxu0 0
    %3788 = vmatpush1.bf16.msra.mxu0 0
    %3789 = vmatprep.subr.bf16.mxu0 0
    %3790 = vmatpush1.bf16.msra.mxu0 0
    %3791 = vmatprep.subr.bf16.mxu0 0
    %3792 = vmatpush1.bf16.msra.mxu0 0
    %3793 = vmatprep.mubr.bf16.mxu0 0
    %3794 = vmatmul.mubr.bf16.gmra.mrb[0].mxu0 %v3568
    %v3795 = vpop.f32.mrb[0].mxu0
    %v3796 = vadd.f32 0.0, %v3795
    %v3797 = vpop.f32.mrb[0].mxu0
    %v3798 = vadd.f32 0.0, %v3797
    %v3799 = vpop.f32.mrb[0].mxu0
    %v3800 = vpop.f32.mrb[0].mxu0
    %3801 = vdwg.mxu0
    %3802 = vmatprep.subr.bf16.mxu0 %v3700
    %3803 = vmatpush1.bf16.msra.mxu0 %v3699
    %3804 = vmatprep.subr.bf16.mxu0 %v3704
    %3805 = vmatpush1.bf16.msra.mxu0 %v3703
    %3806 = vmatprep.subr.bf16.mxu0 %v3708
    %3807 = vmatpush1.bf16.msra.mxu0 %v3707
    %3808 = vmatprep.subr.bf16.mxu0 %v3712
    %3809 = vmatpush1.bf16.msra.mxu0 %v3711
    %3810 = vmatprep.subr.bf16.mxu0 %v3716
    %3811 = vmatpush1.bf16.msra.mxu0 %v3715
    %3812 = vmatprep.subr.bf16.mxu0 %v3720
    %3813 = vmatpush1.bf16.msra.mxu0 %v3719
    %3814 = vmatprep.subr.bf16.mxu0 %v3724
    %3815 = vmatpush1.bf16.msra.mxu0 %v3723
    %3816 = vmatprep.subr.bf16.mxu0 %v3728
    %3817 = vmatpush1.bf16.msra.mxu0 %v3727
    %3818 = vmatprep.subr.bf16.mxu0 0
    %3819 = vmatpush1.bf16.msra.mxu0 0
    %3820 = vmatprep.subr.bf16.mxu0 0
    %3821 = vmatpush1.bf16.msra.mxu0 0
    %3822 = vmatprep.subr.bf16.mxu0 0
    %3823 = vmatpush1.bf16.msra.mxu0 0
    %3824 = vmatprep.subr.bf16.mxu0 0
    %3825 = vmatpush1.bf16.msra.mxu0 0
    %3826 = vmatprep.subr.bf16.mxu0 0
    %3827 = vmatpush1.bf16.msra.mxu0 0
    %3828 = vmatprep.subr.bf16.mxu0 0
    %3829 = vmatpush1.bf16.msra.mxu0 0
    %3830 = vmatprep.subr.bf16.mxu0 0
    %3831 = vmatpush1.bf16.msra.mxu0 0
    %3832 = vmatprep.subr.bf16.mxu0 0
    %3833 = vmatpush1.bf16.msra.mxu0 0
    %3834 = vmatprep.mubr.bf16.mxu0 0
    %3835 = vmatmul.mubr.bf16.gmra.mrb[0].mxu0 %v3568
    %v3836 = vpop.f32.mrb[0].mxu0
    %v3837 = vadd.f32 0.0, %v3836
    %v3838 = vpop.f32.mrb[0].mxu0
    %v3839 = vadd.f32 0.0, %v3838
    %v3840 = vpop.f32.mrb[0].mxu0
    %v3841 = vpop.f32.mrb[0].mxu0
    %3842 = vdwg.mxu0
    %v3843 = vadd.f32 %v3564, %v3796
    %v3844 = vadd.f32 %v3565, %v3798
    %v3845 = vadd.f32 %v3566, %v3837
    %v3846 = vadd.f32 %v3567, %v3839
    %v3847 = vxor.u32 %v3843, 2147483648
    %v3848 = vxor.u32 %v3844, 2147483648
    %v3849 = vxor.u32 %v3845, 2147483648
    %v3850 = vmul.f32 %v3847, 1.442695
    %v3851 = vpow.pop %v3850
    %v3852 = vmul.f32 %v3848, 1.442695
    %v3853 = vpow.pop %v3852
    %v3854 = vmul.f32 %v3849, 1.442695
    %v3855 = vpow.pop %v3854
    %v3856 = vadd.f32 %v3851, 1.0
    %v3857 = vadd.f32 %v3853, 1.0
    %v3858 = vadd.f32 %v3855, 1.0
    %v3859 = vrcp.pop %v3856
    %v3860 = vmul.f32 1.0, %v3859
    %v3861 = vrcp.pop %v3857
    %v3862 = vmul.f32 1.0, %v3861
    %v3863 = vrcp.pop %v3858
    %v3864 = vmul.f32 1.0, %v3863
    %v3865 = vtanh.pop %v3846
    %v3866 = vmul.f32 %v3862, %v3560
    %v3867 = vmul.f32 %v3860, %v3865
    %v3868 = vadd.f32 %v3866, %v3867
    %v3869 = vtanh.pop %v3868
    %v3870 = vmul.f32 %v3864, %v3869
    %s3871 = scalar_lea.vmem [#allocation4], 8
    %3872 = vst [vmem:[%s3871] sm:$0xff] %v3870
    %v3873 = vld [vmem:[%s992] sm:$0xff]
    %v3874 = vld [vmem:[%s992 + $0x8] sm:$0xff]
    %v3875 = vld [vmem:[%s992 + $0x10] sm:$0xff]
    %v3876 = vld [vmem:[%s992 + $0x18] sm:$0xff]
    %v3877 = vpack.c.bf16 %v3870, %v3870
    %v3878 = vld [vmem:[#allocation7] sm:$0xff]
    %v3879 = vld [vmem:[#allocation7 + $0x8] sm:$0xff]
    %v3880 = vld [vmem:[#allocation7 + $0x10] sm:$0xff]
    %v3881 = vld [vmem:[#allocation7 + $0x18] sm:$0xff]
    %v3882 = vld [vmem:[#allocation7 + $0x20] sm:$0xff]
    %v3883 = vld [vmem:[#allocation7 + $0x28] sm:$0xff]
    %v3884 = vld [vmem:[#allocation7 + $0x30] sm:$0xff]
    %v3885 = vld [vmem:[#allocation7 + $0x38] sm:$0xff]
    %v3886 = vld [vmem:[#allocation7 + $0x40] sm:$0xff]
    %v3887 = vld [vmem:[#allocation7 + $0x48] sm:$0xff]
    %v3888 = vld [vmem:[#allocation7 + $0x50] sm:$0xff]
    %v3889 = vld [vmem:[#allocation7 + $0x58] sm:$0xff]
    %v3890 = vld [vmem:[#allocation7 + $0x60] sm:$0xff]
    %v3891 = vld [vmem:[#allocation7 + $0x68] sm:$0xff]
    %v3892 = vld [vmem:[#allocation7 + $0x70] sm:$0xff]
    %v3893 = vld [vmem:[#allocation7 + $0x78] sm:$0xff]
    %v3894 = vld [vmem:[#allocation7 + $0x80] sm:$0xff]
    %v3895 = vld [vmem:[#allocation7 + $0x88] sm:$0xff]
    %v3896 = vld [vmem:[#allocation7 + $0x90] sm:$0xff]
    %v3897 = vld [vmem:[#allocation7 + $0x98] sm:$0xff]
    %v3898 = vld [vmem:[#allocation7 + $0xa0] sm:$0xff]
    %v3899 = vld [vmem:[#allocation7 + $0xa8] sm:$0xff]
    %v3900 = vld [vmem:[#allocation7 + $0xb0] sm:$0xff]
    %v3901 = vld [vmem:[#allocation7 + $0xb8] sm:$0xff]
    %v3902 = vld [vmem:[#allocation7 + $0xc0] sm:$0xff]
    %v3903 = vld [vmem:[#allocation7 + $0xc8] sm:$0xff]
    %v3904 = vld [vmem:[#allocation7 + $0xd0] sm:$0xff]
    %v3905 = vld [vmem:[#allocation7 + $0xd8] sm:$0xff]
    %v3906 = vld [vmem:[#allocation7 + $0xe0] sm:$0xff]
    %v3907 = vld [vmem:[#allocation7 + $0xe8] sm:$0xff]
    %v3908 = vld [vmem:[#allocation7 + $0xf0] sm:$0xff]
    %v3909 = vld [vmem:[#allocation7 + $0xf8] sm:$0xff]
    %v3942 = vunpack.c.l.b16 %v3878
    %v3943 = vunpack.c.h.b16 %v3878
    %v3944 = vunpack.c.l.b16 %v3879
    %v3945 = vunpack.c.h.b16 %v3879
    %v3946 = vunpack.c.l.b16 %v3880
    %v3947 = vunpack.c.h.b16 %v3880
    %v3948 = vunpack.c.l.b16 %v3881
    %v3949 = vunpack.c.h.b16 %v3881
    %v3950 = vunpack.c.l.b16 %v3882
    %v3951 = vunpack.c.h.b16 %v3882
    %v3952 = vunpack.c.l.b16 %v3883
    %v3953 = vunpack.c.h.b16 %v3883
    %v3954 = vunpack.c.l.b16 %v3884
    %v3955 = vunpack.c.h.b16 %v3884
    %v3956 = vunpack.c.l.b16 %v3885
    %v3957 = vunpack.c.h.b16 %v3885
    %v3958 = vunpack.c.l.b16 %v3886
    %v3959 = vunpack.c.h.b16 %v3886
    %v3960 = vunpack.c.l.b16 %v3887
    %v3961 = vunpack.c.h.b16 %v3887
    %v3962 = vunpack.c.l.b16 %v3888
    %v3963 = vunpack.c.h.b16 %v3888
    %v3964 = vunpack.c.l.b16 %v3889
    %v3965 = vunpack.c.h.b16 %v3889
    %v3966 = vunpack.c.l.b16 %v3890
    %v3967 = vunpack.c.h.b16 %v3890
    %v3968 = vunpack.c.l.b16 %v3891
    %v3969 = vunpack.c.h.b16 %v3891
    %v3970 = vunpack.c.l.b16 %v3892
    %v3971 = vunpack.c.h.b16 %v3892
    %v3972 = vunpack.c.l.b16 %v3893
    %v3973 = vunpack.c.h.b16 %v3893
    %v3974 = vunpack.c.l.b16 %v3894
    %v3975 = vunpack.c.h.b16 %v3894
    %v3976 = vunpack.c.l.b16 %v3895
    %v3977 = vunpack.c.h.b16 %v3895
    %v3978 = vunpack.c.l.b16 %v3896
    %v3979 = vunpack.c.h.b16 %v3896
    %v3980 = vunpack.c.l.b16 %v3897
    %v3981 = vunpack.c.h.b16 %v3897
    %v3982 = vunpack.c.l.b16 %v3898
    %v3983 = vunpack.c.h.b16 %v3898
    %v3984 = vunpack.c.l.b16 %v3899
    %v3985 = vunpack.c.h.b16 %v3899
    %v3986 = vunpack.c.l.b16 %v3900
    %v3987 = vunpack.c.h.b16 %v3900
    %v3988 = vunpack.c.l.b16 %v3901
    %v3989 = vunpack.c.h.b16 %v3901
    %v3990 = vunpack.c.l.b16 %v3902
    %v3991 = vunpack.c.h.b16 %v3902
    %v3992 = vunpack.c.l.b16 %v3903
    %v3993 = vunpack.c.h.b16 %v3903
    %v3994 = vunpack.c.l.b16 %v3904
    %v3995 = vunpack.c.h.b16 %v3904
    %v3996 = vunpack.c.l.b16 %v3905
    %v3997 = vunpack.c.h.b16 %v3905
    %v3998 = vunpack.c.l.b16 %v3906
    %v3999 = vunpack.c.h.b16 %v3906
    %v4000 = vunpack.c.l.b16 %v3907
    %v4001 = vunpack.c.h.b16 %v3907
    %v4002 = vunpack.c.l.b16 %v3908
    %v4003 = vunpack.c.h.b16 %v3908
    %v4004 = vunpack.c.l.b16 %v3909
    %v4005 = vunpack.c.h.b16 %v3909
    %v4006 = vpack.c.b16 %v3946, %v3942
    %v4007 = vpack.c.b16 %v3947, %v3943
    %v4008 = vpack.c.b16 %v3948, %v3944
    %v4009 = vpack.c.b16 %v3949, %v3945
    %v4010 = vpack.c.b16 %v3954, %v3950
    %v4011 = vpack.c.b16 %v3955, %v3951
    %v4012 = vpack.c.b16 %v3956, %v3952
    %v4013 = vpack.c.b16 %v3957, %v3953
    %v4014 = vpack.c.b16 %v3962, %v3958
    %v4015 = vpack.c.b16 %v3963, %v3959
    %v4016 = vpack.c.b16 %v3964, %v3960
    %v4017 = vpack.c.b16 %v3965, %v3961
    %v4018 = vpack.c.b16 %v3970, %v3966
    %v4019 = vpack.c.b16 %v3971, %v3967
    %v4020 = vpack.c.b16 %v3972, %v3968
    %v4021 = vpack.c.b16 %v3973, %v3969
    %v4022 = vpack.c.b16 %v3978, %v3974
    %v4023 = vpack.c.b16 %v3979, %v3975
    %v4024 = vpack.c.b16 %v3980, %v3976
    %v4025 = vpack.c.b16 %v3981, %v3977
    %v4026 = vpack.c.b16 %v3986, %v3982
    %v4027 = vpack.c.b16 %v3987, %v3983
    %v4028 = vpack.c.b16 %v3988, %v3984
    %v4029 = vpack.c.b16 %v3989, %v3985
    %v4030 = vpack.c.b16 %v3994, %v3990
    %v4031 = vpack.c.b16 %v3995, %v3991
    %v4032 = vpack.c.b16 %v3996, %v3992
    %v4033 = vpack.c.b16 %v3997, %v3993
    %v4034 = vpack.c.b16 %v4002, %v3998
    %v4035 = vpack.c.b16 %v4003, %v3999
    %v4036 = vpack.c.b16 %v4004, %v4000
    %v4037 = vpack.c.b16 %v4005, %v4001
    %4070 = vmatprep.subr.bf16.mxu0 %v4007
    %4071 = vmatpush1.bf16.msra.mxu0 %v4006
    %4072 = vmatprep.subr.bf16.mxu0 %v4011
    %4073 = vmatpush1.bf16.msra.mxu0 %v4010
    %4074 = vmatprep.subr.bf16.mxu0 %v4015
    %4075 = vmatpush1.bf16.msra.mxu0 %v4014
    %4076 = vmatprep.subr.bf16.mxu0 %v4019
    %4077 = vmatpush1.bf16.msra.mxu0 %v4018
    %4078 = vmatprep.subr.bf16.mxu0 %v4023
    %4079 = vmatpush1.bf16.msra.mxu0 %v4022
    %4080 = vmatprep.subr.bf16.mxu0 %v4027
    %4081 = vmatpush1.bf16.msra.mxu0 %v4026
    %4082 = vmatprep.subr.bf16.mxu0 %v4031
    %4083 = vmatpush1.bf16.msra.mxu0 %v4030
    %4084 = vmatprep.subr.bf16.mxu0 %v4035
    %4085 = vmatpush1.bf16.msra.mxu0 %v4034
    %4086 = vmatprep.subr.bf16.mxu0 0
    %4087 = vmatpush1.bf16.msra.mxu0 0
    %4088 = vmatprep.subr.bf16.mxu0 0
    %4089 = vmatpush1.bf16.msra.mxu0 0
    %4090 = vmatprep.subr.bf16.mxu0 0
    %4091 = vmatpush1.bf16.msra.mxu0 0
    %4092 = vmatprep.subr.bf16.mxu0 0
    %4093 = vmatpush1.bf16.msra.mxu0 0
    %4094 = vmatprep.subr.bf16.mxu0 0
    %4095 = vmatpush1.bf16.msra.mxu0 0
    %4096 = vmatprep.subr.bf16.mxu0 0
    %4097 = vmatpush1.bf16.msra.mxu0 0
    %4098 = vmatprep.subr.bf16.mxu0 0
    %4099 = vmatpush1.bf16.msra.mxu0 0
    %4100 = vmatprep.subr.bf16.mxu0 0
    %4101 = vmatpush1.bf16.msra.mxu0 0
    %4102 = vmatprep.mubr.bf16.mxu0 0
    %4103 = vmatmul.mubr.bf16.gmra.mrb[0].mxu0 %v3877
    %v4104 = vpop.f32.mrb[0].mxu0
    %v4105 = vadd.f32 0.0, %v4104
    %v4106 = vpop.f32.mrb[0].mxu0
    %v4107 = vadd.f32 0.0, %v4106
    %v4108 = vpop.f32.mrb[0].mxu0
    %v4109 = vpop.f32.mrb[0].mxu0
    %4110 = vdwg.mxu0
    %4111 = vmatprep.subr.bf16.mxu0 %v4009
    %4112 = vmatpush1.bf16.msra.mxu0 %v4008
    %4113 = vmatprep.subr.bf16.mxu0 %v4013
    %4114 = vmatpush1.bf16.msra.mxu0 %v4012
    %4115 = vmatprep.subr.bf16.mxu0 %v4017
    %4116 = vmatpush1.bf16.msra.mxu0 %v4016
    %4117 = vmatprep.subr.bf16.mxu0 %v4021
    %4118 = vmatpush1.bf16.msra.mxu0 %v4020
    %4119 = vmatprep.subr.bf16.mxu0 %v4025
    %4120 = vmatpush1.bf16.msra.mxu0 %v4024
    %4121 = vmatprep.subr.bf16.mxu0 %v4029
    %4122 = vmatpush1.bf16.msra.mxu0 %v4028
    %4123 = vmatprep.subr.bf16.mxu0 %v4033
    %4124 = vmatpush1.bf16.msra.mxu0 %v4032
    %4125 = vmatprep.subr.bf16.mxu0 %v4037
    %4126 = vmatpush1.bf16.msra.mxu0 %v4036
    %4127 = vmatprep.subr.bf16.mxu0 0
    %4128 = vmatpush1.bf16.msra.mxu0 0
    %4129 = vmatprep.subr.bf16.mxu0 0
    %4130 = vmatpush1.bf16.msra.mxu0 0
    %4131 = vmatprep.subr.bf16.mxu0 0
    %4132 = vmatpush1.bf16.msra.mxu0 0
    %4133 = vmatprep.subr.bf16.mxu0 0
    %4134 = vmatpush1.bf16.msra.mxu0 0
    %4135 = vmatprep.subr.bf16.mxu0 0
    %4136 = vmatpush1.bf16.msra.mxu0 0
    %4137 = vmatprep.subr.bf16.mxu0 0
    %4138 = vmatpush1.bf16.msra.mxu0 0
    %4139 = vmatprep.subr.bf16.mxu0 0
    %4140 = vmatpush1.bf16.msra.mxu0 0
    %4141 = vmatprep.subr.bf16.mxu0 0
    %4142 = vmatpush1.bf16.msra.mxu0 0
    %4143 = vmatprep.mubr.bf16.mxu0 0
    %4144 = vmatmul.mubr.bf16.gmra.mrb[0].mxu0 %v3877
    %v4145 = vpop.f32.mrb[0].mxu0
    %v4146 = vadd.f32 0.0, %v4145
    %v4147 = vpop.f32.mrb[0].mxu0
    %v4148 = vadd.f32 0.0, %v4147
    %v4149 = vpop.f32.mrb[0].mxu0
    %v4150 = vpop.f32.mrb[0].mxu0
    %4151 = vdwg.mxu0
    %v4152 = vadd.f32 %v3873, %v4105
    %v4153 = vadd.f32 %v3874, %v4107
    %v4154 = vadd.f32 %v3875, %v4146
    %v4155 = vadd.f32 %v3876, %v4148
    %v4156 = vxor.u32 %v4152, 2147483648
    %v4157 = vxor.u32 %v4153, 2147483648
    %v4158 = vxor.u32 %v4154, 2147483648
    %v4159 = vmul.f32 %v4156, 1.442695
    %v4160 = vpow.pop %v4159
    %v4161 = vmul.f32 %v4157, 1.442695
    %v4162 = vpow.pop %v4161
    %v4163 = vmul.f32 %v4158, 1.442695
    %v4164 = vpow.pop %v4163
    %v4165 = vadd.f32 %v4160, 1.0
    %v4166 = vadd.f32 %v4162, 1.0
    %v4167 = vadd.f32 %v4164, 1.0
    %v4168 = vrcp.pop %v4165
    %v4169 = vmul.f32 1.0, %v4168
    %v4170 = vrcp.pop %v4166
    %v4171 = vmul.f32 1.0, %v4170
    %v4172 = vrcp.pop %v4167
    %v4173 = vmul.f32 1.0, %v4172
    %v4174 = vtanh.pop %v4155
    %v4175 = vmul.f32 %v4171, %v3868
    %v4176 = vmul.f32 %v4169, %v4174
    %v4177 = vadd.f32 %v4175, %v4176
    %v4178 = vtanh.pop %v4177
    %v4179 = vmul.f32 %v4173, %v4178
    %s4180 = scalar_lea.vmem [#allocation4], 16
    %4181 = vst [vmem:[%s4180] sm:$0xff] %v4179
    %v4182 = vld [vmem:[%s1302] sm:$0xff]
    %v4183 = vld [vmem:[%s1302 + $0x8] sm:$0xff]
    %v4184 = vld [vmem:[%s1302 + $0x10] sm:$0xff]
    %v4185 = vld [vmem:[%s1302 + $0x18] sm:$0xff]
    %v4186 = vpack.c.bf16 %v4179, %v4179
    %v4187 = vld [vmem:[#allocation7] sm:$0xff]
    %v4188 = vld [vmem:[#allocation7 + $0x8] sm:$0xff]
    %v4189 = vld [vmem:[#allocation7 + $0x10] sm:$0xff]
    %v4190 = vld [vmem:[#allocation7 + $0x18] sm:$0xff]
    %v4191 = vld [vmem:[#allocation7 + $0x20] sm:$0xff]
    %v4192 = vld [vmem:[#allocation7 + $0x28] sm:$0xff]
    %v4193 = vld [vmem:[#allocation7 + $0x30] sm:$0xff]
    %v4194 = vld [vmem:[#allocation7 + $0x38] sm:$0xff]
    %v4195 = vld [vmem:[#allocation7 + $0x40] sm:$0xff]
    %v4196 = vld [vmem:[#allocation7 + $0x48] sm:$0xff]
    %v4197 = vld [vmem:[#allocation7 + $0x50] sm:$0xff]
    %v4198 = vld [vmem:[#allocation7 + $0x58] sm:$0xff]
    %v4199 = vld [vmem:[#allocation7 + $0x60] sm:$0xff]
    %v4200 = vld [vmem:[#allocation7 + $0x68] sm:$0xff]
    %v4201 = vld [vmem:[#allocation7 + $0x70] sm:$0xff]
    %v4202 = vld [vmem:[#allocation7 + $0x78] sm:$0xff]
    %v4203 = vld [vmem:[#allocation7 + $0x80] sm:$0xff]
    %v4204 = vld [vmem:[#allocation7 + $0x88] sm:$0xff]
    %v4205 = vld [vmem:[#allocation7 + $0x90] sm:$0xff]
    %v4206 = vld [vmem:[#allocation7 + $0x98] sm:$0xff]
    %v4207 = vld [vmem:[#allocation7 + $0xa0] sm:$0xff]
    %v4208 = vld [vmem:[#allocation7 + $0xa8] sm:$0xff]
    %v4209 = vld [vmem:[#allocation7 + $0xb0] sm:$0xff]
    %v4210 = vld [vmem:[#allocation7 + $0xb8] sm:$0xff]
    %v4211 = vld [vmem:[#allocation7 + $0xc0] sm:$0xff]
    %v4212 = vld [vmem:[#allocation7 + $0xc8] sm:$0xff]
    %v4213 = vld [vmem:[#allocation7 + $0xd0] sm:$0xff]
    %v4214 = vld [vmem:[#allocation7 + $0xd8] sm:$0xff]
    %v4215 = vld [vmem:[#allocation7 + $0xe0] sm:$0xff]
    %v4216 = vld [vmem:[#allocation7 + $0xe8] sm:$0xff]
    %v4217 = vld [vmem:[#allocation7 + $0xf0] sm:$0xff]
    %v4218 = vld [vmem:[#allocation7 + $0xf8] sm:$0xff]
    %v4251 = vunpack.c.l.b16 %v4187
    %v4252 = vunpack.c.h.b16 %v4187
    %v4253 = vunpack.c.l.b16 %v4188
    %v4254 = vunpack.c.h.b16 %v4188
    %v4255 = vunpack.c.l.b16 %v4189
    %v4256 = vunpack.c.h.b16 %v4189
    %v4257 = vunpack.c.l.b16 %v4190
    %v4258 = vunpack.c.h.b16 %v4190
    %v4259 = vunpack.c.l.b16 %v4191
    %v4260 = vunpack.c.h.b16 %v4191
    %v4261 = vunpack.c.l.b16 %v4192
    %v4262 = vunpack.c.h.b16 %v4192
    %v4263 = vunpack.c.l.b16 %v4193
    %v4264 = vunpack.c.h.b16 %v4193
    %v4265 = vunpack.c.l.b16 %v4194
    %v4266 = vunpack.c.h.b16 %v4194
    %v4267 = vunpack.c.l.b16 %v4195
    %v4268 = vunpack.c.h.b16 %v4195
    %v4269 = vunpack.c.l.b16 %v4196
    %v4270 = vunpack.c.h.b16 %v4196
    %v4271 = vunpack.c.l.b16 %v4197
    %v4272 = vunpack.c.h.b16 %v4197
    %v4273 = vunpack.c.l.b16 %v4198
    %v4274 = vunpack.c.h.b16 %v4198
    %v4275 = vunpack.c.l.b16 %v4199
    %v4276 = vunpack.c.h.b16 %v4199
    %v4277 = vunpack.c.l.b16 %v4200
    %v4278 = vunpack.c.h.b16 %v4200
    %v4279 = vunpack.c.l.b16 %v4201
    %v4280 = vunpack.c.h.b16 %v4201
    %v4281 = vunpack.c.l.b16 %v4202
    %v4282 = vunpack.c.h.b16 %v4202
    %v4283 = vunpack.c.l.b16 %v4203
    %v4284 = vunpack.c.h.b16 %v4203
    %v4285 = vunpack.c.l.b16 %v4204
    %v4286 = vunpack.c.h.b16 %v4204
    %v4287 = vunpack.c.l.b16 %v4205
    %v4288 = vunpack.c.h.b16 %v4205
    %v4289 = vunpack.c.l.b16 %v4206
    %v4290 = vunpack.c.h.b16 %v4206
    %v4291 = vunpack.c.l.b16 %v4207
    %v4292 = vunpack.c.h.b16 %v4207
    %v4293 = vunpack.c.l.b16 %v4208
    %v4294 = vunpack.c.h.b16 %v4208
    %v4295 = vunpack.c.l.b16 %v4209
    %v4296 = vunpack.c.h.b16 %v4209
    %v4297 = vunpack.c.l.b16 %v4210
    %v4298 = vunpack.c.h.b16 %v4210
    %v4299 = vunpack.c.l.b16 %v4211
    %v4300 = vunpack.c.h.b16 %v4211
    %v4301 = vunpack.c.l.b16 %v4212
    %v4302 = vunpack.c.h.b16 %v4212
    %v4303 = vunpack.c.l.b16 %v4213
    %v4304 = vunpack.c.h.b16 %v4213
    %v4305 = vunpack.c.l.b16 %v4214
    %v4306 = vunpack.c.h.b16 %v4214
    %v4307 = vunpack.c.l.b16 %v4215
    %v4308 = vunpack.c.h.b16 %v4215
    %v4309 = vunpack.c.l.b16 %v4216
    %v4310 = vunpack.c.h.b16 %v4216
    %v4311 = vunpack.c.l.b16 %v4217
    %v4312 = vunpack.c.h.b16 %v4217
    %v4313 = vunpack.c.l.b16 %v4218
    %v4314 = vunpack.c.h.b16 %v4218
    %v4315 = vpack.c.b16 %v4255, %v4251
    %v4316 = vpack.c.b16 %v4256, %v4252
    %v4317 = vpack.c.b16 %v4257, %v4253
    %v4318 = vpack.c.b16 %v4258, %v4254
    %v4319 = vpack.c.b16 %v4263, %v4259
    %v4320 = vpack.c.b16 %v4264, %v4260
    %v4321 = vpack.c.b16 %v4265, %v4261
    %v4322 = vpack.c.b16 %v4266, %v4262
    %v4323 = vpack.c.b16 %v4271, %v4267
    %v4324 = vpack.c.b16 %v4272, %v4268
    %v4325 = vpack.c.b16 %v4273, %v4269
    %v4326 = vpack.c.b16 %v4274, %v4270
    %v4327 = vpack.c.b16 %v4279, %v4275
    %v4328 = vpack.c.b16 %v4280, %v4276
    %v4329 = vpack.c.b16 %v4281, %v4277
    %v4330 = vpack.c.b16 %v4282, %v4278
    %v4331 = vpack.c.b16 %v4287, %v4283
    %v4332 = vpack.c.b16 %v4288, %v4284
    %v4333 = vpack.c.b16 %v4289, %v4285
    %v4334 = vpack.c.b16 %v4290, %v4286
    %v4335 = vpack.c.b16 %v4295, %v4291
    %v4336 = vpack.c.b16 %v4296, %v4292
    %v4337 = vpack.c.b16 %v4297, %v4293
    %v4338 = vpack.c.b16 %v4298, %v4294
    %v4339 = vpack.c.b16 %v4303, %v4299
    %v4340 = vpack.c.b16 %v4304, %v4300
    %v4341 = vpack.c.b16 %v4305, %v4301
    %v4342 = vpack.c.b16 %v4306, %v4302
    %v4343 = vpack.c.b16 %v4311, %v4307
    %v4344 = vpack.c.b16 %v4312, %v4308
    %v4345 = vpack.c.b16 %v4313, %v4309
    %v4346 = vpack.c.b16 %v4314, %v4310
    %4379 = vmatprep.subr.bf16.mxu0 %v4316
    %4380 = vmatpush1.bf16.msra.mxu0 %v4315
    %4381 = vmatprep.subr.bf16.mxu0 %v4320
    %4382 = vmatpush1.bf16.msra.mxu0 %v4319
    %4383 = vmatprep.subr.bf16.mxu0 %v4324
    %4384 = vmatpush1.bf16.msra.mxu0 %v4323
    %4385 = vmatprep.subr.bf16.mxu0 %v4328
    %4386 = vmatpush1.bf16.msra.mxu0 %v4327
    %4387 = vmatprep.subr.bf16.mxu0 %v4332
    %4388 = vmatpush1.bf16.msra.mxu0 %v4331
    %4389 = vmatprep.subr.bf16.mxu0 %v4336
    %4390 = vmatpush1.bf16.msra.mxu0 %v4335
    %4391 = vmatprep.subr.bf16.mxu0 %v4340
    %4392 = vmatpush1.bf16.msra.mxu0 %v4339
    %4393 = vmatprep.subr.bf16.mxu0 %v4344
    %4394 = vmatpush1.bf16.msra.mxu0 %v4343
    %4395 = vmatprep.subr.bf16.mxu0 0
    %4396 = vmatpush1.bf16.msra.mxu0 0
    %4397 = vmatprep.subr.bf16.mxu0 0
    %4398 = vmatpush1.bf16.msra.mxu0 0
    %4399 = vmatprep.subr.bf16.mxu0 0
    %4400 = vmatpush1.bf16.msra.mxu0 0
    %4401 = vmatprep.subr.bf16.mxu0 0
    %4402 = vmatpush1.bf16.msra.mxu0 0
    %4403 = vmatprep.subr.bf16.mxu0 0
    %4404 = vmatpush1.bf16.msra.mxu0 0
    %4405 = vmatprep.subr.bf16.mxu0 0
    %4406 = vmatpush1.bf16.msra.mxu0 0
    %4407 = vmatprep.subr.bf16.mxu0 0
    %4408 = vmatpush1.bf16.msra.mxu0 0
    %4409 = vmatprep.subr.bf16.mxu0 0
    %4410 = vmatpush1.bf16.msra.mxu0 0
    %4411 = vmatprep.mubr.bf16.mxu0 0
    %4412 = vmatmul.mubr.bf16.gmra.mrb[0].mxu0 %v4186
    %v4413 = vpop.f32.mrb[0].mxu0
    %v4414 = vadd.f32 0.0, %v4413
    %v4415 = vpop.f32.mrb[0].mxu0
    %v4416 = vadd.f32 0.0, %v4415
    %v4417 = vpop.f32.mrb[0].mxu0
    %v4418 = vpop.f32.mrb[0].mxu0
    %4419 = vdwg.mxu0
    %4420 = vmatprep.subr.bf16.mxu0 %v4318
    %4421 = vmatpush1.bf16.msra.mxu0 %v4317
    %4422 = vmatprep.subr.bf16.mxu0 %v4322
    %4423 = vmatpush1.bf16.msra.mxu0 %v4321
    %4424 = vmatprep.subr.bf16.mxu0 %v4326
    %4425 = vmatpush1.bf16.msra.mxu0 %v4325
    %4426 = vmatprep.subr.bf16.mxu0 %v4330
    %4427 = vmatpush1.bf16.msra.mxu0 %v4329
    %4428 = vmatprep.subr.bf16.mxu0 %v4334
    %4429 = vmatpush1.bf16.msra.mxu0 %v4333
    %4430 = vmatprep.subr.bf16.mxu0 %v4338
    %4431 = vmatpush1.bf16.msra.mxu0 %v4337
    %4432 = vmatprep.subr.bf16.mxu0 %v4342
    %4433 = vmatpush1.bf16.msra.mxu0 %v4341
    %4434 = vmatprep.subr.bf16.mxu0 %v4346
    %4435 = vmatpush1.bf16.msra.mxu0 %v4345
    %4436 = vmatprep.subr.bf16.mxu0 0
    %4437 = vmatpush1.bf16.msra.mxu0 0
    %4438 = vmatprep.subr.bf16.mxu0 0
    %4439 = vmatpush1.bf16.msra.mxu0 0
    %4440 = vmatprep.subr.bf16.mxu0 0
    %4441 = vmatpush1.bf16.msra.mxu0 0
    %4442 = vmatprep.subr.bf16.mxu0 0
    %4443 = vmatpush1.bf16.msra.mxu0 0
    %4444 = vmatprep.subr.bf16.mxu0 0
    %4445 = vmatpush1.bf16.msra.mxu0 0
    %4446 = vmatprep.subr.bf16.mxu0 0
    %4447 = vmatpush1.bf16.msra.mxu0 0
    %4448 = vmatprep.subr.bf16.mxu0 0
    %4449 = vmatpush1.bf16.msra.mxu0 0
    %4450 = vmatprep.subr.bf16.mxu0 0
    %4451 = vmatpush1.bf16.msra.mxu0 0
    %4452 = vmatprep.mubr.bf16.mxu0 0
    %4453 = vmatmul.mubr.bf16.gmra.mrb[0].mxu0 %v4186
    %v4454 = vpop.f32.mrb[0].mxu0
    %v4455 = vadd.f32 0.0, %v4454
    %v4456 = vpop.f32.mrb[0].mxu0
    %v4457 = vadd.f32 0.0, %v4456
    %v4458 = vpop.f32.mrb[0].mxu0
    %v4459 = vpop.f32.mrb[0].mxu0
    %4460 = vdwg.mxu0
    %v4461 = vadd.f32 %v4182, %v4414
    %v4462 = vadd.f32 %v4183, %v4416
    %v4463 = vadd.f32 %v4184, %v4455
    %v4464 = vadd.f32 %v4185, %v4457
    %v4465 = vxor.u32 %v4461, 2147483648
    %v4466 = vxor.u32 %v4462, 2147483648
    %v4467 = vxor.u32 %v4463, 2147483648
    %v4468 = vmul.f32 %v4465, 1.442695
    %v4469 = vpow.pop %v4468
    %v4470 = vmul.f32 %v4466, 1.442695
    %v4471 = vpow.pop %v4470
    %v4472 = vmul.f32 %v4467, 1.442695
    %v4473 = vpow.pop %v4472
    %v4474 = vadd.f32 %v4469, 1.0
    %v4475 = vadd.f32 %v4471, 1.0
    %v4476 = vadd.f32 %v4473, 1.0
    %v4477 = vrcp.pop %v4474
    %v4478 = vmul.f32 1.0, %v4477
    %v4479 = vrcp.pop %v4475
    %v4480 = vmul.f32 1.0, %v4479
    %v4481 = vrcp.pop %v4476
    %v4482 = vmul.f32 1.0, %v4481
    %v4483 = vtanh.pop %v4464
    %v4484 = vmul.f32 %v4480, %v4177
    %v4485 = vmul.f32 %v4478, %v4483
    %v4486 = vadd.f32 %v4484, %v4485
    %v4487 = vtanh.pop %v4486
    %v4488 = vmul.f32 %v4482, %v4487
    %s4489 = scalar_lea.vmem [#allocation4], 24
    %4490 = vst [vmem:[%s4489] sm:$0xff] %v4488
    %v4491 = vld [vmem:[%s1612] sm:$0xff]
    %v4492 = vld [vmem:[%s1612 + $0x8] sm:$0xff]
    %v4493 = vld [vmem:[%s1612 + $0x10] sm:$0xff]
    %v4494 = vld [vmem:[%s1612 + $0x18] sm:$0xff]
    %v4495 = vpack.c.bf16 %v4488, %v4488
    %v4496 = vld [vmem:[#allocation7] sm:$0xff]
    %v4497 = vld [vmem:[#allocation7 + $0x8] sm:$0xff]
    %v4498 = vld [vmem:[#allocation7 + $0x10] sm:$0xff]
    %v4499 = vld [vmem:[#allocation7 + $0x18] sm:$0xff]
    %v4500 = vld [vmem:[#allocation7 + $0x20] sm:$0xff]
    %v4501 = vld [vmem:[#allocation7 + $0x28] sm:$0xff]
    %v4502 = vld [vmem:[#allocation7 + $0x30] sm:$0xff]
    %v4503 = vld [vmem:[#allocation7 + $0x38] sm:$0xff]
    %v4504 = vld [vmem:[#allocation7 + $0x40] sm:$0xff]
    %v4505 = vld [vmem:[#allocation7 + $0x48] sm:$0xff]
    %v4506 = vld [vmem:[#allocation7 + $0x50] sm:$0xff]
    %v4507 = vld [vmem:[#allocation7 + $0x58] sm:$0xff]
    %v4508 = vld [vmem:[#allocation7 + $0x60] sm:$0xff]
    %v4509 = vld [vmem:[#allocation7 + $0x68] sm:$0xff]
    %v4510 = vld [vmem:[#allocation7 + $0x70] sm:$0xff]
    %v4511 = vld [vmem:[#allocation7 + $0x78] sm:$0xff]
    %v4512 = vld [vmem:[#allocation7 + $0x80] sm:$0xff]
    %v4513 = vld [vmem:[#allocation7 + $0x88] sm:$0xff]
    %v4514 = vld [vmem:[#allocation7 + $0x90] sm:$0xff]
    %v4515 = vld [vmem:[#allocation7 + $0x98] sm:$0xff]
    %v4516 = vld [vmem:[#allocation7 + $0xa0] sm:$0xff]
    %v4517 = vld [vmem:[#allocation7 + $0xa8] sm:$0xff]
    %v4518 = vld [vmem:[#allocation7 + $0xb0] sm:$0xff]
    %v4519 = vld [vmem:[#allocation7 + $0xb8] sm:$0xff]
    %v4520 = vld [vmem:[#allocation7 + $0xc0] sm:$0xff]
    %v4521 = vld [vmem:[#allocation7 + $0xc8] sm:$0xff]
    %v4522 = vld [vmem:[#allocation7 + $0xd0] sm:$0xff]
    %v4523 = vld [vmem:[#allocation7 + $0xd8] sm:$0xff]
    %v4524 = vld [vmem:[#allocation7 + $0xe0] sm:$0xff]
    %v4525 = vld [vmem:[#allocation7 + $0xe8] sm:$0xff]
    %v4526 = vld [vmem:[#allocation7 + $0xf0] sm:$0xff]
    %v4527 = vld [vmem:[#allocation7 + $0xf8] sm:$0xff]
    %v4560 = vunpack.c.l.b16 %v4496
    %v4561 = vunpack.c.h.b16 %v4496
    %v4562 = vunpack.c.l.b16 %v4497
    %v4563 = vunpack.c.h.b16 %v4497
    %v4564 = vunpack.c.l.b16 %v4498
    %v4565 = vunpack.c.h.b16 %v4498
    %v4566 = vunpack.c.l.b16 %v4499
    %v4567 = vunpack.c.h.b16 %v4499
    %v4568 = vunpack.c.l.b16 %v4500
    %v4569 = vunpack.c.h.b16 %v4500
    %v4570 = vunpack.c.l.b16 %v4501
    %v4571 = vunpack.c.h.b16 %v4501
    %v4572 = vunpack.c.l.b16 %v4502
    %v4573 = vunpack.c.h.b16 %v4502
    %v4574 = vunpack.c.l.b16 %v4503
    %v4575 = vunpack.c.h.b16 %v4503
    %v4576 = vunpack.c.l.b16 %v4504
    %v4577 = vunpack.c.h.b16 %v4504
    %v4578 = vunpack.c.l.b16 %v4505
    %v4579 = vunpack.c.h.b16 %v4505
    %v4580 = vunpack.c.l.b16 %v4506
    %v4581 = vunpack.c.h.b16 %v4506
    %v4582 = vunpack.c.l.b16 %v4507
    %v4583 = vunpack.c.h.b16 %v4507
    %v4584 = vunpack.c.l.b16 %v4508
    %v4585 = vunpack.c.h.b16 %v4508
    %v4586 = vunpack.c.l.b16 %v4509
    %v4587 = vunpack.c.h.b16 %v4509
    %v4588 = vunpack.c.l.b16 %v4510
    %v4589 = vunpack.c.h.b16 %v4510
    %v4590 = vunpack.c.l.b16 %v4511
    %v4591 = vunpack.c.h.b16 %v4511
    %v4592 = vunpack.c.l.b16 %v4512
    %v4593 = vunpack.c.h.b16 %v4512
    %v4594 = vunpack.c.l.b16 %v4513
    %v4595 = vunpack.c.h.b16 %v4513
    %v4596 = vunpack.c.l.b16 %v4514
    %v4597 = vunpack.c.h.b16 %v4514
    %v4598 = vunpack.c.l.b16 %v4515
    %v4599 = vunpack.c.h.b16 %v4515
    %v4600 = vunpack.c.l.b16 %v4516
    %v4601 = vunpack.c.h.b16 %v4516
    %v4602 = vunpack.c.l.b16 %v4517
    %v4603 = vunpack.c.h.b16 %v4517
    %v4604 = vunpack.c.l.b16 %v4518
    %v4605 = vunpack.c.h.b16 %v4518
    %v4606 = vunpack.c.l.b16 %v4519
    %v4607 = vunpack.c.h.b16 %v4519
    %v4608 = vunpack.c.l.b16 %v4520
    %v4609 = vunpack.c.h.b16 %v4520
    %v4610 = vunpack.c.l.b16 %v4521
    %v4611 = vunpack.c.h.b16 %v4521
    %v4612 = vunpack.c.l.b16 %v4522
    %v4613 = vunpack.c.h.b16 %v4522
    %v4614 = vunpack.c.l.b16 %v4523
    %v4615 = vunpack.c.h.b16 %v4523
    %v4616 = vunpack.c.l.b16 %v4524
    %v4617 = vunpack.c.h.b16 %v4524
    %v4618 = vunpack.c.l.b16 %v4525
    %v4619 = vunpack.c.h.b16 %v4525
    %v4620 = vunpack.c.l.b16 %v4526
    %v4621 = vunpack.c.h.b16 %v4526
    %v4622 = vunpack.c.l.b16 %v4527
    %v4623 = vunpack.c.h.b16 %v4527
    %v4624 = vpack.c.b16 %v4564, %v4560
    %v4625 = vpack.c.b16 %v4565, %v4561
    %v4626 = vpack.c.b16 %v4566, %v4562
    %v4627 = vpack.c.b16 %v4567, %v4563
    %v4628 = vpack.c.b16 %v4572, %v4568
    %v4629 = vpack.c.b16 %v4573, %v4569
    %v4630 = vpack.c.b16 %v4574, %v4570
    %v4631 = vpack.c.b16 %v4575, %v4571
    %v4632 = vpack.c.b16 %v4580, %v4576
    %v4633 = vpack.c.b16 %v4581, %v4577
    %v4634 = vpack.c.b16 %v4582, %v4578
    %v4635 = vpack.c.b16 %v4583, %v4579
    %v4636 = vpack.c.b16 %v4588, %v4584
    %v4637 = vpack.c.b16 %v4589, %v4585
    %v4638 = vpack.c.b16 %v4590, %v4586
    %v4639 = vpack.c.b16 %v4591, %v4587
    %v4640 = vpack.c.b16 %v4596, %v4592
    %v4641 = vpack.c.b16 %v4597, %v4593
    %v4642 = vpack.c.b16 %v4598, %v4594
    %v4643 = vpack.c.b16 %v4599, %v4595
    %v4644 = vpack.c.b16 %v4604, %v4600
    %v4645 = vpack.c.b16 %v4605, %v4601
    %v4646 = vpack.c.b16 %v4606, %v4602
    %v4647 = vpack.c.b16 %v4607, %v4603
    %v4648 = vpack.c.b16 %v4612, %v4608
    %v4649 = vpack.c.b16 %v4613, %v4609
    %v4650 = vpack.c.b16 %v4614, %v4610
    %v4651 = vpack.c.b16 %v4615, %v4611
    %v4652 = vpack.c.b16 %v4620, %v4616
    %v4653 = vpack.c.b16 %v4621, %v4617
    %v4654 = vpack.c.b16 %v4622, %v4618
    %v4655 = vpack.c.b16 %v4623, %v4619
    %4688 = vmatprep.subr.bf16.mxu0 %v4625
    %4689 = vmatpush1.bf16.msra.mxu0 %v4624
    %4690 = vmatprep.subr.bf16.mxu0 %v4629
    %4691 = vmatpush1.bf16.msra.mxu0 %v4628
    %4692 = vmatprep.subr.bf16.mxu0 %v4633
    %4693 = vmatpush1.bf16.msra.mxu0 %v4632
    %4694 = vmatprep.subr.bf16.mxu0 %v4637
    %4695 = vmatpush1.bf16.msra.mxu0 %v4636
    %4696 = vmatprep.subr.bf16.mxu0 %v4641
    %4697 = vmatpush1.bf16.msra.mxu0 %v4640
    %4698 = vmatprep.subr.bf16.mxu0 %v4645
    %4699 = vmatpush1.bf16.msra.mxu0 %v4644
    %4700 = vmatprep.subr.bf16.mxu0 %v4649
    %4701 = vmatpush1.bf16.msra.mxu0 %v4648
    %4702 = vmatprep.subr.bf16.mxu0 %v4653
    %4703 = vmatpush1.bf16.msra.mxu0 %v4652
    %4704 = vmatprep.subr.bf16.mxu0 0
    %4705 = vmatpush1.bf16.msra.mxu0 0
    %4706 = vmatprep.subr.bf16.mxu0 0
    %4707 = vmatpush1.bf16.msra.mxu0 0
    %4708 = vmatprep.subr.bf16.mxu0 0
    %4709 = vmatpush1.bf16.msra.mxu0 0
    %4710 = vmatprep.subr.bf16.mxu0 0
    %4711 = vmatpush1.bf16.msra.mxu0 0
    %4712 = vmatprep.subr.bf16.mxu0 0
    %4713 = vmatpush1.bf16.msra.mxu0 0
    %4714 = vmatprep.subr.bf16.mxu0 0
    %4715 = vmatpush1.bf16.msra.mxu0 0
    %4716 = vmatprep.subr.bf16.mxu0 0
    %4717 = vmatpush1.bf16.msra.mxu0 0
    %4718 = vmatprep.subr.bf16.mxu0 0
    %4719 = vmatpush1.bf16.msra.mxu0 0
    %4720 = vmatprep.mubr.bf16.mxu0 0
    %4721 = vmatmul.mubr.bf16.gmra.mrb[0].mxu0 %v4495
    %v4722 = vpop.f32.mrb[0].mxu0
    %v4723 = vadd.f32 0.0, %v4722
    %v4724 = vpop.f32.mrb[0].mxu0
    %v4725 = vadd.f32 0.0, %v4724
    %v4726 = vpop.f32.mrb[0].mxu0
    %v4727 = vpop.f32.mrb[0].mxu0
    %4728 = vdwg.mxu0
    %4729 = vmatprep.subr.bf16.mxu0 %v4627
    %4730 = vmatpush1.bf16.msra.mxu0 %v4626
    %4731 = vmatprep.subr.bf16.mxu0 %v4631
    %4732 = vmatpush1.bf16.msra.mxu0 %v4630
    %4733 = vmatprep.subr.bf16.mxu0 %v4635
    %4734 = vmatpush1.bf16.msra.mxu0 %v4634
    %4735 = vmatprep.subr.bf16.mxu0 %v4639
    %4736 = vmatpush1.bf16.msra.mxu0 %v4638
    %4737 = vmatprep.subr.bf16.mxu0 %v4643
    %4738 = vmatpush1.bf16.msra.mxu0 %v4642
    %4739 = vmatprep.subr.bf16.mxu0 %v4647
    %4740 = vmatpush1.bf16.msra.mxu0 %v4646
    %4741 = vmatprep.subr.bf16.mxu0 %v4651
    %4742 = vmatpush1.bf16.msra.mxu0 %v4650
    %4743 = vmatprep.subr.bf16.mxu0 %v4655
    %4744 = vmatpush1.bf16.msra.mxu0 %v4654
    %4745 = vmatprep.subr.bf16.mxu0 0
    %4746 = vmatpush1.bf16.msra.mxu0 0
    %4747 = vmatprep.subr.bf16.mxu0 0
    %4748 = vmatpush1.bf16.msra.mxu0 0
    %4749 = vmatprep.subr.bf16.mxu0 0
    %4750 = vmatpush1.bf16.msra.mxu0 0
    %4751 = vmatprep.subr.bf16.mxu0 0
    %4752 = vmatpush1.bf16.msra.mxu0 0
    %4753 = vmatprep.subr.bf16.mxu0 0
    %4754 = vmatpush1.bf16.msra.mxu0 0
    %4755 = vmatprep.subr.bf16.mxu0 0
    %4756 = vmatpush1.bf16.msra.mxu0 0
    %4757 = vmatprep.subr.bf16.mxu0 0
    %4758 = vmatpush1.bf16.msra.mxu0 0
    %4759 = vmatprep.subr.bf16.mxu0 0
    %4760 = vmatpush1.bf16.msra.mxu0 0
    %4761 = vmatprep.mubr.bf16.mxu0 0
    %4762 = vmatmul.mubr.bf16.gmra.mrb[0].mxu0 %v4495
    %v4763 = vpop.f32.mrb[0].mxu0
    %v4764 = vadd.f32 0.0, %v4763
    %v4765 = vpop.f32.mrb[0].mxu0
    %v4766 = vadd.f32 0.0, %v4765
    %v4767 = vpop.f32.mrb[0].mxu0
    %v4768 = vpop.f32.mrb[0].mxu0
    %4769 = vdwg.mxu0
    %v4770 = vadd.f32 %v4491, %v4723
    %v4771 = vadd.f32 %v4492, %v4725
    %v4772 = vadd.f32 %v4493, %v4764
    %v4773 = vadd.f32 %v4494, %v4766
    %v4774 = vxor.u32 %v4770, 2147483648
    %v4775 = vxor.u32 %v4771, 2147483648
    %v4776 = vxor.u32 %v4772, 2147483648
    %v4777 = vmul.f32 %v4774, 1.442695
    %v4778 = vpow.pop %v4777
    %v4779 = vmul.f32 %v4775, 1.442695
    %v4780 = vpow.pop %v4779
    %v4781 = vmul.f32 %v4776, 1.442695
    %v4782 = vpow.pop %v4781
    %v4783 = vadd.f32 %v4778, 1.0
    %v4784 = vadd.f32 %v4780, 1.0
    %v4785 = vadd.f32 %v4782, 1.0
    %v4786 = vrcp.pop %v4783
    %v4787 = vmul.f32 1.0, %v4786
    %v4788 = vrcp.pop %v4784
    %v4789 = vmul.f32 1.0, %v4788
    %v4790 = vrcp.pop %v4785
    %v4791 = vmul.f32 1.0, %v4790
    %v4792 = vtanh.pop %v4773
    %v4793 = vmul.f32 %v4789, %v4486
    %v4794 = vmul.f32 %v4787, %v4792
    %v4795 = vadd.f32 %v4793, %v4794
    %v4796 = vtanh.pop %v4795
    %v4797 = vmul.f32 %v4791, %v4796
    %s4798 = scalar_lea.vmem [#allocation4], 32
    %4799 = vst [vmem:[%s4798] sm:$0xff] %v4797
    %v4800 = vld [vmem:[%s1922] sm:$0xff]
    %v4801 = vld [vmem:[%s1922 + $0x8] sm:$0xff]
    %v4802 = vld [vmem:[%s1922 + $0x10] sm:$0xff]
    %v4803 = vld [vmem:[%s1922 + $0x18] sm:$0xff]
    %v4804 = vpack.c.bf16 %v4797, %v4797
    %v4805 = vld [vmem:[#allocation7] sm:$0xff]
    %v4806 = vld [vmem:[#allocation7 + $0x8] sm:$0xff]
    %v4807 = vld [vmem:[#allocation7 + $0x10] sm:$0xff]
    %v4808 = vld [vmem:[#allocation7 + $0x18] sm:$0xff]
    %v4809 = vld [vmem:[#allocation7 + $0x20] sm:$0xff]
    %v4810 = vld [vmem:[#allocation7 + $0x28] sm:$0xff]
    %v4811 = vld [vmem:[#allocation7 + $0x30] sm:$0xff]
    %v4812 = vld [vmem:[#allocation7 + $0x38] sm:$0xff]
    %v4813 = vld [vmem:[#allocation7 + $0x40] sm:$0xff]
    %v4814 = vld [vmem:[#allocation7 + $0x48] sm:$0xff]
    %v4815 = vld [vmem:[#allocation7 + $0x50] sm:$0xff]
    %v4816 = vld [vmem:[#allocation7 + $0x58] sm:$0xff]
    %v4817 = vld [vmem:[#allocation7 + $0x60] sm:$0xff]
    %v4818 = vld [vmem:[#allocation7 + $0x68] sm:$0xff]
    %v4819 = vld [vmem:[#allocation7 + $0x70] sm:$0xff]
    %v4820 = vld [vmem:[#allocation7 + $0x78] sm:$0xff]
    %v4821 = vld [vmem:[#allocation7 + $0x80] sm:$0xff]
    %v4822 = vld [vmem:[#allocation7 + $0x88] sm:$0xff]
    %v4823 = vld [vmem:[#allocation7 + $0x90] sm:$0xff]
    %v4824 = vld [vmem:[#allocation7 + $0x98] sm:$0xff]
    %v4825 = vld [vmem:[#allocation7 + $0xa0] sm:$0xff]
    %v4826 = vld [vmem:[#allocation7 + $0xa8] sm:$0xff]
    %v4827 = vld [vmem:[#allocation7 + $0xb0] sm:$0xff]
    %v4828 = vld [vmem:[#allocation7 + $0xb8] sm:$0xff]
    %v4829 = vld [vmem:[#allocation7 + $0xc0] sm:$0xff]
    %v4830 = vld [vmem:[#allocation7 + $0xc8] sm:$0xff]
    %v4831 = vld [vmem:[#allocation7 + $0xd0] sm:$0xff]
    %v4832 = vld [vmem:[#allocation7 + $0xd8] sm:$0xff]
    %v4833 = vld [vmem:[#allocation7 + $0xe0] sm:$0xff]
    %v4834 = vld [vmem:[#allocation7 + $0xe8] sm:$0xff]
    %v4835 = vld [vmem:[#allocation7 + $0xf0] sm:$0xff]
    %v4836 = vld [vmem:[#allocation7 + $0xf8] sm:$0xff]
    %v4869 = vunpack.c.l.b16 %v4805
    %v4870 = vunpack.c.h.b16 %v4805
    %v4871 = vunpack.c.l.b16 %v4806
    %v4872 = vunpack.c.h.b16 %v4806
    %v4873 = vunpack.c.l.b16 %v4807
    %v4874 = vunpack.c.h.b16 %v4807
    %v4875 = vunpack.c.l.b16 %v4808
    %v4876 = vunpack.c.h.b16 %v4808
    %v4877 = vunpack.c.l.b16 %v4809
    %v4878 = vunpack.c.h.b16 %v4809
    %v4879 = vunpack.c.l.b16 %v4810
    %v4880 = vunpack.c.h.b16 %v4810
    %v4881 = vunpack.c.l.b16 %v4811
    %v4882 = vunpack.c.h.b16 %v4811
    %v4883 = vunpack.c.l.b16 %v4812
    %v4884 = vunpack.c.h.b16 %v4812
    %v4885 = vunpack.c.l.b16 %v4813
    %v4886 = vunpack.c.h.b16 %v4813
    %v4887 = vunpack.c.l.b16 %v4814
    %v4888 = vunpack.c.h.b16 %v4814
    %v4889 = vunpack.c.l.b16 %v4815
    %v4890 = vunpack.c.h.b16 %v4815
    %v4891 = vunpack.c.l.b16 %v4816
    %v4892 = vunpack.c.h.b16 %v4816
    %v4893 = vunpack.c.l.b16 %v4817
    %v4894 = vunpack.c.h.b16 %v4817
    %v4895 = vunpack.c.l.b16 %v4818
    %v4896 = vunpack.c.h.b16 %v4818
    %v4897 = vunpack.c.l.b16 %v4819
    %v4898 = vunpack.c.h.b16 %v4819
    %v4899 = vunpack.c.l.b16 %v4820
    %v4900 = vunpack.c.h.b16 %v4820
    %v4901 = vunpack.c.l.b16 %v4821
    %v4902 = vunpack.c.h.b16 %v4821
    %v4903 = vunpack.c.l.b16 %v4822
    %v4904 = vunpack.c.h.b16 %v4822
    %v4905 = vunpack.c.l.b16 %v4823
    %v4906 = vunpack.c.h.b16 %v4823
    %v4907 = vunpack.c.l.b16 %v4824
    %v4908 = vunpack.c.h.b16 %v4824
    %v4909 = vunpack.c.l.b16 %v4825
    %v4910 = vunpack.c.h.b16 %v4825
    %v4911 = vunpack.c.l.b16 %v4826
    %v4912 = vunpack.c.h.b16 %v4826
    %v4913 = vunpack.c.l.b16 %v4827
    %v4914 = vunpack.c.h.b16 %v4827
    %v4915 = vunpack.c.l.b16 %v4828
    %v4916 = vunpack.c.h.b16 %v4828
    %v4917 = vunpack.c.l.b16 %v4829
    %v4918 = vunpack.c.h.b16 %v4829
    %v4919 = vunpack.c.l.b16 %v4830
    %v4920 = vunpack.c.h.b16 %v4830
    %v4921 = vunpack.c.l.b16 %v4831
    %v4922 = vunpack.c.h.b16 %v4831
    %v4923 = vunpack.c.l.b16 %v4832
    %v4924 = vunpack.c.h.b16 %v4832
    %v4925 = vunpack.c.l.b16 %v4833
    %v4926 = vunpack.c.h.b16 %v4833
    %v4927 = vunpack.c.l.b16 %v4834
    %v4928 = vunpack.c.h.b16 %v4834
    %v4929 = vunpack.c.l.b16 %v4835
    %v4930 = vunpack.c.h.b16 %v4835
    %v4931 = vunpack.c.l.b16 %v4836
    %v4932 = vunpack.c.h.b16 %v4836
    %v4933 = vpack.c.b16 %v4873, %v4869
    %v4934 = vpack.c.b16 %v4874, %v4870
    %v4935 = vpack.c.b16 %v4875, %v4871
    %v4936 = vpack.c.b16 %v4876, %v4872
    %v4937 = vpack.c.b16 %v4881, %v4877
    %v4938 = vpack.c.b16 %v4882, %v4878
    %v4939 = vpack.c.b16 %v4883, %v4879
    %v4940 = vpack.c.b16 %v4884, %v4880
    %v4941 = vpack.c.b16 %v4889, %v4885
    %v4942 = vpack.c.b16 %v4890, %v4886
    %v4943 = vpack.c.b16 %v4891, %v4887
    %v4944 = vpack.c.b16 %v4892, %v4888
    %v4945 = vpack.c.b16 %v4897, %v4893
    %v4946 = vpack.c.b16 %v4898, %v4894
    %v4947 = vpack.c.b16 %v4899, %v4895
    %v4948 = vpack.c.b16 %v4900, %v4896
    %v4949 = vpack.c.b16 %v4905, %v4901
    %v4950 = vpack.c.b16 %v4906, %v4902
    %v4951 = vpack.c.b16 %v4907, %v4903
    %v4952 = vpack.c.b16 %v4908, %v4904
    %v4953 = vpack.c.b16 %v4913, %v4909
    %v4954 = vpack.c.b16 %v4914, %v4910
    %v4955 = vpack.c.b16 %v4915, %v4911
    %v4956 = vpack.c.b16 %v4916, %v4912
    %v4957 = vpack.c.b16 %v4921, %v4917
    %v4958 = vpack.c.b16 %v4922, %v4918
    %v4959 = vpack.c.b16 %v4923, %v4919
    %v4960 = vpack.c.b16 %v4924, %v4920
    %v4961 = vpack.c.b16 %v4929, %v4925
    %v4962 = vpack.c.b16 %v4930, %v4926
    %v4963 = vpack.c.b16 %v4931, %v4927
    %v4964 = vpack.c.b16 %v4932, %v4928
    %4997 = vmatprep.subr.bf16.mxu0 %v4934
    %4998 = vmatpush1.bf16.msra.mxu0 %v4933
    %4999 = vmatprep.subr.bf16.mxu0 %v4938
    %5000 = vmatpush1.bf16.msra.mxu0 %v4937
    %5001 = vmatprep.subr.bf16.mxu0 %v4942
    %5002 = vmatpush1.bf16.msra.mxu0 %v4941
    %5003 = vmatprep.subr.bf16.mxu0 %v4946
    %5004 = vmatpush1.bf16.msra.mxu0 %v4945
    %5005 = vmatprep.subr.bf16.mxu0 %v4950
    %5006 = vmatpush1.bf16.msra.mxu0 %v4949
    %5007 = vmatprep.subr.bf16.mxu0 %v4954
    %5008 = vmatpush1.bf16.msra.mxu0 %v4953
    %5009 = vmatprep.subr.bf16.mxu0 %v4958
    %5010 = vmatpush1.bf16.msra.mxu0 %v4957
    %5011 = vmatprep.subr.bf16.mxu0 %v4962
    %5012 = vmatpush1.bf16.msra.mxu0 %v4961
    %5013 = vmatprep.subr.bf16.mxu0 0
    %5014 = vmatpush1.bf16.msra.mxu0 0
    %5015 = vmatprep.subr.bf16.mxu0 0
    %5016 = vmatpush1.bf16.msra.mxu0 0
    %5017 = vmatprep.subr.bf16.mxu0 0
    %5018 = vmatpush1.bf16.msra.mxu0 0
    %5019 = vmatprep.subr.bf16.mxu0 0
    %5020 = vmatpush1.bf16.msra.mxu0 0
    %5021 = vmatprep.subr.bf16.mxu0 0
    %5022 = vmatpush1.bf16.msra.mxu0 0
    %5023 = vmatprep.subr.bf16.mxu0 0
    %5024 = vmatpush1.bf16.msra.mxu0 0
    %5025 = vmatprep.subr.bf16.mxu0 0
    %5026 = vmatpush1.bf16.msra.mxu0 0
    %5027 = vmatprep.subr.bf16.mxu0 0
    %5028 = vmatpush1.bf16.msra.mxu0 0
    %5029 = vmatprep.mubr.bf16.mxu0 0
    %5030 = vmatmul.mubr.bf16.gmra.mrb[0].mxu0 %v4804
    %v5031 = vpop.f32.mrb[0].mxu0
    %v5032 = vadd.f32 0.0, %v5031
    %v5033 = vpop.f32.mrb[0].mxu0
    %v5034 = vadd.f32 0.0, %v5033
    %v5035 = vpop.f32.mrb[0].mxu0
    %v5036 = vpop.f32.mrb[0].mxu0
    %5037 = vdwg.mxu0
    %5038 = vmatprep.subr.bf16.mxu0 %v4936
    %5039 = vmatpush1.bf16.msra.mxu0 %v4935
    %5040 = vmatprep.subr.bf16.mxu0 %v4940
    %5041 = vmatpush1.bf16.msra.mxu0 %v4939
    %5042 = vmatprep.subr.bf16.mxu0 %v4944
    %5043 = vmatpush1.bf16.msra.mxu0 %v4943
    %5044 = vmatprep.subr.bf16.mxu0 %v4948
    %5045 = vmatpush1.bf16.msra.mxu0 %v4947
    %5046 = vmatprep.subr.bf16.mxu0 %v4952
    %5047 = vmatpush1.bf16.msra.mxu0 %v4951
    %5048 = vmatprep.subr.bf16.mxu0 %v4956
    %5049 = vmatpush1.bf16.msra.mxu0 %v4955
    %5050 = vmatprep.subr.bf16.mxu0 %v4960
    %5051 = vmatpush1.bf16.msra.mxu0 %v4959
    %5052 = vmatprep.subr.bf16.mxu0 %v4964
    %5053 = vmatpush1.bf16.msra.mxu0 %v4963
    %5054 = vmatprep.subr.bf16.mxu0 0
    %5055 = vmatpush1.bf16.msra.mxu0 0
    %5056 = vmatprep.subr.bf16.mxu0 0
    %5057 = vmatpush1.bf16.msra.mxu0 0
    %5058 = vmatprep.subr.bf16.mxu0 0
    %5059 = vmatpush1.bf16.msra.mxu0 0
    %5060 = vmatprep.subr.bf16.mxu0 0
    %5061 = vmatpush1.bf16.msra.mxu0 0
    %5062 = vmatprep.subr.bf16.mxu0 0
    %5063 = vmatpush1.bf16.msra.mxu0 0
    %5064 = vmatprep.subr.bf16.mxu0 0
    %5065 = vmatpush1.bf16.msra.mxu0 0
    %5066 = vmatprep.subr.bf16.mxu0 0
    %5067 = vmatpush1.bf16.msra.mxu0 0
    %5068 = vmatprep.subr.bf16.mxu0 0
    %5069 = vmatpush1.bf16.msra.mxu0 0
    %5070 = vmatprep.mubr.bf16.mxu0 0
    %5071 = vmatmul.mubr.bf16.gmra.mrb[0].mxu0 %v4804
    %v5072 = vpop.f32.mrb[0].mxu0
    %v5073 = vadd.f32 0.0, %v5072
    %v5074 = vpop.f32.mrb[0].mxu0
    %v5075 = vadd.f32 0.0, %v5074
    %v5076 = vpop.f32.mrb[0].mxu0
    %v5077 = vpop.f32.mrb[0].mxu0
    %5078 = vdwg.mxu0
    %v5079 = vadd.f32 %v4800, %v5032
    %v5080 = vadd.f32 %v4801, %v5034
    %v5081 = vadd.f32 %v4802, %v5073
    %v5082 = vadd.f32 %v4803, %v5075
    %v5083 = vxor.u32 %v5079, 2147483648
    %v5084 = vxor.u32 %v5080, 2147483648
    %v5085 = vxor.u32 %v5081, 2147483648
    %v5086 = vmul.f32 %v5083, 1.442695
    %v5087 = vpow.pop %v5086
    %v5088 = vmul.f32 %v5084, 1.442695
    %v5089 = vpow.pop %v5088
    %v5090 = vmul.f32 %v5085, 1.442695
    %v5091 = vpow.pop %v5090
    %v5092 = vadd.f32 %v5087, 1.0
    %v5093 = vadd.f32 %v5089, 1.0
    %v5094 = vadd.f32 %v5091, 1.0
    %v5095 = vrcp.pop %v5092
    %v5096 = vmul.f32 1.0, %v5095
    %v5097 = vrcp.pop %v5093
    %v5098 = vmul.f32 1.0, %v5097
    %v5099 = vrcp.pop %v5094
    %v5100 = vmul.f32 1.0, %v5099
    %v5101 = vtanh.pop %v5082
    %v5102 = vmul.f32 %v5098, %v4795
    %v5103 = vmul.f32 %v5096, %v5101
    %v5104 = vadd.f32 %v5102, %v5103
    %v5105 = vtanh.pop %v5104
    %v5106 = vmul.f32 %v5100, %v5105
    %s5107 = scalar_lea.vmem [#allocation4], 40
    %5108 = vst [vmem:[%s5107] sm:$0xff] %v5106
    %v5109 = vld [vmem:[%s2232] sm:$0xff]
    %v5110 = vld [vmem:[%s2232 + $0x8] sm:$0xff]
    %v5111 = vld [vmem:[%s2232 + $0x10] sm:$0xff]
    %v5112 = vld [vmem:[%s2232 + $0x18] sm:$0xff]
    %v5113 = vpack.c.bf16 %v5106, %v5106
    %v5114 = vld [vmem:[#allocation7] sm:$0xff]
    %v5115 = vld [vmem:[#allocation7 + $0x8] sm:$0xff]
    %v5116 = vld [vmem:[#allocation7 + $0x10] sm:$0xff]
    %v5117 = vld [vmem:[#allocation7 + $0x18] sm:$0xff]
    %v5118 = vld [vmem:[#allocation7 + $0x20] sm:$0xff]
    %v5119 = vld [vmem:[#allocation7 + $0x28] sm:$0xff]
    %v5120 = vld [vmem:[#allocation7 + $0x30] sm:$0xff]
    %v5121 = vld [vmem:[#allocation7 + $0x38] sm:$0xff]
    %v5122 = vld [vmem:[#allocation7 + $0x40] sm:$0xff]
    %v5123 = vld [vmem:[#allocation7 + $0x48] sm:$0xff]
    %v5124 = vld [vmem:[#allocation7 + $0x50] sm:$0xff]
    %v5125 = vld [vmem:[#allocation7 + $0x58] sm:$0xff]
    %v5126 = vld [vmem:[#allocation7 + $0x60] sm:$0xff]
    %v5127 = vld [vmem:[#allocation7 + $0x68] sm:$0xff]
    %v5128 = vld [vmem:[#allocation7 + $0x70] sm:$0xff]
    %v5129 = vld [vmem:[#allocation7 + $0x78] sm:$0xff]
    %v5130 = vld [vmem:[#allocation7 + $0x80] sm:$0xff]
    %v5131 = vld [vmem:[#allocation7 + $0x88] sm:$0xff]
    %v5132 = vld [vmem:[#allocation7 + $0x90] sm:$0xff]
    %v5133 = vld [vmem:[#allocation7 + $0x98] sm:$0xff]
    %v5134 = vld [vmem:[#allocation7 + $0xa0] sm:$0xff]
    %v5135 = vld [vmem:[#allocation7 + $0xa8] sm:$0xff]
    %v5136 = vld [vmem:[#allocation7 + $0xb0] sm:$0xff]
    %v5137 = vld [vmem:[#allocation7 + $0xb8] sm:$0xff]
    %v5138 = vld [vmem:[#allocation7 + $0xc0] sm:$0xff]
    %v5139 = vld [vmem:[#allocation7 + $0xc8] sm:$0xff]
    %v5140 = vld [vmem:[#allocation7 + $0xd0] sm:$0xff]
    %v5141 = vld [vmem:[#allocation7 + $0xd8] sm:$0xff]
    %v5142 = vld [vmem:[#allocation7 + $0xe0] sm:$0xff]
    %v5143 = vld [vmem:[#allocation7 + $0xe8] sm:$0xff]
    %v5144 = vld [vmem:[#allocation7 + $0xf0] sm:$0xff]
    %v5145 = vld [vmem:[#allocation7 + $0xf8] sm:$0xff]
    %v5178 = vunpack.c.l.b16 %v5114
    %v5179 = vunpack.c.h.b16 %v5114
    %v5180 = vunpack.c.l.b16 %v5115
    %v5181 = vunpack.c.h.b16 %v5115
    %v5182 = vunpack.c.l.b16 %v5116
    %v5183 = vunpack.c.h.b16 %v5116
    %v5184 = vunpack.c.l.b16 %v5117
    %v5185 = vunpack.c.h.b16 %v5117
    %v5186 = vunpack.c.l.b16 %v5118
    %v5187 = vunpack.c.h.b16 %v5118
    %v5188 = vunpack.c.l.b16 %v5119
    %v5189 = vunpack.c.h.b16 %v5119
    %v5190 = vunpack.c.l.b16 %v5120
    %v5191 = vunpack.c.h.b16 %v5120
    %v5192 = vunpack.c.l.b16 %v5121
    %v5193 = vunpack.c.h.b16 %v5121
    %v5194 = vunpack.c.l.b16 %v5122
    %v5195 = vunpack.c.h.b16 %v5122
    %v5196 = vunpack.c.l.b16 %v5123
    %v5197 = vunpack.c.h.b16 %v5123
    %v5198 = vunpack.c.l.b16 %v5124
    %v5199 = vunpack.c.h.b16 %v5124
    %v5200 = vunpack.c.l.b16 %v5125
    %v5201 = vunpack.c.h.b16 %v5125
    %v5202 = vunpack.c.l.b16 %v5126
    %v5203 = vunpack.c.h.b16 %v5126
    %v5204 = vunpack.c.l.b16 %v5127
    %v5205 = vunpack.c.h.b16 %v5127
    %v5206 = vunpack.c.l.b16 %v5128
    %v5207 = vunpack.c.h.b16 %v5128
    %v5208 = vunpack.c.l.b16 %v5129
    %v5209 = vunpack.c.h.b16 %v5129
    %v5210 = vunpack.c.l.b16 %v5130
    %v5211 = vunpack.c.h.b16 %v5130
    %v5212 = vunpack.c.l.b16 %v5131
    %v5213 = vunpack.c.h.b16 %v5131
    %v5214 = vunpack.c.l.b16 %v5132
    %v5215 = vunpack.c.h.b16 %v5132
    %v5216 = vunpack.c.l.b16 %v5133
    %v5217 = vunpack.c.h.b16 %v5133
    %v5218 = vunpack.c.l.b16 %v5134
    %v5219 = vunpack.c.h.b16 %v5134
    %v5220 = vunpack.c.l.b16 %v5135
    %v5221 = vunpack.c.h.b16 %v5135
    %v5222 = vunpack.c.l.b16 %v5136
    %v5223 = vunpack.c.h.b16 %v5136
    %v5224 = vunpack.c.l.b16 %v5137
    %v5225 = vunpack.c.h.b16 %v5137
    %v5226 = vunpack.c.l.b16 %v5138
    %v5227 = vunpack.c.h.b16 %v5138
    %v5228 = vunpack.c.l.b16 %v5139
    %v5229 = vunpack.c.h.b16 %v5139
    %v5230 = vunpack.c.l.b16 %v5140
    %v5231 = vunpack.c.h.b16 %v5140
    %v5232 = vunpack.c.l.b16 %v5141
    %v5233 = vunpack.c.h.b16 %v5141
    %v5234 = vunpack.c.l.b16 %v5142
    %v5235 = vunpack.c.h.b16 %v5142
    %v5236 = vunpack.c.l.b16 %v5143
    %v5237 = vunpack.c.h.b16 %v5143
    %v5238 = vunpack.c.l.b16 %v5144
    %v5239 = vunpack.c.h.b16 %v5144
    %v5240 = vunpack.c.l.b16 %v5145
    %v5241 = vunpack.c.h.b16 %v5145
    %v5242 = vpack.c.b16 %v5182, %v5178
    %v5243 = vpack.c.b16 %v5183, %v5179
    %v5244 = vpack.c.b16 %v5184, %v5180
    %v5245 = vpack.c.b16 %v5185, %v5181
    %v5246 = vpack.c.b16 %v5190, %v5186
    %v5247 = vpack.c.b16 %v5191, %v5187
    %v5248 = vpack.c.b16 %v5192, %v5188
    %v5249 = vpack.c.b16 %v5193, %v5189
    %v5250 = vpack.c.b16 %v5198, %v5194
    %v5251 = vpack.c.b16 %v5199, %v5195
    %v5252 = vpack.c.b16 %v5200, %v5196
    %v5253 = vpack.c.b16 %v5201, %v5197
    %v5254 = vpack.c.b16 %v5206, %v5202
    %v5255 = vpack.c.b16 %v5207, %v5203
    %v5256 = vpack.c.b16 %v5208, %v5204
    %v5257 = vpack.c.b16 %v5209, %v5205
    %v5258 = vpack.c.b16 %v5214, %v5210
    %v5259 = vpack.c.b16 %v5215, %v5211
    %v5260 = vpack.c.b16 %v5216, %v5212
    %v5261 = vpack.c.b16 %v5217, %v5213
    %v5262 = vpack.c.b16 %v5222, %v5218
    %v5263 = vpack.c.b16 %v5223, %v5219
    %v5264 = vpack.c.b16 %v5224, %v5220
    %v5265 = vpack.c.b16 %v5225, %v5221
    %v5266 = vpack.c.b16 %v5230, %v5226
    %v5267 = vpack.c.b16 %v5231, %v5227
    %v5268 = vpack.c.b16 %v5232, %v5228
    %v5269 = vpack.c.b16 %v5233, %v5229
    %v5270 = vpack.c.b16 %v5238, %v5234
    %v5271 = vpack.c.b16 %v5239, %v5235
    %v5272 = vpack.c.b16 %v5240, %v5236
    %v5273 = vpack.c.b16 %v5241, %v5237
    %5306 = vmatprep.subr.bf16.mxu0 %v5243
    %5307 = vmatpush1.bf16.msra.mxu0 %v5242
    %5308 = vmatprep.subr.bf16.mxu0 %v5247
    %5309 = vmatpush1.bf16.msra.mxu0 %v5246
    %5310 = vmatprep.subr.bf16.mxu0 %v5251
    %5311 = vmatpush1.bf16.msra.mxu0 %v5250
    %5312 = vmatprep.subr.bf16.mxu0 %v5255
    %5313 = vmatpush1.bf16.msra.mxu0 %v5254
    %5314 = vmatprep.subr.bf16.mxu0 %v5259
    %5315 = vmatpush1.bf16.msra.mxu0 %v5258
    %5316 = vmatprep.subr.bf16.mxu0 %v5263
    %5317 = vmatpush1.bf16.msra.mxu0 %v5262
    %5318 = vmatprep.subr.bf16.mxu0 %v5267
    %5319 = vmatpush1.bf16.msra.mxu0 %v5266
    %5320 = vmatprep.subr.bf16.mxu0 %v5271
    %5321 = vmatpush1.bf16.msra.mxu0 %v5270
    %5322 = vmatprep.subr.bf16.mxu0 0
    %5323 = vmatpush1.bf16.msra.mxu0 0
    %5324 = vmatprep.subr.bf16.mxu0 0
    %5325 = vmatpush1.bf16.msra.mxu0 0
    %5326 = vmatprep.subr.bf16.mxu0 0
    %5327 = vmatpush1.bf16.msra.mxu0 0
    %5328 = vmatprep.subr.bf16.mxu0 0
    %5329 = vmatpush1.bf16.msra.mxu0 0
    %5330 = vmatprep.subr.bf16.mxu0 0
    %5331 = vmatpush1.bf16.msra.mxu0 0
    %5332 = vmatprep.subr.bf16.mxu0 0
    %5333 = vmatpush1.bf16.msra.mxu0 0
    %5334 = vmatprep.subr.bf16.mxu0 0
    %5335 = vmatpush1.bf16.msra.mxu0 0
    %5336 = vmatprep.subr.bf16.mxu0 0
    %5337 = vmatpush1.bf16.msra.mxu0 0
    %5338 = vmatprep.mubr.bf16.mxu0 0
    %5339 = vmatmul.mubr.bf16.gmra.mrb[0].mxu0 %v5113
    %v5340 = vpop.f32.mrb[0].mxu0
    %v5341 = vadd.f32 0.0, %v5340
    %v5342 = vpop.f32.mrb[0].mxu0
    %v5343 = vadd.f32 0.0, %v5342
    %v5344 = vpop.f32.mrb[0].mxu0
    %v5345 = vpop.f32.mrb[0].mxu0
    %5346 = vdwg.mxu0
    %5347 = vmatprep.subr.bf16.mxu0 %v5245
    %5348 = vmatpush1.bf16.msra.mxu0 %v5244
    %5349 = vmatprep.subr.bf16.mxu0 %v5249
    %5350 = vmatpush1.bf16.msra.mxu0 %v5248
    %5351 = vmatprep.subr.bf16.mxu0 %v5253
    %5352 = vmatpush1.bf16.msra.mxu0 %v5252
    %5353 = vmatprep.subr.bf16.mxu0 %v5257
    %5354 = vmatpush1.bf16.msra.mxu0 %v5256
    %5355 = vmatprep.subr.bf16.mxu0 %v5261
    %5356 = vmatpush1.bf16.msra.mxu0 %v5260
    %5357 = vmatprep.subr.bf16.mxu0 %v5265
    %5358 = vmatpush1.bf16.msra.mxu0 %v5264
    %5359 = vmatprep.subr.bf16.mxu0 %v5269
    %5360 = vmatpush1.bf16.msra.mxu0 %v5268
    %5361 = vmatprep.subr.bf16.mxu0 %v5273
    %5362 = vmatpush1.bf16.msra.mxu0 %v5272
    %5363 = vmatprep.subr.bf16.mxu0 0
    %5364 = vmatpush1.bf16.msra.mxu0 0
    %5365 = vmatprep.subr.bf16.mxu0 0
    %5366 = vmatpush1.bf16.msra.mxu0 0
    %5367 = vmatprep.subr.bf16.mxu0 0
    %5368 = vmatpush1.bf16.msra.mxu0 0
    %5369 = vmatprep.subr.bf16.mxu0 0
    %5370 = vmatpush1.bf16.msra.mxu0 0
    %5371 = vmatprep.subr.bf16.mxu0 0
    %5372 = vmatpush1.bf16.msra.mxu0 0
    %5373 = vmatprep.subr.bf16.mxu0 0
    %5374 = vmatpush1.bf16.msra.mxu0 0
    %5375 = vmatprep.subr.bf16.mxu0 0
    %5376 = vmatpush1.bf16.msra.mxu0 0
    %5377 = vmatprep.subr.bf16.mxu0 0
    %5378 = vmatpush1.bf16.msra.mxu0 0
    %5379 = vmatprep.mubr.bf16.mxu0 0
    %5380 = vmatmul.mubr.bf16.gmra.mrb[0].mxu0 %v5113
    %v5381 = vpop.f32.mrb[0].mxu0
    %v5382 = vadd.f32 0.0, %v5381
    %v5383 = vpop.f32.mrb[0].mxu0
    %v5384 = vadd.f32 0.0, %v5383
    %v5385 = vpop.f32.mrb[0].mxu0
    %v5386 = vpop.f32.mrb[0].mxu0
    %5387 = vdwg.mxu0
    %v5388 = vadd.f32 %v5109, %v5341
    %v5389 = vadd.f32 %v5110, %v5343
    %v5390 = vadd.f32 %v5111, %v5382
    %v5391 = vadd.f32 %v5112, %v5384
    %v5392 = vxor.u32 %v5388, 2147483648
    %v5393 = vxor.u32 %v5389, 2147483648
    %v5394 = vxor.u32 %v5390, 2147483648
    %v5395 = vmul.f32 %v5392, 1.442695
    %v5396 = vpow.pop %v5395
    %v5397 = vmul.f32 %v5393, 1.442695
    %v5398 = vpow.pop %v5397
    %v5399 = vmul.f32 %v5394, 1.442695
    %v5400 = vpow.pop %v5399
    %v5401 = vadd.f32 %v5396, 1.0
    %v5402 = vadd.f32 %v5398, 1.0
    %v5403 = vadd.f32 %v5400, 1.0
    %v5404 = vrcp.pop %v5401
    %v5405 = vmul.f32 1.0, %v5404
    %v5406 = vrcp.pop %v5402
    %v5407 = vmul.f32 1.0, %v5406
    %v5408 = vrcp.pop %v5403
    %v5409 = vmul.f32 1.0, %v5408
    %v5410 = vtanh.pop %v5391
    %v5411 = vmul.f32 %v5407, %v5104
    %v5412 = vmul.f32 %v5405, %v5410
    %v5413 = vadd.f32 %v5411, %v5412
    %v5414 = vtanh.pop %v5413
    %v5415 = vmul.f32 %v5409, %v5414
    %s5416 = scalar_lea.vmem [#allocation4], 48
    %5417 = vst [vmem:[%s5416] sm:$0xff] %v5415
    %v5418 = vld [vmem:[%s2542] sm:$0xff]
    %v5419 = vld [vmem:[%s2542 + $0x8] sm:$0xff]
    %v5420 = vld [vmem:[%s2542 + $0x10] sm:$0xff]
    %v5421 = vld [vmem:[%s2542 + $0x18] sm:$0xff]
    %v5422 = vpack.c.bf16 %v5415, %v5415
    %v5423 = vld [vmem:[#allocation7] sm:$0xff]
    %v5424 = vld [vmem:[#allocation7 + $0x8] sm:$0xff]
    %v5425 = vld [vmem:[#allocation7 + $0x10] sm:$0xff]
    %v5426 = vld [vmem:[#allocation7 + $0x18] sm:$0xff]
    %v5427 = vld [vmem:[#allocation7 + $0x20] sm:$0xff]
    %v5428 = vld [vmem:[#allocation7 + $0x28] sm:$0xff]
    %v5429 = vld [vmem:[#allocation7 + $0x30] sm:$0xff]
    %v5430 = vld [vmem:[#allocation7 + $0x38] sm:$0xff]
    %v5431 = vld [vmem:[#allocation7 + $0x40] sm:$0xff]
    %v5432 = vld [vmem:[#allocation7 + $0x48] sm:$0xff]
    %v5433 = vld [vmem:[#allocation7 + $0x50] sm:$0xff]
    %v5434 = vld [vmem:[#allocation7 + $0x58] sm:$0xff]
    %v5435 = vld [vmem:[#allocation7 + $0x60] sm:$0xff]
    %v5436 = vld [vmem:[#allocation7 + $0x68] sm:$0xff]
    %v5437 = vld [vmem:[#allocation7 + $0x70] sm:$0xff]
    %v5438 = vld [vmem:[#allocation7 + $0x78] sm:$0xff]
    %v5439 = vld [vmem:[#allocation7 + $0x80] sm:$0xff]
    %v5440 = vld [vmem:[#allocation7 + $0x88] sm:$0xff]
    %v5441 = vld [vmem:[#allocation7 + $0x90] sm:$0xff]
    %v5442 = vld [vmem:[#allocation7 + $0x98] sm:$0xff]
    %v5443 = vld [vmem:[#allocation7 + $0xa0] sm:$0xff]
    %v5444 = vld [vmem:[#allocation7 + $0xa8] sm:$0xff]
    %v5445 = vld [vmem:[#allocation7 + $0xb0] sm:$0xff]
    %v5446 = vld [vmem:[#allocation7 + $0xb8] sm:$0xff]
    %v5447 = vld [vmem:[#allocation7 + $0xc0] sm:$0xff]
    %v5448 = vld [vmem:[#allocation7 + $0xc8] sm:$0xff]
    %v5449 = vld [vmem:[#allocation7 + $0xd0] sm:$0xff]
    %v5450 = vld [vmem:[#allocation7 + $0xd8] sm:$0xff]
    %v5451 = vld [vmem:[#allocation7 + $0xe0] sm:$0xff]
    %v5452 = vld [vmem:[#allocation7 + $0xe8] sm:$0xff]
    %v5453 = vld [vmem:[#allocation7 + $0xf0] sm:$0xff]
    %v5454 = vld [vmem:[#allocation7 + $0xf8] sm:$0xff]
    %v5487 = vunpack.c.l.b16 %v5423
    %v5488 = vunpack.c.h.b16 %v5423
    %v5489 = vunpack.c.l.b16 %v5424
    %v5490 = vunpack.c.h.b16 %v5424
    %v5491 = vunpack.c.l.b16 %v5425
    %v5492 = vunpack.c.h.b16 %v5425
    %v5493 = vunpack.c.l.b16 %v5426
    %v5494 = vunpack.c.h.b16 %v5426
    %v5495 = vunpack.c.l.b16 %v5427
    %v5496 = vunpack.c.h.b16 %v5427
    %v5497 = vunpack.c.l.b16 %v5428
    %v5498 = vunpack.c.h.b16 %v5428
    %v5499 = vunpack.c.l.b16 %v5429
    %v5500 = vunpack.c.h.b16 %v5429
    %v5501 = vunpack.c.l.b16 %v5430
    %v5502 = vunpack.c.h.b16 %v5430
    %v5503 = vunpack.c.l.b16 %v5431
    %v5504 = vunpack.c.h.b16 %v5431
    %v5505 = vunpack.c.l.b16 %v5432
    %v5506 = vunpack.c.h.b16 %v5432
    %v5507 = vunpack.c.l.b16 %v5433
    %v5508 = vunpack.c.h.b16 %v5433
    %v5509 = vunpack.c.l.b16 %v5434
    %v5510 = vunpack.c.h.b16 %v5434
    %v5511 = vunpack.c.l.b16 %v5435
    %v5512 = vunpack.c.h.b16 %v5435
    %v5513 = vunpack.c.l.b16 %v5436
    %v5514 = vunpack.c.h.b16 %v5436
    %v5515 = vunpack.c.l.b16 %v5437
    %v5516 = vunpack.c.h.b16 %v5437
    %v5517 = vunpack.c.l.b16 %v5438
    %v5518 = vunpack.c.h.b16 %v5438
    %v5519 = vunpack.c.l.b16 %v5439
    %v5520 = vunpack.c.h.b16 %v5439
    %v5521 = vunpack.c.l.b16 %v5440
    %v5522 = vunpack.c.h.b16 %v5440
    %v5523 = vunpack.c.l.b16 %v5441
    %v5524 = vunpack.c.h.b16 %v5441
    %v5525 = vunpack.c.l.b16 %v5442
    %v5526 = vunpack.c.h.b16 %v5442
    %v5527 = vunpack.c.l.b16 %v5443
    %v5528 = vunpack.c.h.b16 %v5443
    %v5529 = vunpack.c.l.b16 %v5444
    %v5530 = vunpack.c.h.b16 %v5444
    %v5531 = vunpack.c.l.b16 %v5445
    %v5532 = vunpack.c.h.b16 %v5445
    %v5533 = vunpack.c.l.b16 %v5446
    %v5534 = vunpack.c.h.b16 %v5446
    %v5535 = vunpack.c.l.b16 %v5447
    %v5536 = vunpack.c.h.b16 %v5447
    %v5537 = vunpack.c.l.b16 %v5448
    %v5538 = vunpack.c.h.b16 %v5448
    %v5539 = vunpack.c.l.b16 %v5449
    %v5540 = vunpack.c.h.b16 %v5449
    %v5541 = vunpack.c.l.b16 %v5450
    %v5542 = vunpack.c.h.b16 %v5450
    %v5543 = vunpack.c.l.b16 %v5451
    %v5544 = vunpack.c.h.b16 %v5451
    %v5545 = vunpack.c.l.b16 %v5452
    %v5546 = vunpack.c.h.b16 %v5452
    %v5547 = vunpack.c.l.b16 %v5453
    %v5548 = vunpack.c.h.b16 %v5453
    %v5549 = vunpack.c.l.b16 %v5454
    %v5550 = vunpack.c.h.b16 %v5454
    %v5551 = vpack.c.b16 %v5491, %v5487
    %v5552 = vpack.c.b16 %v5492, %v5488
    %v5553 = vpack.c.b16 %v5493, %v5489
    %v5554 = vpack.c.b16 %v5494, %v5490
    %v5555 = vpack.c.b16 %v5499, %v5495
    %v5556 = vpack.c.b16 %v5500, %v5496
    %v5557 = vpack.c.b16 %v5501, %v5497
    %v5558 = vpack.c.b16 %v5502, %v5498
    %v5559 = vpack.c.b16 %v5507, %v5503
    %v5560 = vpack.c.b16 %v5508, %v5504
    %v5561 = vpack.c.b16 %v5509, %v5505
    %v5562 = vpack.c.b16 %v5510, %v5506
    %v5563 = vpack.c.b16 %v5515, %v5511
    %v5564 = vpack.c.b16 %v5516, %v5512
    %v5565 = vpack.c.b16 %v5517, %v5513
    %v5566 = vpack.c.b16 %v5518, %v5514
    %v5567 = vpack.c.b16 %v5523, %v5519
    %v5568 = vpack.c.b16 %v5524, %v5520
    %v5569 = vpack.c.b16 %v5525, %v5521
    %v5570 = vpack.c.b16 %v5526, %v5522
    %v5571 = vpack.c.b16 %v5531, %v5527
    %v5572 = vpack.c.b16 %v5532, %v5528
    %v5573 = vpack.c.b16 %v5533, %v5529
    %v5574 = vpack.c.b16 %v5534, %v5530
    %v5575 = vpack.c.b16 %v5539, %v5535
    %v5576 = vpack.c.b16 %v5540, %v5536
    %v5577 = vpack.c.b16 %v5541, %v5537
    %v5578 = vpack.c.b16 %v5542, %v5538
    %v5579 = vpack.c.b16 %v5547, %v5543
    %v5580 = vpack.c.b16 %v5548, %v5544
    %v5581 = vpack.c.b16 %v5549, %v5545
    %v5582 = vpack.c.b16 %v5550, %v5546
    %5615 = vmatprep.subr.bf16.mxu0 %v5552
    %5616 = vmatpush1.bf16.msra.mxu0 %v5551
    %5617 = vmatprep.subr.bf16.mxu0 %v5556
    %5618 = vmatpush1.bf16.msra.mxu0 %v5555
    %5619 = vmatprep.subr.bf16.mxu0 %v5560
    %5620 = vmatpush1.bf16.msra.mxu0 %v5559
    %5621 = vmatprep.subr.bf16.mxu0 %v5564
    %5622 = vmatpush1.bf16.msra.mxu0 %v5563
    %5623 = vmatprep.subr.bf16.mxu0 %v5568
    %5624 = vmatpush1.bf16.msra.mxu0 %v5567
    %5625 = vmatprep.subr.bf16.mxu0 %v5572
    %5626 = vmatpush1.bf16.msra.mxu0 %v5571
    %5627 = vmatprep.subr.bf16.mxu0 %v5576
    %5628 = vmatpush1.bf16.msra.mxu0 %v5575
    %5629 = vmatprep.subr.bf16.mxu0 %v5580
    %5630 = vmatpush1.bf16.msra.mxu0 %v5579
    %5631 = vmatprep.subr.bf16.mxu0 0
    %5632 = vmatpush1.bf16.msra.mxu0 0
    %5633 = vmatprep.subr.bf16.mxu0 0
    %5634 = vmatpush1.bf16.msra.mxu0 0
    %5635 = vmatprep.subr.bf16.mxu0 0
    %5636 = vmatpush1.bf16.msra.mxu0 0
    %5637 = vmatprep.subr.bf16.mxu0 0
    %5638 = vmatpush1.bf16.msra.mxu0 0
    %5639 = vmatprep.subr.bf16.mxu0 0
    %5640 = vmatpush1.bf16.msra.mxu0 0
    %5641 = vmatprep.subr.bf16.mxu0 0
    %5642 = vmatpush1.bf16.msra.mxu0 0
    %5643 = vmatprep.subr.bf16.mxu0 0
    %5644 = vmatpush1.bf16.msra.mxu0 0
    %5645 = vmatprep.subr.bf16.mxu0 0
    %5646 = vmatpush1.bf16.msra.mxu0 0
    %5647 = vmatprep.mubr.bf16.mxu0 0
    %5648 = vmatmul.mubr.bf16.gmra.mrb[0].mxu0 %v5422
    %v5649 = vpop.f32.mrb[0].mxu0
    %v5650 = vadd.f32 0.0, %v5649
    %v5651 = vpop.f32.mrb[0].mxu0
    %v5652 = vadd.f32 0.0, %v5651
    %v5653 = vpop.f32.mrb[0].mxu0
    %v5654 = vpop.f32.mrb[0].mxu0
    %5655 = vdwg.mxu0
    %5656 = vmatprep.subr.bf16.mxu0 %v5554
    %5657 = vmatpush1.bf16.msra.mxu0 %v5553
    %5658 = vmatprep.subr.bf16.mxu0 %v5558
    %5659 = vmatpush1.bf16.msra.mxu0 %v5557
    %5660 = vmatprep.subr.bf16.mxu0 %v5562
    %5661 = vmatpush1.bf16.msra.mxu0 %v5561
    %5662 = vmatprep.subr.bf16.mxu0 %v5566
    %5663 = vmatpush1.bf16.msra.mxu0 %v5565
    %5664 = vmatprep.subr.bf16.mxu0 %v5570
    %5665 = vmatpush1.bf16.msra.mxu0 %v5569
    %5666 = vmatprep.subr.bf16.mxu0 %v5574
    %5667 = vmatpush1.bf16.msra.mxu0 %v5573
    %5668 = vmatprep.subr.bf16.mxu0 %v5578
    %5669 = vmatpush1.bf16.msra.mxu0 %v5577
    %5670 = vmatprep.subr.bf16.mxu0 %v5582
    %5671 = vmatpush1.bf16.msra.mxu0 %v5581
    %5672 = vmatprep.subr.bf16.mxu0 0
    %5673 = vmatpush1.bf16.msra.mxu0 0
    %5674 = vmatprep.subr.bf16.mxu0 0
    %5675 = vmatpush1.bf16.msra.mxu0 0
    %5676 = vmatprep.subr.bf16.mxu0 0
    %5677 = vmatpush1.bf16.msra.mxu0 0
    %5678 = vmatprep.subr.bf16.mxu0 0
    %5679 = vmatpush1.bf16.msra.mxu0 0
    %5680 = vmatprep.subr.bf16.mxu0 0
    %5681 = vmatpush1.bf16.msra.mxu0 0
    %5682 = vmatprep.subr.bf16.mxu0 0
    %5683 = vmatpush1.bf16.msra.mxu0 0
    %5684 = vmatprep.subr.bf16.mxu0 0
    %5685 = vmatpush1.bf16.msra.mxu0 0
    %5686 = vmatprep.subr.bf16.mxu0 0
    %5687 = vmatpush1.bf16.msra.mxu0 0
    %5688 = vmatprep.mubr.bf16.mxu0 0
    %5689 = vmatmul.mubr.bf16.gmra.mrb[0].mxu0 %v5422
    %v5690 = vpop.f32.mrb[0].mxu0
    %v5691 = vadd.f32 0.0, %v5690
    %v5692 = vpop.f32.mrb[0].mxu0
    %v5693 = vadd.f32 0.0, %v5692
    %v5694 = vpop.f32.mrb[0].mxu0
    %v5695 = vpop.f32.mrb[0].mxu0
    %5696 = vdwg.mxu0
    %v5697 = vadd.f32 %v5418, %v5650
    %v5698 = vadd.f32 %v5419, %v5652
    %v5699 = vadd.f32 %v5420, %v5691
    %v5700 = vadd.f32 %v5421, %v5693
    %v5701 = vxor.u32 %v5697, 2147483648
    %v5702 = vxor.u32 %v5698, 2147483648
    %v5703 = vxor.u32 %v5699, 2147483648
    %v5704 = vmul.f32 %v5701, 1.442695
    %v5705 = vpow.pop %v5704
    %v5706 = vmul.f32 %v5702, 1.442695
    %v5707 = vpow.pop %v5706
    %v5708 = vmul.f32 %v5703, 1.442695
    %v5709 = vpow.pop %v5708
    %v5710 = vadd.f32 %v5705, 1.0
    %v5711 = vadd.f32 %v5707, 1.0
    %v5712 = vadd.f32 %v5709, 1.0
    %v5713 = vrcp.pop %v5710
    %v5714 = vmul.f32 1.0, %v5713
    %v5715 = vrcp.pop %v5711
    %v5716 = vmul.f32 1.0, %v5715
    %v5717 = vrcp.pop %v5712
    %v5718 = vmul.f32 1.0, %v5717
    %v5719 = vtanh.pop %v5700
    %v5720 = vmul.f32 %v5716, %v5413
    %v5721 = vmul.f32 %v5714, %v5719
    %v5722 = vadd.f32 %v5720, %v5721
    %v5723 = vtanh.pop %v5722
    %v5724 = vmul.f32 %v5718, %v5723
    %s5725 = scalar_lea.vmem [#allocation4], 56
    %5726 = vst [vmem:[%s5725] sm:$0xff] %v5724
    %v5727 = vld [vmem:[#allocation4] sm:$0xff]
    %v5728 = vld [vmem:[#allocation4 + $0x8] sm:$0xff]
    %v5729 = vld [vmem:[#allocation4 + $0x10] sm:$0xff]
    %v5730 = vld [vmem:[#allocation4 + $0x18] sm:$0xff]
    %v5731 = vld [vmem:[#allocation4 + $0x20] sm:$0xff]
    %v5732 = vld [vmem:[#allocation4 + $0x28] sm:$0xff]
    %v5733 = vld [vmem:[#allocation4 + $0x30] sm:$0xff]
    %v5734 = vld [vmem:[#allocation4 + $0x38] sm:$0xff]
    %v5735 = vpack.c.bf16 %v5728, %v5727
    %v5736 = vpack.c.bf16 %v5730, %v5729
    %v5737 = vpack.c.bf16 %v5732, %v5731
    %v5738 = vpack.c.bf16 %v5734, %v5733
    %v5739 = vld [vmem:[#allocation9] sm:$0xff]
    %v5740 = vld [vmem:[#allocation9 + $0x8] sm:$0xff]
    %v5741 = vld [vmem:[#allocation9 + $0x10] sm:$0xff]
    %v5742 = vld [vmem:[#allocation9 + $0x18] sm:$0xff]
    %v5743 = vld [vmem:[#allocation9 + $0x20] sm:$0xff]
    %v5744 = vld [vmem:[#allocation9 + $0x28] sm:$0xff]
    %v5745 = vld [vmem:[#allocation9 + $0x30] sm:$0xff]
    %v5746 = vld [vmem:[#allocation9 + $0x38] sm:$0xff]
    %v5747 = vld [vmem:[#allocation9 + $0x40] sm:$0xff]
    %v5748 = vld [vmem:[#allocation9 + $0x48] sm:$0xff]
    %v5749 = vld [vmem:[#allocation9 + $0x50] sm:$0xff]
    %v5750 = vld [vmem:[#allocation9 + $0x58] sm:$0xff]
    %v5751 = vld [vmem:[#allocation9 + $0x60] sm:$0xff]
    %v5752 = vld [vmem:[#allocation9 + $0x68] sm:$0xff]
    %v5753 = vld [vmem:[#allocation9 + $0x70] sm:$0xff]
    %v5754 = vld [vmem:[#allocation9 + $0x78] sm:$0xff]
    %v5755 = vld [vmem:[#allocation9 + $0x80] sm:$0xff]
    %v5756 = vld [vmem:[#allocation9 + $0x88] sm:$0xff]
    %v5757 = vld [vmem:[#allocation9 + $0x90] sm:$0xff]
    %v5758 = vld [vmem:[#allocation9 + $0x98] sm:$0xff]
    %v5759 = vld [vmem:[#allocation9 + $0xa0] sm:$0xff]
    %v5760 = vld [vmem:[#allocation9 + $0xa8] sm:$0xff]
    %v5761 = vld [vmem:[#allocation9 + $0xb0] sm:$0xff]
    %v5762 = vld [vmem:[#allocation9 + $0xb8] sm:$0xff]
    %v5763 = vld [vmem:[#allocation9 + $0xc0] sm:$0xff]
    %v5764 = vld [vmem:[#allocation9 + $0xc8] sm:$0xff]
    %v5765 = vld [vmem:[#allocation9 + $0xd0] sm:$0xff]
    %v5766 = vld [vmem:[#allocation9 + $0xd8] sm:$0xff]
    %v5767 = vld [vmem:[#allocation9 + $0xe0] sm:$0xff]
    %v5768 = vld [vmem:[#allocation9 + $0xe8] sm:$0xff]
    %v5769 = vld [vmem:[#allocation9 + $0xf0] sm:$0xff]
    %v5770 = vld [vmem:[#allocation9 + $0xf8] sm:$0xff]
    %v5771 = vld [vmem:[%s9] sm:$0xf]
    %v5773 = vlaneseq
    %v5774 = vshrl.u32 %v5773, 7
    %v5775 = vsub.s32 0, %v5774
    %v5776 = vrot.slane %v5771, %v5775
    %v5777 = vlaneseq
    %v5778 = vshrl.u32 %v5777, 7
    %v5779 = vsub.s32 1, %v5778
    %v5780 = vrot.slane %v5771, %v5779
    %v5781 = vlaneseq
    %v5782 = vshrl.u32 %v5781, 7
    %v5783 = vsub.s32 2, %v5782
    %v5784 = vrot.slane %v5771, %v5783
    %v5785 = vlaneseq
    %v5786 = vshrl.u32 %v5785, 7
    %v5787 = vsub.s32 3, %v5786
    %v5788 = vrot.slane %v5771, %v5787
    %v5825 = vunpack.c.l.b16 %v5739
    %v5826 = vunpack.c.h.b16 %v5739
    %v5827 = vunpack.c.l.b16 %v5740
    %v5828 = vunpack.c.h.b16 %v5740
    %v5829 = vunpack.c.l.b16 %v5741
    %v5830 = vunpack.c.h.b16 %v5741
    %v5831 = vunpack.c.l.b16 %v5742
    %v5832 = vunpack.c.h.b16 %v5742
    %v5833 = vunpack.c.l.b16 %v5743
    %v5834 = vunpack.c.h.b16 %v5743
    %v5835 = vunpack.c.l.b16 %v5744
    %v5836 = vunpack.c.h.b16 %v5744
    %v5837 = vunpack.c.l.b16 %v5745
    %v5838 = vunpack.c.h.b16 %v5745
    %v5839 = vunpack.c.l.b16 %v5746
    %v5840 = vunpack.c.h.b16 %v5746
    %v5841 = vunpack.c.l.b16 %v5747
    %v5842 = vunpack.c.h.b16 %v5747
    %v5843 = vunpack.c.l.b16 %v5748
    %v5844 = vunpack.c.h.b16 %v5748
    %v5845 = vunpack.c.l.b16 %v5749
    %v5846 = vunpack.c.h.b16 %v5749
    %v5847 = vunpack.c.l.b16 %v5750
    %v5848 = vunpack.c.h.b16 %v5750
    %v5849 = vunpack.c.l.b16 %v5751
    %v5850 = vunpack.c.h.b16 %v5751
    %v5851 = vunpack.c.l.b16 %v5752
    %v5852 = vunpack.c.h.b16 %v5752
    %v5853 = vunpack.c.l.b16 %v5753
    %v5854 = vunpack.c.h.b16 %v5753
    %v5855 = vunpack.c.l.b16 %v5754
    %v5856 = vunpack.c.h.b16 %v5754
    %v5857 = vunpack.c.l.b16 %v5755
    %v5858 = vunpack.c.h.b16 %v5755
    %v5859 = vunpack.c.l.b16 %v5756
    %v5860 = vunpack.c.h.b16 %v5756
    %v5861 = vunpack.c.l.b16 %v5757
    %v5862 = vunpack.c.h.b16 %v5757
    %v5863 = vunpack.c.l.b16 %v5758
    %v5864 = vunpack.c.h.b16 %v5758
    %v5865 = vunpack.c.l.b16 %v5759
    %v5866 = vunpack.c.h.b16 %v5759
    %v5867 = vunpack.c.l.b16 %v5760
    %v5868 = vunpack.c.h.b16 %v5760
    %v5869 = vunpack.c.l.b16 %v5761
    %v5870 = vunpack.c.h.b16 %v5761
    %v5871 = vunpack.c.l.b16 %v5762
    %v5872 = vunpack.c.h.b16 %v5762
    %v5873 = vunpack.c.l.b16 %v5763
    %v5874 = vunpack.c.h.b16 %v5763
    %v5875 = vunpack.c.l.b16 %v5764
    %v5876 = vunpack.c.h.b16 %v5764
    %v5877 = vunpack.c.l.b16 %v5765
    %v5878 = vunpack.c.h.b16 %v5765
    %v5879 = vunpack.c.l.b16 %v5766
    %v5880 = vunpack.c.h.b16 %v5766
    %v5881 = vunpack.c.l.b16 %v5767
    %v5882 = vunpack.c.h.b16 %v5767
    %v5883 = vunpack.c.l.b16 %v5768
    %v5884 = vunpack.c.h.b16 %v5768
    %v5885 = vunpack.c.l.b16 %v5769
    %v5886 = vunpack.c.h.b16 %v5769
    %v5887 = vunpack.c.l.b16 %v5770
    %v5888 = vunpack.c.h.b16 %v5770
    %v5889 = vpack.c.b16 %v5829, %v5825
    %v5890 = vpack.c.b16 %v5830, %v5826
    %v5891 = vpack.c.b16 %v5831, %v5827
    %v5892 = vpack.c.b16 %v5832, %v5828
    %v5893 = vpack.c.b16 %v5837, %v5833
    %v5894 = vpack.c.b16 %v5838, %v5834
    %v5895 = vpack.c.b16 %v5839, %v5835
    %v5896 = vpack.c.b16 %v5840, %v5836
    %v5897 = vpack.c.b16 %v5845, %v5841
    %v5898 = vpack.c.b16 %v5846, %v5842
    %v5899 = vpack.c.b16 %v5847, %v5843
    %v5900 = vpack.c.b16 %v5848, %v5844
    %v5901 = vpack.c.b16 %v5853, %v5849
    %v5902 = vpack.c.b16 %v5854, %v5850
    %v5903 = vpack.c.b16 %v5855, %v5851
    %v5904 = vpack.c.b16 %v5856, %v5852
    %v5905 = vpack.c.b16 %v5861, %v5857
    %v5906 = vpack.c.b16 %v5862, %v5858
    %v5907 = vpack.c.b16 %v5863, %v5859
    %v5908 = vpack.c.b16 %v5864, %v5860
    %v5909 = vpack.c.b16 %v5869, %v5865
    %v5910 = vpack.c.b16 %v5870, %v5866
    %v5911 = vpack.c.b16 %v5871, %v5867
    %v5912 = vpack.c.b16 %v5872, %v5868
    %v5913 = vpack.c.b16 %v5877, %v5873
    %v5914 = vpack.c.b16 %v5878, %v5874
    %v5915 = vpack.c.b16 %v5879, %v5875
    %v5916 = vpack.c.b16 %v5880, %v5876
    %v5917 = vpack.c.b16 %v5885, %v5881
    %v5918 = vpack.c.b16 %v5886, %v5882
    %v5919 = vpack.c.b16 %v5887, %v5883
    %v5920 = vpack.c.b16 %v5888, %v5884
    %5953 = vmatprep.subr.bf16.mxu0 %v5890
    %5954 = vmatpush1.bf16.msra.mxu0 %v5889
    %5955 = vmatprep.subr.bf16.mxu0 %v5894
    %5956 = vmatpush1.bf16.msra.mxu0 %v5893
    %5957 = vmatprep.subr.bf16.mxu0 %v5898
    %5958 = vmatpush1.bf16.msra.mxu0 %v5897
    %5959 = vmatprep.subr.bf16.mxu0 %v5902
    %5960 = vmatpush1.bf16.msra.mxu0 %v5901
    %5961 = vmatprep.subr.bf16.mxu0 %v5906
    %5962 = vmatpush1.bf16.msra.mxu0 %v5905
    %5963 = vmatprep.subr.bf16.mxu0 %v5910
    %5964 = vmatpush1.bf16.msra.mxu0 %v5909
    %5965 = vmatprep.subr.bf16.mxu0 %v5914
    %5966 = vmatpush1.bf16.msra.mxu0 %v5913
    %5967 = vmatprep.subr.bf16.mxu0 %v5918
    %5968 = vmatpush1.bf16.msra.mxu0 %v5917
    %5969 = vmatprep.subr.bf16.mxu0 0
    %5970 = vmatpush1.bf16.msra.mxu0 0
    %5971 = vmatprep.subr.bf16.mxu0 0
    %5972 = vmatpush1.bf16.msra.mxu0 0
    %5973 = vmatprep.subr.bf16.mxu0 0
    %5974 = vmatpush1.bf16.msra.mxu0 0
    %5975 = vmatprep.subr.bf16.mxu0 0
    %5976 = vmatpush1.bf16.msra.mxu0 0
    %5977 = vmatprep.subr.bf16.mxu0 0
    %5978 = vmatpush1.bf16.msra.mxu0 0
    %5979 = vmatprep.subr.bf16.mxu0 0
    %5980 = vmatpush1.bf16.msra.mxu0 0
    %5981 = vmatprep.subr.bf16.mxu0 0
    %5982 = vmatpush1.bf16.msra.mxu0 0
    %5983 = vmatprep.subr.bf16.mxu0 0
    %5984 = vmatpush1.bf16.msra.mxu0 0
    %5985 = vmatprep.mubr.bf16.mxu0 0
    %5986 = vmatmul.mubr.bf16.gmra.mrb[0].mxu0 %v5735
    %v5987 = vpop.f32.mrb[0].mxu0
    %v5988 = vadd.f32 %v5776, %v5987
    %v5989 = vpop.f32.mrb[0].mxu0
    %v5990 = vadd.f32 %v5780, %v5989
    %v5991 = vpop.f32.mrb[0].mxu0
    %v5992 = vadd.f32 %v5776, %v5991
    %v5993 = vpop.f32.mrb[0].mxu0
    %v5994 = vadd.f32 %v5780, %v5993
    %5995 = vmatprep.mubr.bf16.mxu0 0
    %5996 = vmatmul.mubr.bf16.gmra.mrb[0].mxu0 %v5736
    %v5997 = vpop.f32.mrb[0].mxu0
    %v5998 = vadd.f32 %v5776, %v5997
    %v5999 = vpop.f32.mrb[0].mxu0
    %v6000 = vadd.f32 %v5780, %v5999
    %v6001 = vpop.f32.mrb[0].mxu0
    %v6002 = vadd.f32 %v5776, %v6001
    %v6003 = vpop.f32.mrb[0].mxu0
    %v6004 = vadd.f32 %v5780, %v6003
    %6005 = vmatprep.mubr.bf16.mxu0 0
    %6006 = vmatmul.mubr.bf16.gmra.mrb[0].mxu0 %v5737
    %v6007 = vpop.f32.mrb[0].mxu0
    %v6008 = vadd.f32 %v5776, %v6007
    %v6009 = vpop.f32.mrb[0].mxu0
    %v6010 = vadd.f32 %v5780, %v6009
    %v6011 = vpop.f32.mrb[0].mxu0
    %v6012 = vadd.f32 %v5776, %v6011
    %v6013 = vpop.f32.mrb[0].mxu0
    %v6014 = vadd.f32 %v5780, %v6013
    %6015 = vmatprep.mubr.bf16.mxu0 0
    %6016 = vmatmul.mubr.bf16.gmra.mrb[0].mxu0 %v5738
    %v6017 = vpop.f32.mrb[0].mxu0
    %v6018 = vadd.f32 %v5776, %v6017
    %v6019 = vpop.f32.mrb[0].mxu0
    %v6020 = vadd.f32 %v5780, %v6019
    %v6021 = vpop.f32.mrb[0].mxu0
    %v6022 = vadd.f32 %v5776, %v6021
    %v6023 = vpop.f32.mrb[0].mxu0
    %v6024 = vadd.f32 %v5780, %v6023
    %6025 = vdwg.mxu0
    %6026 = vmatprep.subr.bf16.mxu0 %v5892
    %6027 = vmatpush1.bf16.msra.mxu0 %v5891
    %6028 = vmatprep.subr.bf16.mxu0 %v5896
    %6029 = vmatpush1.bf16.msra.mxu0 %v5895
    %6030 = vmatprep.subr.bf16.mxu0 %v5900
    %6031 = vmatpush1.bf16.msra.mxu0 %v5899
    %6032 = vmatprep.subr.bf16.mxu0 %v5904
    %6033 = vmatpush1.bf16.msra.mxu0 %v5903
    %6034 = vmatprep.subr.bf16.mxu0 %v5908
    %6035 = vmatpush1.bf16.msra.mxu0 %v5907
    %6036 = vmatprep.subr.bf16.mxu0 %v5912
    %6037 = vmatpush1.bf16.msra.mxu0 %v5911
    %6038 = vmatprep.subr.bf16.mxu0 %v5916
    %6039 = vmatpush1.bf16.msra.mxu0 %v5915
    %6040 = vmatprep.subr.bf16.mxu0 %v5920
    %6041 = vmatpush1.bf16.msra.mxu0 %v5919
    %6042 = vmatprep.subr.bf16.mxu0 0
    %6043 = vmatpush1.bf16.msra.mxu0 0
    %6044 = vmatprep.subr.bf16.mxu0 0
    %6045 = vmatpush1.bf16.msra.mxu0 0
    %6046 = vmatprep.subr.bf16.mxu0 0
    %6047 = vmatpush1.bf16.msra.mxu0 0
    %6048 = vmatprep.subr.bf16.mxu0 0
    %6049 = vmatpush1.bf16.msra.mxu0 0
    %6050 = vmatprep.subr.bf16.mxu0 0
    %6051 = vmatpush1.bf16.msra.mxu0 0
    %6052 = vmatprep.subr.bf16.mxu0 0
    %6053 = vmatpush1.bf16.msra.mxu0 0
    %6054 = vmatprep.subr.bf16.mxu0 0
    %6055 = vmatpush1.bf16.msra.mxu0 0
    %6056 = vmatprep.subr.bf16.mxu0 0
    %6057 = vmatpush1.bf16.msra.mxu0 0
    %6058 = vmatprep.mubr.bf16.mxu0 0
    %6059 = vmatmul.mubr.bf16.gmra.mrb[0].mxu0 %v5735
    %v6060 = vpop.f32.mrb[0].mxu0
    %v6061 = vadd.f32 %v5784, %v6060
    %v6062 = vpop.f32.mrb[0].mxu0
    %v6063 = vadd.f32 %v5788, %v6062
    %v6064 = vpop.f32.mrb[0].mxu0
    %v6065 = vadd.f32 %v5784, %v6064
    %v6066 = vpop.f32.mrb[0].mxu0
    %v6067 = vadd.f32 %v5788, %v6066
    %6068 = vmatprep.mubr.bf16.mxu0 0
    %6069 = vmatmul.mubr.bf16.gmra.mrb[0].mxu0 %v5736
    %v6070 = vpop.f32.mrb[0].mxu0
    %v6071 = vadd.f32 %v5784, %v6070
    %v6072 = vpop.f32.mrb[0].mxu0
    %v6073 = vadd.f32 %v5788, %v6072
    %v6074 = vpop.f32.mrb[0].mxu0
    %v6075 = vadd.f32 %v5784, %v6074
    %v6076 = vpop.f32.mrb[0].mxu0
    %v6077 = vadd.f32 %v5788, %v6076
    %6078 = vmatprep.mubr.bf16.mxu0 0
    %6079 = vmatmul.mubr.bf16.gmra.mrb[0].mxu0 %v5737
    %v6080 = vpop.f32.mrb[0].mxu0
    %v6081 = vadd.f32 %v5784, %v6080
    %v6082 = vpop.f32.mrb[0].mxu0
    %v6083 = vadd.f32 %v5788, %v6082
    %v6084 = vpop.f32.mrb[0].mxu0
    %v6085 = vadd.f32 %v5784, %v6084
    %v6086 = vpop.f32.mrb[0].mxu0
    %v6087 = vadd.f32 %v5788, %v6086
    %6088 = vmatprep.mubr.bf16.mxu0 0
    %6089 = vmatmul.mubr.bf16.gmra.mrb[0].mxu0 %v5738
    %v6090 = vpop.f32.mrb[0].mxu0
    %v6091 = vadd.f32 %v5784, %v6090
    %v6092 = vpop.f32.mrb[0].mxu0
    %v6093 = vadd.f32 %v5788, %v6092
    %v6094 = vpop.f32.mrb[0].mxu0
    %v6095 = vadd.f32 %v5784, %v6094
    %v6096 = vpop.f32.mrb[0].mxu0
    %v6097 = vadd.f32 %v5788, %v6096
    %6098 = vdwg.mxu0
    %6099 = vst [vmem:[#allocation2] sm:$0xff] %v5988
    %6100 = vst [vmem:[#allocation2 + $0x8] sm:$0xff] %v5990
    %6101 = vst [vmem:[#allocation2 + $0x10] sm:$0xff] %v6061
    %6102 = vst [vmem:[#allocation2 + $0x18] sm:$0xff] %v6063
    %6103 = vst [vmem:[#allocation2 + $0x20] sm:$0xff] %v5992
    %6104 = vst [vmem:[#allocation2 + $0x28] sm:$0xff] %v5994
    %6105 = vst [vmem:[#allocation2 + $0x30] sm:$0xff] %v6065
    %6106 = vst [vmem:[#allocation2 + $0x38] sm:$0xff] %v6067
    %6107 = vst [vmem:[#allocation2 + $0x40] sm:$0xff] %v5998
    %6108 = vst [vmem:[#allocation2 + $0x48] sm:$0xff] %v6000
    %6109 = vst [vmem:[#allocation2 + $0x50] sm:$0xff] %v6071
    %6110 = vst [vmem:[#allocation2 + $0x58] sm:$0xff] %v6073
    %6111 = vst [vmem:[#allocation2 + $0x60] sm:$0xff] %v6002
    %6112 = vst [vmem:[#allocation2 + $0x68] sm:$0xff] %v6004
    %6113 = vst [vmem:[#allocation2 + $0x70] sm:$0xff] %v6075
    %6114 = vst [vmem:[#allocation2 + $0x78] sm:$0xff] %v6077
    %6115 = vst [vmem:[#allocation2 + $0x80] sm:$0xff] %v6008
    %6116 = vst [vmem:[#allocation2 + $0x88] sm:$0xff] %v6010
    %6117 = vst [vmem:[#allocation2 + $0x90] sm:$0xff] %v6081
    %6118 = vst [vmem:[#allocation2 + $0x98] sm:$0xff] %v6083
    %6119 = vst [vmem:[#allocation2 + $0xa0] sm:$0xff] %v6012
    %6120 = vst [vmem:[#allocation2 + $0xa8] sm:$0xff] %v6014
    %6121 = vst [vmem:[#allocation2 + $0xb0] sm:$0xff] %v6085
    %6122 = vst [vmem:[#allocation2 + $0xb8] sm:$0xff] %v6087
    %6123 = vst [vmem:[#allocation2 + $0xc0] sm:$0xff] %v6018
    %6124 = vst [vmem:[#allocation2 + $0xc8] sm:$0xff] %v6020
    %6125 = vst [vmem:[#allocation2 + $0xd0] sm:$0xff] %v6091
    %6126 = vst [vmem:[#allocation2 + $0xd8] sm:$0xff] %v6093
    %6127 = vst [vmem:[#allocation2 + $0xe0] sm:$0xff] %v6022
    %6128 = vst [vmem:[#allocation2 + $0xe8] sm:$0xff] %v6024
    %6129 = vst [vmem:[#allocation2 + $0xf0] sm:$0xff] %v6095
    %6130 = vst [vmem:[#allocation2 + $0xf8] sm:$0xff] %v6097
    %v6131 = vld [vmem:[#allocation2] sm:$0xff]
    %v6132 = vld [vmem:[#allocation2 + $0x8] sm:$0xff]
    %v6133 = vld [vmem:[#allocation2 + $0x10] sm:$0xff]
    %v6134 = vld [vmem:[#allocation2 + $0x18] sm:$0xff]
    %v6135 = vpack.c.bf16 %v5724, %v5724
    %v6136 = vld [vmem:[#allocation10] sm:$0xff]
    %v6137 = vld [vmem:[#allocation10 + $0x8] sm:$0xff]
    %v6138 = vld [vmem:[#allocation10 + $0x10] sm:$0xff]
    %v6139 = vld [vmem:[#allocation10 + $0x18] sm:$0xff]
    %v6140 = vld [vmem:[#allocation10 + $0x20] sm:$0xff]
    %v6141 = vld [vmem:[#allocation10 + $0x28] sm:$0xff]
    %v6142 = vld [vmem:[#allocation10 + $0x30] sm:$0xff]
    %v6143 = vld [vmem:[#allocation10 + $0x38] sm:$0xff]
    %v6144 = vld [vmem:[#allocation10 + $0x40] sm:$0xff]
    %v6145 = vld [vmem:[#allocation10 + $0x48] sm:$0xff]
    %v6146 = vld [vmem:[#allocation10 + $0x50] sm:$0xff]
    %v6147 = vld [vmem:[#allocation10 + $0x58] sm:$0xff]
    %v6148 = vld [vmem:[#allocation10 + $0x60] sm:$0xff]
    %v6149 = vld [vmem:[#allocation10 + $0x68] sm:$0xff]
    %v6150 = vld [vmem:[#allocation10 + $0x70] sm:$0xff]
    %v6151 = vld [vmem:[#allocation10 + $0x78] sm:$0xff]
    %v6152 = vld [vmem:[#allocation10 + $0x80] sm:$0xff]
    %v6153 = vld [vmem:[#allocation10 + $0x88] sm:$0xff]
    %v6154 = vld [vmem:[#allocation10 + $0x90] sm:$0xff]
    %v6155 = vld [vmem:[#allocation10 + $0x98] sm:$0xff]
    %v6156 = vld [vmem:[#allocation10 + $0xa0] sm:$0xff]
    %v6157 = vld [vmem:[#allocation10 + $0xa8] sm:$0xff]
    %v6158 = vld [vmem:[#allocation10 + $0xb0] sm:$0xff]
    %v6159 = vld [vmem:[#allocation10 + $0xb8] sm:$0xff]
    %v6160 = vld [vmem:[#allocation10 + $0xc0] sm:$0xff]
    %v6161 = vld [vmem:[#allocation10 + $0xc8] sm:$0xff]
    %v6162 = vld [vmem:[#allocation10 + $0xd0] sm:$0xff]
    %v6163 = vld [vmem:[#allocation10 + $0xd8] sm:$0xff]
    %v6164 = vld [vmem:[#allocation10 + $0xe0] sm:$0xff]
    %v6165 = vld [vmem:[#allocation10 + $0xe8] sm:$0xff]
    %v6166 = vld [vmem:[#allocation10 + $0xf0] sm:$0xff]
    %v6167 = vld [vmem:[#allocation10 + $0xf8] sm:$0xff]
    %v6200 = vunpack.c.l.b16 %v6136
    %v6201 = vunpack.c.h.b16 %v6136
    %v6202 = vunpack.c.l.b16 %v6137
    %v6203 = vunpack.c.h.b16 %v6137
    %v6204 = vunpack.c.l.b16 %v6138
    %v6205 = vunpack.c.h.b16 %v6138
    %v6206 = vunpack.c.l.b16 %v6139
    %v6207 = vunpack.c.h.b16 %v6139
    %v6208 = vunpack.c.l.b16 %v6140
    %v6209 = vunpack.c.h.b16 %v6140
    %v6210 = vunpack.c.l.b16 %v6141
    %v6211 = vunpack.c.h.b16 %v6141
    %v6212 = vunpack.c.l.b16 %v6142
    %v6213 = vunpack.c.h.b16 %v6142
    %v6214 = vunpack.c.l.b16 %v6143
    %v6215 = vunpack.c.h.b16 %v6143
    %v6216 = vunpack.c.l.b16 %v6144
    %v6217 = vunpack.c.h.b16 %v6144
    %v6218 = vunpack.c.l.b16 %v6145
    %v6219 = vunpack.c.h.b16 %v6145
    %v6220 = vunpack.c.l.b16 %v6146
    %v6221 = vunpack.c.h.b16 %v6146
    %v6222 = vunpack.c.l.b16 %v6147
    %v6223 = vunpack.c.h.b16 %v6147
    %v6224 = vunpack.c.l.b16 %v6148
    %v6225 = vunpack.c.h.b16 %v6148
    %v6226 = vunpack.c.l.b16 %v6149
    %v6227 = vunpack.c.h.b16 %v6149
    %v6228 = vunpack.c.l.b16 %v6150
    %v6229 = vunpack.c.h.b16 %v6150
    %v6230 = vunpack.c.l.b16 %v6151
    %v6231 = vunpack.c.h.b16 %v6151
    %v6232 = vunpack.c.l.b16 %v6152
    %v6233 = vunpack.c.h.b16 %v6152
    %v6234 = vunpack.c.l.b16 %v6153
    %v6235 = vunpack.c.h.b16 %v6153
    %v6236 = vunpack.c.l.b16 %v6154
    %v6237 = vunpack.c.h.b16 %v6154
    %v6238 = vunpack.c.l.b16 %v6155
    %v6239 = vunpack.c.h.b16 %v6155
    %v6240 = vunpack.c.l.b16 %v6156
    %v6241 = vunpack.c.h.b16 %v6156
    %v6242 = vunpack.c.l.b16 %v6157
    %v6243 = vunpack.c.h.b16 %v6157
    %v6244 = vunpack.c.l.b16 %v6158
    %v6245 = vunpack.c.h.b16 %v6158
    %v6246 = vunpack.c.l.b16 %v6159
    %v6247 = vunpack.c.h.b16 %v6159
    %v6248 = vunpack.c.l.b16 %v6160
    %v6249 = vunpack.c.h.b16 %v6160
    %v6250 = vunpack.c.l.b16 %v6161
    %v6251 = vunpack.c.h.b16 %v6161
    %v6252 = vunpack.c.l.b16 %v6162
    %v6253 = vunpack.c.h.b16 %v6162
    %v6254 = vunpack.c.l.b16 %v6163
    %v6255 = vunpack.c.h.b16 %v6163
    %v6256 = vunpack.c.l.b16 %v6164
    %v6257 = vunpack.c.h.b16 %v6164
    %v6258 = vunpack.c.l.b16 %v6165
    %v6259 = vunpack.c.h.b16 %v6165
    %v6260 = vunpack.c.l.b16 %v6166
    %v6261 = vunpack.c.h.b16 %v6166
    %v6262 = vunpack.c.l.b16 %v6167
    %v6263 = vunpack.c.h.b16 %v6167
    %v6264 = vpack.c.b16 %v6204, %v6200
    %v6265 = vpack.c.b16 %v6205, %v6201
    %v6266 = vpack.c.b16 %v6206, %v6202
    %v6267 = vpack.c.b16 %v6207, %v6203
    %v6268 = vpack.c.b16 %v6212, %v6208
    %v6269 = vpack.c.b16 %v6213, %v6209
    %v6270 = vpack.c.b16 %v6214, %v6210
    %v6271 = vpack.c.b16 %v6215, %v6211
    %v6272 = vpack.c.b16 %v6220, %v6216
    %v6273 = vpack.c.b16 %v6221, %v6217
    %v6274 = vpack.c.b16 %v6222, %v6218
    %v6275 = vpack.c.b16 %v6223, %v6219
    %v6276 = vpack.c.b16 %v6228, %v6224
    %v6277 = vpack.c.b16 %v6229, %v6225
    %v6278 = vpack.c.b16 %v6230, %v6226
    %v6279 = vpack.c.b16 %v6231, %v6227
    %v6280 = vpack.c.b16 %v6236, %v6232
    %v6281 = vpack.c.b16 %v6237, %v6233
    %v6282 = vpack.c.b16 %v6238, %v6234
    %v6283 = vpack.c.b16 %v6239, %v6235
    %v6284 = vpack.c.b16 %v6244, %v6240
    %v6285 = vpack.c.b16 %v6245, %v6241
    %v6286 = vpack.c.b16 %v6246, %v6242
    %v6287 = vpack.c.b16 %v6247, %v6243
    %v6288 = vpack.c.b16 %v6252, %v6248
    %v6289 = vpack.c.b16 %v6253, %v6249
    %v6290 = vpack.c.b16 %v6254, %v6250
    %v6291 = vpack.c.b16 %v6255, %v6251
    %v6292 = vpack.c.b16 %v6260, %v6256
    %v6293 = vpack.c.b16 %v6261, %v6257
    %v6294 = vpack.c.b16 %v6262, %v6258
    %v6295 = vpack.c.b16 %v6263, %v6259
    %6328 = vmatprep.subr.bf16.mxu0 %v6265
    %6329 = vmatpush1.bf16.msra.mxu0 %v6264
    %6330 = vmatprep.subr.bf16.mxu0 %v6269
    %6331 = vmatpush1.bf16.msra.mxu0 %v6268
    %6332 = vmatprep.subr.bf16.mxu0 %v6273
    %6333 = vmatpush1.bf16.msra.mxu0 %v6272
    %6334 = vmatprep.subr.bf16.mxu0 %v6277
    %6335 = vmatpush1.bf16.msra.mxu0 %v6276
    %6336 = vmatprep.subr.bf16.mxu0 %v6281
    %6337 = vmatpush1.bf16.msra.mxu0 %v6280
    %6338 = vmatprep.subr.bf16.mxu0 %v6285
    %6339 = vmatpush1.bf16.msra.mxu0 %v6284
    %6340 = vmatprep.subr.bf16.mxu0 %v6289
    %6341 = vmatpush1.bf16.msra.mxu0 %v6288
    %6342 = vmatprep.subr.bf16.mxu0 %v6293
    %6343 = vmatpush1.bf16.msra.mxu0 %v6292
    %6344 = vmatprep.subr.bf16.mxu0 0
    %6345 = vmatpush1.bf16.msra.mxu0 0
    %6346 = vmatprep.subr.bf16.mxu0 0
    %6347 = vmatpush1.bf16.msra.mxu0 0
    %6348 = vmatprep.subr.bf16.mxu0 0
    %6349 = vmatpush1.bf16.msra.mxu0 0
    %6350 = vmatprep.subr.bf16.mxu0 0
    %6351 = vmatpush1.bf16.msra.mxu0 0
    %6352 = vmatprep.subr.bf16.mxu0 0
    %6353 = vmatpush1.bf16.msra.mxu0 0
    %6354 = vmatprep.subr.bf16.mxu0 0
    %6355 = vmatpush1.bf16.msra.mxu0 0
    %6356 = vmatprep.subr.bf16.mxu0 0
    %6357 = vmatpush1.bf16.msra.mxu0 0
    %6358 = vmatprep.subr.bf16.mxu0 0
    %6359 = vmatpush1.bf16.msra.mxu0 0
    %6360 = vmatprep.mubr.bf16.mxu0 0
    %6361 = vmatmul.mubr.bf16.gmra.mrb[0].mxu0 %v6135
    %v6362 = vpop.f32.mrb[0].mxu0
    %v6363 = vadd.f32 0.0, %v6362
    %v6364 = vpop.f32.mrb[0].mxu0
    %v6365 = vadd.f32 0.0, %v6364
    %v6366 = vpop.f32.mrb[0].mxu0
    %v6367 = vpop.f32.mrb[0].mxu0
    %6368 = vdwg.mxu0
    %6369 = vmatprep.subr.bf16.mxu0 %v6267
    %6370 = vmatpush1.bf16.msra.mxu0 %v6266
    %6371 = vmatprep.subr.bf16.mxu0 %v6271
    %6372 = vmatpush1.bf16.msra.mxu0 %v6270
    %6373 = vmatprep.subr.bf16.mxu0 %v6275
    %6374 = vmatpush1.bf16.msra.mxu0 %v6274
    %6375 = vmatprep.subr.bf16.mxu0 %v6279
    %6376 = vmatpush1.bf16.msra.mxu0 %v6278
    %6377 = vmatprep.subr.bf16.mxu0 %v6283
    %6378 = vmatpush1.bf16.msra.mxu0 %v6282
    %6379 = vmatprep.subr.bf16.mxu0 %v6287
    %6380 = vmatpush1.bf16.msra.mxu0 %v6286
    %6381 = vmatprep.subr.bf16.mxu0 %v6291
    %6382 = vmatpush1.bf16.msra.mxu0 %v6290
    %6383 = vmatprep.subr.bf16.mxu0 %v6295
    %6384 = vmatpush1.bf16.msra.mxu0 %v6294
    %6385 = vmatprep.subr.bf16.mxu0 0
    %6386 = vmatpush1.bf16.msra.mxu0 0
    %6387 = vmatprep.subr.bf16.mxu0 0
    %6388 = vmatpush1.bf16.msra.mxu0 0
    %6389 = vmatprep.subr.bf16.mxu0 0
    %6390 = vmatpush1.bf16.msra.mxu0 0
    %6391 = vmatprep.subr.bf16.mxu0 0
    %6392 = vmatpush1.bf16.msra.mxu0 0
    %6393 = vmatprep.subr.bf16.mxu0 0
    %6394 = vmatpush1.bf16.msra.mxu0 0
    %6395 = vmatprep.subr.bf16.mxu0 0
    %6396 = vmatpush1.bf16.msra.mxu0 0
    %6397 = vmatprep.subr.bf16.mxu0 0
    %6398 = vmatpush1.bf16.msra.mxu0 0
    %6399 = vmatprep.subr.bf16.mxu0 0
    %6400 = vmatpush1.bf16.msra.mxu0 0
    %6401 = vmatprep.mubr.bf16.mxu0 0
    %6402 = vmatmul.mubr.bf16.gmra.mrb[0].mxu0 %v6135
    %v6403 = vpop.f32.mrb[0].mxu0
    %v6404 = vadd.f32 0.0, %v6403
    %v6405 = vpop.f32.mrb[0].mxu0
    %v6406 = vadd.f32 0.0, %v6405
    %v6407 = vpop.f32.mrb[0].mxu0
    %v6408 = vpop.f32.mrb[0].mxu0
    %6409 = vdwg.mxu0
    %v6410 = vadd.f32 %v6131, %v6363
    %v6411 = vadd.f32 %v6132, %v6365
    %v6412 = vadd.f32 %v6133, %v6404
    %v6413 = vadd.f32 %v6134, %v6406
    %v6414 = vxor.u32 %v6410, 2147483648
    %v6415 = vxor.u32 %v6411, 2147483648
    %v6416 = vxor.u32 %v6412, 2147483648
    %v6417 = vmul.f32 %v6414, 1.442695
    %v6418 = vpow.pop %v6417
    %v6419 = vmul.f32 %v6415, 1.442695
    %v6420 = vpow.pop %v6419
    %v6421 = vmul.f32 %v6416, 1.442695
    %v6422 = vpow.pop %v6421
    %v6423 = vadd.f32 %v6418, 1.0
    %v6424 = vadd.f32 %v6420, 1.0
    %v6425 = vadd.f32 %v6422, 1.0
    %v6426 = vrcp.pop %v6423
    %v6427 = vmul.f32 1.0, %v6426
    %v6428 = vrcp.pop %v6424
    %v6429 = vmul.f32 1.0, %v6428
    %v6430 = vrcp.pop %v6425
    %v6431 = vmul.f32 1.0, %v6430
    %v6432 = vtanh.pop %v6413
    %v6433 = vmul.f32 %v6429, %v5722
    %v6434 = vmul.f32 %v6427, %v6432
    %v6435 = vadd.f32 %v6433, %v6434
    %v6436 = vtanh.pop %v6435
    %v6437 = vmul.f32 %v6431, %v6436
    %6438 = vst [vmem:[#allocation3] sm:$0xff] %v6437
    %v6439 = vld [vmem:[%s682] sm:$0xff]
    %v6440 = vld [vmem:[%s682 + $0x8] sm:$0xff]
    %v6441 = vld [vmem:[%s682 + $0x10] sm:$0xff]
    %v6442 = vld [vmem:[%s682 + $0x18] sm:$0xff]
    %v6443 = vpack.c.bf16 %v6437, %v6437
    %v6444 = vld [vmem:[#allocation10] sm:$0xff]
    %v6445 = vld [vmem:[#allocation10 + $0x8] sm:$0xff]
    %v6446 = vld [vmem:[#allocation10 + $0x10] sm:$0xff]
    %v6447 = vld [vmem:[#allocation10 + $0x18] sm:$0xff]
    %v6448 = vld [vmem:[#allocation10 + $0x20] sm:$0xff]
    %v6449 = vld [vmem:[#allocation10 + $0x28] sm:$0xff]
    %v6450 = vld [vmem:[#allocation10 + $0x30] sm:$0xff]
    %v6451 = vld [vmem:[#allocation10 + $0x38] sm:$0xff]
    %v6452 = vld [vmem:[#allocation10 + $0x40] sm:$0xff]
    %v6453 = vld [vmem:[#allocation10 + $0x48] sm:$0xff]
    %v6454 = vld [vmem:[#allocation10 + $0x50] sm:$0xff]
    %v6455 = vld [vmem:[#allocation10 + $0x58] sm:$0xff]
    %v6456 = vld [vmem:[#allocation10 + $0x60] sm:$0xff]
    %v6457 = vld [vmem:[#allocation10 + $0x68] sm:$0xff]
    %v6458 = vld [vmem:[#allocation10 + $0x70] sm:$0xff]
    %v6459 = vld [vmem:[#allocation10 + $0x78] sm:$0xff]
    %v6460 = vld [vmem:[#allocation10 + $0x80] sm:$0xff]
    %v6461 = vld [vmem:[#allocation10 + $0x88] sm:$0xff]
    %v6462 = vld [vmem:[#allocation10 + $0x90] sm:$0xff]
    %v6463 = vld [vmem:[#allocation10 + $0x98] sm:$0xff]
    %v6464 = vld [vmem:[#allocation10 + $0xa0] sm:$0xff]
    %v6465 = vld [vmem:[#allocation10 + $0xa8] sm:$0xff]
    %v6466 = vld [vmem:[#allocation10 + $0xb0] sm:$0xff]
    %v6467 = vld [vmem:[#allocation10 + $0xb8] sm:$0xff]
    %v6468 = vld [vmem:[#allocation10 + $0xc0] sm:$0xff]
    %v6469 = vld [vmem:[#allocation10 + $0xc8] sm:$0xff]
    %v6470 = vld [vmem:[#allocation10 + $0xd0] sm:$0xff]
    %v6471 = vld [vmem:[#allocation10 + $0xd8] sm:$0xff]
    %v6472 = vld [vmem:[#allocation10 + $0xe0] sm:$0xff]
    %v6473 = vld [vmem:[#allocation10 + $0xe8] sm:$0xff]
    %v6474 = vld [vmem:[#allocation10 + $0xf0] sm:$0xff]
    %v6475 = vld [vmem:[#allocation10 + $0xf8] sm:$0xff]
    %v6508 = vunpack.c.l.b16 %v6444
    %v6509 = vunpack.c.h.b16 %v6444
    %v6510 = vunpack.c.l.b16 %v6445
    %v6511 = vunpack.c.h.b16 %v6445
    %v6512 = vunpack.c.l.b16 %v6446
    %v6513 = vunpack.c.h.b16 %v6446
    %v6514 = vunpack.c.l.b16 %v6447
    %v6515 = vunpack.c.h.b16 %v6447
    %v6516 = vunpack.c.l.b16 %v6448
    %v6517 = vunpack.c.h.b16 %v6448
    %v6518 = vunpack.c.l.b16 %v6449
    %v6519 = vunpack.c.h.b16 %v6449
    %v6520 = vunpack.c.l.b16 %v6450
    %v6521 = vunpack.c.h.b16 %v6450
    %v6522 = vunpack.c.l.b16 %v6451
    %v6523 = vunpack.c.h.b16 %v6451
    %v6524 = vunpack.c.l.b16 %v6452
    %v6525 = vunpack.c.h.b16 %v6452
    %v6526 = vunpack.c.l.b16 %v6453
    %v6527 = vunpack.c.h.b16 %v6453
    %v6528 = vunpack.c.l.b16 %v6454
    %v6529 = vunpack.c.h.b16 %v6454
    %v6530 = vunpack.c.l.b16 %v6455
    %v6531 = vunpack.c.h.b16 %v6455
    %v6532 = vunpack.c.l.b16 %v6456
    %v6533 = vunpack.c.h.b16 %v6456
    %v6534 = vunpack.c.l.b16 %v6457
    %v6535 = vunpack.c.h.b16 %v6457
    %v6536 = vunpack.c.l.b16 %v6458
    %v6537 = vunpack.c.h.b16 %v6458
    %v6538 = vunpack.c.l.b16 %v6459
    %v6539 = vunpack.c.h.b16 %v6459
    %v6540 = vunpack.c.l.b16 %v6460
    %v6541 = vunpack.c.h.b16 %v6460
    %v6542 = vunpack.c.l.b16 %v6461
    %v6543 = vunpack.c.h.b16 %v6461
    %v6544 = vunpack.c.l.b16 %v6462
    %v6545 = vunpack.c.h.b16 %v6462
    %v6546 = vunpack.c.l.b16 %v6463
    %v6547 = vunpack.c.h.b16 %v6463
    %v6548 = vunpack.c.l.b16 %v6464
    %v6549 = vunpack.c.h.b16 %v6464
    %v6550 = vunpack.c.l.b16 %v6465
    %v6551 = vunpack.c.h.b16 %v6465
    %v6552 = vunpack.c.l.b16 %v6466
    %v6553 = vunpack.c.h.b16 %v6466
    %v6554 = vunpack.c.l.b16 %v6467
    %v6555 = vunpack.c.h.b16 %v6467
    %v6556 = vunpack.c.l.b16 %v6468
    %v6557 = vunpack.c.h.b16 %v6468
    %v6558 = vunpack.c.l.b16 %v6469
    %v6559 = vunpack.c.h.b16 %v6469
    %v6560 = vunpack.c.l.b16 %v6470
    %v6561 = vunpack.c.h.b16 %v6470
    %v6562 = vunpack.c.l.b16 %v6471
    %v6563 = vunpack.c.h.b16 %v6471
    %v6564 = vunpack.c.l.b16 %v6472
    %v6565 = vunpack.c.h.b16 %v6472
    %v6566 = vunpack.c.l.b16 %v6473
    %v6567 = vunpack.c.h.b16 %v6473
    %v6568 = vunpack.c.l.b16 %v6474
    %v6569 = vunpack.c.h.b16 %v6474
    %v6570 = vunpack.c.l.b16 %v6475
    %v6571 = vunpack.c.h.b16 %v6475
    %v6572 = vpack.c.b16 %v6512, %v6508
    %v6573 = vpack.c.b16 %v6513, %v6509
    %v6574 = vpack.c.b16 %v6514, %v6510
    %v6575 = vpack.c.b16 %v6515, %v6511
    %v6576 = vpack.c.b16 %v6520, %v6516
    %v6577 = vpack.c.b16 %v6521, %v6517
    %v6578 = vpack.c.b16 %v6522, %v6518
    %v6579 = vpack.c.b16 %v6523, %v6519
    %v6580 = vpack.c.b16 %v6528, %v6524
    %v6581 = vpack.c.b16 %v6529, %v6525
    %v6582 = vpack.c.b16 %v6530, %v6526
    %v6583 = vpack.c.b16 %v6531, %v6527
    %v6584 = vpack.c.b16 %v6536, %v6532
    %v6585 = vpack.c.b16 %v6537, %v6533
    %v6586 = vpack.c.b16 %v6538, %v6534
    %v6587 = vpack.c.b16 %v6539, %v6535
    %v6588 = vpack.c.b16 %v6544, %v6540
    %v6589 = vpack.c.b16 %v6545, %v6541
    %v6590 = vpack.c.b16 %v6546, %v6542
    %v6591 = vpack.c.b16 %v6547, %v6543
    %v6592 = vpack.c.b16 %v6552, %v6548
    %v6593 = vpack.c.b16 %v6553, %v6549
    %v6594 = vpack.c.b16 %v6554, %v6550
    %v6595 = vpack.c.b16 %v6555, %v6551
    %v6596 = vpack.c.b16 %v6560, %v6556
    %v6597 = vpack.c.b16 %v6561, %v6557
    %v6598 = vpack.c.b16 %v6562, %v6558
    %v6599 = vpack.c.b16 %v6563, %v6559
    %v6600 = vpack.c.b16 %v6568, %v6564
    %v6601 = vpack.c.b16 %v6569, %v6565
    %v6602 = vpack.c.b16 %v6570, %v6566
    %v6603 = vpack.c.b16 %v6571, %v6567
    %6636 = vmatprep.subr.bf16.mxu0 %v6573
    %6637 = vmatpush1.bf16.msra.mxu0 %v6572
    %6638 = vmatprep.subr.bf16.mxu0 %v6577
    %6639 = vmatpush1.bf16.msra.mxu0 %v6576
    %6640 = vmatprep.subr.bf16.mxu0 %v6581
    %6641 = vmatpush1.bf16.msra.mxu0 %v6580
    %6642 = vmatprep.subr.bf16.mxu0 %v6585
    %6643 = vmatpush1.bf16.msra.mxu0 %v6584
    %6644 = vmatprep.subr.bf16.mxu0 %v6589
    %6645 = vmatpush1.bf16.msra.mxu0 %v6588
    %6646 = vmatprep.subr.bf16.mxu0 %v6593
    %6647 = vmatpush1.bf16.msra.mxu0 %v6592
    %6648 = vmatprep.subr.bf16.mxu0 %v6597
    %6649 = vmatpush1.bf16.msra.mxu0 %v6596
    %6650 = vmatprep.subr.bf16.mxu0 %v6601
    %6651 = vmatpush1.bf16.msra.mxu0 %v6600
    %6652 = vmatprep.subr.bf16.mxu0 0
    %6653 = vmatpush1.bf16.msra.mxu0 0
    %6654 = vmatprep.subr.bf16.mxu0 0
    %6655 = vmatpush1.bf16.msra.mxu0 0
    %6656 = vmatprep.subr.bf16.mxu0 0
    %6657 = vmatpush1.bf16.msra.mxu0 0
    %6658 = vmatprep.subr.bf16.mxu0 0
    %6659 = vmatpush1.bf16.msra.mxu0 0
    %6660 = vmatprep.subr.bf16.mxu0 0
    %6661 = vmatpush1.bf16.msra.mxu0 0
    %6662 = vmatprep.subr.bf16.mxu0 0
    %6663 = vmatpush1.bf16.msra.mxu0 0
    %6664 = vmatprep.subr.bf16.mxu0 0
    %6665 = vmatpush1.bf16.msra.mxu0 0
    %6666 = vmatprep.subr.bf16.mxu0 0
    %6667 = vmatpush1.bf16.msra.mxu0 0
    %6668 = vmatprep.mubr.bf16.mxu0 0
    %6669 = vmatmul.mubr.bf16.gmra.mrb[0].mxu0 %v6443
    %v6670 = vpop.f32.mrb[0].mxu0
    %v6671 = vadd.f32 0.0, %v6670
    %v6672 = vpop.f32.mrb[0].mxu0
    %v6673 = vadd.f32 0.0, %v6672
    %v6674 = vpop.f32.mrb[0].mxu0
    %v6675 = vpop.f32.mrb[0].mxu0
    %6676 = vdwg.mxu0
    %6677 = vmatprep.subr.bf16.mxu0 %v6575
    %6678 = vmatpush1.bf16.msra.mxu0 %v6574
    %6679 = vmatprep.subr.bf16.mxu0 %v6579
    %6680 = vmatpush1.bf16.msra.mxu0 %v6578
    %6681 = vmatprep.subr.bf16.mxu0 %v6583
    %6682 = vmatpush1.bf16.msra.mxu0 %v6582
    %6683 = vmatprep.subr.bf16.mxu0 %v6587
    %6684 = vmatpush1.bf16.msra.mxu0 %v6586
    %6685 = vmatprep.subr.bf16.mxu0 %v6591
    %6686 = vmatpush1.bf16.msra.mxu0 %v6590
    %6687 = vmatprep.subr.bf16.mxu0 %v6595
    %6688 = vmatpush1.bf16.msra.mxu0 %v6594
    %6689 = vmatprep.subr.bf16.mxu0 %v6599
    %6690 = vmatpush1.bf16.msra.mxu0 %v6598
    %6691 = vmatprep.subr.bf16.mxu0 %v6603
    %6692 = vmatpush1.bf16.msra.mxu0 %v6602
    %6693 = vmatprep.subr.bf16.mxu0 0
    %6694 = vmatpush1.bf16.msra.mxu0 0
    %6695 = vmatprep.subr.bf16.mxu0 0
    %6696 = vmatpush1.bf16.msra.mxu0 0
    %6697 = vmatprep.subr.bf16.mxu0 0
    %6698 = vmatpush1.bf16.msra.mxu0 0
    %6699 = vmatprep.subr.bf16.mxu0 0
    %6700 = vmatpush1.bf16.msra.mxu0 0
    %6701 = vmatprep.subr.bf16.mxu0 0
    %6702 = vmatpush1.bf16.msra.mxu0 0
    %6703 = vmatprep.subr.bf16.mxu0 0
    %6704 = vmatpush1.bf16.msra.mxu0 0
    %6705 = vmatprep.subr.bf16.mxu0 0
    %6706 = vmatpush1.bf16.msra.mxu0 0
    %6707 = vmatprep.subr.bf16.mxu0 0
    %6708 = vmatpush1.bf16.msra.mxu0 0
    %6709 = vmatprep.mubr.bf16.mxu0 0
    %6710 = vmatmul.mubr.bf16.gmra.mrb[0].mxu0 %v6443
    %v6711 = vpop.f32.mrb[0].mxu0
    %v6712 = vadd.f32 0.0, %v6711
    %v6713 = vpop.f32.mrb[0].mxu0
    %v6714 = vadd.f32 0.0, %v6713
    %v6715 = vpop.f32.mrb[0].mxu0
    %v6716 = vpop.f32.mrb[0].mxu0
    %6717 = vdwg.mxu0
    %v6718 = vadd.f32 %v6439, %v6671
    %v6719 = vadd.f32 %v6440, %v6673
    %v6720 = vadd.f32 %v6441, %v6712
    %v6721 = vadd.f32 %v6442, %v6714
    %v6722 = vxor.u32 %v6718, 2147483648
    %v6723 = vxor.u32 %v6719, 2147483648
    %v6724 = vxor.u32 %v6720, 2147483648
    %v6725 = vmul.f32 %v6722, 1.442695
    %v6726 = vpow.pop %v6725
    %v6727 = vmul.f32 %v6723, 1.442695
    %v6728 = vpow.pop %v6727
    %v6729 = vmul.f32 %v6724, 1.442695
    %v6730 = vpow.pop %v6729
    %v6731 = vadd.f32 %v6726, 1.0
    %v6732 = vadd.f32 %v6728, 1.0
    %v6733 = vadd.f32 %v6730, 1.0
    %v6734 = vrcp.pop %v6731
    %v6735 = vmul.f32 1.0, %v6734
    %v6736 = vrcp.pop %v6732
    %v6737 = vmul.f32 1.0, %v6736
    %v6738 = vrcp.pop %v6733
    %v6739 = vmul.f32 1.0, %v6738
    %v6740 = vtanh.pop %v6721
    %v6741 = vmul.f32 %v6737, %v6435
    %v6742 = vmul.f32 %v6735, %v6740
    %v6743 = vadd.f32 %v6741, %v6742
    %v6744 = vtanh.pop %v6743
    %v6745 = vmul.f32 %v6739, %v6744
    %6746 = vst [vmem:[%s990] sm:$0xff] %v6745
    %v6747 = vld [vmem:[%s992] sm:$0xff]
    %v6748 = vld [vmem:[%s992 + $0x8] sm:$0xff]
    %v6749 = vld [vmem:[%s992 + $0x10] sm:$0xff]
    %v6750 = vld [vmem:[%s992 + $0x18] sm:$0xff]
    %v6751 = vpack.c.bf16 %v6745, %v6745
    %v6752 = vld [vmem:[#allocation10] sm:$0xff]
    %v6753 = vld [vmem:[#allocation10 + $0x8] sm:$0xff]
    %v6754 = vld [vmem:[#allocation10 + $0x10] sm:$0xff]
    %v6755 = vld [vmem:[#allocation10 + $0x18] sm:$0xff]
    %v6756 = vld [vmem:[#allocation10 + $0x20] sm:$0xff]
    %v6757 = vld [vmem:[#allocation10 + $0x28] sm:$0xff]
    %v6758 = vld [vmem:[#allocation10 + $0x30] sm:$0xff]
    %v6759 = vld [vmem:[#allocation10 + $0x38] sm:$0xff]
    %v6760 = vld [vmem:[#allocation10 + $0x40] sm:$0xff]
    %v6761 = vld [vmem:[#allocation10 + $0x48] sm:$0xff]
    %v6762 = vld [vmem:[#allocation10 + $0x50] sm:$0xff]
    %v6763 = vld [vmem:[#allocation10 + $0x58] sm:$0xff]
    %v6764 = vld [vmem:[#allocation10 + $0x60] sm:$0xff]
    %v6765 = vld [vmem:[#allocation10 + $0x68] sm:$0xff]
    %v6766 = vld [vmem:[#allocation10 + $0x70] sm:$0xff]
    %v6767 = vld [vmem:[#allocation10 + $0x78] sm:$0xff]
    %v6768 = vld [vmem:[#allocation10 + $0x80] sm:$0xff]
    %v6769 = vld [vmem:[#allocation10 + $0x88] sm:$0xff]
    %v6770 = vld [vmem:[#allocation10 + $0x90] sm:$0xff]
    %v6771 = vld [vmem:[#allocation10 + $0x98] sm:$0xff]
    %v6772 = vld [vmem:[#allocation10 + $0xa0] sm:$0xff]
    %v6773 = vld [vmem:[#allocation10 + $0xa8] sm:$0xff]
    %v6774 = vld [vmem:[#allocation10 + $0xb0] sm:$0xff]
    %v6775 = vld [vmem:[#allocation10 + $0xb8] sm:$0xff]
    %v6776 = vld [vmem:[#allocation10 + $0xc0] sm:$0xff]
    %v6777 = vld [vmem:[#allocation10 + $0xc8] sm:$0xff]
    %v6778 = vld [vmem:[#allocation10 + $0xd0] sm:$0xff]
    %v6779 = vld [vmem:[#allocation10 + $0xd8] sm:$0xff]
    %v6780 = vld [vmem:[#allocation10 + $0xe0] sm:$0xff]
    %v6781 = vld [vmem:[#allocation10 + $0xe8] sm:$0xff]
    %v6782 = vld [vmem:[#allocation10 + $0xf0] sm:$0xff]
    %v6783 = vld [vmem:[#allocation10 + $0xf8] sm:$0xff]
    %v6816 = vunpack.c.l.b16 %v6752
    %v6817 = vunpack.c.h.b16 %v6752
    %v6818 = vunpack.c.l.b16 %v6753
    %v6819 = vunpack.c.h.b16 %v6753
    %v6820 = vunpack.c.l.b16 %v6754
    %v6821 = vunpack.c.h.b16 %v6754
    %v6822 = vunpack.c.l.b16 %v6755
    %v6823 = vunpack.c.h.b16 %v6755
    %v6824 = vunpack.c.l.b16 %v6756
    %v6825 = vunpack.c.h.b16 %v6756
    %v6826 = vunpack.c.l.b16 %v6757
    %v6827 = vunpack.c.h.b16 %v6757
    %v6828 = vunpack.c.l.b16 %v6758
    %v6829 = vunpack.c.h.b16 %v6758
    %v6830 = vunpack.c.l.b16 %v6759
    %v6831 = vunpack.c.h.b16 %v6759
    %v6832 = vunpack.c.l.b16 %v6760
    %v6833 = vunpack.c.h.b16 %v6760
    %v6834 = vunpack.c.l.b16 %v6761
    %v6835 = vunpack.c.h.b16 %v6761
    %v6836 = vunpack.c.l.b16 %v6762
    %v6837 = vunpack.c.h.b16 %v6762
    %v6838 = vunpack.c.l.b16 %v6763
    %v6839 = vunpack.c.h.b16 %v6763
    %v6840 = vunpack.c.l.b16 %v6764
    %v6841 = vunpack.c.h.b16 %v6764
    %v6842 = vunpack.c.l.b16 %v6765
    %v6843 = vunpack.c.h.b16 %v6765
    %v6844 = vunpack.c.l.b16 %v6766
    %v6845 = vunpack.c.h.b16 %v6766
    %v6846 = vunpack.c.l.b16 %v6767
    %v6847 = vunpack.c.h.b16 %v6767
    %v6848 = vunpack.c.l.b16 %v6768
    %v6849 = vunpack.c.h.b16 %v6768
    %v6850 = vunpack.c.l.b16 %v6769
    %v6851 = vunpack.c.h.b16 %v6769
    %v6852 = vunpack.c.l.b16 %v6770
    %v6853 = vunpack.c.h.b16 %v6770
    %v6854 = vunpack.c.l.b16 %v6771
    %v6855 = vunpack.c.h.b16 %v6771
    %v6856 = vunpack.c.l.b16 %v6772
    %v6857 = vunpack.c.h.b16 %v6772
    %v6858 = vunpack.c.l.b16 %v6773
    %v6859 = vunpack.c.h.b16 %v6773
    %v6860 = vunpack.c.l.b16 %v6774
    %v6861 = vunpack.c.h.b16 %v6774
    %v6862 = vunpack.c.l.b16 %v6775
    %v6863 = vunpack.c.h.b16 %v6775
    %v6864 = vunpack.c.l.b16 %v6776
    %v6865 = vunpack.c.h.b16 %v6776
    %v6866 = vunpack.c.l.b16 %v6777
    %v6867 = vunpack.c.h.b16 %v6777
    %v6868 = vunpack.c.l.b16 %v6778
    %v6869 = vunpack.c.h.b16 %v6778
    %v6870 = vunpack.c.l.b16 %v6779
    %v6871 = vunpack.c.h.b16 %v6779
    %v6872 = vunpack.c.l.b16 %v6780
    %v6873 = vunpack.c.h.b16 %v6780
    %v6874 = vunpack.c.l.b16 %v6781
    %v6875 = vunpack.c.h.b16 %v6781
    %v6876 = vunpack.c.l.b16 %v6782
    %v6877 = vunpack.c.h.b16 %v6782
    %v6878 = vunpack.c.l.b16 %v6783
    %v6879 = vunpack.c.h.b16 %v6783
    %v6880 = vpack.c.b16 %v6820, %v6816
    %v6881 = vpack.c.b16 %v6821, %v6817
    %v6882 = vpack.c.b16 %v6822, %v6818
    %v6883 = vpack.c.b16 %v6823, %v6819
    %v6884 = vpack.c.b16 %v6828, %v6824
    %v6885 = vpack.c.b16 %v6829, %v6825
    %v6886 = vpack.c.b16 %v6830, %v6826
    %v6887 = vpack.c.b16 %v6831, %v6827
    %v6888 = vpack.c.b16 %v6836, %v6832
    %v6889 = vpack.c.b16 %v6837, %v6833
    %v6890 = vpack.c.b16 %v6838, %v6834
    %v6891 = vpack.c.b16 %v6839, %v6835
    %v6892 = vpack.c.b16 %v6844, %v6840
    %v6893 = vpack.c.b16 %v6845, %v6841
    %v6894 = vpack.c.b16 %v6846, %v6842
    %v6895 = vpack.c.b16 %v6847, %v6843
    %v6896 = vpack.c.b16 %v6852, %v6848
    %v6897 = vpack.c.b16 %v6853, %v6849
    %v6898 = vpack.c.b16 %v6854, %v6850
    %v6899 = vpack.c.b16 %v6855, %v6851
    %v6900 = vpack.c.b16 %v6860, %v6856
    %v6901 = vpack.c.b16 %v6861, %v6857
    %v6902 = vpack.c.b16 %v6862, %v6858
    %v6903 = vpack.c.b16 %v6863, %v6859
    %v6904 = vpack.c.b16 %v6868, %v6864
    %v6905 = vpack.c.b16 %v6869, %v6865
    %v6906 = vpack.c.b16 %v6870, %v6866
    %v6907 = vpack.c.b16 %v6871, %v6867
    %v6908 = vpack.c.b16 %v6876, %v6872
    %v6909 = vpack.c.b16 %v6877, %v6873
    %v6910 = vpack.c.b16 %v6878, %v6874
    %v6911 = vpack.c.b16 %v6879, %v6875
    %6944 = vmatprep.subr.bf16.mxu0 %v6881
    %6945 = vmatpush1.bf16.msra.mxu0 %v6880
    %6946 = vmatprep.subr.bf16.mxu0 %v6885
    %6947 = vmatpush1.bf16.msra.mxu0 %v6884
    %6948 = vmatprep.subr.bf16.mxu0 %v6889
    %6949 = vmatpush1.bf16.msra.mxu0 %v6888
    %6950 = vmatprep.subr.bf16.mxu0 %v6893
    %6951 = vmatpush1.bf16.msra.mxu0 %v6892
    %6952 = vmatprep.subr.bf16.mxu0 %v6897
    %6953 = vmatpush1.bf16.msra.mxu0 %v6896
    %6954 = vmatprep.subr.bf16.mxu0 %v6901
    %6955 = vmatpush1.bf16.msra.mxu0 %v6900
    %6956 = vmatprep.subr.bf16.mxu0 %v6905
    %6957 = vmatpush1.bf16.msra.mxu0 %v6904
    %6958 = vmatprep.subr.bf16.mxu0 %v6909
    %6959 = vmatpush1.bf16.msra.mxu0 %v6908
    %6960 = vmatprep.subr.bf16.mxu0 0
    %6961 = vmatpush1.bf16.msra.mxu0 0
    %6962 = vmatprep.subr.bf16.mxu0 0
    %6963 = vmatpush1.bf16.msra.mxu0 0
    %6964 = vmatprep.subr.bf16.mxu0 0
    %6965 = vmatpush1.bf16.msra.mxu0 0
    %6966 = vmatprep.subr.bf16.mxu0 0
    %6967 = vmatpush1.bf16.msra.mxu0 0
    %6968 = vmatprep.subr.bf16.mxu0 0
    %6969 = vmatpush1.bf16.msra.mxu0 0
    %6970 = vmatprep.subr.bf16.mxu0 0
    %6971 = vmatpush1.bf16.msra.mxu0 0
    %6972 = vmatprep.subr.bf16.mxu0 0
    %6973 = vmatpush1.bf16.msra.mxu0 0
    %6974 = vmatprep.subr.bf16.mxu0 0
    %6975 = vmatpush1.bf16.msra.mxu0 0
    %6976 = vmatprep.mubr.bf16.mxu0 0
    %6977 = vmatmul.mubr.bf16.gmra.mrb[0].mxu0 %v6751
    %v6978 = vpop.f32.mrb[0].mxu0
    %v6979 = vadd.f32 0.0, %v6978
    %v6980 = vpop.f32.mrb[0].mxu0
    %v6981 = vadd.f32 0.0, %v6980
    %v6982 = vpop.f32.mrb[0].mxu0
    %v6983 = vpop.f32.mrb[0].mxu0
    %6984 = vdwg.mxu0
    %6985 = vmatprep.subr.bf16.mxu0 %v6883
    %6986 = vmatpush1.bf16.msra.mxu0 %v6882
    %6987 = vmatprep.subr.bf16.mxu0 %v6887
    %6988 = vmatpush1.bf16.msra.mxu0 %v6886
    %6989 = vmatprep.subr.bf16.mxu0 %v6891
    %6990 = vmatpush1.bf16.msra.mxu0 %v6890
    %6991 = vmatprep.subr.bf16.mxu0 %v6895
    %6992 = vmatpush1.bf16.msra.mxu0 %v6894
    %6993 = vmatprep.subr.bf16.mxu0 %v6899
    %6994 = vmatpush1.bf16.msra.mxu0 %v6898
    %6995 = vmatprep.subr.bf16.mxu0 %v6903
    %6996 = vmatpush1.bf16.msra.mxu0 %v6902
    %6997 = vmatprep.subr.bf16.mxu0 %v6907
    %6998 = vmatpush1.bf16.msra.mxu0 %v6906
    %6999 = vmatprep.subr.bf16.mxu0 %v6911
    %7000 = vmatpush1.bf16.msra.mxu0 %v6910
    %7001 = vmatprep.subr.bf16.mxu0 0
    %7002 = vmatpush1.bf16.msra.mxu0 0
    %7003 = vmatprep.subr.bf16.mxu0 0
    %7004 = vmatpush1.bf16.msra.mxu0 0
    %7005 = vmatprep.subr.bf16.mxu0 0
    %7006 = vmatpush1.bf16.msra.mxu0 0
    %7007 = vmatprep.subr.bf16.mxu0 0
    %7008 = vmatpush1.bf16.msra.mxu0 0
    %7009 = vmatprep.subr.bf16.mxu0 0
    %7010 = vmatpush1.bf16.msra.mxu0 0
    %7011 = vmatprep.subr.bf16.mxu0 0
    %7012 = vmatpush1.bf16.msra.mxu0 0
    %7013 = vmatprep.subr.bf16.mxu0 0
    %7014 = vmatpush1.bf16.msra.mxu0 0
    %7015 = vmatprep.subr.bf16.mxu0 0
    %7016 = vmatpush1.bf16.msra.mxu0 0
    %7017 = vmatprep.mubr.bf16.mxu0 0
    %7018 = vmatmul.mubr.bf16.gmra.mrb[0].mxu0 %v6751
    %v7019 = vpop.f32.mrb[0].mxu0
    %v7020 = vadd.f32 0.0, %v7019
    %v7021 = vpop.f32.mrb[0].mxu0
    %v7022 = vadd.f32 0.0, %v7021
    %v7023 = vpop.f32.mrb[0].mxu0
    %v7024 = vpop.f32.mrb[0].mxu0
    %7025 = vdwg.mxu0
    %v7026 = vadd.f32 %v6747, %v6979
    %v7027 = vadd.f32 %v6748, %v6981
    %v7028 = vadd.f32 %v6749, %v7020
    %v7029 = vadd.f32 %v6750, %v7022
    %v7030 = vxor.u32 %v7026, 2147483648
    %v7031 = vxor.u32 %v7027, 2147483648
    %v7032 = vxor.u32 %v7028, 2147483648
    %v7033 = vmul.f32 %v7030, 1.442695
    %v7034 = vpow.pop %v7033
    %v7035 = vmul.f32 %v7031, 1.442695
    %v7036 = vpow.pop %v7035
    %v7037 = vmul.f32 %v7032, 1.442695
    %v7038 = vpow.pop %v7037
    %v7039 = vadd.f32 %v7034, 1.0
    %v7040 = vadd.f32 %v7036, 1.0
    %v7041 = vadd.f32 %v7038, 1.0
    %v7042 = vrcp.pop %v7039
    %v7043 = vmul.f32 1.0, %v7042
    %v7044 = vrcp.pop %v7040
    %v7045 = vmul.f32 1.0, %v7044
    %v7046 = vrcp.pop %v7041
    %v7047 = vmul.f32 1.0, %v7046
    %v7048 = vtanh.pop %v7029
    %v7049 = vmul.f32 %v7045, %v6743
    %v7050 = vmul.f32 %v7043, %v7048
    %v7051 = vadd.f32 %v7049, %v7050
    %v7052 = vtanh.pop %v7051
    %v7053 = vmul.f32 %v7047, %v7052
    %7054 = vst [vmem:[%s1300] sm:$0xff] %v7053
    %v7055 = vld [vmem:[%s1302] sm:$0xff]
    %v7056 = vld [vmem:[%s1302 + $0x8] sm:$0xff]
    %v7057 = vld [vmem:[%s1302 + $0x10] sm:$0xff]
    %v7058 = vld [vmem:[%s1302 + $0x18] sm:$0xff]
    %v7059 = vpack.c.bf16 %v7053, %v7053
    %v7060 = vld [vmem:[#allocation10] sm:$0xff]
    %v7061 = vld [vmem:[#allocation10 + $0x8] sm:$0xff]
    %v7062 = vld [vmem:[#allocation10 + $0x10] sm:$0xff]
    %v7063 = vld [vmem:[#allocation10 + $0x18] sm:$0xff]
    %v7064 = vld [vmem:[#allocation10 + $0x20] sm:$0xff]
    %v7065 = vld [vmem:[#allocation10 + $0x28] sm:$0xff]
    %v7066 = vld [vmem:[#allocation10 + $0x30] sm:$0xff]
    %v7067 = vld [vmem:[#allocation10 + $0x38] sm:$0xff]
    %v7068 = vld [vmem:[#allocation10 + $0x40] sm:$0xff]
    %v7069 = vld [vmem:[#allocation10 + $0x48] sm:$0xff]
    %v7070 = vld [vmem:[#allocation10 + $0x50] sm:$0xff]
    %v7071 = vld [vmem:[#allocation10 + $0x58] sm:$0xff]
    %v7072 = vld [vmem:[#allocation10 + $0x60] sm:$0xff]
    %v7073 = vld [vmem:[#allocation10 + $0x68] sm:$0xff]
    %v7074 = vld [vmem:[#allocation10 + $0x70] sm:$0xff]
    %v7075 = vld [vmem:[#allocation10 + $0x78] sm:$0xff]
    %v7076 = vld [vmem:[#allocation10 + $0x80] sm:$0xff]
    %v7077 = vld [vmem:[#allocation10 + $0x88] sm:$0xff]
    %v7078 = vld [vmem:[#allocation10 + $0x90] sm:$0xff]
    %v7079 = vld [vmem:[#allocation10 + $0x98] sm:$0xff]
    %v7080 = vld [vmem:[#allocation10 + $0xa0] sm:$0xff]
    %v7081 = vld [vmem:[#allocation10 + $0xa8] sm:$0xff]
    %v7082 = vld [vmem:[#allocation10 + $0xb0] sm:$0xff]
    %v7083 = vld [vmem:[#allocation10 + $0xb8] sm:$0xff]
    %v7084 = vld [vmem:[#allocation10 + $0xc0] sm:$0xff]
    %v7085 = vld [vmem:[#allocation10 + $0xc8] sm:$0xff]
    %v7086 = vld [vmem:[#allocation10 + $0xd0] sm:$0xff]
    %v7087 = vld [vmem:[#allocation10 + $0xd8] sm:$0xff]
    %v7088 = vld [vmem:[#allocation10 + $0xe0] sm:$0xff]
    %v7089 = vld [vmem:[#allocation10 + $0xe8] sm:$0xff]
    %v7090 = vld [vmem:[#allocation10 + $0xf0] sm:$0xff]
    %v7091 = vld [vmem:[#allocation10 + $0xf8] sm:$0xff]
    %v7124 = vunpack.c.l.b16 %v7060
    %v7125 = vunpack.c.h.b16 %v7060
    %v7126 = vunpack.c.l.b16 %v7061
    %v7127 = vunpack.c.h.b16 %v7061
    %v7128 = vunpack.c.l.b16 %v7062
    %v7129 = vunpack.c.h.b16 %v7062
    %v7130 = vunpack.c.l.b16 %v7063
    %v7131 = vunpack.c.h.b16 %v7063
    %v7132 = vunpack.c.l.b16 %v7064
    %v7133 = vunpack.c.h.b16 %v7064
    %v7134 = vunpack.c.l.b16 %v7065
    %v7135 = vunpack.c.h.b16 %v7065
    %v7136 = vunpack.c.l.b16 %v7066
    %v7137 = vunpack.c.h.b16 %v7066
    %v7138 = vunpack.c.l.b16 %v7067
    %v7139 = vunpack.c.h.b16 %v7067
    %v7140 = vunpack.c.l.b16 %v7068
    %v7141 = vunpack.c.h.b16 %v7068
    %v7142 = vunpack.c.l.b16 %v7069
    %v7143 = vunpack.c.h.b16 %v7069
    %v7144 = vunpack.c.l.b16 %v7070
    %v7145 = vunpack.c.h.b16 %v7070
    %v7146 = vunpack.c.l.b16 %v7071
    %v7147 = vunpack.c.h.b16 %v7071
    %v7148 = vunpack.c.l.b16 %v7072
    %v7149 = vunpack.c.h.b16 %v7072
    %v7150 = vunpack.c.l.b16 %v7073
    %v7151 = vunpack.c.h.b16 %v7073
    %v7152 = vunpack.c.l.b16 %v7074
    %v7153 = vunpack.c.h.b16 %v7074
    %v7154 = vunpack.c.l.b16 %v7075
    %v7155 = vunpack.c.h.b16 %v7075
    %v7156 = vunpack.c.l.b16 %v7076
    %v7157 = vunpack.c.h.b16 %v7076
    %v7158 = vunpack.c.l.b16 %v7077
    %v7159 = vunpack.c.h.b16 %v7077
    %v7160 = vunpack.c.l.b16 %v7078
    %v7161 = vunpack.c.h.b16 %v7078
    %v7162 = vunpack.c.l.b16 %v7079
    %v7163 = vunpack.c.h.b16 %v7079
    %v7164 = vunpack.c.l.b16 %v7080
    %v7165 = vunpack.c.h.b16 %v7080
    %v7166 = vunpack.c.l.b16 %v7081
    %v7167 = vunpack.c.h.b16 %v7081
    %v7168 = vunpack.c.l.b16 %v7082
    %v7169 = vunpack.c.h.b16 %v7082
    %v7170 = vunpack.c.l.b16 %v7083
    %v7171 = vunpack.c.h.b16 %v7083
    %v7172 = vunpack.c.l.b16 %v7084
    %v7173 = vunpack.c.h.b16 %v7084
    %v7174 = vunpack.c.l.b16 %v7085
    %v7175 = vunpack.c.h.b16 %v7085
    %v7176 = vunpack.c.l.b16 %v7086
    %v7177 = vunpack.c.h.b16 %v7086
    %v7178 = vunpack.c.l.b16 %v7087
    %v7179 = vunpack.c.h.b16 %v7087
    %v7180 = vunpack.c.l.b16 %v7088
    %v7181 = vunpack.c.h.b16 %v7088
    %v7182 = vunpack.c.l.b16 %v7089
    %v7183 = vunpack.c.h.b16 %v7089
    %v7184 = vunpack.c.l.b16 %v7090
    %v7185 = vunpack.c.h.b16 %v7090
    %v7186 = vunpack.c.l.b16 %v7091
    %v7187 = vunpack.c.h.b16 %v7091
    %v7188 = vpack.c.b16 %v7128, %v7124
    %v7189 = vpack.c.b16 %v7129, %v7125
    %v7190 = vpack.c.b16 %v7130, %v7126
    %v7191 = vpack.c.b16 %v7131, %v7127
    %v7192 = vpack.c.b16 %v7136, %v7132
    %v7193 = vpack.c.b16 %v7137, %v7133
    %v7194 = vpack.c.b16 %v7138, %v7134
    %v7195 = vpack.c.b16 %v7139, %v7135
    %v7196 = vpack.c.b16 %v7144, %v7140
    %v7197 = vpack.c.b16 %v7145, %v7141
    %v7198 = vpack.c.b16 %v7146, %v7142
    %v7199 = vpack.c.b16 %v7147, %v7143
    %v7200 = vpack.c.b16 %v7152, %v7148
    %v7201 = vpack.c.b16 %v7153, %v7149
    %v7202 = vpack.c.b16 %v7154, %v7150
    %v7203 = vpack.c.b16 %v7155, %v7151
    %v7204 = vpack.c.b16 %v7160, %v7156
    %v7205 = vpack.c.b16 %v7161, %v7157
    %v7206 = vpack.c.b16 %v7162, %v7158
    %v7207 = vpack.c.b16 %v7163, %v7159
    %v7208 = vpack.c.b16 %v7168, %v7164
    %v7209 = vpack.c.b16 %v7169, %v7165
    %v7210 = vpack.c.b16 %v7170, %v7166
    %v7211 = vpack.c.b16 %v7171, %v7167
    %v7212 = vpack.c.b16 %v7176, %v7172
    %v7213 = vpack.c.b16 %v7177, %v7173
    %v7214 = vpack.c.b16 %v7178, %v7174
    %v7215 = vpack.c.b16 %v7179, %v7175
    %v7216 = vpack.c.b16 %v7184, %v7180
    %v7217 = vpack.c.b16 %v7185, %v7181
    %v7218 = vpack.c.b16 %v7186, %v7182
    %v7219 = vpack.c.b16 %v7187, %v7183
    %7252 = vmatprep.subr.bf16.mxu0 %v7189
    %7253 = vmatpush1.bf16.msra.mxu0 %v7188
    %7254 = vmatprep.subr.bf16.mxu0 %v7193
    %7255 = vmatpush1.bf16.msra.mxu0 %v7192
    %7256 = vmatprep.subr.bf16.mxu0 %v7197
    %7257 = vmatpush1.bf16.msra.mxu0 %v7196
    %7258 = vmatprep.subr.bf16.mxu0 %v7201
    %7259 = vmatpush1.bf16.msra.mxu0 %v7200
    %7260 = vmatprep.subr.bf16.mxu0 %v7205
    %7261 = vmatpush1.bf16.msra.mxu0 %v7204
    %7262 = vmatprep.subr.bf16.mxu0 %v7209
    %7263 = vmatpush1.bf16.msra.mxu0 %v7208
    %7264 = vmatprep.subr.bf16.mxu0 %v7213
    %7265 = vmatpush1.bf16.msra.mxu0 %v7212
    %7266 = vmatprep.subr.bf16.mxu0 %v7217
    %7267 = vmatpush1.bf16.msra.mxu0 %v7216
    %7268 = vmatprep.subr.bf16.mxu0 0
    %7269 = vmatpush1.bf16.msra.mxu0 0
    %7270 = vmatprep.subr.bf16.mxu0 0
    %7271 = vmatpush1.bf16.msra.mxu0 0
    %7272 = vmatprep.subr.bf16.mxu0 0
    %7273 = vmatpush1.bf16.msra.mxu0 0
    %7274 = vmatprep.subr.bf16.mxu0 0
    %7275 = vmatpush1.bf16.msra.mxu0 0
    %7276 = vmatprep.subr.bf16.mxu0 0
    %7277 = vmatpush1.bf16.msra.mxu0 0
    %7278 = vmatprep.subr.bf16.mxu0 0
    %7279 = vmatpush1.bf16.msra.mxu0 0
    %7280 = vmatprep.subr.bf16.mxu0 0
    %7281 = vmatpush1.bf16.msra.mxu0 0
    %7282 = vmatprep.subr.bf16.mxu0 0
    %7283 = vmatpush1.bf16.msra.mxu0 0
    %7284 = vmatprep.mubr.bf16.mxu0 0
    %7285 = vmatmul.mubr.bf16.gmra.mrb[0].mxu0 %v7059
    %v7286 = vpop.f32.mrb[0].mxu0
    %v7287 = vadd.f32 0.0, %v7286
    %v7288 = vpop.f32.mrb[0].mxu0
    %v7289 = vadd.f32 0.0, %v7288
    %v7290 = vpop.f32.mrb[0].mxu0
    %v7291 = vpop.f32.mrb[0].mxu0
    %7292 = vdwg.mxu0
    %7293 = vmatprep.subr.bf16.mxu0 %v7191
    %7294 = vmatpush1.bf16.msra.mxu0 %v7190
    %7295 = vmatprep.subr.bf16.mxu0 %v7195
    %7296 = vmatpush1.bf16.msra.mxu0 %v7194
    %7297 = vmatprep.subr.bf16.mxu0 %v7199
    %7298 = vmatpush1.bf16.msra.mxu0 %v7198
    %7299 = vmatprep.subr.bf16.mxu0 %v7203
    %7300 = vmatpush1.bf16.msra.mxu0 %v7202
    %7301 = vmatprep.subr.bf16.mxu0 %v7207
    %7302 = vmatpush1.bf16.msra.mxu0 %v7206
    %7303 = vmatprep.subr.bf16.mxu0 %v7211
    %7304 = vmatpush1.bf16.msra.mxu0 %v7210
    %7305 = vmatprep.subr.bf16.mxu0 %v7215
    %7306 = vmatpush1.bf16.msra.mxu0 %v7214
    %7307 = vmatprep.subr.bf16.mxu0 %v7219
    %7308 = vmatpush1.bf16.msra.mxu0 %v7218
    %7309 = vmatprep.subr.bf16.mxu0 0
    %7310 = vmatpush1.bf16.msra.mxu0 0
    %7311 = vmatprep.subr.bf16.mxu0 0
    %7312 = vmatpush1.bf16.msra.mxu0 0
    %7313 = vmatprep.subr.bf16.mxu0 0
    %7314 = vmatpush1.bf16.msra.mxu0 0
    %7315 = vmatprep.subr.bf16.mxu0 0
    %7316 = vmatpush1.bf16.msra.mxu0 0
    %7317 = vmatprep.subr.bf16.mxu0 0
    %7318 = vmatpush1.bf16.msra.mxu0 0
    %7319 = vmatprep.subr.bf16.mxu0 0
    %7320 = vmatpush1.bf16.msra.mxu0 0
    %7321 = vmatprep.subr.bf16.mxu0 0
    %7322 = vmatpush1.bf16.msra.mxu0 0
    %7323 = vmatprep.subr.bf16.mxu0 0
    %7324 = vmatpush1.bf16.msra.mxu0 0
    %7325 = vmatprep.mubr.bf16.mxu0 0
    %7326 = vmatmul.mubr.bf16.gmra.mrb[0].mxu0 %v7059
    %v7327 = vpop.f32.mrb[0].mxu0
    %v7328 = vadd.f32 0.0, %v7327
    %v7329 = vpop.f32.mrb[0].mxu0
    %v7330 = vadd.f32 0.0, %v7329
    %v7331 = vpop.f32.mrb[0].mxu0
    %v7332 = vpop.f32.mrb[0].mxu0
    %7333 = vdwg.mxu0
    %v7334 = vadd.f32 %v7055, %v7287
    %v7335 = vadd.f32 %v7056, %v7289
    %v7336 = vadd.f32 %v7057, %v7328
    %v7337 = vadd.f32 %v7058, %v7330
    %v7338 = vxor.u32 %v7334, 2147483648
    %v7339 = vxor.u32 %v7335, 2147483648
    %v7340 = vxor.u32 %v7336, 2147483648
    %v7341 = vmul.f32 %v7338, 1.442695
    %v7342 = vpow.pop %v7341
    %v7343 = vmul.f32 %v7339, 1.442695
    %v7344 = vpow.pop %v7343
    %v7345 = vmul.f32 %v7340, 1.442695
    %v7346 = vpow.pop %v7345
    %v7347 = vadd.f32 %v7342, 1.0
    %v7348 = vadd.f32 %v7344, 1.0
    %v7349 = vadd.f32 %v7346, 1.0
    %v7350 = vrcp.pop %v7347
    %v7351 = vmul.f32 1.0, %v7350
    %v7352 = vrcp.pop %v7348
    %v7353 = vmul.f32 1.0, %v7352
    %v7354 = vrcp.pop %v7349
    %v7355 = vmul.f32 1.0, %v7354
    %v7356 = vtanh.pop %v7337
    %v7357 = vmul.f32 %v7353, %v7051
    %v7358 = vmul.f32 %v7351, %v7356
    %v7359 = vadd.f32 %v7357, %v7358
    %v7360 = vtanh.pop %v7359
    %v7361 = vmul.f32 %v7355, %v7360
    %7362 = vst [vmem:[%s1610] sm:$0xff] %v7361
    %v7363 = vld [vmem:[%s1612] sm:$0xff]
    %v7364 = vld [vmem:[%s1612 + $0x8] sm:$0xff]
    %v7365 = vld [vmem:[%s1612 + $0x10] sm:$0xff]
    %v7366 = vld [vmem:[%s1612 + $0x18] sm:$0xff]
    %v7367 = vpack.c.bf16 %v7361, %v7361
    %v7368 = vld [vmem:[#allocation10] sm:$0xff]
    %v7369 = vld [vmem:[#allocation10 + $0x8] sm:$0xff]
    %v7370 = vld [vmem:[#allocation10 + $0x10] sm:$0xff]
    %v7371 = vld [vmem:[#allocation10 + $0x18] sm:$0xff]
    %v7372 = vld [vmem:[#allocation10 + $0x20] sm:$0xff]
    %v7373 = vld [vmem:[#allocation10 + $0x28] sm:$0xff]
    %v7374 = vld [vmem:[#allocation10 + $0x30] sm:$0xff]
    %v7375 = vld [vmem:[#allocation10 + $0x38] sm:$0xff]
    %v7376 = vld [vmem:[#allocation10 + $0x40] sm:$0xff]
    %v7377 = vld [vmem:[#allocation10 + $0x48] sm:$0xff]
    %v7378 = vld [vmem:[#allocation10 + $0x50] sm:$0xff]
    %v7379 = vld [vmem:[#allocation10 + $0x58] sm:$0xff]
    %v7380 = vld [vmem:[#allocation10 + $0x60] sm:$0xff]
    %v7381 = vld [vmem:[#allocation10 + $0x68] sm:$0xff]
    %v7382 = vld [vmem:[#allocation10 + $0x70] sm:$0xff]
    %v7383 = vld [vmem:[#allocation10 + $0x78] sm:$0xff]
    %v7384 = vld [vmem:[#allocation10 + $0x80] sm:$0xff]
    %v7385 = vld [vmem:[#allocation10 + $0x88] sm:$0xff]
    %v7386 = vld [vmem:[#allocation10 + $0x90] sm:$0xff]
    %v7387 = vld [vmem:[#allocation10 + $0x98] sm:$0xff]
    %v7388 = vld [vmem:[#allocation10 + $0xa0] sm:$0xff]
    %v7389 = vld [vmem:[#allocation10 + $0xa8] sm:$0xff]
    %v7390 = vld [vmem:[#allocation10 + $0xb0] sm:$0xff]
    %v7391 = vld [vmem:[#allocation10 + $0xb8] sm:$0xff]
    %v7392 = vld [vmem:[#allocation10 + $0xc0] sm:$0xff]
    %v7393 = vld [vmem:[#allocation10 + $0xc8] sm:$0xff]
    %v7394 = vld [vmem:[#allocation10 + $0xd0] sm:$0xff]
    %v7395 = vld [vmem:[#allocation10 + $0xd8] sm:$0xff]
    %v7396 = vld [vmem:[#allocation10 + $0xe0] sm:$0xff]
    %v7397 = vld [vmem:[#allocation10 + $0xe8] sm:$0xff]
    %v7398 = vld [vmem:[#allocation10 + $0xf0] sm:$0xff]
    %v7399 = vld [vmem:[#allocation10 + $0xf8] sm:$0xff]
    %v7432 = vunpack.c.l.b16 %v7368
    %v7433 = vunpack.c.h.b16 %v7368
    %v7434 = vunpack.c.l.b16 %v7369
    %v7435 = vunpack.c.h.b16 %v7369
    %v7436 = vunpack.c.l.b16 %v7370
    %v7437 = vunpack.c.h.b16 %v7370
    %v7438 = vunpack.c.l.b16 %v7371
    %v7439 = vunpack.c.h.b16 %v7371
    %v7440 = vunpack.c.l.b16 %v7372
    %v7441 = vunpack.c.h.b16 %v7372
    %v7442 = vunpack.c.l.b16 %v7373
    %v7443 = vunpack.c.h.b16 %v7373
    %v7444 = vunpack.c.l.b16 %v7374
    %v7445 = vunpack.c.h.b16 %v7374
    %v7446 = vunpack.c.l.b16 %v7375
    %v7447 = vunpack.c.h.b16 %v7375
    %v7448 = vunpack.c.l.b16 %v7376
    %v7449 = vunpack.c.h.b16 %v7376
    %v7450 = vunpack.c.l.b16 %v7377
    %v7451 = vunpack.c.h.b16 %v7377
    %v7452 = vunpack.c.l.b16 %v7378
    %v7453 = vunpack.c.h.b16 %v7378
    %v7454 = vunpack.c.l.b16 %v7379
    %v7455 = vunpack.c.h.b16 %v7379
    %v7456 = vunpack.c.l.b16 %v7380
    %v7457 = vunpack.c.h.b16 %v7380
    %v7458 = vunpack.c.l.b16 %v7381
    %v7459 = vunpack.c.h.b16 %v7381
    %v7460 = vunpack.c.l.b16 %v7382
    %v7461 = vunpack.c.h.b16 %v7382
    %v7462 = vunpack.c.l.b16 %v7383
    %v7463 = vunpack.c.h.b16 %v7383
    %v7464 = vunpack.c.l.b16 %v7384
    %v7465 = vunpack.c.h.b16 %v7384
    %v7466 = vunpack.c.l.b16 %v7385
    %v7467 = vunpack.c.h.b16 %v7385
    %v7468 = vunpack.c.l.b16 %v7386
    %v7469 = vunpack.c.h.b16 %v7386
    %v7470 = vunpack.c.l.b16 %v7387
    %v7471 = vunpack.c.h.b16 %v7387
    %v7472 = vunpack.c.l.b16 %v7388
    %v7473 = vunpack.c.h.b16 %v7388
    %v7474 = vunpack.c.l.b16 %v7389
    %v7475 = vunpack.c.h.b16 %v7389
    %v7476 = vunpack.c.l.b16 %v7390
    %v7477 = vunpack.c.h.b16 %v7390
    %v7478 = vunpack.c.l.b16 %v7391
    %v7479 = vunpack.c.h.b16 %v7391
    %v7480 = vunpack.c.l.b16 %v7392
    %v7481 = vunpack.c.h.b16 %v7392
    %v7482 = vunpack.c.l.b16 %v7393
    %v7483 = vunpack.c.h.b16 %v7393
    %v7484 = vunpack.c.l.b16 %v7394
    %v7485 = vunpack.c.h.b16 %v7394
    %v7486 = vunpack.c.l.b16 %v7395
    %v7487 = vunpack.c.h.b16 %v7395
    %v7488 = vunpack.c.l.b16 %v7396
    %v7489 = vunpack.c.h.b16 %v7396
    %v7490 = vunpack.c.l.b16 %v7397
    %v7491 = vunpack.c.h.b16 %v7397
    %v7492 = vunpack.c.l.b16 %v7398
    %v7493 = vunpack.c.h.b16 %v7398
    %v7494 = vunpack.c.l.b16 %v7399
    %v7495 = vunpack.c.h.b16 %v7399
    %v7496 = vpack.c.b16 %v7436, %v7432
    %v7497 = vpack.c.b16 %v7437, %v7433
    %v7498 = vpack.c.b16 %v7438, %v7434
    %v7499 = vpack.c.b16 %v7439, %v7435
    %v7500 = vpack.c.b16 %v7444, %v7440
    %v7501 = vpack.c.b16 %v7445, %v7441
    %v7502 = vpack.c.b16 %v7446, %v7442
    %v7503 = vpack.c.b16 %v7447, %v7443
    %v7504 = vpack.c.b16 %v7452, %v7448
    %v7505 = vpack.c.b16 %v7453, %v7449
    %v7506 = vpack.c.b16 %v7454, %v7450
    %v7507 = vpack.c.b16 %v7455, %v7451
    %v7508 = vpack.c.b16 %v7460, %v7456
    %v7509 = vpack.c.b16 %v7461, %v7457
    %v7510 = vpack.c.b16 %v7462, %v7458
    %v7511 = vpack.c.b16 %v7463, %v7459
    %v7512 = vpack.c.b16 %v7468, %v7464
    %v7513 = vpack.c.b16 %v7469, %v7465
    %v7514 = vpack.c.b16 %v7470, %v7466
    %v7515 = vpack.c.b16 %v7471, %v7467
    %v7516 = vpack.c.b16 %v7476, %v7472
    %v7517 = vpack.c.b16 %v7477, %v7473
    %v7518 = vpack.c.b16 %v7478, %v7474
    %v7519 = vpack.c.b16 %v7479, %v7475
    %v7520 = vpack.c.b16 %v7484, %v7480
    %v7521 = vpack.c.b16 %v7485, %v7481
    %v7522 = vpack.c.b16 %v7486, %v7482
    %v7523 = vpack.c.b16 %v7487, %v7483
    %v7524 = vpack.c.b16 %v7492, %v7488
    %v7525 = vpack.c.b16 %v7493, %v7489
    %v7526 = vpack.c.b16 %v7494, %v7490
    %v7527 = vpack.c.b16 %v7495, %v7491
    %7560 = vmatprep.subr.bf16.mxu0 %v7497
    %7561 = vmatpush1.bf16.msra.mxu0 %v7496
    %7562 = vmatprep.subr.bf16.mxu0 %v7501
    %7563 = vmatpush1.bf16.msra.mxu0 %v7500
    %7564 = vmatprep.subr.bf16.mxu0 %v7505
    %7565 = vmatpush1.bf16.msra.mxu0 %v7504
    %7566 = vmatprep.subr.bf16.mxu0 %v7509
    %7567 = vmatpush1.bf16.msra.mxu0 %v7508
    %7568 = vmatprep.subr.bf16.mxu0 %v7513
    %7569 = vmatpush1.bf16.msra.mxu0 %v7512
    %7570 = vmatprep.subr.bf16.mxu0 %v7517
    %7571 = vmatpush1.bf16.msra.mxu0 %v7516
    %7572 = vmatprep.subr.bf16.mxu0 %v7521
    %7573 = vmatpush1.bf16.msra.mxu0 %v7520
    %7574 = vmatprep.subr.bf16.mxu0 %v7525
    %7575 = vmatpush1.bf16.msra.mxu0 %v7524
    %7576 = vmatprep.subr.bf16.mxu0 0
    %7577 = vmatpush1.bf16.msra.mxu0 0
    %7578 = vmatprep.subr.bf16.mxu0 0
    %7579 = vmatpush1.bf16.msra.mxu0 0
    %7580 = vmatprep.subr.bf16.mxu0 0
    %7581 = vmatpush1.bf16.msra.mxu0 0
    %7582 = vmatprep.subr.bf16.mxu0 0
    %7583 = vmatpush1.bf16.msra.mxu0 0
    %7584 = vmatprep.subr.bf16.mxu0 0
    %7585 = vmatpush1.bf16.msra.mxu0 0
    %7586 = vmatprep.subr.bf16.mxu0 0
    %7587 = vmatpush1.bf16.msra.mxu0 0
    %7588 = vmatprep.subr.bf16.mxu0 0
    %7589 = vmatpush1.bf16.msra.mxu0 0
    %7590 = vmatprep.subr.bf16.mxu0 0
    %7591 = vmatpush1.bf16.msra.mxu0 0
    %7592 = vmatprep.mubr.bf16.mxu0 0
    %7593 = vmatmul.mubr.bf16.gmra.mrb[0].mxu0 %v7367
    %v7594 = vpop.f32.mrb[0].mxu0
    %v7595 = vadd.f32 0.0, %v7594
    %v7596 = vpop.f32.mrb[0].mxu0
    %v7597 = vadd.f32 0.0, %v7596
    %v7598 = vpop.f32.mrb[0].mxu0
    %v7599 = vpop.f32.mrb[0].mxu0
    %7600 = vdwg.mxu0
    %7601 = vmatprep.subr.bf16.mxu0 %v7499
    %7602 = vmatpush1.bf16.msra.mxu0 %v7498
    %7603 = vmatprep.subr.bf16.mxu0 %v7503
    %7604 = vmatpush1.bf16.msra.mxu0 %v7502
    %7605 = vmatprep.subr.bf16.mxu0 %v7507
    %7606 = vmatpush1.bf16.msra.mxu0 %v7506
    %7607 = vmatprep.subr.bf16.mxu0 %v7511
    %7608 = vmatpush1.bf16.msra.mxu0 %v7510
    %7609 = vmatprep.subr.bf16.mxu0 %v7515
    %7610 = vmatpush1.bf16.msra.mxu0 %v7514
    %7611 = vmatprep.subr.bf16.mxu0 %v7519
    %7612 = vmatpush1.bf16.msra.mxu0 %v7518
    %7613 = vmatprep.subr.bf16.mxu0 %v7523
    %7614 = vmatpush1.bf16.msra.mxu0 %v7522
    %7615 = vmatprep.subr.bf16.mxu0 %v7527
    %7616 = vmatpush1.bf16.msra.mxu0 %v7526
    %7617 = vmatprep.subr.bf16.mxu0 0
    %7618 = vmatpush1.bf16.msra.mxu0 0
    %7619 = vmatprep.subr.bf16.mxu0 0
    %7620 = vmatpush1.bf16.msra.mxu0 0
    %7621 = vmatprep.subr.bf16.mxu0 0
    %7622 = vmatpush1.bf16.msra.mxu0 0
    %7623 = vmatprep.subr.bf16.mxu0 0
    %7624 = vmatpush1.bf16.msra.mxu0 0
    %7625 = vmatprep.subr.bf16.mxu0 0
    %7626 = vmatpush1.bf16.msra.mxu0 0
    %7627 = vmatprep.subr.bf16.mxu0 0
    %7628 = vmatpush1.bf16.msra.mxu0 0
    %7629 = vmatprep.subr.bf16.mxu0 0
    %7630 = vmatpush1.bf16.msra.mxu0 0
    %7631 = vmatprep.subr.bf16.mxu0 0
    %7632 = vmatpush1.bf16.msra.mxu0 0
    %7633 = vmatprep.mubr.bf16.mxu0 0
    %7634 = vmatmul.mubr.bf16.gmra.mrb[0].mxu0 %v7367
    %v7635 = vpop.f32.mrb[0].mxu0
    %v7636 = vadd.f32 0.0, %v7635
    %v7637 = vpop.f32.mrb[0].mxu0
    %v7638 = vadd.f32 0.0, %v7637
    %v7639 = vpop.f32.mrb[0].mxu0
    %v7640 = vpop.f32.mrb[0].mxu0
    %7641 = vdwg.mxu0
    %v7642 = vadd.f32 %v7363, %v7595
    %v7643 = vadd.f32 %v7364, %v7597
    %v7644 = vadd.f32 %v7365, %v7636
    %v7645 = vadd.f32 %v7366, %v7638
    %v7646 = vxor.u32 %v7642, 2147483648
    %v7647 = vxor.u32 %v7643, 2147483648
    %v7648 = vxor.u32 %v7644, 2147483648
    %v7649 = vmul.f32 %v7646, 1.442695
    %v7650 = vpow.pop %v7649
    %v7651 = vmul.f32 %v7647, 1.442695
    %v7652 = vpow.pop %v7651
    %v7653 = vmul.f32 %v7648, 1.442695
    %v7654 = vpow.pop %v7653
    %v7655 = vadd.f32 %v7650, 1.0
    %v7656 = vadd.f32 %v7652, 1.0
    %v7657 = vadd.f32 %v7654, 1.0
    %v7658 = vrcp.pop %v7655
    %v7659 = vmul.f32 1.0, %v7658
    %v7660 = vrcp.pop %v7656
    %v7661 = vmul.f32 1.0, %v7660
    %v7662 = vrcp.pop %v7657
    %v7663 = vmul.f32 1.0, %v7662
    %v7664 = vtanh.pop %v7645
    %v7665 = vmul.f32 %v7661, %v7359
    %v7666 = vmul.f32 %v7659, %v7664
    %v7667 = vadd.f32 %v7665, %v7666
    %v7668 = vtanh.pop %v7667
    %v7669 = vmul.f32 %v7663, %v7668
    %7670 = vst [vmem:[%s1920] sm:$0xff] %v7669
    %v7671 = vld [vmem:[%s1922] sm:$0xff]
    %v7672 = vld [vmem:[%s1922 + $0x8] sm:$0xff]
    %v7673 = vld [vmem:[%s1922 + $0x10] sm:$0xff]
    %v7674 = vld [vmem:[%s1922 + $0x18] sm:$0xff]
    %v7675 = vpack.c.bf16 %v7669, %v7669
    %v7676 = vld [vmem:[#allocation10] sm:$0xff]
    %v7677 = vld [vmem:[#allocation10 + $0x8] sm:$0xff]
    %v7678 = vld [vmem:[#allocation10 + $0x10] sm:$0xff]
    %v7679 = vld [vmem:[#allocation10 + $0x18] sm:$0xff]
    %v7680 = vld [vmem:[#allocation10 + $0x20] sm:$0xff]
    %v7681 = vld [vmem:[#allocation10 + $0x28] sm:$0xff]
    %v7682 = vld [vmem:[#allocation10 + $0x30] sm:$0xff]
    %v7683 = vld [vmem:[#allocation10 + $0x38] sm:$0xff]
    %v7684 = vld [vmem:[#allocation10 + $0x40] sm:$0xff]
    %v7685 = vld [vmem:[#allocation10 + $0x48] sm:$0xff]
    %v7686 = vld [vmem:[#allocation10 + $0x50] sm:$0xff]
    %v7687 = vld [vmem:[#allocation10 + $0x58] sm:$0xff]
    %v7688 = vld [vmem:[#allocation10 + $0x60] sm:$0xff]
    %v7689 = vld [vmem:[#allocation10 + $0x68] sm:$0xff]
    %v7690 = vld [vmem:[#allocation10 + $0x70] sm:$0xff]
    %v7691 = vld [vmem:[#allocation10 + $0x78] sm:$0xff]
    %v7692 = vld [vmem:[#allocation10 + $0x80] sm:$0xff]
    %v7693 = vld [vmem:[#allocation10 + $0x88] sm:$0xff]
    %v7694 = vld [vmem:[#allocation10 + $0x90] sm:$0xff]
    %v7695 = vld [vmem:[#allocation10 + $0x98] sm:$0xff]
    %v7696 = vld [vmem:[#allocation10 + $0xa0] sm:$0xff]
    %v7697 = vld [vmem:[#allocation10 + $0xa8] sm:$0xff]
    %v7698 = vld [vmem:[#allocation10 + $0xb0] sm:$0xff]
    %v7699 = vld [vmem:[#allocation10 + $0xb8] sm:$0xff]
    %v7700 = vld [vmem:[#allocation10 + $0xc0] sm:$0xff]
    %v7701 = vld [vmem:[#allocation10 + $0xc8] sm:$0xff]
    %v7702 = vld [vmem:[#allocation10 + $0xd0] sm:$0xff]
    %v7703 = vld [vmem:[#allocation10 + $0xd8] sm:$0xff]
    %v7704 = vld [vmem:[#allocation10 + $0xe0] sm:$0xff]
    %v7705 = vld [vmem:[#allocation10 + $0xe8] sm:$0xff]
    %v7706 = vld [vmem:[#allocation10 + $0xf0] sm:$0xff]
    %v7707 = vld [vmem:[#allocation10 + $0xf8] sm:$0xff]
    %v7740 = vunpack.c.l.b16 %v7676
    %v7741 = vunpack.c.h.b16 %v7676
    %v7742 = vunpack.c.l.b16 %v7677
    %v7743 = vunpack.c.h.b16 %v7677
    %v7744 = vunpack.c.l.b16 %v7678
    %v7745 = vunpack.c.h.b16 %v7678
    %v7746 = vunpack.c.l.b16 %v7679
    %v7747 = vunpack.c.h.b16 %v7679
    %v7748 = vunpack.c.l.b16 %v7680
    %v7749 = vunpack.c.h.b16 %v7680
    %v7750 = vunpack.c.l.b16 %v7681
    %v7751 = vunpack.c.h.b16 %v7681
    %v7752 = vunpack.c.l.b16 %v7682
    %v7753 = vunpack.c.h.b16 %v7682
    %v7754 = vunpack.c.l.b16 %v7683
    %v7755 = vunpack.c.h.b16 %v7683
    %v7756 = vunpack.c.l.b16 %v7684
    %v7757 = vunpack.c.h.b16 %v7684
    %v7758 = vunpack.c.l.b16 %v7685
    %v7759 = vunpack.c.h.b16 %v7685
    %v7760 = vunpack.c.l.b16 %v7686
    %v7761 = vunpack.c.h.b16 %v7686
    %v7762 = vunpack.c.l.b16 %v7687
    %v7763 = vunpack.c.h.b16 %v7687
    %v7764 = vunpack.c.l.b16 %v7688
    %v7765 = vunpack.c.h.b16 %v7688
    %v7766 = vunpack.c.l.b16 %v7689
    %v7767 = vunpack.c.h.b16 %v7689
    %v7768 = vunpack.c.l.b16 %v7690
    %v7769 = vunpack.c.h.b16 %v7690
    %v7770 = vunpack.c.l.b16 %v7691
    %v7771 = vunpack.c.h.b16 %v7691
    %v7772 = vunpack.c.l.b16 %v7692
    %v7773 = vunpack.c.h.b16 %v7692
    %v7774 = vunpack.c.l.b16 %v7693
    %v7775 = vunpack.c.h.b16 %v7693
    %v7776 = vunpack.c.l.b16 %v7694
    %v7777 = vunpack.c.h.b16 %v7694
    %v7778 = vunpack.c.l.b16 %v7695
    %v7779 = vunpack.c.h.b16 %v7695
    %v7780 = vunpack.c.l.b16 %v7696
    %v7781 = vunpack.c.h.b16 %v7696
    %v7782 = vunpack.c.l.b16 %v7697
    %v7783 = vunpack.c.h.b16 %v7697
    %v7784 = vunpack.c.l.b16 %v7698
    %v7785 = vunpack.c.h.b16 %v7698
    %v7786 = vunpack.c.l.b16 %v7699
    %v7787 = vunpack.c.h.b16 %v7699
    %v7788 = vunpack.c.l.b16 %v7700
    %v7789 = vunpack.c.h.b16 %v7700
    %v7790 = vunpack.c.l.b16 %v7701
    %v7791 = vunpack.c.h.b16 %v7701
    %v7792 = vunpack.c.l.b16 %v7702
    %v7793 = vunpack.c.h.b16 %v7702
    %v7794 = vunpack.c.l.b16 %v7703
    %v7795 = vunpack.c.h.b16 %v7703
    %v7796 = vunpack.c.l.b16 %v7704
    %v7797 = vunpack.c.h.b16 %v7704
    %v7798 = vunpack.c.l.b16 %v7705
    %v7799 = vunpack.c.h.b16 %v7705
    %v7800 = vunpack.c.l.b16 %v7706
    %v7801 = vunpack.c.h.b16 %v7706
    %v7802 = vunpack.c.l.b16 %v7707
    %v7803 = vunpack.c.h.b16 %v7707
    %v7804 = vpack.c.b16 %v7744, %v7740
    %v7805 = vpack.c.b16 %v7745, %v7741
    %v7806 = vpack.c.b16 %v7746, %v7742
    %v7807 = vpack.c.b16 %v7747, %v7743
    %v7808 = vpack.c.b16 %v7752, %v7748
    %v7809 = vpack.c.b16 %v7753, %v7749
    %v7810 = vpack.c.b16 %v7754, %v7750
    %v7811 = vpack.c.b16 %v7755, %v7751
    %v7812 = vpack.c.b16 %v7760, %v7756
    %v7813 = vpack.c.b16 %v7761, %v7757
    %v7814 = vpack.c.b16 %v7762, %v7758
    %v7815 = vpack.c.b16 %v7763, %v7759
    %v7816 = vpack.c.b16 %v7768, %v7764
    %v7817 = vpack.c.b16 %v7769, %v7765
    %v7818 = vpack.c.b16 %v7770, %v7766
    %v7819 = vpack.c.b16 %v7771, %v7767
    %v7820 = vpack.c.b16 %v7776, %v7772
    %v7821 = vpack.c.b16 %v7777, %v7773
    %v7822 = vpack.c.b16 %v7778, %v7774
    %v7823 = vpack.c.b16 %v7779, %v7775
    %v7824 = vpack.c.b16 %v7784, %v7780
    %v7825 = vpack.c.b16 %v7785, %v7781
    %v7826 = vpack.c.b16 %v7786, %v7782
    %v7827 = vpack.c.b16 %v7787, %v7783
    %v7828 = vpack.c.b16 %v7792, %v7788
    %v7829 = vpack.c.b16 %v7793, %v7789
    %v7830 = vpack.c.b16 %v7794, %v7790
    %v7831 = vpack.c.b16 %v7795, %v7791
    %v7832 = vpack.c.b16 %v7800, %v7796
    %v7833 = vpack.c.b16 %v7801, %v7797
    %v7834 = vpack.c.b16 %v7802, %v7798
    %v7835 = vpack.c.b16 %v7803, %v7799
    %7868 = vmatprep.subr.bf16.mxu0 %v7805
    %7869 = vmatpush1.bf16.msra.mxu0 %v7804
    %7870 = vmatprep.subr.bf16.mxu0 %v7809
    %7871 = vmatpush1.bf16.msra.mxu0 %v7808
    %7872 = vmatprep.subr.bf16.mxu0 %v7813
    %7873 = vmatpush1.bf16.msra.mxu0 %v7812
    %7874 = vmatprep.subr.bf16.mxu0 %v7817
    %7875 = vmatpush1.bf16.msra.mxu0 %v7816
    %7876 = vmatprep.subr.bf16.mxu0 %v7821
    %7877 = vmatpush1.bf16.msra.mxu0 %v7820
    %7878 = vmatprep.subr.bf16.mxu0 %v7825
    %7879 = vmatpush1.bf16.msra.mxu0 %v7824
    %7880 = vmatprep.subr.bf16.mxu0 %v7829
    %7881 = vmatpush1.bf16.msra.mxu0 %v7828
    %7882 = vmatprep.subr.bf16.mxu0 %v7833
    %7883 = vmatpush1.bf16.msra.mxu0 %v7832
    %7884 = vmatprep.subr.bf16.mxu0 0
    %7885 = vmatpush1.bf16.msra.mxu0 0
    %7886 = vmatprep.subr.bf16.mxu0 0
    %7887 = vmatpush1.bf16.msra.mxu0 0
    %7888 = vmatprep.subr.bf16.mxu0 0
    %7889 = vmatpush1.bf16.msra.mxu0 0
    %7890 = vmatprep.subr.bf16.mxu0 0
    %7891 = vmatpush1.bf16.msra.mxu0 0
    %7892 = vmatprep.subr.bf16.mxu0 0
    %7893 = vmatpush1.bf16.msra.mxu0 0
    %7894 = vmatprep.subr.bf16.mxu0 0
    %7895 = vmatpush1.bf16.msra.mxu0 0
    %7896 = vmatprep.subr.bf16.mxu0 0
    %7897 = vmatpush1.bf16.msra.mxu0 0
    %7898 = vmatprep.subr.bf16.mxu0 0
    %7899 = vmatpush1.bf16.msra.mxu0 0
    %7900 = vmatprep.mubr.bf16.mxu0 0
    %7901 = vmatmul.mubr.bf16.gmra.mrb[0].mxu0 %v7675
    %v7902 = vpop.f32.mrb[0].mxu0
    %v7903 = vadd.f32 0.0, %v7902
    %v7904 = vpop.f32.mrb[0].mxu0
    %v7905 = vadd.f32 0.0, %v7904
    %v7906 = vpop.f32.mrb[0].mxu0
    %v7907 = vpop.f32.mrb[0].mxu0
    %7908 = vdwg.mxu0
    %7909 = vmatprep.subr.bf16.mxu0 %v7807
    %7910 = vmatpush1.bf16.msra.mxu0 %v7806
    %7911 = vmatprep.subr.bf16.mxu0 %v7811
    %7912 = vmatpush1.bf16.msra.mxu0 %v7810
    %7913 = vmatprep.subr.bf16.mxu0 %v7815
    %7914 = vmatpush1.bf16.msra.mxu0 %v7814
    %7915 = vmatprep.subr.bf16.mxu0 %v7819
    %7916 = vmatpush1.bf16.msra.mxu0 %v7818
    %7917 = vmatprep.subr.bf16.mxu0 %v7823
    %7918 = vmatpush1.bf16.msra.mxu0 %v7822
    %7919 = vmatprep.subr.bf16.mxu0 %v7827
    %7920 = vmatpush1.bf16.msra.mxu0 %v7826
    %7921 = vmatprep.subr.bf16.mxu0 %v7831
    %7922 = vmatpush1.bf16.msra.mxu0 %v7830
    %7923 = vmatprep.subr.bf16.mxu0 %v7835
    %7924 = vmatpush1.bf16.msra.mxu0 %v7834
    %7925 = vmatprep.subr.bf16.mxu0 0
    %7926 = vmatpush1.bf16.msra.mxu0 0
    %7927 = vmatprep.subr.bf16.mxu0 0
    %7928 = vmatpush1.bf16.msra.mxu0 0
    %7929 = vmatprep.subr.bf16.mxu0 0
    %7930 = vmatpush1.bf16.msra.mxu0 0
    %7931 = vmatprep.subr.bf16.mxu0 0
    %7932 = vmatpush1.bf16.msra.mxu0 0
    %7933 = vmatprep.subr.bf16.mxu0 0
    %7934 = vmatpush1.bf16.msra.mxu0 0
    %7935 = vmatprep.subr.bf16.mxu0 0
    %7936 = vmatpush1.bf16.msra.mxu0 0
    %7937 = vmatprep.subr.bf16.mxu0 0
    %7938 = vmatpush1.bf16.msra.mxu0 0
    %7939 = vmatprep.subr.bf16.mxu0 0
    %7940 = vmatpush1.bf16.msra.mxu0 0
    %7941 = vmatprep.mubr.bf16.mxu0 0
    %7942 = vmatmul.mubr.bf16.gmra.mrb[0].mxu0 %v7675
    %v7943 = vpop.f32.mrb[0].mxu0
    %v7944 = vadd.f32 0.0, %v7943
    %v7945 = vpop.f32.mrb[0].mxu0
    %v7946 = vadd.f32 0.0, %v7945
    %v7947 = vpop.f32.mrb[0].mxu0
    %v7948 = vpop.f32.mrb[0].mxu0
    %7949 = vdwg.mxu0
    %v7950 = vadd.f32 %v7671, %v7903
    %v7951 = vadd.f32 %v7672, %v7905
    %v7952 = vadd.f32 %v7673, %v7944
    %v7953 = vadd.f32 %v7674, %v7946
    %v7954 = vxor.u32 %v7950, 2147483648
    %v7955 = vxor.u32 %v7951, 2147483648
    %v7956 = vxor.u32 %v7952, 2147483648
    %v7957 = vmul.f32 %v7954, 1.442695
    %v7958 = vpow.pop %v7957
    %v7959 = vmul.f32 %v7955, 1.442695
    %v7960 = vpow.pop %v7959
    %v7961 = vmul.f32 %v7956, 1.442695
    %v7962 = vpow.pop %v7961
    %v7963 = vadd.f32 %v7958, 1.0
    %v7964 = vadd.f32 %v7960, 1.0
    %v7965 = vadd.f32 %v7962, 1.0
    %v7966 = vrcp.pop %v7963
    %v7967 = vmul.f32 1.0, %v7966
    %v7968 = vrcp.pop %v7964
    %v7969 = vmul.f32 1.0, %v7968
    %v7970 = vrcp.pop %v7965
    %v7971 = vmul.f32 1.0, %v7970
    %v7972 = vtanh.pop %v7953
    %v7973 = vmul.f32 %v7969, %v7667
    %v7974 = vmul.f32 %v7967, %v7972
    %v7975 = vadd.f32 %v7973, %v7974
    %v7976 = vtanh.pop %v7975
    %v7977 = vmul.f32 %v7971, %v7976
    %7978 = vst [vmem:[%s2230] sm:$0xff] %v7977
    %v7979 = vld [vmem:[%s2232] sm:$0xff]
    %v7980 = vld [vmem:[%s2232 + $0x8] sm:$0xff]
    %v7981 = vld [vmem:[%s2232 + $0x10] sm:$0xff]
    %v7982 = vld [vmem:[%s2232 + $0x18] sm:$0xff]
    %v7983 = vpack.c.bf16 %v7977, %v7977
    %v7984 = vld [vmem:[#allocation10] sm:$0xff]
    %v7985 = vld [vmem:[#allocation10 + $0x8] sm:$0xff]
    %v7986 = vld [vmem:[#allocation10 + $0x10] sm:$0xff]
    %v7987 = vld [vmem:[#allocation10 + $0x18] sm:$0xff]
    %v7988 = vld [vmem:[#allocation10 + $0x20] sm:$0xff]
    %v7989 = vld [vmem:[#allocation10 + $0x28] sm:$0xff]
    %v7990 = vld [vmem:[#allocation10 + $0x30] sm:$0xff]
    %v7991 = vld [vmem:[#allocation10 + $0x38] sm:$0xff]
    %v7992 = vld [vmem:[#allocation10 + $0x40] sm:$0xff]
    %v7993 = vld [vmem:[#allocation10 + $0x48] sm:$0xff]
    %v7994 = vld [vmem:[#allocation10 + $0x50] sm:$0xff]
    %v7995 = vld [vmem:[#allocation10 + $0x58] sm:$0xff]
    %v7996 = vld [vmem:[#allocation10 + $0x60] sm:$0xff]
    %v7997 = vld [vmem:[#allocation10 + $0x68] sm:$0xff]
    %v7998 = vld [vmem:[#allocation10 + $0x70] sm:$0xff]
    %v7999 = vld [vmem:[#allocation10 + $0x78] sm:$0xff]
    %v8000 = vld [vmem:[#allocation10 + $0x80] sm:$0xff]
    %v8001 = vld [vmem:[#allocation10 + $0x88] sm:$0xff]
    %v8002 = vld [vmem:[#allocation10 + $0x90] sm:$0xff]
    %v8003 = vld [vmem:[#allocation10 + $0x98] sm:$0xff]
    %v8004 = vld [vmem:[#allocation10 + $0xa0] sm:$0xff]
    %v8005 = vld [vmem:[#allocation10 + $0xa8] sm:$0xff]
    %v8006 = vld [vmem:[#allocation10 + $0xb0] sm:$0xff]
    %v8007 = vld [vmem:[#allocation10 + $0xb8] sm:$0xff]
    %v8008 = vld [vmem:[#allocation10 + $0xc0] sm:$0xff]
    %v8009 = vld [vmem:[#allocation10 + $0xc8] sm:$0xff]
    %v8010 = vld [vmem:[#allocation10 + $0xd0] sm:$0xff]
    %v8011 = vld [vmem:[#allocation10 + $0xd8] sm:$0xff]
    %v8012 = vld [vmem:[#allocation10 + $0xe0] sm:$0xff]
    %v8013 = vld [vmem:[#allocation10 + $0xe8] sm:$0xff]
    %v8014 = vld [vmem:[#allocation10 + $0xf0] sm:$0xff]
    %v8015 = vld [vmem:[#allocation10 + $0xf8] sm:$0xff]
    %v8048 = vunpack.c.l.b16 %v7984
    %v8049 = vunpack.c.h.b16 %v7984
    %v8050 = vunpack.c.l.b16 %v7985
    %v8051 = vunpack.c.h.b16 %v7985
    %v8052 = vunpack.c.l.b16 %v7986
    %v8053 = vunpack.c.h.b16 %v7986
    %v8054 = vunpack.c.l.b16 %v7987
    %v8055 = vunpack.c.h.b16 %v7987
    %v8056 = vunpack.c.l.b16 %v7988
    %v8057 = vunpack.c.h.b16 %v7988
    %v8058 = vunpack.c.l.b16 %v7989
    %v8059 = vunpack.c.h.b16 %v7989
    %v8060 = vunpack.c.l.b16 %v7990
    %v8061 = vunpack.c.h.b16 %v7990
    %v8062 = vunpack.c.l.b16 %v7991
    %v8063 = vunpack.c.h.b16 %v7991
    %v8064 = vunpack.c.l.b16 %v7992
    %v8065 = vunpack.c.h.b16 %v7992
    %v8066 = vunpack.c.l.b16 %v7993
    %v8067 = vunpack.c.h.b16 %v7993
    %v8068 = vunpack.c.l.b16 %v7994
    %v8069 = vunpack.c.h.b16 %v7994
    %v8070 = vunpack.c.l.b16 %v7995
    %v8071 = vunpack.c.h.b16 %v7995
    %v8072 = vunpack.c.l.b16 %v7996
    %v8073 = vunpack.c.h.b16 %v7996
    %v8074 = vunpack.c.l.b16 %v7997
    %v8075 = vunpack.c.h.b16 %v7997
    %v8076 = vunpack.c.l.b16 %v7998
    %v8077 = vunpack.c.h.b16 %v7998
    %v8078 = vunpack.c.l.b16 %v7999
    %v8079 = vunpack.c.h.b16 %v7999
    %v8080 = vunpack.c.l.b16 %v8000
    %v8081 = vunpack.c.h.b16 %v8000
    %v8082 = vunpack.c.l.b16 %v8001
    %v8083 = vunpack.c.h.b16 %v8001
    %v8084 = vunpack.c.l.b16 %v8002
    %v8085 = vunpack.c.h.b16 %v8002
    %v8086 = vunpack.c.l.b16 %v8003
    %v8087 = vunpack.c.h.b16 %v8003
    %v8088 = vunpack.c.l.b16 %v8004
    %v8089 = vunpack.c.h.b16 %v8004
    %v8090 = vunpack.c.l.b16 %v8005
    %v8091 = vunpack.c.h.b16 %v8005
    %v8092 = vunpack.c.l.b16 %v8006
    %v8093 = vunpack.c.h.b16 %v8006
    %v8094 = vunpack.c.l.b16 %v8007
    %v8095 = vunpack.c.h.b16 %v8007
    %v8096 = vunpack.c.l.b16 %v8008
    %v8097 = vunpack.c.h.b16 %v8008
    %v8098 = vunpack.c.l.b16 %v8009
    %v8099 = vunpack.c.h.b16 %v8009
    %v8100 = vunpack.c.l.b16 %v8010
    %v8101 = vunpack.c.h.b16 %v8010
    %v8102 = vunpack.c.l.b16 %v8011
    %v8103 = vunpack.c.h.b16 %v8011
    %v8104 = vunpack.c.l.b16 %v8012
    %v8105 = vunpack.c.h.b16 %v8012
    %v8106 = vunpack.c.l.b16 %v8013
    %v8107 = vunpack.c.h.b16 %v8013
    %v8108 = vunpack.c.l.b16 %v8014
    %v8109 = vunpack.c.h.b16 %v8014
    %v8110 = vunpack.c.l.b16 %v8015
    %v8111 = vunpack.c.h.b16 %v8015
    %v8112 = vpack.c.b16 %v8052, %v8048
    %v8113 = vpack.c.b16 %v8053, %v8049
    %v8114 = vpack.c.b16 %v8054, %v8050
    %v8115 = vpack.c.b16 %v8055, %v8051
    %v8116 = vpack.c.b16 %v8060, %v8056
    %v8117 = vpack.c.b16 %v8061, %v8057
    %v8118 = vpack.c.b16 %v8062, %v8058
    %v8119 = vpack.c.b16 %v8063, %v8059
    %v8120 = vpack.c.b16 %v8068, %v8064
    %v8121 = vpack.c.b16 %v8069, %v8065
    %v8122 = vpack.c.b16 %v8070, %v8066
    %v8123 = vpack.c.b16 %v8071, %v8067
    %v8124 = vpack.c.b16 %v8076, %v8072
    %v8125 = vpack.c.b16 %v8077, %v8073
    %v8126 = vpack.c.b16 %v8078, %v8074
    %v8127 = vpack.c.b16 %v8079, %v8075
    %v8128 = vpack.c.b16 %v8084, %v8080
    %v8129 = vpack.c.b16 %v8085, %v8081
    %v8130 = vpack.c.b16 %v8086, %v8082
    %v8131 = vpack.c.b16 %v8087, %v8083
    %v8132 = vpack.c.b16 %v8092, %v8088
    %v8133 = vpack.c.b16 %v8093, %v8089
    %v8134 = vpack.c.b16 %v8094, %v8090
    %v8135 = vpack.c.b16 %v8095, %v8091
    %v8136 = vpack.c.b16 %v8100, %v8096
    %v8137 = vpack.c.b16 %v8101, %v8097
    %v8138 = vpack.c.b16 %v8102, %v8098
    %v8139 = vpack.c.b16 %v8103, %v8099
    %v8140 = vpack.c.b16 %v8108, %v8104
    %v8141 = vpack.c.b16 %v8109, %v8105
    %v8142 = vpack.c.b16 %v8110, %v8106
    %v8143 = vpack.c.b16 %v8111, %v8107
    %8176 = vmatprep.subr.bf16.mxu0 %v8113
    %8177 = vmatpush1.bf16.msra.mxu0 %v8112
    %8178 = vmatprep.subr.bf16.mxu0 %v8117
    %8179 = vmatpush1.bf16.msra.mxu0 %v8116
    %8180 = vmatprep.subr.bf16.mxu0 %v8121
    %8181 = vmatpush1.bf16.msra.mxu0 %v8120
    %8182 = vmatprep.subr.bf16.mxu0 %v8125
    %8183 = vmatpush1.bf16.msra.mxu0 %v8124
    %8184 = vmatprep.subr.bf16.mxu0 %v8129
    %8185 = vmatpush1.bf16.msra.mxu0 %v8128
    %8186 = vmatprep.subr.bf16.mxu0 %v8133
    %8187 = vmatpush1.bf16.msra.mxu0 %v8132
    %8188 = vmatprep.subr.bf16.mxu0 %v8137
    %8189 = vmatpush1.bf16.msra.mxu0 %v8136
    %8190 = vmatprep.subr.bf16.mxu0 %v8141
    %8191 = vmatpush1.bf16.msra.mxu0 %v8140
    %8192 = vmatprep.subr.bf16.mxu0 0
    %8193 = vmatpush1.bf16.msra.mxu0 0
    %8194 = vmatprep.subr.bf16.mxu0 0
    %8195 = vmatpush1.bf16.msra.mxu0 0
    %8196 = vmatprep.subr.bf16.mxu0 0
    %8197 = vmatpush1.bf16.msra.mxu0 0
    %8198 = vmatprep.subr.bf16.mxu0 0
    %8199 = vmatpush1.bf16.msra.mxu0 0
    %8200 = vmatprep.subr.bf16.mxu0 0
    %8201 = vmatpush1.bf16.msra.mxu0 0
    %8202 = vmatprep.subr.bf16.mxu0 0
    %8203 = vmatpush1.bf16.msra.mxu0 0
    %8204 = vmatprep.subr.bf16.mxu0 0
    %8205 = vmatpush1.bf16.msra.mxu0 0
    %8206 = vmatprep.subr.bf16.mxu0 0
    %8207 = vmatpush1.bf16.msra.mxu0 0
    %8208 = vmatprep.mubr.bf16.mxu0 0
    %8209 = vmatmul.mubr.bf16.gmra.mrb[0].mxu0 %v7983
    %v8210 = vpop.f32.mrb[0].mxu0
    %v8211 = vadd.f32 0.0, %v8210
    %v8212 = vpop.f32.mrb[0].mxu0
    %v8213 = vadd.f32 0.0, %v8212
    %v8214 = vpop.f32.mrb[0].mxu0
    %v8215 = vpop.f32.mrb[0].mxu0
    %8216 = vdwg.mxu0
    %8217 = vmatprep.subr.bf16.mxu0 %v8115
    %8218 = vmatpush1.bf16.msra.mxu0 %v8114
    %8219 = vmatprep.subr.bf16.mxu0 %v8119
    %8220 = vmatpush1.bf16.msra.mxu0 %v8118
    %8221 = vmatprep.subr.bf16.mxu0 %v8123
    %8222 = vmatpush1.bf16.msra.mxu0 %v8122
    %8223 = vmatprep.subr.bf16.mxu0 %v8127
    %8224 = vmatpush1.bf16.msra.mxu0 %v8126
    %8225 = vmatprep.subr.bf16.mxu0 %v8131
    %8226 = vmatpush1.bf16.msra.mxu0 %v8130
    %8227 = vmatprep.subr.bf16.mxu0 %v8135
    %8228 = vmatpush1.bf16.msra.mxu0 %v8134
    %8229 = vmatprep.subr.bf16.mxu0 %v8139
    %8230 = vmatpush1.bf16.msra.mxu0 %v8138
    %8231 = vmatprep.subr.bf16.mxu0 %v8143
    %8232 = vmatpush1.bf16.msra.mxu0 %v8142
    %8233 = vmatprep.subr.bf16.mxu0 0
    %8234 = vmatpush1.bf16.msra.mxu0 0
    %8235 = vmatprep.subr.bf16.mxu0 0
    %8236 = vmatpush1.bf16.msra.mxu0 0
    %8237 = vmatprep.subr.bf16.mxu0 0
    %8238 = vmatpush1.bf16.msra.mxu0 0
    %8239 = vmatprep.subr.bf16.mxu0 0
    %8240 = vmatpush1.bf16.msra.mxu0 0
    %8241 = vmatprep.subr.bf16.mxu0 0
    %8242 = vmatpush1.bf16.msra.mxu0 0
    %8243 = vmatprep.subr.bf16.mxu0 0
    %8244 = vmatpush1.bf16.msra.mxu0 0
    %8245 = vmatprep.subr.bf16.mxu0 0
    %8246 = vmatpush1.bf16.msra.mxu0 0
    %8247 = vmatprep.subr.bf16.mxu0 0
    %8248 = vmatpush1.bf16.msra.mxu0 0
    %8249 = vmatprep.mubr.bf16.mxu0 0
    %8250 = vmatmul.mubr.bf16.gmra.mrb[0].mxu0 %v7983
    %v8251 = vpop.f32.mrb[0].mxu0
    %v8252 = vadd.f32 0.0, %v8251
    %v8253 = vpop.f32.mrb[0].mxu0
    %v8254 = vadd.f32 0.0, %v8253
    %v8255 = vpop.f32.mrb[0].mxu0
    %v8256 = vpop.f32.mrb[0].mxu0
    %8257 = vdwg.mxu0
    %v8258 = vadd.f32 %v7979, %v8211
    %v8259 = vadd.f32 %v7980, %v8213
    %v8260 = vadd.f32 %v7981, %v8252
    %v8261 = vadd.f32 %v7982, %v8254
    %v8262 = vxor.u32 %v8258, 2147483648
    %v8263 = vxor.u32 %v8259, 2147483648
    %v8264 = vxor.u32 %v8260, 2147483648
    %v8265 = vmul.f32 %v8262, 1.442695
    %v8266 = vpow.pop %v8265
    %v8267 = vmul.f32 %v8263, 1.442695
    %v8268 = vpow.pop %v8267
    %v8269 = vmul.f32 %v8264, 1.442695
    %v8270 = vpow.pop %v8269
    %v8271 = vadd.f32 %v8266, 1.0
    %v8272 = vadd.f32 %v8268, 1.0
    %v8273 = vadd.f32 %v8270, 1.0
    %v8274 = vrcp.pop %v8271
    %v8275 = vmul.f32 1.0, %v8274
    %v8276 = vrcp.pop %v8272
    %v8277 = vmul.f32 1.0, %v8276
    %v8278 = vrcp.pop %v8273
    %v8279 = vmul.f32 1.0, %v8278
    %v8280 = vtanh.pop %v8261
    %v8281 = vmul.f32 %v8277, %v7975
    %v8282 = vmul.f32 %v8275, %v8280
    %v8283 = vadd.f32 %v8281, %v8282
    %v8284 = vtanh.pop %v8283
    %v8285 = vmul.f32 %v8279, %v8284
    %8286 = vst [vmem:[%s2540] sm:$0xff] %v8285
    %v8287 = vld [vmem:[%s2542] sm:$0xff]
    %v8288 = vld [vmem:[%s2542 + $0x8] sm:$0xff]
    %v8289 = vld [vmem:[%s2542 + $0x10] sm:$0xff]
    %v8290 = vld [vmem:[%s2542 + $0x18] sm:$0xff]
    %v8291 = vpack.c.bf16 %v8285, %v8285
    %v8292 = vld [vmem:[#allocation10] sm:$0xff]
    %v8293 = vld [vmem:[#allocation10 + $0x8] sm:$0xff]
    %v8294 = vld [vmem:[#allocation10 + $0x10] sm:$0xff]
    %v8295 = vld [vmem:[#allocation10 + $0x18] sm:$0xff]
    %v8296 = vld [vmem:[#allocation10 + $0x20] sm:$0xff]
    %v8297 = vld [vmem:[#allocation10 + $0x28] sm:$0xff]
    %v8298 = vld [vmem:[#allocation10 + $0x30] sm:$0xff]
    %v8299 = vld [vmem:[#allocation10 + $0x38] sm:$0xff]
    %v8300 = vld [vmem:[#allocation10 + $0x40] sm:$0xff]
    %v8301 = vld [vmem:[#allocation10 + $0x48] sm:$0xff]
    %v8302 = vld [vmem:[#allocation10 + $0x50] sm:$0xff]
    %v8303 = vld [vmem:[#allocation10 + $0x58] sm:$0xff]
    %v8304 = vld [vmem:[#allocation10 + $0x60] sm:$0xff]
    %v8305 = vld [vmem:[#allocation10 + $0x68] sm:$0xff]
    %v8306 = vld [vmem:[#allocation10 + $0x70] sm:$0xff]
    %v8307 = vld [vmem:[#allocation10 + $0x78] sm:$0xff]
    %v8308 = vld [vmem:[#allocation10 + $0x80] sm:$0xff]
    %v8309 = vld [vmem:[#allocation10 + $0x88] sm:$0xff]
    %v8310 = vld [vmem:[#allocation10 + $0x90] sm:$0xff]
    %v8311 = vld [vmem:[#allocation10 + $0x98] sm:$0xff]
    %v8312 = vld [vmem:[#allocation10 + $0xa0] sm:$0xff]
    %v8313 = vld [vmem:[#allocation10 + $0xa8] sm:$0xff]
    %v8314 = vld [vmem:[#allocation10 + $0xb0] sm:$0xff]
    %v8315 = vld [vmem:[#allocation10 + $0xb8] sm:$0xff]
    %v8316 = vld [vmem:[#allocation10 + $0xc0] sm:$0xff]
    %v8317 = vld [vmem:[#allocation10 + $0xc8] sm:$0xff]
    %v8318 = vld [vmem:[#allocation10 + $0xd0] sm:$0xff]
    %v8319 = vld [vmem:[#allocation10 + $0xd8] sm:$0xff]
    %v8320 = vld [vmem:[#allocation10 + $0xe0] sm:$0xff]
    %v8321 = vld [vmem:[#allocation10 + $0xe8] sm:$0xff]
    %v8322 = vld [vmem:[#allocation10 + $0xf0] sm:$0xff]
    %v8323 = vld [vmem:[#allocation10 + $0xf8] sm:$0xff]
    %v8356 = vunpack.c.l.b16 %v8292
    %v8357 = vunpack.c.h.b16 %v8292
    %v8358 = vunpack.c.l.b16 %v8293
    %v8359 = vunpack.c.h.b16 %v8293
    %v8360 = vunpack.c.l.b16 %v8294
    %v8361 = vunpack.c.h.b16 %v8294
    %v8362 = vunpack.c.l.b16 %v8295
    %v8363 = vunpack.c.h.b16 %v8295
    %v8364 = vunpack.c.l.b16 %v8296
    %v8365 = vunpack.c.h.b16 %v8296
    %v8366 = vunpack.c.l.b16 %v8297
    %v8367 = vunpack.c.h.b16 %v8297
    %v8368 = vunpack.c.l.b16 %v8298
    %v8369 = vunpack.c.h.b16 %v8298
    %v8370 = vunpack.c.l.b16 %v8299
    %v8371 = vunpack.c.h.b16 %v8299
    %v8372 = vunpack.c.l.b16 %v8300
    %v8373 = vunpack.c.h.b16 %v8300
    %v8374 = vunpack.c.l.b16 %v8301
    %v8375 = vunpack.c.h.b16 %v8301
    %v8376 = vunpack.c.l.b16 %v8302
    %v8377 = vunpack.c.h.b16 %v8302
    %v8378 = vunpack.c.l.b16 %v8303
    %v8379 = vunpack.c.h.b16 %v8303
    %v8380 = vunpack.c.l.b16 %v8304
    %v8381 = vunpack.c.h.b16 %v8304
    %v8382 = vunpack.c.l.b16 %v8305
    %v8383 = vunpack.c.h.b16 %v8305
    %v8384 = vunpack.c.l.b16 %v8306
    %v8385 = vunpack.c.h.b16 %v8306
    %v8386 = vunpack.c.l.b16 %v8307
    %v8387 = vunpack.c.h.b16 %v8307
    %v8388 = vunpack.c.l.b16 %v8308
    %v8389 = vunpack.c.h.b16 %v8308
    %v8390 = vunpack.c.l.b16 %v8309
    %v8391 = vunpack.c.h.b16 %v8309
    %v8392 = vunpack.c.l.b16 %v8310
    %v8393 = vunpack.c.h.b16 %v8310
    %v8394 = vunpack.c.l.b16 %v8311
    %v8395 = vunpack.c.h.b16 %v8311
    %v8396 = vunpack.c.l.b16 %v8312
    %v8397 = vunpack.c.h.b16 %v8312
    %v8398 = vunpack.c.l.b16 %v8313
    %v8399 = vunpack.c.h.b16 %v8313
    %v8400 = vunpack.c.l.b16 %v8314
    %v8401 = vunpack.c.h.b16 %v8314
    %v8402 = vunpack.c.l.b16 %v8315
    %v8403 = vunpack.c.h.b16 %v8315
    %v8404 = vunpack.c.l.b16 %v8316
    %v8405 = vunpack.c.h.b16 %v8316
    %v8406 = vunpack.c.l.b16 %v8317
    %v8407 = vunpack.c.h.b16 %v8317
    %v8408 = vunpack.c.l.b16 %v8318
    %v8409 = vunpack.c.h.b16 %v8318
    %v8410 = vunpack.c.l.b16 %v8319
    %v8411 = vunpack.c.h.b16 %v8319
    %v8412 = vunpack.c.l.b16 %v8320
    %v8413 = vunpack.c.h.b16 %v8320
    %v8414 = vunpack.c.l.b16 %v8321
    %v8415 = vunpack.c.h.b16 %v8321
    %v8416 = vunpack.c.l.b16 %v8322
    %v8417 = vunpack.c.h.b16 %v8322
    %v8418 = vunpack.c.l.b16 %v8323
    %v8419 = vunpack.c.h.b16 %v8323
    %v8420 = vpack.c.b16 %v8360, %v8356
    %v8421 = vpack.c.b16 %v8361, %v8357
    %v8422 = vpack.c.b16 %v8362, %v8358
    %v8423 = vpack.c.b16 %v8363, %v8359
    %v8424 = vpack.c.b16 %v8368, %v8364
    %v8425 = vpack.c.b16 %v8369, %v8365
    %v8426 = vpack.c.b16 %v8370, %v8366
    %v8427 = vpack.c.b16 %v8371, %v8367
    %v8428 = vpack.c.b16 %v8376, %v8372
    %v8429 = vpack.c.b16 %v8377, %v8373
    %v8430 = vpack.c.b16 %v8378, %v8374
    %v8431 = vpack.c.b16 %v8379, %v8375
    %v8432 = vpack.c.b16 %v8384, %v8380
    %v8433 = vpack.c.b16 %v8385, %v8381
    %v8434 = vpack.c.b16 %v8386, %v8382
    %v8435 = vpack.c.b16 %v8387, %v8383
    %v8436 = vpack.c.b16 %v8392, %v8388
    %v8437 = vpack.c.b16 %v8393, %v8389
    %v8438 = vpack.c.b16 %v8394, %v8390
    %v8439 = vpack.c.b16 %v8395, %v8391
    %v8440 = vpack.c.b16 %v8400, %v8396
    %v8441 = vpack.c.b16 %v8401, %v8397
    %v8442 = vpack.c.b16 %v8402, %v8398
    %v8443 = vpack.c.b16 %v8403, %v8399
    %v8444 = vpack.c.b16 %v8408, %v8404
    %v8445 = vpack.c.b16 %v8409, %v8405
    %v8446 = vpack.c.b16 %v8410, %v8406
    %v8447 = vpack.c.b16 %v8411, %v8407
    %v8448 = vpack.c.b16 %v8416, %v8412
    %v8449 = vpack.c.b16 %v8417, %v8413
    %v8450 = vpack.c.b16 %v8418, %v8414
    %v8451 = vpack.c.b16 %v8419, %v8415
    %8484 = vmatprep.subr.bf16.mxu0 %v8421
    %8485 = vmatpush1.bf16.msra.mxu0 %v8420
    %8486 = vmatprep.subr.bf16.mxu0 %v8425
    %8487 = vmatpush1.bf16.msra.mxu0 %v8424
    %8488 = vmatprep.subr.bf16.mxu0 %v8429
    %8489 = vmatpush1.bf16.msra.mxu0 %v8428
    %8490 = vmatprep.subr.bf16.mxu0 %v8433
    %8491 = vmatpush1.bf16.msra.mxu0 %v8432
    %8492 = vmatprep.subr.bf16.mxu0 %v8437
    %8493 = vmatpush1.bf16.msra.mxu0 %v8436
    %8494 = vmatprep.subr.bf16.mxu0 %v8441
    %8495 = vmatpush1.bf16.msra.mxu0 %v8440
    %8496 = vmatprep.subr.bf16.mxu0 %v8445
    %8497 = vmatpush1.bf16.msra.mxu0 %v8444
    %8498 = vmatprep.subr.bf16.mxu0 %v8449
    %8499 = vmatpush1.bf16.msra.mxu0 %v8448
    %8500 = vmatprep.subr.bf16.mxu0 0
    %8501 = vmatpush1.bf16.msra.mxu0 0
    %8502 = vmatprep.subr.bf16.mxu0 0
    %8503 = vmatpush1.bf16.msra.mxu0 0
    %8504 = vmatprep.subr.bf16.mxu0 0
    %8505 = vmatpush1.bf16.msra.mxu0 0
    %8506 = vmatprep.subr.bf16.mxu0 0
    %8507 = vmatpush1.bf16.msra.mxu0 0
    %8508 = vmatprep.subr.bf16.mxu0 0
    %8509 = vmatpush1.bf16.msra.mxu0 0
    %8510 = vmatprep.subr.bf16.mxu0 0
    %8511 = vmatpush1.bf16.msra.mxu0 0
    %8512 = vmatprep.subr.bf16.mxu0 0
    %8513 = vmatpush1.bf16.msra.mxu0 0
    %8514 = vmatprep.subr.bf16.mxu0 0
    %8515 = vmatpush1.bf16.msra.mxu0 0
    %8516 = vmatprep.mubr.bf16.mxu0 0
    %8517 = vmatmul.mubr.bf16.gmra.mrb[0].mxu0 %v8291
    %v8518 = vpop.f32.mrb[0].mxu0
    %v8519 = vadd.f32 0.0, %v8518
    %v8520 = vpop.f32.mrb[0].mxu0
    %v8521 = vadd.f32 0.0, %v8520
    %v8522 = vpop.f32.mrb[0].mxu0
    %v8523 = vpop.f32.mrb[0].mxu0
    %8524 = vdwg.mxu0
    %8525 = vmatprep.subr.bf16.mxu0 %v8423
    %8526 = vmatpush1.bf16.msra.mxu0 %v8422
    %8527 = vmatprep.subr.bf16.mxu0 %v8427
    %8528 = vmatpush1.bf16.msra.mxu0 %v8426
    %8529 = vmatprep.subr.bf16.mxu0 %v8431
    %8530 = vmatpush1.bf16.msra.mxu0 %v8430
    %8531 = vmatprep.subr.bf16.mxu0 %v8435
    %8532 = vmatpush1.bf16.msra.mxu0 %v8434
    %8533 = vmatprep.subr.bf16.mxu0 %v8439
    %8534 = vmatpush1.bf16.msra.mxu0 %v8438
    %8535 = vmatprep.subr.bf16.mxu0 %v8443
    %8536 = vmatpush1.bf16.msra.mxu0 %v8442
    %8537 = vmatprep.subr.bf16.mxu0 %v8447
    %8538 = vmatpush1.bf16.msra.mxu0 %v8446
    %8539 = vmatprep.subr.bf16.mxu0 %v8451
    %8540 = vmatpush1.bf16.msra.mxu0 %v8450
    %8541 = vmatprep.subr.bf16.mxu0 0
    %8542 = vmatpush1.bf16.msra.mxu0 0
    %8543 = vmatprep.subr.bf16.mxu0 0
    %8544 = vmatpush1.bf16.msra.mxu0 0
    %8545 = vmatprep.subr.bf16.mxu0 0
    %8546 = vmatpush1.bf16.msra.mxu0 0
    %8547 = vmatprep.subr.bf16.mxu0 0
    %8548 = vmatpush1.bf16.msra.mxu0 0
    %8549 = vmatprep.subr.bf16.mxu0 0
    %8550 = vmatpush1.bf16.msra.mxu0 0
    %8551 = vmatprep.subr.bf16.mxu0 0
    %8552 = vmatpush1.bf16.msra.mxu0 0
    %8553 = vmatprep.subr.bf16.mxu0 0
    %8554 = vmatpush1.bf16.msra.mxu0 0
    %8555 = vmatprep.subr.bf16.mxu0 0
    %8556 = vmatpush1.bf16.msra.mxu0 0
    %8557 = vmatprep.mubr.bf16.mxu0 0
    %8558 = vmatmul.mubr.bf16.gmra.mrb[0].mxu0 %v8291
    %v8559 = vpop.f32.mrb[0].mxu0
    %v8560 = vadd.f32 0.0, %v8559
    %v8561 = vpop.f32.mrb[0].mxu0
    %v8562 = vadd.f32 0.0, %v8561
    %v8563 = vpop.f32.mrb[0].mxu0
    %v8564 = vpop.f32.mrb[0].mxu0
    %8565 = vdwg.mxu0
    %v8566 = vadd.f32 %v8287, %v8519
    %v8567 = vadd.f32 %v8288, %v8521
    %v8568 = vadd.f32 %v8289, %v8560
    %v8569 = vadd.f32 %v8290, %v8562
    %v8570 = vxor.u32 %v8566, 2147483648
    %v8571 = vxor.u32 %v8567, 2147483648
    %v8572 = vxor.u32 %v8568, 2147483648
    %v8573 = vmul.f32 %v8570, 1.442695
    %v8574 = vpow.pop %v8573
    %v8575 = vmul.f32 %v8571, 1.442695
    %v8576 = vpow.pop %v8575
    %v8577 = vmul.f32 %v8572, 1.442695
    %v8578 = vpow.pop %v8577
    %v8579 = vadd.f32 %v8574, 1.0
    %v8580 = vadd.f32 %v8576, 1.0
    %v8581 = vadd.f32 %v8578, 1.0
    %v8582 = vrcp.pop %v8579
    %v8583 = vmul.f32 1.0, %v8582
    %v8584 = vrcp.pop %v8580
    %v8585 = vmul.f32 1.0, %v8584
    %v8586 = vrcp.pop %v8581
    %v8587 = vmul.f32 1.0, %v8586
    %v8588 = vtanh.pop %v8569
    %v8589 = vmul.f32 %v8585, %v8283
    %v8590 = vmul.f32 %v8583, %v8588
    %v8591 = vadd.f32 %v8589, %v8590
    %v8592 = vtanh.pop %v8591
    %v8593 = vmul.f32 %v8587, %v8592
    %8594 = vst [vmem:[%s2850] sm:$0xff] %v8593
    %v8595 = vld [vmem:[#allocation3] sm:$0xff]
    %v8596 = vld [vmem:[#allocation3 + $0x8] sm:$0xff]
    %v8597 = vld [vmem:[#allocation3 + $0x10] sm:$0xff]
    %v8598 = vld [vmem:[#allocation3 + $0x18] sm:$0xff]
    %v8599 = vld [vmem:[#allocation3 + $0x20] sm:$0xff]
    %v8600 = vld [vmem:[#allocation3 + $0x28] sm:$0xff]
    %v8601 = vld [vmem:[#allocation3 + $0x30] sm:$0xff]
    %v8602 = vld [vmem:[#allocation3 + $0x38] sm:$0xff]
    %v8603 = vld [vmem:[#allocation12] sm:$0xff]
    %v8604 = vld [vmem:[#allocation12 + $0x8] sm:$0xff]
    %v8605 = vld [vmem:[#allocation12 + $0x10] sm:$0xff]
    %v8606 = vld [vmem:[#allocation12 + $0x18] sm:$0xff]
    %v8607 = vld [vmem:[#allocation12 + $0x20] sm:$0xff]
    %v8608 = vld [vmem:[#allocation12 + $0x28] sm:$0xff]
    %v8609 = vld [vmem:[#allocation12 + $0x30] sm:$0xff]
    %v8610 = vld [vmem:[#allocation12 + $0x38] sm:$0xff]
    %v8611 = vld [vmem:[#allocation12 + $0x40] sm:$0xff]
    %v8612 = vld [vmem:[#allocation12 + $0x48] sm:$0xff]
    %v8613 = vld [vmem:[#allocation12 + $0x50] sm:$0xff]
    %v8614 = vld [vmem:[#allocation12 + $0x58] sm:$0xff]
    %v8615 = vld [vmem:[#allocation12 + $0x60] sm:$0xff]
    %v8616 = vld [vmem:[#allocation12 + $0x68] sm:$0xff]
    %v8617 = vld [vmem:[#allocation12 + $0x70] sm:$0xff]
    %v8618 = vld [vmem:[#allocation12 + $0x78] sm:$0xff]
    %v8619 = vld [vmem:[%s11] sm:$0x1]
    %v8621 = vlaneseq
    %v8622 = vshrl.u32 %v8621, 7
    %v8623 = vsub.s32 0, %v8622
    %v8624 = vrot.slane %v8619, %v8623
    %8626 = vmatprep.subr.mxu0 0.0
    %8627 = vmatpush1.msra.mxu0 %v8603
    %8628 = vmatprep.subr.mxu0 0.0
    %8629 = vmatpush1.msra.mxu0 %v8604
    %8630 = vmatprep.subr.mxu0 0.0
    %8631 = vmatpush1.msra.mxu0 %v8605
    %8632 = vmatprep.subr.mxu0 0.0
    %8633 = vmatpush1.msra.mxu0 %v8606
    %8634 = vmatprep.subr.mxu0 0.0
    %8635 = vmatpush1.msra.mxu0 %v8607
    %8636 = vmatprep.subr.mxu0 0.0
    %8637 = vmatpush1.msra.mxu0 %v8608
    %8638 = vmatprep.subr.mxu0 0.0
    %8639 = vmatpush1.msra.mxu0 %v8609
    %8640 = vmatprep.subr.mxu0 0.0
    %8641 = vmatpush1.msra.mxu0 %v8610
    %8642 = vmatprep.subr.mxu0 0.0
    %8643 = vmatpush1.msra.mxu0 %v8611
    %8644 = vmatprep.subr.mxu0 0.0
    %8645 = vmatpush1.msra.mxu0 %v8612
    %8646 = vmatprep.subr.mxu0 0.0
    %8647 = vmatpush1.msra.mxu0 %v8613
    %8648 = vmatprep.subr.mxu0 0.0
    %8649 = vmatpush1.msra.mxu0 %v8614
    %8650 = vmatprep.subr.mxu0 0.0
    %8651 = vmatpush1.msra.mxu0 %v8615
    %8652 = vmatprep.subr.mxu0 0.0
    %8653 = vmatpush1.msra.mxu0 %v8616
    %8654 = vmatprep.subr.mxu0 0.0
    %8655 = vmatpush1.msra.mxu0 %v8617
    %8656 = vmatprep.subr.mxu0 0.0
    %8657 = vmatpush1.msra.mxu0 %v8618
    %8658 = vmatprep.subr.mxu0 0.0
    %8659 = vmatpush1.msra.mxu0 0.0
    %8660 = vmatprep.subr.mxu0 0.0
    %8661 = vmatpush1.msra.mxu0 0.0
    %8662 = vmatprep.subr.mxu0 0.0
    %8663 = vmatpush1.msra.mxu0 0.0
    %8664 = vmatprep.subr.mxu0 0.0
    %8665 = vmatpush1.msra.mxu0 0.0
    %8666 = vmatprep.subr.mxu0 0.0
    %8667 = vmatpush1.msra.mxu0 0.0
    %8668 = vmatprep.subr.mxu0 0.0
    %8669 = vmatpush1.msra.mxu0 0.0
    %8670 = vmatprep.subr.mxu0 0.0
    %8671 = vmatpush1.msra.mxu0 0.0
    %8672 = vmatprep.subr.mxu0 0.0
    %8673 = vmatpush1.msra.mxu0 0.0
    %8674 = vmatprep.subr.mxu0 0.0
    %8675 = vmatpush1.msra.mxu0 0.0
    %8676 = vmatprep.subr.mxu0 0.0
    %8677 = vmatpush1.msra.mxu0 0.0
    %8678 = vmatprep.subr.mxu0 0.0
    %8679 = vmatpush1.msra.mxu0 0.0
    %8680 = vmatprep.subr.mxu0 0.0
    %8681 = vmatpush1.msra.mxu0 0.0
    %8682 = vmatprep.subr.mxu0 0.0
    %8683 = vmatpush1.msra.mxu0 0.0
    %8684 = vmatprep.subr.mxu0 0.0
    %8685 = vmatpush1.msra.mxu0 0.0
    %8686 = vmatprep.subr.mxu0 0.0
    %8687 = vmatpush1.msra.mxu0 0.0
    %8688 = vmatprep.subr.mxu0 0.0
    %8689 = vmatpush1.msra.mxu0 0.0
    %8690 = vmatprep.mubr.f32.mxu0 0.0
    %8691 = vmatmul.mubr.f32.gmra.mrb[0].mxu0 %v8595
    %v8692 = vpop.f32.mrb[0].mxu0
    %v8693 = vadd.f32 %v8624, %v8692
    %v8694 = vpop.f32.mrb[0].mxu0
    %8695 = vmatprep.mubr.f32.mxu0 0.0
    %8696 = vmatmul.mubr.f32.gmra.mrb[0].mxu0 %v8596
    %v8697 = vpop.f32.mrb[0].mxu0
    %v8698 = vadd.f32 %v8624, %v8697
    %v8699 = vpop.f32.mrb[0].mxu0
    %8700 = vmatprep.mubr.f32.mxu0 0.0
    %8701 = vmatmul.mubr.f32.gmra.mrb[0].mxu0 %v8597
    %v8702 = vpop.f32.mrb[0].mxu0
    %v8703 = vadd.f32 %v8624, %v8702
    %v8704 = vpop.f32.mrb[0].mxu0
    %8705 = vmatprep.mubr.f32.mxu0 0.0
    %8706 = vmatmul.mubr.f32.gmra.mrb[0].mxu0 %v8598
    %v8707 = vpop.f32.mrb[0].mxu0
    %v8708 = vadd.f32 %v8624, %v8707
    %v8709 = vpop.f32.mrb[0].mxu0
    %8710 = vmatprep.mubr.f32.mxu0 0.0
    %8711 = vmatmul.mubr.f32.gmra.mrb[0].mxu0 %v8599
    %v8712 = vpop.f32.mrb[0].mxu0
    %v8713 = vadd.f32 %v8624, %v8712
    %v8714 = vpop.f32.mrb[0].mxu0
    %8715 = vmatprep.mubr.f32.mxu0 0.0
    %8716 = vmatmul.mubr.f32.gmra.mrb[0].mxu0 %v8600
    %v8717 = vpop.f32.mrb[0].mxu0
    %v8718 = vadd.f32 %v8624, %v8717
    %v8719 = vpop.f32.mrb[0].mxu0
    %8720 = vmatprep.mubr.f32.mxu0 0.0
    %8721 = vmatmul.mubr.f32.gmra.mrb[0].mxu0 %v8601
    %v8722 = vpop.f32.mrb[0].mxu0
    %v8723 = vadd.f32 %v8624, %v8722
    %v8724 = vpop.f32.mrb[0].mxu0
    %8725 = vmatprep.mubr.f32.mxu0 0.0
    %8726 = vmatmul.mubr.f32.gmra.mrb[0].mxu0 %v8602
    %v8727 = vpop.f32.mrb[0].mxu0
    %v8728 = vadd.f32 %v8624, %v8727
    %v8729 = vpop.f32.mrb[0].mxu0
    %8730 = vdwg.mxu0
    %v8731 = vmax.f32 %v8693, 0.0
    %v8732 = vmax.f32 %v8698, 0.0
    %v8733 = vmax.f32 %v8703, 0.0
    %v8734 = vmax.f32 %v8708, 0.0
    %v8735 = vmax.f32 %v8713, 0.0
    %v8736 = vmax.f32 %v8718, 0.0
    %v8737 = vmax.f32 %v8723, 0.0
    %v8738 = vmax.f32 %v8728, 0.0
    %v8739 = vld [vmem:[%s12] sm:$0xff]
    %v8740 = vld [vmem:[%s12 + $0x8] sm:$0xff]
    %v8741 = vld [vmem:[%s12 + $0x10] sm:$0xff]
    %v8742 = vld [vmem:[%s12 + $0x18] sm:$0xff]
    %v8743 = vld [vmem:[%s12 + $0x20] sm:$0xff]
    %v8744 = vld [vmem:[%s12 + $0x28] sm:$0xff]
    %v8745 = vld [vmem:[%s12 + $0x30] sm:$0xff]
    %v8746 = vld [vmem:[%s12 + $0x38] sm:$0xff]
    %v8747 = vld [vmem:[%s12 + $0x40] sm:$0xff]
    %v8748 = vld [vmem:[%s12 + $0x48] sm:$0xff]
    %v8749 = vld [vmem:[%s12 + $0x50] sm:$0xff]
    %v8750 = vld [vmem:[%s12 + $0x58] sm:$0xff]
    %v8751 = vld [vmem:[%s12 + $0x60] sm:$0xff]
    %v8752 = vld [vmem:[%s12 + $0x68] sm:$0xff]
    %v8753 = vld [vmem:[%s12 + $0x70] sm:$0xff]
    %v8754 = vld [vmem:[%s12 + $0x78] sm:$0xff]
    %v8755 = vld [vmem:[%s13] sm:$0x1]
    %v8757 = vlaneseq
    %v8758 = vshrl.u32 %v8757, 7
    %v8759 = vsub.s32 0, %v8758
    %v8760 = vrot.slane %v8755, %v8759
    %8762 = vmatprep.subr.mxu0 0.0
    %8763 = vmatpush1.msra.mxu0 %v8739
    %8764 = vmatprep.subr.mxu0 0.0
    %8765 = vmatpush1.msra.mxu0 %v8740
    %8766 = vmatprep.subr.mxu0 0.0
    %8767 = vmatpush1.msra.mxu0 %v8741
    %8768 = vmatprep.subr.mxu0 0.0
    %8769 = vmatpush1.msra.mxu0 %v8742
    %8770 = vmatprep.subr.mxu0 0.0
    %8771 = vmatpush1.msra.mxu0 %v8743
    %8772 = vmatprep.subr.mxu0 0.0
    %8773 = vmatpush1.msra.mxu0 %v8744
    %8774 = vmatprep.subr.mxu0 0.0
    %8775 = vmatpush1.msra.mxu0 %v8745
    %8776 = vmatprep.subr.mxu0 0.0
    %8777 = vmatpush1.msra.mxu0 %v8746
    %8778 = vmatprep.subr.mxu0 0.0
    %8779 = vmatpush1.msra.mxu0 %v8747
    %8780 = vmatprep.subr.mxu0 0.0
    %8781 = vmatpush1.msra.mxu0 %v8748
    %8782 = vmatprep.subr.mxu0 0.0
    %8783 = vmatpush1.msra.mxu0 %v8749
    %8784 = vmatprep.subr.mxu0 0.0
    %8785 = vmatpush1.msra.mxu0 %v8750
    %8786 = vmatprep.subr.mxu0 0.0
    %8787 = vmatpush1.msra.mxu0 %v8751
    %8788 = vmatprep.subr.mxu0 0.0
    %8789 = vmatpush1.msra.mxu0 %v8752
    %8790 = vmatprep.subr.mxu0 0.0
    %8791 = vmatpush1.msra.mxu0 %v8753
    %8792 = vmatprep.subr.mxu0 0.0
    %8793 = vmatpush1.msra.mxu0 %v8754
    %8794 = vmatprep.subr.mxu0 0.0
    %8795 = vmatpush1.msra.mxu0 0.0
    %8796 = vmatprep.subr.mxu0 0.0
    %8797 = vmatpush1.msra.mxu0 0.0
    %8798 = vmatprep.subr.mxu0 0.0
    %8799 = vmatpush1.msra.mxu0 0.0
    %8800 = vmatprep.subr.mxu0 0.0
    %8801 = vmatpush1.msra.mxu0 0.0
    %8802 = vmatprep.subr.mxu0 0.0
    %8803 = vmatpush1.msra.mxu0 0.0
    %8804 = vmatprep.subr.mxu0 0.0
    %8805 = vmatpush1.msra.mxu0 0.0
    %8806 = vmatprep.subr.mxu0 0.0
    %8807 = vmatpush1.msra.mxu0 0.0
    %8808 = vmatprep.subr.mxu0 0.0
    %8809 = vmatpush1.msra.mxu0 0.0
    %8810 = vmatprep.subr.mxu0 0.0
    %8811 = vmatpush1.msra.mxu0 0.0
    %8812 = vmatprep.subr.mxu0 0.0
    %8813 = vmatpush1.msra.mxu0 0.0
    %8814 = vmatprep.subr.mxu0 0.0
    %8815 = vmatpush1.msra.mxu0 0.0
    %8816 = vmatprep.subr.mxu0 0.0
    %8817 = vmatpush1.msra.mxu0 0.0
    %8818 = vmatprep.subr.mxu0 0.0
    %8819 = vmatpush1.msra.mxu0 0.0
    %8820 = vmatprep.subr.mxu0 0.0
    %8821 = vmatpush1.msra.mxu0 0.0
    %8822 = vmatprep.subr.mxu0 0.0
    %8823 = vmatpush1.msra.mxu0 0.0
    %8824 = vmatprep.subr.mxu0 0.0
    %8825 = vmatpush1.msra.mxu0 0.0
    %8826 = vmatprep.mubr.f32.mxu0 0.0
    %8827 = vmatmul.mubr.f32.gmra.mrb[0].mxu0 %v8731
    %v8828 = vpop.f32.mrb[0].mxu0
    %v8829 = vadd.f32 %v8760, %v8828
    %v8830 = vpop.f32.mrb[0].mxu0
    %8831 = vmatprep.mubr.f32.mxu0 0.0
    %8832 = vmatmul.mubr.f32.gmra.mrb[0].mxu0 %v8732
    %v8833 = vpop.f32.mrb[0].mxu0
    %v8834 = vadd.f32 %v8760, %v8833
    %v8835 = vpop.f32.mrb[0].mxu0
    %8836 = vmatprep.mubr.f32.mxu0 0.0
    %8837 = vmatmul.mubr.f32.gmra.mrb[0].mxu0 %v8733
    %v8838 = vpop.f32.mrb[0].mxu0
    %v8839 = vadd.f32 %v8760, %v8838
    %v8840 = vpop.f32.mrb[0].mxu0
    %8841 = vmatprep.mubr.f32.mxu0 0.0
    %8842 = vmatmul.mubr.f32.gmra.mrb[0].mxu0 %v8734
    %v8843 = vpop.f32.mrb[0].mxu0
    %v8844 = vadd.f32 %v8760, %v8843
    %v8845 = vpop.f32.mrb[0].mxu0
    %8846 = vmatprep.mubr.f32.mxu0 0.0
    %8847 = vmatmul.mubr.f32.gmra.mrb[0].mxu0 %v8735
    %v8848 = vpop.f32.mrb[0].mxu0
    %v8849 = vadd.f32 %v8760, %v8848
    %v8850 = vpop.f32.mrb[0].mxu0
    %8851 = vmatprep.mubr.f32.mxu0 0.0
    %8852 = vmatmul.mubr.f32.gmra.mrb[0].mxu0 %v8736
    %v8853 = vpop.f32.mrb[0].mxu0
    %v8854 = vadd.f32 %v8760, %v8853
    %v8855 = vpop.f32.mrb[0].mxu0
    %8856 = vmatprep.mubr.f32.mxu0 0.0
    %8857 = vmatmul.mubr.f32.gmra.mrb[0].mxu0 %v8737
    %v8858 = vpop.f32.mrb[0].mxu0
    %v8859 = vadd.f32 %v8760, %v8858
    %v8860 = vpop.f32.mrb[0].mxu0
    %8861 = vmatprep.mubr.f32.mxu0 0.0
    %8862 = vmatmul.mubr.f32.gmra.mrb[0].mxu0 %v8738
    %v8863 = vpop.f32.mrb[0].mxu0
    %v8864 = vadd.f32 %v8760, %v8863
    %v8865 = vpop.f32.mrb[0].mxu0
    %8866 = vdwg.mxu0
    %v8867 = vmax.f32 %v8829, 0.0
    %v8868 = vmax.f32 %v8834, 0.0
    %v8869 = vmax.f32 %v8839, 0.0
    %v8870 = vmax.f32 %v8844, 0.0
    %v8871 = vmax.f32 %v8849, 0.0
    %v8872 = vmax.f32 %v8854, 0.0
    %v8873 = vmax.f32 %v8859, 0.0
    %v8874 = vmax.f32 %v8864, 0.0
    %vm8875 = vcmask 15360
    %v8876 = vsel %vm8875, %v8867, -inf
    %8877 = vmax.xlane.f32.xlu0 %v8876
    %v8878 = vpop.xlane.xlu0 %8877
    %v8879 = vsel %vm8875, %v8868, -inf
    %8880 = vmax.xlane.f32.xlu0 %v8879
    %v8881 = vpop.xlane.xlu0 %8880
    %v8882 = vsel %vm8875, %v8869, -inf
    %8883 = vmax.xlane.f32.xlu0 %v8882
    %v8884 = vpop.xlane.xlu0 %8883
    %v8885 = vsel %vm8875, %v8870, -inf
    %8886 = vmax.xlane.f32.xlu0 %v8885
    %v8887 = vpop.xlane.xlu0 %8886
    %v8888 = vsel %vm8875, %v8871, -inf
    %8889 = vmax.xlane.f32.xlu0 %v8888
    %v8890 = vpop.xlane.xlu0 %8889
    %v8891 = vsel %vm8875, %v8872, -inf
    %8892 = vmax.xlane.f32.xlu0 %v8891
    %v8893 = vpop.xlane.xlu0 %8892
    %v8894 = vsel %vm8875, %v8873, -inf
    %8895 = vmax.xlane.f32.xlu0 %v8894
    %v8896 = vpop.xlane.xlu0 %8895
    %v8897 = vsel %vm8875, %v8874, -inf
    %8898 = vmax.xlane.f32.xlu0 %v8897
    %v8899 = vpop.xlane.xlu0 %8898
    %v8900 = vsub.f32 %v8867, %v8878
    %v8901 = vsub.f32 %v8868, %v8881
    %v8902 = vsub.f32 %v8869, %v8884
    %v8903 = vsub.f32 %v8870, %v8887
    %v8904 = vsub.f32 %v8871, %v8890
    %v8905 = vsub.f32 %v8872, %v8893
    %v8906 = vsub.f32 %v8873, %v8896
    %v8907 = vsub.f32 %v8874, %v8899
    %v8908 = vmul.f32 %v8900, 1.442695
    %v8909 = vpow.pop %v8908
    %v8910 = vmul.f32 %v8901, 1.442695
    %v8911 = vpow.pop %v8910
    %v8912 = vmul.f32 %v8902, 1.442695
    %v8913 = vpow.pop %v8912
    %v8914 = vmul.f32 %v8903, 1.442695
    %v8915 = vpow.pop %v8914
    %v8916 = vmul.f32 %v8904, 1.442695
    %v8917 = vpow.pop %v8916
    %v8918 = vmul.f32 %v8905, 1.442695
    %v8919 = vpow.pop %v8918
    %v8920 = vmul.f32 %v8906, 1.442695
    %v8921 = vpow.pop %v8920
    %v8922 = vmul.f32 %v8907, 1.442695
    %v8923 = vpow.pop %v8922
    %v8924 = vsel %vm8875, %v8909, 0.0
    %8925 = vadd.xlane.f32.xlu0 %v8924
    %v8926 = vpop.xlane.xlu0 %8925
    %v8927 = vsel %vm8875, %v8911, 0.0
    %8928 = vadd.xlane.f32.xlu0 %v8927
    %v8929 = vpop.xlane.xlu0 %8928
    %v8930 = vsel %vm8875, %v8913, 0.0
    %8931 = vadd.xlane.f32.xlu0 %v8930
    %v8932 = vpop.xlane.xlu0 %8931
    %v8933 = vsel %vm8875, %v8915, 0.0
    %8934 = vadd.xlane.f32.xlu0 %v8933
    %v8935 = vpop.xlane.xlu0 %8934
    %v8936 = vsel %vm8875, %v8917, 0.0
    %8937 = vadd.xlane.f32.xlu0 %v8936
    %v8938 = vpop.xlane.xlu0 %8937
    %v8939 = vsel %vm8875, %v8919, 0.0
    %8940 = vadd.xlane.f32.xlu0 %v8939
    %v8941 = vpop.xlane.xlu0 %8940
    %v8942 = vsel %vm8875, %v8921, 0.0
    %8943 = vadd.xlane.f32.xlu0 %v8942
    %v8944 = vpop.xlane.xlu0 %8943
    %v8945 = vsel %vm8875, %v8923, 0.0
    %8946 = vadd.xlane.f32.xlu0 %v8945
    %v8947 = vpop.xlane.xlu0 %8946
    %v8948 = vrcp.pop %v8926
    %v8949 = vmul.f32 %v8909, %v8948
    %v8950 = vrcp.pop %v8929
    %v8951 = vmul.f32 %v8911, %v8950
    %v8952 = vrcp.pop %v8932
    %v8953 = vmul.f32 %v8913, %v8952
    %v8954 = vrcp.pop %v8935
    %v8955 = vmul.f32 %v8915, %v8954
    %v8956 = vrcp.pop %v8938
    %v8957 = vmul.f32 %v8917, %v8956
    %v8958 = vrcp.pop %v8941
    %v8959 = vmul.f32 %v8919, %v8958
    %v8960 = vrcp.pop %v8944
    %v8961 = vmul.f32 %v8921, %v8960
    %v8962 = vrcp.pop %v8947
    %v8963 = vmul.f32 %v8923, %v8962
    %8964 = vst.msk [vmem:[%s16] sm:$0xff] %vm8875, %v8949
    %8965 = vst.msk [vmem:[%s16 + $0x8] sm:$0xff] %vm8875, %v8951
    %8966 = vst.msk [vmem:[%s16 + $0x10] sm:$0xff] %vm8875, %v8953
    %8967 = vst.msk [vmem:[%s16 + $0x18] sm:$0xff] %vm8875, %v8955
    %8968 = vst.msk [vmem:[%s16 + $0x20] sm:$0xff] %vm8875, %v8957
    %8969 = vst.msk [vmem:[%s16 + $0x28] sm:$0xff] %vm8875, %v8959
    %8970 = vst.msk [vmem:[%s16 + $0x30] sm:$0xff] %vm8875, %v8961
    %8971 = vst.msk [vmem:[%s16 + $0x38] sm:$0xff] %vm8875, %v8963
    // Predicated region
    $region86: #{lstm_model_forward.1} parent=1 // pred_check
      _
    $region87: #{lstm_model_forward.1} parent=1 // pred_check_branch
      %8973 = sbr.rel (0) target = $region89
    $region88: #{lstm_model_forward.1} parent=1 // pred_region
      _
    $region89: #{lstm_model_forward.1} parent=1 // pred_fallthru
      _
    // Predicated region
    $region90: #{lstm_model_forward.1} parent=1 // pred_check
      _
    $region91: #{lstm_model_forward.1} parent=1 // pred_check_branch
      %8975 = sbr.rel (0) target = $region93
    $region92: #{lstm_model_forward.1} parent=1 // pred_region
      _
    $region93: #{lstm_model_forward.1} parent=1 // pred_fallthru
      _
    %8976 = vsyncpa [#allocation6], 1
    %8977 = vsyncpa [#allocation8], 1
    %8978 = vsyncpa [#allocation11], 1

</llo_original>
